<compile_context>
chip_gen: v5e
topology: v5e:2x2
jax: 0.10.0
libtpu: 0.0.40
codegen_flags: <defaults>
</compile_context>

<pallas_src>
import functools

import jax
import jax.numpy as jnp
import numpy as np
from jax.experimental import pallas as pl
from jax.experimental.pallas import tpu as pltpu


def _box3(u):
    """3x3 box filter (sum / 9) with zero padding — separable, in registers."""
    H, W = u.shape
    zc = jnp.zeros((H, 1), u.dtype)
    h = (u
         + jnp.concatenate([zc, u[:, :W - 1]], axis=1)
         + jnp.concatenate([u[:, 1:], zc], axis=1))
    zr = jnp.zeros((1, W), u.dtype)
    v = (h
         + jnp.concatenate([zr, h[:H - 1, :]], axis=0)
         + jnp.concatenate([h[1:, :], zr], axis=0))
    return v * (1.0 / 9.0)


def _weighted_ori_loss_kernel(
    x_ref,       # (1, H, W, C)  logits (or probabilities if logits=False)
    t_ref,       # (1, H, W, C)  target distribution over orientation bins
    m_ref,       # (1, H, W)     mask
    cossin_ref,  # (C, 2)        [cos(2*angle_k) | sin(2*angle_k)]
    out_ref,     # (1, 3, 128)   per-image partials, value broadcast over lanes
    *,
    eps,
    logits,
):
    x = x_ref[0].astype(jnp.float32)      # (H, W, C)
    t = t_ref[0].astype(jnp.float32)      # (H, W, C)
    m = m_ref[0].astype(jnp.float32)      # (H, W)
    H, W, C = x.shape

    if logits:
        xmax = jnp.max(x, axis=-1, keepdims=True)              # (H, W, 1)
        ex = jnp.exp(x - xmax)                                  # (H, W, C)
        sum_ex = jnp.sum(ex, axis=-1, keepdims=True)            # (H, W, 1)
        p = ex * pl.reciprocal(sum_ex, approx=True)             # softmax
        lse = xmax + jnp.log(sum_ex)                            # (H, W, 1)
        # log_pt = sum_c t*log(softmax(x)) = sum_c t*(x - lse)  (no log over C)
        log_pt = jnp.sum(t * (x - lse), axis=-1)                # (H, W)
    else:
        p = jnp.clip(x, eps, 1.0 - eps)
        log_pt = jnp.sum(t * jnp.log(p), axis=-1)               # (H, W)

    # ---- coherence term: per-pixel orientation vector via one MXU matmul ----
    cs = jnp.dot(p.reshape(H * W, C), cossin_ref[...],
                 preferred_element_type=jnp.float32)            # (H*W, 2)
    cs = cs.reshape(H, W, 2)
    col = jax.lax.broadcasted_iota(jnp.int32, (1, 1, 2), 2)
    w_cos = (col == 0).astype(jnp.float32)
    cos_ori = jnp.sum(cs * w_cos, axis=-1)                      # (H, W)
    sin_ori = jnp.sum(cs * (1.0 - w_cos), axis=-1)              # (H, W)
    mod_ori = jnp.sqrt(cos_ori * cos_ori + sin_ori * sin_ori)

    cos_f = _box3(cos_ori)
    sin_f = _box3(sin_ori)
    mod_f = _box3(mod_ori)
    coherence = jnp.sqrt(sin_f * sin_f + cos_f * cos_f) * pl.reciprocal(
        jnp.maximum(mod_f, eps), approx=True)

    # ---- per-image partial sums, emitted lane-dense; combined in the wrapper ----
    s_nlp = jnp.sum(-log_pt * m)
    s_mask = jnp.sum(m)
    s_coh = jnp.sum(coherence * m)

    row = jax.lax.broadcasted_iota(jnp.int32, (3, 128), 0)
    out_ref[0] = jnp.where(row == 0, s_nlp,
                           jnp.where(row == 1, s_mask, s_coh))


def weighted_ori_loss(
    input_nchw,
    target_nchw,
    mask=None,
    *,
    ang_stride=2,
    coherence=1.0,
    eps=1e-6,
    logits=True,
):
    """Pallas implementation of WeightedOriLoss.forward (masked path; a mask of
    ones reproduces the unmasked means exactly)."""
    N, C, H, W = input_nchw.shape
    ang = np.arange(ang_stride / 2.0, 180.0, ang_stride) / 90.0 * np.pi
    assert ang.shape[0] == C, f"channels {C} != angle bins {ang.shape[0]}"
    cossin = jnp.asarray(np.stack([np.cos(ang), np.sin(ang)], axis=1),
                         dtype=jnp.float32)                      # (C, 2)

    # NCHW -> NHWC (channels on lanes), keeping the caller's dtype (bf16 stays
    # bf16 -> half the HBM traffic); the kernel upcasts to f32 after load.
    x = jnp.transpose(input_nchw, (0, 2, 3, 1))
    t = jnp.transpose(target_nchw, (0, 2, 3, 1))
    if mask is None:
        m = jnp.ones((N, H, W), jnp.float32)
    else:
        m = jnp.reshape(mask, (N, H, W)).astype(jnp.float32)

    kernel = functools.partial(
        _weighted_ori_loss_kernel, eps=float(eps), logits=bool(logits))

    parts = pl.pallas_call(
        kernel,
        out_shape=jax.ShapeDtypeStruct((N, 3, 128), jnp.float32),
        grid_spec=pltpu.PrefetchScalarGridSpec(
            num_scalar_prefetch=0,
            grid=(N,),
            in_specs=[
                pl.BlockSpec((1, H, W, C), lambda n: (n, 0, 0, 0)),
                pl.BlockSpec((1, H, W, C), lambda n: (n, 0, 0, 0)),
                pl.BlockSpec((1, H, W), lambda n: (n, 0, 0)),
                pl.BlockSpec((C, 2), lambda n: (0, 0)),
            ],
            out_specs=pl.BlockSpec((1, 3, 128), lambda n: (n, 0, 0)),
        ),
        compiler_params=pltpu.CompilerParams(
            dimension_semantics=("parallel",)),
    )(x, t, m, cossin)

    # Final 3-scalar combine in f32 outside the kernel.
    sums = jnp.sum(parts[:, :, 0], axis=0)   # [sum(-log_pt*m), sum(m), sum(coh*m)]
    loss_bce = sums[0] / jnp.maximum(sums[1], eps)
    loss_coh = sums[1] / jnp.maximum(sums[2], eps) - 1.0
    return loss_bce + float(coherence) * loss_coh


# ----------------------- pure-JAX reference (for checking) -----------------------
def _ref_weighted_ori_loss(x, t, mask, *, ang_stride=2, coherence=1.0, eps=1e-6):
    N, C, H, W = x.shape
    p = jax.nn.softmax(x, axis=1)
    log_pt = jnp.sum(t * jnp.log(p), axis=1, keepdims=True)
    loss_bce = jnp.sum(-log_pt * mask) / jnp.maximum(jnp.sum(mask), eps)

    ang = np.arange(ang_stride / 2.0, 180.0, ang_stride) / 90.0 * np.pi
    cosk = jnp.asarray(np.cos(ang), jnp.float32)[None, :, None, None]
    sink = jnp.asarray(np.sin(ang), jnp.float32)[None, :, None, None]
    cos_ori = jnp.sum(p * cosk, axis=1, keepdims=True)
    sin_ori = jnp.sum(p * sink, axis=1, keepdims=True)
    mod_ori = jnp.sqrt(sin_ori ** 2 + cos_ori ** 2)

    k = jnp.ones((1, 1, 3, 3), jnp.float32) / 9.0
    conv = lambda u: jax.lax.conv_general_dilated(
        u, k, window_strides=(1, 1), padding=((1, 1), (1, 1)),
        dimension_numbers=("NCHW", "OIHW", "NCHW"))
    cos2, sin2, mod = conv(cos_ori), conv(sin_ori), conv(mod_ori)
    coh = jnp.sqrt(sin2 ** 2 + cos2 ** 2) / jnp.maximum(mod, eps)
    loss_coh = jnp.sum(mask) / jnp.maximum(jnp.sum(coh * mask), eps) - 1.0
    return loss_bce + coherence * loss_coh


if __name__ == "__main__":
    key = jax.random.PRNGKey(0)
    k1, k2, k3 = jax.random.split(key, 3)
    N, C, H, W = 2, 90, 16, 16          # C = 180 / ang_stride with ang_stride=2
    x = jax.random.normal(k1, (N, C, H, W), jnp.float32)
    t = jax.nn.softmax(jax.random.normal(k2, (N, C, H, W), jnp.float32), axis=1)
    mask = (jax.random.uniform(k3, (N, 1, H, W)) > 0.3).astype(jnp.float32)

    loss = weighted_ori_loss(x, t, mask, ang_stride=2, coherence=1.0)
    loss = jax.block_until_ready(loss)

    ref = _ref_weighted_ori_loss(x, t, mask, ang_stride=2, coherence=1.0)
    assert abs(float(loss) - float(ref)) < 2e-3 * max(1.0, abs(float(ref))), (
        float(loss), float(ref))

    # bf16 inputs pass straight through the wrapper (HBM-traffic halved);
    # looser tolerance because the inputs themselves are rounded to bf16.
    loss_bf16 = weighted_ori_loss(x.astype(jnp.bfloat16), t.astype(jnp.bfloat16),
                                  mask, ang_stride=2, coherence=1.0)
    loss_bf16 = jax.block_until_ready(loss_bf16)
    assert abs(float(loss_bf16) - float(ref)) < 5e-2 * max(1.0, abs(float(ref))), (
        float(loss_bf16), float(ref))

    print("KERNEL_OK")
</pallas_src>

<mosaic_0001>
module attributes {stable_mosaic.version = 11 : i64} {
  func.func @_weighted_ori_loss_kernel(%arg0: i32, %arg1: memref<1x16x16x90xf32, #tpu.memory_space<vmem>>, %arg2: memref<1x16x16x90xf32, #tpu.memory_space<vmem>>, %arg3: memref<1x16x16xf32, #tpu.memory_space<vmem>>, %arg4: memref<90x2xf32, #tpu.memory_space<vmem>>, %arg5: memref<1x3x128xf32, #tpu.memory_space<vmem>>) attributes {dimension_semantics = [#tpu.dimension_semantics<parallel>], iteration_bounds = array<i64: 2>, scalar_prefetch = 0 : i64, scratch_operands = 0 : i64, tpu.core_type = #tpu.core_type<tc>, window_params = [{transform_indices = @transform_0, window_bounds = array<i64: 1, 16, 16, 90>}, {transform_indices = @transform_1, window_bounds = array<i64: 1, 16, 16, 90>}, {transform_indices = @transform_2, window_bounds = array<i64: 1, 16, 16>}, {pipeline_mode = #tpu.pipeline_mode<synchronous>, transform_indices = @transform_3, window_bounds = array<i64: 90, 2>}, {transform_indices = @transform_4, window_bounds = array<i64: 1, 3, 128>}]} {
    %c0 = arith.constant 0 : index
    %c0_0 = arith.constant 0 : index
    %c0_1 = arith.constant 0 : index
    %c0_2 = arith.constant 0 : index
    %0 = vector.load %arg1[%c0, %c0_0, %c0_1, %c0_2] : memref<1x16x16x90xf32, #tpu.memory_space<vmem>>, vector<1x16x16x90xf32>
    %1 = vector.shape_cast %0 : vector<1x16x16x90xf32> to vector<16x16x90xf32>
    %c0_3 = arith.constant 0 : index
    %c0_4 = arith.constant 0 : index
    %c0_5 = arith.constant 0 : index
    %c0_6 = arith.constant 0 : index
    %2 = vector.load %arg2[%c0_3, %c0_4, %c0_5, %c0_6] : memref<1x16x16x90xf32, #tpu.memory_space<vmem>>, vector<1x16x16x90xf32>
    %3 = vector.shape_cast %2 : vector<1x16x16x90xf32> to vector<16x16x90xf32>
    %c0_7 = arith.constant 0 : index
    %c0_8 = arith.constant 0 : index
    %c0_9 = arith.constant 0 : index
    %4 = vector.load %arg3[%c0_7, %c0_8, %c0_9] : memref<1x16x16xf32, #tpu.memory_space<vmem>>, vector<1x16x16xf32>
    %5 = vector.shape_cast %4 : vector<1x16x16xf32> to vector<16x16xf32>
    %cst = arith.constant dense<0xFF800000> : vector<16x16xf32>
    %6 = vector.multi_reduction <maximumf>, %1, %cst [2] : vector<16x16x90xf32> to vector<16x16xf32>
    %7 = vector.shape_cast %6 : vector<16x16xf32> to vector<16x16x1xf32>
    %8 = vector.broadcast %7 : vector<16x16x1xf32> to vector<16x16x90xf32>
    %9 = arith.subf %1, %8 : vector<16x16x90xf32>
    %10 = math.exp %9 : vector<16x16x90xf32>
    %cst_10 = arith.constant dense<0.000000e+00> : vector<16x16xf32>
    %11 = vector.multi_reduction <add>, %10, %cst_10 [2] : vector<16x16x90xf32> to vector<16x16xf32>
    %12 = vector.shape_cast %11 : vector<16x16xf32> to vector<16x16x1xf32>
    %13 = tpu.reciprocal %12 {approx = true} : vector<16x16x1xf32> -> vector<16x16x1xf32>
    %14 = vector.broadcast %13 : vector<16x16x1xf32> to vector<16x16x90xf32>
    %15 = arith.mulf %10, %14 : vector<16x16x90xf32>
    %16 = math.log %12 : vector<16x16x1xf32>
    %17 = arith.addf %7, %16 : vector<16x16x1xf32>
    %18 = vector.broadcast %17 : vector<16x16x1xf32> to vector<16x16x90xf32>
    %19 = arith.subf %1, %18 : vector<16x16x90xf32>
    %20 = arith.mulf %3, %19 : vector<16x16x90xf32>
    %cst_11 = arith.constant dense<0.000000e+00> : vector<16x16xf32>
    %21 = vector.multi_reduction <add>, %20, %cst_11 [2] : vector<16x16x90xf32> to vector<16x16xf32>
    %22 = vector.shape_cast %15 : vector<16x16x90xf32> to vector<256x90xf32>
    %c0_12 = arith.constant 0 : index
    %c0_13 = arith.constant 0 : index
    %23 = vector.load %arg4[%c0_12, %c0_13] : memref<90x2xf32, #tpu.memory_space<vmem>>, vector<90x2xf32>
    %cst_14 = arith.constant dense<0.000000e+00> : vector<256x2xf32>
    %24 = tpu.matmul %22, %23, %cst_14 {dimension_numbers = #tpu.dot_dimension_numbers<[1], [0], [0], [1], [0, 0, 1, 1], [], []>} : vector<256x90xf32>, vector<90x2xf32>, vector<256x2xf32> -> vector<256x2xf32>
    %25 = vector.shape_cast %24 : vector<256x2xf32> to vector<16x16x2xf32>
    %26 = tpu.iota {dimensions = array<i32: 2>} : vector<1x1x2xi32>
    %c0_i32 = arith.constant 0 : i32
    %27 = vector.broadcast %c0_i32 : i32 to vector<1x1x2xi32>
    %28 = arith.cmpi eq, %26, %27 : vector<1x1x2xi32>
    %29 = arith.extui %28 : vector<1x1x2xi1> to vector<1x1x2xi32>
    %30 = arith.sitofp %29 : vector<1x1x2xi32> to vector<1x1x2xf32>
    %31 = vector.broadcast %30 : vector<1x1x2xf32> to vector<16x16x2xf32>
    %32 = arith.mulf %25, %31 : vector<16x16x2xf32>
    %cst_15 = arith.constant dense<0.000000e+00> : vector<16x16xf32>
    %33 = vector.multi_reduction <add>, %32, %cst_15 [2] : vector<16x16x2xf32> to vector<16x16xf32>
    %cst_16 = arith.constant 1.000000e+00 : f32
    %34 = vector.broadcast %cst_16 : f32 to vector<1x1x2xf32>
    %35 = arith.subf %34, %30 : vector<1x1x2xf32>
    %36 = vector.broadcast %35 : vector<1x1x2xf32> to vector<16x16x2xf32>
    %37 = arith.mulf %25, %36 : vector<16x16x2xf32>
    %cst_17 = arith.constant dense<0.000000e+00> : vector<16x16xf32>
    %38 = vector.multi_reduction <add>, %37, %cst_17 [2] : vector<16x16x2xf32> to vector<16x16xf32>
    %39 = arith.mulf %33, %33 : vector<16x16xf32>
    %40 = arith.mulf %38, %38 : vector<16x16xf32>
    %41 = arith.addf %39, %40 : vector<16x16xf32>
    %42 = math.sqrt %41 : vector<16x16xf32>
    %cst_18 = arith.constant 0.000000e+00 : f32
    %43 = vector.broadcast %cst_18 : f32 to vector<16x1xf32>
    %44 = vector.extract_strided_slice %33 {offsets = [0, 0], sizes = [16, 15], strides = [1, 1]} : vector<16x16xf32> to vector<16x15xf32>
    %45 = tpu.concatenate %43, %44 in 1 : vector<16x1xf32>, vector<16x15xf32> -> vector<16x16xf32>
    %46 = arith.addf %33, %45 : vector<16x16xf32>
    %47 = vector.extract_strided_slice %33 {offsets = [0, 1], sizes = [16, 15], strides = [1, 1]} : vector<16x16xf32> to vector<16x15xf32>
    %48 = tpu.concatenate %47, %43 in 1 : vector<16x15xf32>, vector<16x1xf32> -> vector<16x16xf32>
    %49 = arith.addf %46, %48 : vector<16x16xf32>
    %cst_19 = arith.constant 0.000000e+00 : f32
    %50 = vector.broadcast %cst_19 : f32 to vector<1x16xf32>
    %51 = vector.extract_strided_slice %49 {offsets = [0, 0], sizes = [15, 16], strides = [1, 1]} : vector<16x16xf32> to vector<15x16xf32>
    %52 = tpu.concatenate %50, %51 in 0 : vector<1x16xf32>, vector<15x16xf32> -> vector<16x16xf32>
    %53 = arith.addf %49, %52 : vector<16x16xf32>
    %54 = vector.extract_strided_slice %49 {offsets = [1, 0], sizes = [15, 16], strides = [1, 1]} : vector<16x16xf32> to vector<15x16xf32>
    %55 = tpu.concatenate %54, %50 in 0 : vector<15x16xf32>, vector<1x16xf32> -> vector<16x16xf32>
    %56 = arith.addf %53, %55 : vector<16x16xf32>
    %cst_20 = arith.constant 0.111111112 : f32
    %57 = vector.broadcast %cst_20 : f32 to vector<16x16xf32>
    %58 = arith.mulf %56, %57 : vector<16x16xf32>
    %cst_21 = arith.constant 0.000000e+00 : f32
    %59 = vector.broadcast %cst_21 : f32 to vector<16x1xf32>
    %60 = vector.extract_strided_slice %38 {offsets = [0, 0], sizes = [16, 15], strides = [1, 1]} : vector<16x16xf32> to vector<16x15xf32>
    %61 = tpu.concatenate %59, %60 in 1 : vector<16x1xf32>, vector<16x15xf32> -> vector<16x16xf32>
    %62 = arith.addf %38, %61 : vector<16x16xf32>
    %63 = vector.extract_strided_slice %38 {offsets = [0, 1], sizes = [16, 15], strides = [1, 1]} : vector<16x16xf32> to vector<16x15xf32>
    %64 = tpu.concatenate %63, %59 in 1 : vector<16x15xf32>, vector<16x1xf32> -> vector<16x16xf32>
    %65 = arith.addf %62, %64 : vector<16x16xf32>
    %cst_22 = arith.constant 0.000000e+00 : f32
    %66 = vector.broadcast %cst_22 : f32 to vector<1x16xf32>
    %67 = vector.extract_strided_slice %65 {offsets = [0, 0], sizes = [15, 16], strides = [1, 1]} : vector<16x16xf32> to vector<15x16xf32>
    %68 = tpu.concatenate %66, %67 in 0 : vector<1x16xf32>, vector<15x16xf32> -> vector<16x16xf32>
    %69 = arith.addf %65, %68 : vector<16x16xf32>
    %70 = vector.extract_strided_slice %65 {offsets = [1, 0], sizes = [15, 16], strides = [1, 1]} : vector<16x16xf32> to vector<15x16xf32>
    %71 = tpu.concatenate %70, %66 in 0 : vector<15x16xf32>, vector<1x16xf32> -> vector<16x16xf32>
    %72 = arith.addf %69, %71 : vector<16x16xf32>
    %cst_23 = arith.constant 0.111111112 : f32
    %73 = vector.broadcast %cst_23 : f32 to vector<16x16xf32>
    %74 = arith.mulf %72, %73 : vector<16x16xf32>
    %cst_24 = arith.constant 0.000000e+00 : f32
    %75 = vector.broadcast %cst_24 : f32 to vector<16x1xf32>
    %76 = vector.extract_strided_slice %42 {offsets = [0, 0], sizes = [16, 15], strides = [1, 1]} : vector<16x16xf32> to vector<16x15xf32>
    %77 = tpu.concatenate %75, %76 in 1 : vector<16x1xf32>, vector<16x15xf32> -> vector<16x16xf32>
    %78 = arith.addf %42, %77 : vector<16x16xf32>
    %79 = vector.extract_strided_slice %42 {offsets = [0, 1], sizes = [16, 15], strides = [1, 1]} : vector<16x16xf32> to vector<16x15xf32>
    %80 = tpu.concatenate %79, %75 in 1 : vector<16x15xf32>, vector<16x1xf32> -> vector<16x16xf32>
    %81 = arith.addf %78, %80 : vector<16x16xf32>
    %cst_25 = arith.constant 0.000000e+00 : f32
    %82 = vector.broadcast %cst_25 : f32 to vector<1x16xf32>
    %83 = vector.extract_strided_slice %81 {offsets = [0, 0], sizes = [15, 16], strides = [1, 1]} : vector<16x16xf32> to vector<15x16xf32>
    %84 = tpu.concatenate %82, %83 in 0 : vector<1x16xf32>, vector<15x16xf32> -> vector<16x16xf32>
    %85 = arith.addf %81, %84 : vector<16x16xf32>
    %86 = vector.extract_strided_slice %81 {offsets = [1, 0], sizes = [15, 16], strides = [1, 1]} : vector<16x16xf32> to vector<15x16xf32>
    %87 = tpu.concatenate %86, %82 in 0 : vector<15x16xf32>, vector<1x16xf32> -> vector<16x16xf32>
    %88 = arith.addf %85, %87 : vector<16x16xf32>
    %cst_26 = arith.constant 0.111111112 : f32
    %89 = vector.broadcast %cst_26 : f32 to vector<16x16xf32>
    %90 = arith.mulf %88, %89 : vector<16x16xf32>
    %91 = arith.mulf %74, %74 : vector<16x16xf32>
    %92 = arith.mulf %58, %58 : vector<16x16xf32>
    %93 = arith.addf %91, %92 : vector<16x16xf32>
    %94 = math.sqrt %93 : vector<16x16xf32>
    %cst_27 = arith.constant 9.99999997E-7 : f32
    %95 = vector.broadcast %cst_27 : f32 to vector<16x16xf32>
    %96 = arith.maximumf %90, %95 : vector<16x16xf32>
    %97 = tpu.reciprocal %96 {approx = true} : vector<16x16xf32> -> vector<16x16xf32>
    %98 = arith.mulf %94, %97 : vector<16x16xf32>
    %cst_28 = arith.constant 0.000000e+00 : f32
    %99 = vector.broadcast %cst_28 : f32 to vector<16x16xf32>
    %100 = arith.subf %99, %21 : vector<16x16xf32>
    %101 = arith.mulf %100, %5 : vector<16x16xf32>
    %102 = vector.shape_cast %101 : vector<16x16xf32> to vector<1x16x16xf32>
    %cst_29 = arith.constant dense<0.000000e+00> : vector<1xf32>
    %103 = vector.multi_reduction <add>, %102, %cst_29 [1, 2] : vector<1x16x16xf32> to vector<1xf32>
    %104 = vector.shape_cast %103 : vector<1xf32> to vector<1x1x1xf32>
    %105 = vector.extract %104[0, 0, 0] : f32 from vector<1x1x1xf32>
    %106 = vector.shape_cast %5 : vector<16x16xf32> to vector<1x16x16xf32>
    %cst_30 = arith.constant dense<0.000000e+00> : vector<1xf32>
    %107 = vector.multi_reduction <add>, %106, %cst_30 [1, 2] : vector<1x16x16xf32> to vector<1xf32>
    %108 = vector.shape_cast %107 : vector<1xf32> to vector<1x1x1xf32>
    %109 = vector.extract %108[0, 0, 0] : f32 from vector<1x1x1xf32>
    %110 = arith.mulf %98, %5 : vector<16x16xf32>
    %111 = vector.shape_cast %110 : vector<16x16xf32> to vector<1x16x16xf32>
    %cst_31 = arith.constant dense<0.000000e+00> : vector<1xf32>
    %112 = vector.multi_reduction <add>, %111, %cst_31 [1, 2] : vector<1x16x16xf32> to vector<1xf32>
    %113 = vector.shape_cast %112 : vector<1xf32> to vector<1x1x1xf32>
    %114 = vector.extract %113[0, 0, 0] : f32 from vector<1x1x1xf32>
    %115 = tpu.iota {dimensions = array<i32: 0>} : vector<3x128xi32>
    %c0_i32_32 = arith.constant 0 : i32
    %116 = vector.broadcast %c0_i32_32 : i32 to vector<3x128xi32>
    %117 = arith.cmpi eq, %115, %116 : vector<3x128xi32>
    %c1_i32 = arith.constant 1 : i32
    %118 = vector.broadcast %c1_i32 : i32 to vector<3x128xi32>
    %119 = arith.cmpi eq, %115, %118 : vector<3x128xi32>
    %120 = vector.broadcast %109 : f32 to vector<3x128xf32>
    %121 = vector.broadcast %114 : f32 to vector<3x128xf32>
    %122 = arith.select %119, %120, %121 : vector<3x128xi1>, vector<3x128xf32>
    %123 = vector.broadcast %105 : f32 to vector<3x128xf32>
    %124 = arith.select %117, %123, %122 : vector<3x128xi1>, vector<3x128xf32>
    %c0_33 = arith.constant 0 : index
    %c0_34 = arith.constant 0 : index
    %c0_35 = arith.constant 0 : index
    %125 = vector.load %arg5[%c0_33, %c0_34, %c0_35] : memref<1x3x128xf32, #tpu.memory_space<vmem>>, vector<1x3x128xf32>
    %126 = vector.shape_cast %125 : vector<1x3x128xf32> to vector<3x128xf32>
    %127 = vector.shape_cast %124 : vector<3x128xf32> to vector<1x3x128xf32>
    tpu.vector_store %arg5[%c0_33, %c0_34, %c0_35], %127 {strides = array<i32>} : memref<1x3x128xf32, #tpu.memory_space<vmem>>, vector<1x3x128xf32>,
    return
  }
  func.func @transform_0(%arg0: i32) -> (i32, i32, i32, i32) {
    %c0_i32 = arith.constant 0 : i32
    %c0_i32_0 = arith.constant 0 : i32
    %c0_i32_1 = arith.constant 0 : i32
    %c0_i32_2 = arith.constant 0 : i32
    return %arg0, %c0_i32, %c0_i32_0, %c0_i32_1 : i32, i32, i32, i32
  }
  func.func @transform_1(%arg0: i32) -> (i32, i32, i32, i32) {
    %c0_i32 = arith.constant 0 : i32
    %c0_i32_0 = arith.constant 0 : i32
    %c0_i32_1 = arith.constant 0 : i32
    %c0_i32_2 = arith.constant 0 : i32
    return %arg0, %c0_i32, %c0_i32_0, %c0_i32_1 : i32, i32, i32, i32
  }
  func.func @transform_2(%arg0: i32) -> (i32, i32, i32) {
    %c0_i32 = arith.constant 0 : i32
    %c0_i32_0 = arith.constant 0 : i32
    %c0_i32_1 = arith.constant 0 : i32
    return %arg0, %c0_i32, %c0_i32_0 : i32, i32, i32
  }
  func.func @transform_3(%arg0: i32) -> (i32, i32) {
    %c0_i32 = arith.constant 0 : i32
    %c0_i32_0 = arith.constant 0 : i32
    %c0_i32_1 = arith.constant 0 : i32
    return %c0_i32, %c0_i32_0 : i32, i32
  }
  func.func @transform_4(%arg0: i32) -> (i32, i32, i32) {
    %c0_i32 = arith.constant 0 : i32
    %c0_i32_0 = arith.constant 0 : i32
    %c0_i32_1 = arith.constant 0 : i32
    return %arg0, %c0_i32, %c0_i32_0 : i32, i32, i32
  }
}

</mosaic_0001>

<llo_original>
// kernel: tpu_custom_call.1
$region0: #{tpu_custom_call.1}
  #allocation0 [shape = 'u32[]', space=smem, size = 0x4, offset = 0x4, fixed_abs, tag = 'smem constant byte address 0x4 - core index']
  #allocation1 [shape = 'u32[72,128]{1,0:T(1,128)}', space=vmem, size = 0x9000, scoped, tag = 'internal scratch']
  %s0 = inlined_call_operand.hbm [shape: f32[2,16,16,90], index: 0, kind: input, shape index: {}]
  %s1 = inlined_call_operand.hbm [shape: f32[2,16,16,90], index: 1, kind: input, shape index: {}]
  %s2 = inlined_call_operand.vmem [shape: f32[2,16,16], index: 2, kind: input, shape index: {}]
  %s3 = inlined_call_operand.vmem [shape: f32[90,2], index: 3, kind: input, shape index: {}]
  %s4 = inlined_call_operand.vmem [shape: f32[2,3,128], index: 4, kind: output, shape index: {}]
  %s5 = sld [smem:[#allocation0]]
  $region57: #{tpu_custom_call.1} parent=0
    _
  %s7 = ssub.s32 1, %s5
  %s8 = scalar_select 0, %s7, %s5
  $region1: #{tpu_custom_call.1} parent=0
    #allocation2 [shape = 'u8[262144]{0}', space=vmem, size = 0x40000, scoped, tag = 'input window, operand 0']
    #allocation3 [shape = 's32[2]{0}', space=sflag, size = 0x8, scoped, tag = 'scoped memory for tpu_custom_call.1']
    #allocation4 [shape = 'u8[262144]{0}', space=vmem, size = 0x40000, scoped, tag = 'input window, operand 1']
    #allocation5 [shape = 's32[2]{0}', space=sflag, size = 0x8, scoped, tag = 'scoped memory for tpu_custom_call.1']
    %9 = vsyncpa [#allocation3], 0
    %s10 = scalar_lea.sflag [#allocation3], 1
    %11 = vsyncpa %s10, 0
    %12 = vsyncpa [#allocation5], 0
    %s13 = scalar_lea.sflag [#allocation5], 1
    %14 = vsyncpa %s13, 0
    loop: start=0, step=1, limit=4
    $region2: #{tpu_custom_call.1} parent=1 // loop_pre_header
      _
    $region3: #{tpu_custom_call.1} parent=1 // loop_header
      %s16 = sphi 0, %s20
      %p17 = scmp.ge.s32.totalorder %s16, 4
      %s26 = sphi 0, %s28
      %s29 = sphi 0, %s26
      %s30 = sphi 0, %s29
      %s46 = sphi 0, %s30
      %s52 = sphi 0, %s54
      %s55 = sphi 0, %s52
      %s56 = sphi 0, %s55
      %s72 = sphi 0, %s56
      %s78 = sphi 0, %s80
      %s81 = sphi 0, %s78
      %s82 = sphi 0, %s81
      %s98 = sphi 0, %s82
      %s102 = sphi 0, %s102
      %s104 = sphi 0, %s102
      %s105 = sphi 0, %s104
      %s119 = sphi 0, %s105
      %s125 = sphi 0, %s127
      %s128 = sphi 0, %s125
      %s129 = sphi 0, %s128
      %s145 = sphi 0, %s129
    $region4: #{tpu_custom_call.1} parent=1 // loop_header_branch
      %19 = sbr.rel (%p17) target = $region8
    $region5: #{tpu_custom_call.1} parent=1 // loop_body
      %s21 = ssub.s32 %s16, 1
      %s22 = ssub.s32 %s16, 2
      %s23 = sadd.s32 %s16, 1
      %s24 = ssub.s32 %s16, %s23
      %p25 = scmp.eq.s32.totalorder %s24, 0
      %s27 = sadd.s32 %s26, 1
      %s28 = scalar_select %p25, %s26, %s27
      %p31 = pneg %p25
      %p32 = scmp.eq.s32.totalorder %s16, 1
      %p33 = por %p31, %p32
      %p34 = scmp.ne.s32.totalorder %s26, %s29
      %p35 = scmp.eq.s32.totalorder %s16, 0
      %p36 = por %p34, %p35
      %p37 = scmp.ne.s32.totalorder %s26, %s29
      %p38 = scmp.eq.s32.totalorder %s21, 1
      %p39 = por %p37, %p38
      %p40 = scmp.ne.s32.totalorder %s29, %s30
      %p41 = scmp.eq.s32.totalorder %s21, 0
      %p42 = por %p40, %p41
      %p43 = scmp.ne.s32.totalorder %s29, %s30
      %p44 = scmp.eq.s32.totalorder %s22, 1
      %p45 = por %p43, %p44
      %p47 = scmp.ne.s32.totalorder %s30, %s46
      %p48 = scmp.eq.s32.totalorder %s22, 0
      %p49 = por %p47, %p48
      %s50 = ssub.s32 %s16, %s23
      %p51 = scmp.eq.s32.totalorder %s50, 0
      %s53 = sadd.s32 %s52, 1
      %s54 = scalar_select %p51, %s52, %s53
      %p57 = pneg %p51
      %p58 = scmp.eq.s32.totalorder %s16, 1
      %p59 = por %p57, %p58
      %p60 = scmp.ne.s32.totalorder %s52, %s55
      %p61 = scmp.eq.s32.totalorder %s16, 0
      %p62 = por %p60, %p61
      %p63 = scmp.ne.s32.totalorder %s52, %s55
      %p64 = scmp.eq.s32.totalorder %s21, 1
      %p65 = por %p63, %p64
      %p66 = scmp.ne.s32.totalorder %s55, %s56
      %p67 = scmp.eq.s32.totalorder %s21, 0
      %p68 = por %p66, %p67
      %p69 = scmp.ne.s32.totalorder %s55, %s56
      %p70 = scmp.eq.s32.totalorder %s22, 1
      %p71 = por %p69, %p70
      %p73 = scmp.ne.s32.totalorder %s56, %s72
      %p74 = scmp.eq.s32.totalorder %s22, 0
      %p75 = por %p73, %p74
      %s76 = ssub.s32 %s16, %s23
      %p77 = scmp.eq.s32.totalorder %s76, 0
      %s79 = sadd.s32 %s78, 1
      %s80 = scalar_select %p77, %s78, %s79
      %p83 = pneg %p77
      %p84 = scmp.eq.s32.totalorder %s16, 1
      %p85 = por %p83, %p84
      %p86 = scmp.ne.s32.totalorder %s78, %s81
      %p87 = scmp.eq.s32.totalorder %s16, 0
      %p88 = por %p86, %p87
      %p89 = scmp.ne.s32.totalorder %s78, %s81
      %p90 = scmp.eq.s32.totalorder %s21, 1
      %p91 = por %p89, %p90
      %p92 = scmp.ne.s32.totalorder %s81, %s82
      %p93 = scmp.eq.s32.totalorder %s21, 0
      %p94 = por %p92, %p93
      %p95 = scmp.ne.s32.totalorder %s81, %s82
      %p96 = scmp.eq.s32.totalorder %s22, 1
      %p97 = por %p95, %p96
      %p99 = scmp.ne.s32.totalorder %s82, %s98
      %p100 = scmp.eq.s32.totalorder %s22, 0
      %p101 = por %p99, %p100
      %s103 = sadd.s32 %s102, 1
      %p106 = scmp.eq.s32.totalorder %s16, 1
      %p107 = scmp.ne.s32.totalorder %s102, %s104
      %p108 = scmp.eq.s32.totalorder %s16, 0
      %p109 = por %p107, %p108
      %p110 = scmp.ne.s32.totalorder %s102, %s104
      %p111 = scmp.eq.s32.totalorder %s21, 1
      %p112 = por %p110, %p111
      %p113 = scmp.ne.s32.totalorder %s104, %s105
      %p114 = scmp.eq.s32.totalorder %s21, 0
      %p115 = por %p113, %p114
      %p116 = scmp.ne.s32.totalorder %s104, %s105
      %p117 = scmp.eq.s32.totalorder %s22, 1
      %p118 = por %p116, %p117
      %p120 = scmp.ne.s32.totalorder %s105, %s119
      %p121 = scmp.eq.s32.totalorder %s22, 0
      %p122 = por %p120, %p121
      %s123 = ssub.s32 %s16, %s23
      %p124 = scmp.eq.s32.totalorder %s123, 0
      %s126 = sadd.s32 %s125, 1
      %s127 = scalar_select %p124, %s125, %s126
      %p130 = pneg %p124
      %p131 = scmp.eq.s32.totalorder %s16, 1
      %p132 = por %p130, %p131
      %p133 = scmp.ne.s32.totalorder %s125, %s128
      %p134 = scmp.eq.s32.totalorder %s16, 0
      %p135 = por %p133, %p134
      %p136 = scmp.ne.s32.totalorder %s125, %s128
      %p137 = scmp.eq.s32.totalorder %s21, 1
      %p138 = por %p136, %p137
      %p139 = scmp.ne.s32.totalorder %s128, %s129
      %p140 = scmp.eq.s32.totalorder %s21, 0
      %p141 = por %p139, %p140
      %p142 = scmp.ne.s32.totalorder %s128, %s129
      %p143 = scmp.eq.s32.totalorder %s22, 1
      %p144 = por %p142, %p143
      %p146 = scmp.ne.s32.totalorder %s129, %s145
      %p147 = scmp.eq.s32.totalorder %s22, 0
      %p148 = por %p146, %p147
      %p149 = scmp.le.s32.totalorder 1, %s16
      %p150 = scmp.lt.s32.totalorder %s16, 3
      %p151 = pnand %p149, %p150
      %p152 = pneg %p151
      // Predicated region
      $region9: #{tpu_custom_call.1} parent=5 // pred_check
        _
      $region10: #{tpu_custom_call.1} parent=5 // pred_check_branch
        %154 = sbr.rel (%p151) target = $region12
      $region11: #{tpu_custom_call.1} parent=5 // pred_region
        %s155 = ssub.s32 %s16, 1
        // Predicated region
        $region13: #{tpu_custom_call.1} parent=11 // pred_check
          %p156 = pneg %p115
        $region14: #{tpu_custom_call.1} parent=11 // pred_check_branch
          %158 = sbr.rel (%p156) target = $region16
        $region15: #{tpu_custom_call.1} parent=11 // pred_region
          _
        $region16: #{tpu_custom_call.1} parent=11 // pred_fallthru
          _
      $region12: #{tpu_custom_call.1} parent=5 // pred_fallthru
        _
      %p159 = scmp.lt.s32.totalorder %s16, 2
      // Predicated region
      $region17: #{tpu_custom_call.1} parent=5 // pred_check
        %p160 = pneg %p159
      $region18: #{tpu_custom_call.1} parent=5 // pred_check_branch
        %162 = sbr.rel (%p160) target = $region20
      $region19: #{tpu_custom_call.1} parent=5 // pred_region
        // Predicated region
        $region21: #{tpu_custom_call.1} parent=19 // pred_check
          %p163 = pneg %p36
        $region22: #{tpu_custom_call.1} parent=19 // pred_check_branch
          %165 = sbr.rel (%p163) target = $region24
        $region23: #{tpu_custom_call.1} parent=19 // pred_region
          %s166 = sand.u32 %s26, 1
          %s167 = scalar_lea.sflag [#allocation3], %s166
          %s168 = sand.u32 %s26, 1
          %s169 = smul.addr %s168, 256
          %s170 = scalar_lea.vmem [#allocation2], %s169
          %172 = vsyncadd %s167, 0
          %s173 = smul.addr %s16, 32
          %s174 = smul.addr %s173, 8
          %s175 = scalar_lea.hbm %s0, %s174
          %s176 = sshll.u32 %s175, 4
          %s177 = int_to_ptr.hbm [resolvable:$true] %s176
          %s178 = sshll.u32 %s170, 4
          %s179 = int_to_ptr.vmem [resolvable:$true] %s178
          %184 = dma.hbm_to_vmem [thread:$0]  %s177, 4096, %s179, %s167, 128, 128, 8
        $region24: #{tpu_custom_call.1} parent=19 // pred_fallthru
          _
        // Predicated region
        $region25: #{tpu_custom_call.1} parent=19 // pred_check
          %p185 = pneg %p62
        $region26: #{tpu_custom_call.1} parent=19 // pred_check_branch
          %187 = sbr.rel (%p185) target = $region28
        $region27: #{tpu_custom_call.1} parent=19 // pred_region
          %s188 = sand.u32 %s52, 1
          %s189 = scalar_lea.sflag [#allocation5], %s188
          %s190 = sand.u32 %s52, 1
          %s191 = smul.addr %s190, 256
          %s192 = scalar_lea.vmem [#allocation4], %s191
          %194 = vsyncadd %s189, 0
          %s195 = smul.addr %s16, 32
          %s196 = smul.addr %s195, 8
          %s197 = scalar_lea.hbm %s1, %s196
          %s198 = sshll.u32 %s197, 4
          %s199 = int_to_ptr.hbm [resolvable:$true] %s198
          %s200 = sshll.u32 %s192, 4
          %s201 = int_to_ptr.vmem [resolvable:$true] %s200
          %206 = dma.hbm_to_vmem [thread:$0]  %s199, 4096, %s201, %s189, 128, 128, 8
        $region28: #{tpu_custom_call.1} parent=19 // pred_fallthru
          _
        // Predicated region
        $region29: #{tpu_custom_call.1} parent=19 // pred_check
          %p207 = pneg %p88
        $region30: #{tpu_custom_call.1} parent=19 // pred_check_branch
          %209 = sbr.rel (%p207) target = $region32
        $region31: #{tpu_custom_call.1} parent=19 // pred_region
          %p210 = scmp.lt.s32.totalorder %s16, 1
          %s211 = scalar_select %p210, %s16, 1
          %s212 = smul.addr %s211, 2
          %s213 = smul.addr %s212, 8
          %s214 = scalar_lea.vmem %s2, %s213
        $region32: #{tpu_custom_call.1} parent=19 // pred_fallthru
          _
      $region20: #{tpu_custom_call.1} parent=5 // pred_fallthru
        _
      %p215 = scmp.le.s32.totalorder 1, %s16
      %p216 = scmp.lt.s32.totalorder %s16, 3
      %p217 = pnand %p215, %p216
      %p218 = pneg %p217
      // Predicated region
      $region33: #{tpu_custom_call.1} parent=5 // pred_check
        _
      $region34: #{tpu_custom_call.1} parent=5 // pred_check_branch
        %220 = sbr.rel (%p217) target = $region36
      $region35: #{tpu_custom_call.1} parent=5 // pred_region
        %s221 = ssub.s32 %s16, 1
        %s222 = sand.u32 %s29, 1
        %s223 = scalar_lea.sflag [#allocation3], %s222
        %s224 = sand.u32 %s29, 1
        %s225 = smul.addr %s224, 256
        %s226 = scalar_lea.vmem [#allocation2], %s225
        // Predicated region
        $region37: #{tpu_custom_call.1} parent=35 // pred_check
          %p227 = pneg %p42
        $region38: #{tpu_custom_call.1} parent=35 // pred_check_branch
          %229 = sbr.rel (%p227) target = $region40
        $region39: #{tpu_custom_call.1} parent=35 // pred_region
          %231 = dma.done %s223, 4096
        $region40: #{tpu_custom_call.1} parent=35 // pred_fallthru
          _
        %s232 = sand.u32 %s55, 1
        %s233 = scalar_lea.sflag [#allocation5], %s232
        %s234 = sand.u32 %s55, 1
        %s235 = smul.addr %s234, 256
        %s236 = scalar_lea.vmem [#allocation4], %s235
        // Predicated region
        $region41: #{tpu_custom_call.1} parent=35 // pred_check
          %p237 = pneg %p68
        $region42: #{tpu_custom_call.1} parent=35 // pred_check_branch
          %239 = sbr.rel (%p237) target = $region44
        $region43: #{tpu_custom_call.1} parent=35 // pred_region
          %241 = dma.done %s233, 4096
        $region44: #{tpu_custom_call.1} parent=35 // pred_fallthru
          _
        %s242 = sand.u32 %s29, 1
        %s243 = scalar_lea.sflag [#allocation3], %s242
        %s244 = sand.u32 %s29, 1
        %s245 = smul.addr %s244, 256
        %s246 = scalar_lea.vmem [#allocation2], %s245
        %p247 = pneg %p42
        %p248 = pneg %p39
        %s249 = sand.u32 %s55, 1
        %s250 = scalar_lea.sflag [#allocation5], %s249
        %s251 = sand.u32 %s55, 1
        %s252 = smul.addr %s251, 256
        %s253 = scalar_lea.vmem [#allocation4], %s252
        %p254 = pneg %p68
        %p255 = pneg %p65
        %p256 = scmp.lt.s32.totalorder %s21, 1
        %s257 = scalar_select %p256, %s21, 1
        %s258 = smul.addr %s257, 2
        %s259 = smul.addr %s258, 8
        %s260 = scalar_lea.vmem %s2, %s259
        %p261 = pneg %p94
        %p262 = pneg %p91
        %p263 = pneg %p115
        %p264 = pneg %p112
        %p265 = pneg %p141
        %p266 = pneg %p138
        %p267 = scmp.lt.s32.totalorder %s21, 1
        %s268 = scalar_select %p267, %s21, 1
        %s269 = smul.addr %s268, 4
        %s270 = scalar_lea.vmem %s4, %s269
        %p271 = scmp.lt.s32.totalorder %s21, 1
        %s272 = scalar_select %p271, %s21, 1
        %s273 = smul.addr %s272, 2
        %s274 = smul.addr %s273, 8
        %s275 = scalar_lea.vmem %s2, %s274
        %p276 = scmp.lt.s32.totalorder %s21, 1
        %s277 = scalar_select %p276, %s21, 1
        %s278 = smul.addr %s277, 4
        %s279 = scalar_lea.vmem %s4, %s278
        %v280 = vld [vmem:[%s226] sm:$0xff]
        %v281 = vld [vmem:[%s226 + $0x8] sm:$0xff]
        %v282 = vld [vmem:[%s226 + $0x10] sm:$0xff]
        %v283 = vld [vmem:[%s226 + $0x18] sm:$0xff]
        %v284 = vld [vmem:[%s226 + $0x20] sm:$0xff]
        %v285 = vld [vmem:[%s226 + $0x28] sm:$0xff]
        %v286 = vld [vmem:[%s226 + $0x30] sm:$0xff]
        %v287 = vld [vmem:[%s226 + $0x38] sm:$0xff]
        %v288 = vld [vmem:[%s226 + $0x40] sm:$0xff]
        %v289 = vld [vmem:[%s226 + $0x48] sm:$0xff]
        %v290 = vld [vmem:[%s226 + $0x50] sm:$0xff]
        %v291 = vld [vmem:[%s226 + $0x58] sm:$0xff]
        %v292 = vld [vmem:[%s226 + $0x60] sm:$0xff]
        %v293 = vld [vmem:[%s226 + $0x68] sm:$0xff]
        %v294 = vld [vmem:[%s226 + $0x70] sm:$0xff]
        %v295 = vld [vmem:[%s226 + $0x78] sm:$0xff]
        %v296 = vld [vmem:[%s226 + $0x80] sm:$0xff]
        %v297 = vld [vmem:[%s226 + $0x88] sm:$0xff]
        %v298 = vld [vmem:[%s226 + $0x90] sm:$0xff]
        %v299 = vld [vmem:[%s226 + $0x98] sm:$0xff]
        %v300 = vld [vmem:[%s226 + $0xa0] sm:$0xff]
        %v301 = vld [vmem:[%s226 + $0xa8] sm:$0xff]
        %v302 = vld [vmem:[%s226 + $0xb0] sm:$0xff]
        %v303 = vld [vmem:[%s226 + $0xb8] sm:$0xff]
        %v304 = vld [vmem:[%s226 + $0xc0] sm:$0xff]
        %v305 = vld [vmem:[%s226 + $0xc8] sm:$0xff]
        %v306 = vld [vmem:[%s226 + $0xd0] sm:$0xff]
        %v307 = vld [vmem:[%s226 + $0xd8] sm:$0xff]
        %v308 = vld [vmem:[%s226 + $0xe0] sm:$0xff]
        %v309 = vld [vmem:[%s226 + $0xe8] sm:$0xff]
        %v310 = vld [vmem:[%s226 + $0xf0] sm:$0xff]
        %v311 = vld [vmem:[%s226 + $0xf8] sm:$0xff]
        %v312 = vld [vmem:[%s236] sm:$0xff]
        %v313 = vld [vmem:[%s236 + $0x8] sm:$0xff]
        %v314 = vld [vmem:[%s236 + $0x10] sm:$0xff]
        %v315 = vld [vmem:[%s236 + $0x18] sm:$0xff]
        %v316 = vld [vmem:[%s236 + $0x20] sm:$0xff]
        %v317 = vld [vmem:[%s236 + $0x28] sm:$0xff]
        %v318 = vld [vmem:[%s236 + $0x30] sm:$0xff]
        %v319 = vld [vmem:[%s236 + $0x38] sm:$0xff]
        %v320 = vld [vmem:[%s236 + $0x40] sm:$0xff]
        %v321 = vld [vmem:[%s236 + $0x48] sm:$0xff]
        %v322 = vld [vmem:[%s236 + $0x50] sm:$0xff]
        %v323 = vld [vmem:[%s236 + $0x58] sm:$0xff]
        %v324 = vld [vmem:[%s236 + $0x60] sm:$0xff]
        %v325 = vld [vmem:[%s236 + $0x68] sm:$0xff]
        %v326 = vld [vmem:[%s236 + $0x70] sm:$0xff]
        %v327 = vld [vmem:[%s236 + $0x78] sm:$0xff]
        %v328 = vld [vmem:[%s236 + $0x80] sm:$0xff]
        %v329 = vld [vmem:[%s236 + $0x88] sm:$0xff]
        %v330 = vld [vmem:[%s236 + $0x90] sm:$0xff]
        %v331 = vld [vmem:[%s236 + $0x98] sm:$0xff]
        %v332 = vld [vmem:[%s236 + $0xa0] sm:$0xff]
        %v333 = vld [vmem:[%s236 + $0xa8] sm:$0xff]
        %v334 = vld [vmem:[%s236 + $0xb0] sm:$0xff]
        %v335 = vld [vmem:[%s236 + $0xb8] sm:$0xff]
        %v336 = vld [vmem:[%s236 + $0xc0] sm:$0xff]
        %v337 = vld [vmem:[%s236 + $0xc8] sm:$0xff]
        %v338 = vld [vmem:[%s236 + $0xd0] sm:$0xff]
        %v339 = vld [vmem:[%s236 + $0xd8] sm:$0xff]
        %v340 = vld [vmem:[%s236 + $0xe0] sm:$0xff]
        %v341 = vld [vmem:[%s236 + $0xe8] sm:$0xff]
        %v342 = vld [vmem:[%s236 + $0xf0] sm:$0xff]
        %v343 = vld [vmem:[%s236 + $0xf8] sm:$0xff]
        %v344 = vld [vmem:[%s275] sm:$0xff]
        %v345 = vld [vmem:[%s275 + $0x8] sm:$0xff]
        %vm346 = vcmask 736256
        %v347 = vsel %vm346, %v280, -inf
        %348 = vmax.xlane.f32.xlu0 %v347
        %v349 = vpop.xlane.xlu0 %348
        %v350 = vsel %vm346, %v281, -inf
        %351 = vmax.xlane.f32.xlu0 %v350
        %v352 = vpop.xlane.xlu0 %351
        %v353 = vsel %vm346, %v282, -inf
        %354 = vmax.xlane.f32.xlu0 %v353
        %v355 = vpop.xlane.xlu0 %354
        %v356 = vsel %vm346, %v283, -inf
        %357 = vmax.xlane.f32.xlu0 %v356
        %v358 = vpop.xlane.xlu0 %357
        %v359 = vsel %vm346, %v284, -inf
        %360 = vmax.xlane.f32.xlu0 %v359
        %v361 = vpop.xlane.xlu0 %360
        %v362 = vsel %vm346, %v285, -inf
        %363 = vmax.xlane.f32.xlu0 %v362
        %v364 = vpop.xlane.xlu0 %363
        %v365 = vsel %vm346, %v286, -inf
        %366 = vmax.xlane.f32.xlu0 %v365
        %v367 = vpop.xlane.xlu0 %366
        %v368 = vsel %vm346, %v287, -inf
        %369 = vmax.xlane.f32.xlu0 %v368
        %v370 = vpop.xlane.xlu0 %369
        %v371 = vsel %vm346, %v288, -inf
        %372 = vmax.xlane.f32.xlu0 %v371
        %v373 = vpop.xlane.xlu0 %372
        %v374 = vsel %vm346, %v289, -inf
        %375 = vmax.xlane.f32.xlu0 %v374
        %v376 = vpop.xlane.xlu0 %375
        %v377 = vsel %vm346, %v290, -inf
        %378 = vmax.xlane.f32.xlu0 %v377
        %v379 = vpop.xlane.xlu0 %378
        %v380 = vsel %vm346, %v291, -inf
        %381 = vmax.xlane.f32.xlu0 %v380
        %v382 = vpop.xlane.xlu0 %381
        %v383 = vsel %vm346, %v292, -inf
        %384 = vmax.xlane.f32.xlu0 %v383
        %v385 = vpop.xlane.xlu0 %384
        %v386 = vsel %vm346, %v293, -inf
        %387 = vmax.xlane.f32.xlu0 %v386
        %v388 = vpop.xlane.xlu0 %387
        %v389 = vsel %vm346, %v294, -inf
        %390 = vmax.xlane.f32.xlu0 %v389
        %v391 = vpop.xlane.xlu0 %390
        %v392 = vsel %vm346, %v295, -inf
        %393 = vmax.xlane.f32.xlu0 %v392
        %v394 = vpop.xlane.xlu0 %393
        %v395 = vsel %vm346, %v296, -inf
        %396 = vmax.xlane.f32.xlu0 %v395
        %v397 = vpop.xlane.xlu0 %396
        %v398 = vsel %vm346, %v297, -inf
        %399 = vmax.xlane.f32.xlu0 %v398
        %v400 = vpop.xlane.xlu0 %399
        %v401 = vsel %vm346, %v298, -inf
        %402 = vmax.xlane.f32.xlu0 %v401
        %v403 = vpop.xlane.xlu0 %402
        %v404 = vsel %vm346, %v299, -inf
        %405 = vmax.xlane.f32.xlu0 %v404
        %v406 = vpop.xlane.xlu0 %405
        %v407 = vsel %vm346, %v300, -inf
        %408 = vmax.xlane.f32.xlu0 %v407
        %v409 = vpop.xlane.xlu0 %408
        %v410 = vsel %vm346, %v301, -inf
        %411 = vmax.xlane.f32.xlu0 %v410
        %v412 = vpop.xlane.xlu0 %411
        %v413 = vsel %vm346, %v302, -inf
        %414 = vmax.xlane.f32.xlu0 %v413
        %v415 = vpop.xlane.xlu0 %414
        %v416 = vsel %vm346, %v303, -inf
        %417 = vmax.xlane.f32.xlu0 %v416
        %v418 = vpop.xlane.xlu0 %417
        %v419 = vsel %vm346, %v304, -inf
        %420 = vmax.xlane.f32.xlu0 %v419
        %v421 = vpop.xlane.xlu0 %420
        %v422 = vsel %vm346, %v305, -inf
        %423 = vmax.xlane.f32.xlu0 %v422
        %v424 = vpop.xlane.xlu0 %423
        %v425 = vsel %vm346, %v306, -inf
        %426 = vmax.xlane.f32.xlu0 %v425
        %v427 = vpop.xlane.xlu0 %426
        %v428 = vsel %vm346, %v307, -inf
        %429 = vmax.xlane.f32.xlu0 %v428
        %v430 = vpop.xlane.xlu0 %429
        %v431 = vsel %vm346, %v308, -inf
        %432 = vmax.xlane.f32.xlu0 %v431
        %v433 = vpop.xlane.xlu0 %432
        %v434 = vsel %vm346, %v309, -inf
        %435 = vmax.xlane.f32.xlu0 %v434
        %v436 = vpop.xlane.xlu0 %435
        %v437 = vsel %vm346, %v310, -inf
        %438 = vmax.xlane.f32.xlu0 %v437
        %v439 = vpop.xlane.xlu0 %438
        %v440 = vsel %vm346, %v311, -inf
        %441 = vmax.xlane.f32.xlu0 %v440
        %v442 = vpop.xlane.xlu0 %441
        %v443 = vsub.f32 %v280, %v349
        %v444 = vsub.f32 %v281, %v352
        %v445 = vsub.f32 %v282, %v355
        %v446 = vsub.f32 %v283, %v358
        %v447 = vsub.f32 %v284, %v361
        %v448 = vsub.f32 %v285, %v364
        %v449 = vsub.f32 %v286, %v367
        %v450 = vsub.f32 %v287, %v370
        %v451 = vsub.f32 %v288, %v373
        %v452 = vsub.f32 %v289, %v376
        %v453 = vsub.f32 %v290, %v379
        %v454 = vsub.f32 %v291, %v382
        %v455 = vsub.f32 %v292, %v385
        %v456 = vsub.f32 %v293, %v388
        %v457 = vsub.f32 %v294, %v391
        %v458 = vsub.f32 %v295, %v394
        %v459 = vsub.f32 %v296, %v397
        %v460 = vsub.f32 %v297, %v400
        %v461 = vsub.f32 %v298, %v403
        %v462 = vsub.f32 %v299, %v406
        %v463 = vsub.f32 %v300, %v409
        %v464 = vsub.f32 %v301, %v412
        %v465 = vsub.f32 %v302, %v415
        %v466 = vsub.f32 %v303, %v418
        %v467 = vsub.f32 %v304, %v421
        %v468 = vsub.f32 %v305, %v424
        %v469 = vsub.f32 %v306, %v427
        %v470 = vsub.f32 %v307, %v430
        %v471 = vsub.f32 %v308, %v433
        %v472 = vsub.f32 %v309, %v436
        %v473 = vsub.f32 %v310, %v439
        %v474 = vsub.f32 %v311, %v442
        %v475 = vmul.f32 %v443, 1.442695
        %v476 = vpow.pop %v475
        %v477 = vmul.f32 %v444, 1.442695
        %v478 = vpow.pop %v477
        %v479 = vmul.f32 %v445, 1.442695
        %v480 = vpow.pop %v479
        %v481 = vmul.f32 %v446, 1.442695
        %v482 = vpow.pop %v481
        %v483 = vmul.f32 %v447, 1.442695
        %v484 = vpow.pop %v483
        %v485 = vmul.f32 %v448, 1.442695
        %v486 = vpow.pop %v485
        %v487 = vmul.f32 %v449, 1.442695
        %v488 = vpow.pop %v487
        %v489 = vmul.f32 %v450, 1.442695
        %v490 = vpow.pop %v489
        %v491 = vmul.f32 %v451, 1.442695
        %v492 = vpow.pop %v491
        %v493 = vmul.f32 %v452, 1.442695
        %v494 = vpow.pop %v493
        %v495 = vmul.f32 %v453, 1.442695
        %v496 = vpow.pop %v495
        %v497 = vmul.f32 %v454, 1.442695
        %v498 = vpow.pop %v497
        %v499 = vmul.f32 %v455, 1.442695
        %v500 = vpow.pop %v499
        %v501 = vmul.f32 %v456, 1.442695
        %v502 = vpow.pop %v501
        %v503 = vmul.f32 %v457, 1.442695
        %v504 = vpow.pop %v503
        %v505 = vmul.f32 %v458, 1.442695
        %v506 = vpow.pop %v505
        %v507 = vmul.f32 %v459, 1.442695
        %v508 = vpow.pop %v507
        %v509 = vmul.f32 %v460, 1.442695
        %v510 = vpow.pop %v509
        %v511 = vmul.f32 %v461, 1.442695
        %v512 = vpow.pop %v511
        %v513 = vmul.f32 %v462, 1.442695
        %v514 = vpow.pop %v513
        %v515 = vmul.f32 %v463, 1.442695
        %v516 = vpow.pop %v515
        %v517 = vmul.f32 %v464, 1.442695
        %v518 = vpow.pop %v517
        %v519 = vmul.f32 %v465, 1.442695
        %v520 = vpow.pop %v519
        %v521 = vmul.f32 %v466, 1.442695
        %v522 = vpow.pop %v521
        %v523 = vmul.f32 %v467, 1.442695
        %v524 = vpow.pop %v523
        %v525 = vmul.f32 %v468, 1.442695
        %v526 = vpow.pop %v525
        %v527 = vmul.f32 %v469, 1.442695
        %v528 = vpow.pop %v527
        %v529 = vmul.f32 %v470, 1.442695
        %v530 = vpow.pop %v529
        %v531 = vmul.f32 %v471, 1.442695
        %v532 = vpow.pop %v531
        %v533 = vmul.f32 %v472, 1.442695
        %v534 = vpow.pop %v533
        %v535 = vmul.f32 %v473, 1.442695
        %v536 = vpow.pop %v535
        %v537 = vmul.f32 %v474, 1.442695
        %v538 = vpow.pop %v537
        %v539 = vsel %vm346, %v476, 0.0
        %540 = vadd.xlane.f32.xlu0 %v539
        %v541 = vpop.xlane.xlu0 %540
        %v542 = vsel %vm346, %v478, 0.0
        %543 = vadd.xlane.f32.xlu0 %v542
        %v544 = vpop.xlane.xlu0 %543
        %v545 = vsel %vm346, %v480, 0.0
        %546 = vadd.xlane.f32.xlu0 %v545
        %v547 = vpop.xlane.xlu0 %546
        %v548 = vsel %vm346, %v482, 0.0
        %549 = vadd.xlane.f32.xlu0 %v548
        %v550 = vpop.xlane.xlu0 %549
        %v551 = vsel %vm346, %v484, 0.0
        %552 = vadd.xlane.f32.xlu0 %v551
        %v553 = vpop.xlane.xlu0 %552
        %v554 = vsel %vm346, %v486, 0.0
        %555 = vadd.xlane.f32.xlu0 %v554
        %v556 = vpop.xlane.xlu0 %555
        %v557 = vsel %vm346, %v488, 0.0
        %558 = vadd.xlane.f32.xlu0 %v557
        %v559 = vpop.xlane.xlu0 %558
        %v560 = vsel %vm346, %v490, 0.0
        %561 = vadd.xlane.f32.xlu0 %v560
        %v562 = vpop.xlane.xlu0 %561
        %v563 = vsel %vm346, %v492, 0.0
        %564 = vadd.xlane.f32.xlu0 %v563
        %v565 = vpop.xlane.xlu0 %564
        %v566 = vsel %vm346, %v494, 0.0
        %567 = vadd.xlane.f32.xlu0 %v566
        %v568 = vpop.xlane.xlu0 %567
        %v569 = vsel %vm346, %v496, 0.0
        %570 = vadd.xlane.f32.xlu0 %v569
        %v571 = vpop.xlane.xlu0 %570
        %v572 = vsel %vm346, %v498, 0.0
        %573 = vadd.xlane.f32.xlu0 %v572
        %v574 = vpop.xlane.xlu0 %573
        %v575 = vsel %vm346, %v500, 0.0
        %576 = vadd.xlane.f32.xlu0 %v575
        %v577 = vpop.xlane.xlu0 %576
        %v578 = vsel %vm346, %v502, 0.0
        %579 = vadd.xlane.f32.xlu0 %v578
        %v580 = vpop.xlane.xlu0 %579
        %v581 = vsel %vm346, %v504, 0.0
        %582 = vadd.xlane.f32.xlu0 %v581
        %v583 = vpop.xlane.xlu0 %582
        %v584 = vsel %vm346, %v506, 0.0
        %585 = vadd.xlane.f32.xlu0 %v584
        %v586 = vpop.xlane.xlu0 %585
        %v587 = vsel %vm346, %v508, 0.0
        %588 = vadd.xlane.f32.xlu0 %v587
        %v589 = vpop.xlane.xlu0 %588
        %v590 = vsel %vm346, %v510, 0.0
        %591 = vadd.xlane.f32.xlu0 %v590
        %v592 = vpop.xlane.xlu0 %591
        %v593 = vsel %vm346, %v512, 0.0
        %594 = vadd.xlane.f32.xlu0 %v593
        %v595 = vpop.xlane.xlu0 %594
        %v596 = vsel %vm346, %v514, 0.0
        %597 = vadd.xlane.f32.xlu0 %v596
        %v598 = vpop.xlane.xlu0 %597
        %v599 = vsel %vm346, %v516, 0.0
        %600 = vadd.xlane.f32.xlu0 %v599
        %v601 = vpop.xlane.xlu0 %600
        %v602 = vsel %vm346, %v518, 0.0
        %603 = vadd.xlane.f32.xlu0 %v602
        %v604 = vpop.xlane.xlu0 %603
        %v605 = vsel %vm346, %v520, 0.0
        %606 = vadd.xlane.f32.xlu0 %v605
        %v607 = vpop.xlane.xlu0 %606
        %v608 = vsel %vm346, %v522, 0.0
        %609 = vadd.xlane.f32.xlu0 %v608
        %v610 = vpop.xlane.xlu0 %609
        %v611 = vsel %vm346, %v524, 0.0
        %612 = vadd.xlane.f32.xlu0 %v611
        %v613 = vpop.xlane.xlu0 %612
        %v614 = vsel %vm346, %v526, 0.0
        %615 = vadd.xlane.f32.xlu0 %v614
        %v616 = vpop.xlane.xlu0 %615
        %v617 = vsel %vm346, %v528, 0.0
        %618 = vadd.xlane.f32.xlu0 %v617
        %v619 = vpop.xlane.xlu0 %618
        %v620 = vsel %vm346, %v530, 0.0
        %621 = vadd.xlane.f32.xlu0 %v620
        %v622 = vpop.xlane.xlu0 %621
        %v623 = vsel %vm346, %v532, 0.0
        %624 = vadd.xlane.f32.xlu0 %v623
        %v625 = vpop.xlane.xlu0 %624
        %v626 = vsel %vm346, %v534, 0.0
        %627 = vadd.xlane.f32.xlu0 %v626
        %v628 = vpop.xlane.xlu0 %627
        %v629 = vsel %vm346, %v536, 0.0
        %630 = vadd.xlane.f32.xlu0 %v629
        %v631 = vpop.xlane.xlu0 %630
        %v632 = vsel %vm346, %v538, 0.0
        %633 = vadd.xlane.f32.xlu0 %v632
        %v634 = vpop.xlane.xlu0 %633
        %v635 = vrcp.pop %v541
        %v636 = vrcp.pop %v544
        %v637 = vrcp.pop %v547
        %v638 = vrcp.pop %v550
        %v639 = vrcp.pop %v553
        %v640 = vrcp.pop %v556
        %v641 = vrcp.pop %v559
        %v642 = vrcp.pop %v562
        %v643 = vrcp.pop %v565
        %v644 = vrcp.pop %v568
        %v645 = vrcp.pop %v571
        %v646 = vrcp.pop %v574
        %v647 = vrcp.pop %v577
        %v648 = vrcp.pop %v580
        %v649 = vrcp.pop %v583
        %v650 = vrcp.pop %v586
        %v651 = vrcp.pop %v589
        %v652 = vrcp.pop %v592
        %v653 = vrcp.pop %v595
        %v654 = vrcp.pop %v598
        %v655 = vrcp.pop %v601
        %v656 = vrcp.pop %v604
        %v657 = vrcp.pop %v607
        %v658 = vrcp.pop %v610
        %v659 = vrcp.pop %v613
        %v660 = vrcp.pop %v616
        %v661 = vrcp.pop %v619
        %v662 = vrcp.pop %v622
        %v663 = vrcp.pop %v625
        %v664 = vrcp.pop %v628
        %v665 = vrcp.pop %v631
        %v666 = vrcp.pop %v634
        %v667 = vmul.f32 %v476, %v635
        %v668 = vmul.f32 %v478, %v636
        %v669 = vmul.f32 %v480, %v637
        %v670 = vmul.f32 %v482, %v638
        %v671 = vmul.f32 %v484, %v639
        %v672 = vmul.f32 %v486, %v640
        %v673 = vmul.f32 %v488, %v641
        %v674 = vmul.f32 %v490, %v642
        %v675 = vmul.f32 %v492, %v643
        %v676 = vmul.f32 %v494, %v644
        %v677 = vmul.f32 %v496, %v645
        %v678 = vmul.f32 %v498, %v646
        %v679 = vmul.f32 %v500, %v647
        %v680 = vmul.f32 %v502, %v648
        %v681 = vmul.f32 %v504, %v649
        %v682 = vmul.f32 %v506, %v650
        %v683 = vmul.f32 %v508, %v651
        %v684 = vmul.f32 %v510, %v652
        %v685 = vmul.f32 %v512, %v653
        %v686 = vmul.f32 %v514, %v654
        %v687 = vmul.f32 %v516, %v655
        %v688 = vmul.f32 %v518, %v656
        %v689 = vmul.f32 %v520, %v657
        %v690 = vmul.f32 %v522, %v658
        %v691 = vmul.f32 %v524, %v659
        %v692 = vmul.f32 %v526, %v660
        %v693 = vmul.f32 %v528, %v661
        %v694 = vmul.f32 %v530, %v662
        %v695 = vmul.f32 %v532, %v663
        %v696 = vmul.f32 %v534, %v664
        %v697 = vmul.f32 %v536, %v665
        %v698 = vmul.f32 %v538, %v666
        %v699 = vlog2.pop %v541
        %v700 = vmul.f32 %v699, 0.6931472
        %v701 = vlog2.pop %v544
        %v702 = vmul.f32 %v701, 0.6931472
        %v703 = vlog2.pop %v547
        %v704 = vmul.f32 %v703, 0.6931472
        %v705 = vlog2.pop %v550
        %v706 = vmul.f32 %v705, 0.6931472
        %v707 = vlog2.pop %v553
        %v708 = vmul.f32 %v707, 0.6931472
        %v709 = vlog2.pop %v556
        %v710 = vmul.f32 %v709, 0.6931472
        %v711 = vlog2.pop %v559
        %v712 = vmul.f32 %v711, 0.6931472
        %v713 = vlog2.pop %v562
        %v714 = vmul.f32 %v713, 0.6931472
        %v715 = vlog2.pop %v565
        %v716 = vmul.f32 %v715, 0.6931472
        %v717 = vlog2.pop %v568
        %v718 = vmul.f32 %v717, 0.6931472
        %v719 = vlog2.pop %v571
        %v720 = vmul.f32 %v719, 0.6931472
        %v721 = vlog2.pop %v574
        %v722 = vmul.f32 %v721, 0.6931472
        %v723 = vlog2.pop %v577
        %v724 = vmul.f32 %v723, 0.6931472
        %v725 = vlog2.pop %v580
        %v726 = vmul.f32 %v725, 0.6931472
        %v727 = vlog2.pop %v583
        %v728 = vmul.f32 %v727, 0.6931472
        %v729 = vlog2.pop %v586
        %v730 = vmul.f32 %v729, 0.6931472
        %v731 = vlog2.pop %v589
        %v732 = vmul.f32 %v731, 0.6931472
        %v733 = vlog2.pop %v592
        %v734 = vmul.f32 %v733, 0.6931472
        %v735 = vlog2.pop %v595
        %v736 = vmul.f32 %v735, 0.6931472
        %v737 = vlog2.pop %v598
        %v738 = vmul.f32 %v737, 0.6931472
        %v739 = vlog2.pop %v601
        %v740 = vmul.f32 %v739, 0.6931472
        %v741 = vlog2.pop %v604
        %v742 = vmul.f32 %v741, 0.6931472
        %v743 = vlog2.pop %v607
        %v744 = vmul.f32 %v743, 0.6931472
        %v745 = vlog2.pop %v610
        %v746 = vmul.f32 %v745, 0.6931472
        %v747 = vlog2.pop %v613
        %v748 = vmul.f32 %v747, 0.6931472
        %v749 = vlog2.pop %v616
        %v750 = vmul.f32 %v749, 0.6931472
        %v751 = vlog2.pop %v619
        %v752 = vmul.f32 %v751, 0.6931472
        %v753 = vlog2.pop %v622
        %v754 = vmul.f32 %v753, 0.6931472
        %v755 = vlog2.pop %v625
        %v756 = vmul.f32 %v755, 0.6931472
        %v757 = vlog2.pop %v628
        %v758 = vmul.f32 %v757, 0.6931472
        %v759 = vlog2.pop %v631
        %v760 = vmul.f32 %v759, 0.6931472
        %v761 = vlog2.pop %v634
        %v762 = vmul.f32 %v761, 0.6931472
        %v763 = vadd.f32 %v349, %v700
        %v764 = vadd.f32 %v352, %v702
        %v765 = vadd.f32 %v355, %v704
        %v766 = vadd.f32 %v358, %v706
        %v767 = vadd.f32 %v361, %v708
        %v768 = vadd.f32 %v364, %v710
        %v769 = vadd.f32 %v367, %v712
        %v770 = vadd.f32 %v370, %v714
        %v771 = vadd.f32 %v373, %v716
        %v772 = vadd.f32 %v376, %v718
        %v773 = vadd.f32 %v379, %v720
        %v774 = vadd.f32 %v382, %v722
        %v775 = vadd.f32 %v385, %v724
        %v776 = vadd.f32 %v388, %v726
        %v777 = vadd.f32 %v391, %v728
        %v778 = vadd.f32 %v394, %v730
        %v779 = vadd.f32 %v397, %v732
        %v780 = vadd.f32 %v400, %v734
        %v781 = vadd.f32 %v403, %v736
        %v782 = vadd.f32 %v406, %v738
        %v783 = vadd.f32 %v409, %v740
        %v784 = vadd.f32 %v412, %v742
        %v785 = vadd.f32 %v415, %v744
        %v786 = vadd.f32 %v418, %v746
        %v787 = vadd.f32 %v421, %v748
        %v788 = vadd.f32 %v424, %v750
        %v789 = vadd.f32 %v427, %v752
        %v790 = vadd.f32 %v430, %v754
        %v791 = vadd.f32 %v433, %v756
        %v792 = vadd.f32 %v436, %v758
        %v793 = vadd.f32 %v439, %v760
        %v794 = vadd.f32 %v442, %v762
        %v795 = vsub.f32 %v280, %v763
        %v796 = vsub.f32 %v281, %v764
        %v797 = vsub.f32 %v282, %v765
        %v798 = vsub.f32 %v283, %v766
        %v799 = vsub.f32 %v284, %v767
        %v800 = vsub.f32 %v285, %v768
        %v801 = vsub.f32 %v286, %v769
        %v802 = vsub.f32 %v287, %v770
        %v803 = vsub.f32 %v288, %v771
        %v804 = vsub.f32 %v289, %v772
        %v805 = vsub.f32 %v290, %v773
        %v806 = vsub.f32 %v291, %v774
        %v807 = vsub.f32 %v292, %v775
        %v808 = vsub.f32 %v293, %v776
        %v809 = vsub.f32 %v294, %v777
        %v810 = vsub.f32 %v295, %v778
        %v811 = vsub.f32 %v296, %v779
        %v812 = vsub.f32 %v297, %v780
        %v813 = vsub.f32 %v298, %v781
        %v814 = vsub.f32 %v299, %v782
        %v815 = vsub.f32 %v300, %v783
        %v816 = vsub.f32 %v301, %v784
        %v817 = vsub.f32 %v302, %v785
        %v818 = vsub.f32 %v303, %v786
        %v819 = vsub.f32 %v304, %v787
        %v820 = vsub.f32 %v305, %v788
        %v821 = vsub.f32 %v306, %v789
        %v822 = vsub.f32 %v307, %v790
        %v823 = vsub.f32 %v308, %v791
        %v824 = vsub.f32 %v309, %v792
        %v825 = vsub.f32 %v310, %v793
        %v826 = vsub.f32 %v311, %v794
        %v827 = vmul.f32 %v312, %v795
        %v828 = vmul.f32 %v313, %v796
        %v829 = vmul.f32 %v314, %v797
        %v830 = vmul.f32 %v315, %v798
        %v831 = vmul.f32 %v316, %v799
        %v832 = vmul.f32 %v317, %v800
        %v833 = vmul.f32 %v318, %v801
        %v834 = vmul.f32 %v319, %v802
        %v835 = vmul.f32 %v320, %v803
        %v836 = vmul.f32 %v321, %v804
        %v837 = vmul.f32 %v322, %v805
        %v838 = vmul.f32 %v323, %v806
        %v839 = vmul.f32 %v324, %v807
        %v840 = vmul.f32 %v325, %v808
        %v841 = vmul.f32 %v326, %v809
        %v842 = vmul.f32 %v327, %v810
        %v843 = vmul.f32 %v328, %v811
        %v844 = vmul.f32 %v329, %v812
        %v845 = vmul.f32 %v330, %v813
        %v846 = vmul.f32 %v331, %v814
        %v847 = vmul.f32 %v332, %v815
        %v848 = vmul.f32 %v333, %v816
        %v849 = vmul.f32 %v334, %v817
        %v850 = vmul.f32 %v335, %v818
        %v851 = vmul.f32 %v336, %v819
        %v852 = vmul.f32 %v337, %v820
        %v853 = vmul.f32 %v338, %v821
        %v854 = vmul.f32 %v339, %v822
        %v855 = vmul.f32 %v340, %v823
        %v856 = vmul.f32 %v341, %v824
        %v857 = vmul.f32 %v342, %v825
        %v858 = vmul.f32 %v343, %v826
        %v859 = vsel %vm346, %v827, 0.0
        %860 = vadd.xlane.f32.xlu0 %v859
        %v861 = vpop.xlane.xlu0 %860
        %v862 = vsel %vm346, %v828, 0.0
        %863 = vadd.xlane.f32.xlu0 %v862
        %v864 = vpop.xlane.xlu0 %863
        %v865 = vsel %vm346, %v829, 0.0
        %866 = vadd.xlane.f32.xlu0 %v865
        %v867 = vpop.xlane.xlu0 %866
        %v868 = vsel %vm346, %v830, 0.0
        %869 = vadd.xlane.f32.xlu0 %v868
        %v870 = vpop.xlane.xlu0 %869
        %v871 = vsel %vm346, %v831, 0.0
        %872 = vadd.xlane.f32.xlu0 %v871
        %v873 = vpop.xlane.xlu0 %872
        %v874 = vsel %vm346, %v832, 0.0
        %875 = vadd.xlane.f32.xlu0 %v874
        %v876 = vpop.xlane.xlu0 %875
        %v877 = vsel %vm346, %v833, 0.0
        %878 = vadd.xlane.f32.xlu0 %v877
        %v879 = vpop.xlane.xlu0 %878
        %v880 = vsel %vm346, %v834, 0.0
        %881 = vadd.xlane.f32.xlu0 %v880
        %v882 = vpop.xlane.xlu0 %881
        %v883 = vsel %vm346, %v835, 0.0
        %884 = vadd.xlane.f32.xlu0 %v883
        %v885 = vpop.xlane.xlu0 %884
        %v886 = vsel %vm346, %v836, 0.0
        %887 = vadd.xlane.f32.xlu0 %v886
        %v888 = vpop.xlane.xlu0 %887
        %v889 = vsel %vm346, %v837, 0.0
        %890 = vadd.xlane.f32.xlu0 %v889
        %v891 = vpop.xlane.xlu0 %890
        %v892 = vsel %vm346, %v838, 0.0
        %893 = vadd.xlane.f32.xlu0 %v892
        %v894 = vpop.xlane.xlu0 %893
        %v895 = vsel %vm346, %v839, 0.0
        %896 = vadd.xlane.f32.xlu0 %v895
        %v897 = vpop.xlane.xlu0 %896
        %v898 = vsel %vm346, %v840, 0.0
        %899 = vadd.xlane.f32.xlu0 %v898
        %v900 = vpop.xlane.xlu0 %899
        %v901 = vsel %vm346, %v841, 0.0
        %902 = vadd.xlane.f32.xlu0 %v901
        %v903 = vpop.xlane.xlu0 %902
        %v904 = vsel %vm346, %v842, 0.0
        %905 = vadd.xlane.f32.xlu0 %v904
        %v906 = vpop.xlane.xlu0 %905
        %v907 = vsel %vm346, %v843, 0.0
        %908 = vadd.xlane.f32.xlu0 %v907
        %v909 = vpop.xlane.xlu0 %908
        %v910 = vsel %vm346, %v844, 0.0
        %911 = vadd.xlane.f32.xlu0 %v910
        %v912 = vpop.xlane.xlu0 %911
        %v913 = vsel %vm346, %v845, 0.0
        %914 = vadd.xlane.f32.xlu0 %v913
        %v915 = vpop.xlane.xlu0 %914
        %v916 = vsel %vm346, %v846, 0.0
        %917 = vadd.xlane.f32.xlu0 %v916
        %v918 = vpop.xlane.xlu0 %917
        %v919 = vsel %vm346, %v847, 0.0
        %920 = vadd.xlane.f32.xlu0 %v919
        %v921 = vpop.xlane.xlu0 %920
        %v922 = vsel %vm346, %v848, 0.0
        %923 = vadd.xlane.f32.xlu0 %v922
        %v924 = vpop.xlane.xlu0 %923
        %v925 = vsel %vm346, %v849, 0.0
        %926 = vadd.xlane.f32.xlu0 %v925
        %v927 = vpop.xlane.xlu0 %926
        %v928 = vsel %vm346, %v850, 0.0
        %929 = vadd.xlane.f32.xlu0 %v928
        %v930 = vpop.xlane.xlu0 %929
        %v931 = vsel %vm346, %v851, 0.0
        %932 = vadd.xlane.f32.xlu0 %v931
        %v933 = vpop.xlane.xlu0 %932
        %v934 = vsel %vm346, %v852, 0.0
        %935 = vadd.xlane.f32.xlu0 %v934
        %v936 = vpop.xlane.xlu0 %935
        %v937 = vsel %vm346, %v853, 0.0
        %938 = vadd.xlane.f32.xlu0 %v937
        %v939 = vpop.xlane.xlu0 %938
        %v940 = vsel %vm346, %v854, 0.0
        %941 = vadd.xlane.f32.xlu0 %v940
        %v942 = vpop.xlane.xlu0 %941
        %v943 = vsel %vm346, %v855, 0.0
        %944 = vadd.xlane.f32.xlu0 %v943
        %v945 = vpop.xlane.xlu0 %944
        %v946 = vsel %vm346, %v856, 0.0
        %947 = vadd.xlane.f32.xlu0 %v946
        %v948 = vpop.xlane.xlu0 %947
        %v949 = vsel %vm346, %v857, 0.0
        %950 = vadd.xlane.f32.xlu0 %v949
        %v951 = vpop.xlane.xlu0 %950
        %v952 = vsel %vm346, %v858, 0.0
        %953 = vadd.xlane.f32.xlu0 %v952
        %v954 = vpop.xlane.xlu0 %953
        %v955 = vld [vmem:[%s3] sm:$0xff]
        %v956 = vld [vmem:[%s3 + $0x8] sm:$0xff]
        %v957 = vld [vmem:[%s3 + $0x10] sm:$0xff]
        %v958 = vld [vmem:[%s3 + $0x18] sm:$0xff]
        %v959 = vld [vmem:[%s3 + $0x20] sm:$0xff]
        %v960 = vld [vmem:[%s3 + $0x28] sm:$0xff]
        %v961 = vld [vmem:[%s3 + $0x30] sm:$0xff]
        %v962 = vld [vmem:[%s3 + $0x38] sm:$0xff]
        %v963 = vld [vmem:[%s3 + $0x40] sm:$0xff]
        %v964 = vld [vmem:[%s3 + $0x48] sm:$0xff]
        %v965 = vld [vmem:[%s3 + $0x50] sm:$0xff]
        %v966 = vld [vmem:[%s3 + $0x58] sm:$0x3]
        %v968 = vsel %vm346, %v667, 0
        %v971 = vsel %vm346, %v668, 0
        %v974 = vsel %vm346, %v669, 0
        %v977 = vsel %vm346, %v670, 0
        %v980 = vsel %vm346, %v671, 0
        %v983 = vsel %vm346, %v672, 0
        %v986 = vsel %vm346, %v673, 0
        %v989 = vsel %vm346, %v674, 0
        %v992 = vsel %vm346, %v675, 0
        %v995 = vsel %vm346, %v676, 0
        %v998 = vsel %vm346, %v677, 0
        %v1001 = vsel %vm346, %v678, 0
        %v1004 = vsel %vm346, %v679, 0
        %v1007 = vsel %vm346, %v680, 0
        %v1010 = vsel %vm346, %v681, 0
        %v1013 = vsel %vm346, %v682, 0
        %v1016 = vsel %vm346, %v683, 0
        %v1019 = vsel %vm346, %v684, 0
        %v1022 = vsel %vm346, %v685, 0
        %v1025 = vsel %vm346, %v686, 0
        %v1028 = vsel %vm346, %v687, 0
        %v1031 = vsel %vm346, %v688, 0
        %v1034 = vsel %vm346, %v689, 0
        %v1037 = vsel %vm346, %v690, 0
        %v1040 = vsel %vm346, %v691, 0
        %v1043 = vsel %vm346, %v692, 0
        %v1046 = vsel %vm346, %v693, 0
        %v1049 = vsel %vm346, %v694, 0
        %v1052 = vsel %vm346, %v695, 0
        %v1055 = vsel %vm346, %v696, 0
        %v1058 = vsel %vm346, %v697, 0
        %v1061 = vsel %vm346, %v698, 0
        %vm1063 = vcmask 1041408
        %v1065 = vsel %vm1063, %v966, 0
        %1067 = vmatpush.msra.mxu0 0.0
        %1068 = vmatpush.msra.mxu0 0.0
        %1069 = vmatpush.msra.mxu0 0.0
        %1070 = vmatpush.msra.mxu0 0.0
        %1071 = vmatpush.msra.mxu0 %v1065
        %1072 = vmatpush.msra.mxu0 %v965
        %1073 = vmatpush.msra.mxu0 %v964
        %1074 = vmatpush.msra.mxu0 %v963
        %1075 = vmatpush.msra.mxu0 %v962
        %1076 = vmatpush.msra.mxu0 %v961
        %1077 = vmatpush.msra.mxu0 %v960
        %1078 = vmatpush.msra.mxu0 %v959
        %1079 = vmatpush.msra.mxu0 %v958
        %1080 = vmatpush.msra.mxu0 %v957
        %1081 = vmatpush.msra.mxu0 %v956
        %1082 = vmatpush.msra.mxu0 %v955
        %1083 = vmatmul.f32.gmra.mxu0 %v968
        %v1084 = vpop.f32.mrf.mxu0
        %v1085 = vadd.f32 0.0, %v1084
        %1086 = vmatmul.f32.gmra.mxu0 %v971
        %v1087 = vpop.f32.mrf.mxu0
        %v1088 = vadd.f32 0.0, %v1087
        %1089 = vmatmul.f32.gmra.mxu0 %v974
        %v1090 = vpop.f32.mrf.mxu0
        %v1091 = vadd.f32 0.0, %v1090
        %1092 = vmatmul.f32.gmra.mxu0 %v977
        %v1093 = vpop.f32.mrf.mxu0
        %v1094 = vadd.f32 0.0, %v1093
        %1095 = vmatmul.f32.gmra.mxu0 %v980
        %v1096 = vpop.f32.mrf.mxu0
        %v1097 = vadd.f32 0.0, %v1096
        %1098 = vmatmul.f32.gmra.mxu0 %v983
        %v1099 = vpop.f32.mrf.mxu0
        %v1100 = vadd.f32 0.0, %v1099
        %1101 = vmatmul.f32.gmra.mxu0 %v986
        %v1102 = vpop.f32.mrf.mxu0
        %v1103 = vadd.f32 0.0, %v1102
        %1104 = vmatmul.f32.gmra.mxu0 %v989
        %v1105 = vpop.f32.mrf.mxu0
        %v1106 = vadd.f32 0.0, %v1105
        %1107 = vmatmul.f32.gmra.mxu0 %v992
        %v1108 = vpop.f32.mrf.mxu0
        %v1109 = vadd.f32 0.0, %v1108
        %1110 = vmatmul.f32.gmra.mxu0 %v995
        %v1111 = vpop.f32.mrf.mxu0
        %v1112 = vadd.f32 0.0, %v1111
        %1113 = vmatmul.f32.gmra.mxu0 %v998
        %v1114 = vpop.f32.mrf.mxu0
        %v1115 = vadd.f32 0.0, %v1114
        %1116 = vmatmul.f32.gmra.mxu0 %v1001
        %v1117 = vpop.f32.mrf.mxu0
        %v1118 = vadd.f32 0.0, %v1117
        %1119 = vmatmul.f32.gmra.mxu0 %v1004
        %v1120 = vpop.f32.mrf.mxu0
        %v1121 = vadd.f32 0.0, %v1120
        %1122 = vmatmul.f32.gmra.mxu0 %v1007
        %v1123 = vpop.f32.mrf.mxu0
        %v1124 = vadd.f32 0.0, %v1123
        %1125 = vmatmul.f32.gmra.mxu0 %v1010
        %v1126 = vpop.f32.mrf.mxu0
        %v1127 = vadd.f32 0.0, %v1126
        %1128 = vmatmul.f32.gmra.mxu0 %v1013
        %v1129 = vpop.f32.mrf.mxu0
        %v1130 = vadd.f32 0.0, %v1129
        %1131 = vmatmul.f32.gmra.mxu0 %v1016
        %v1132 = vpop.f32.mrf.mxu0
        %v1133 = vadd.f32 0.0, %v1132
        %1134 = vmatmul.f32.gmra.mxu0 %v1019
        %v1135 = vpop.f32.mrf.mxu0
        %v1136 = vadd.f32 0.0, %v1135
        %1137 = vmatmul.f32.gmra.mxu0 %v1022
        %v1138 = vpop.f32.mrf.mxu0
        %v1139 = vadd.f32 0.0, %v1138
        %1140 = vmatmul.f32.gmra.mxu0 %v1025
        %v1141 = vpop.f32.mrf.mxu0
        %v1142 = vadd.f32 0.0, %v1141
        %1143 = vmatmul.f32.gmra.mxu0 %v1028
        %v1144 = vpop.f32.mrf.mxu0
        %v1145 = vadd.f32 0.0, %v1144
        %1146 = vmatmul.f32.gmra.mxu0 %v1031
        %v1147 = vpop.f32.mrf.mxu0
        %v1148 = vadd.f32 0.0, %v1147
        %1149 = vmatmul.f32.gmra.mxu0 %v1034
        %v1150 = vpop.f32.mrf.mxu0
        %v1151 = vadd.f32 0.0, %v1150
        %1152 = vmatmul.f32.gmra.mxu0 %v1037
        %v1153 = vpop.f32.mrf.mxu0
        %v1154 = vadd.f32 0.0, %v1153
        %1155 = vmatmul.f32.gmra.mxu0 %v1040
        %v1156 = vpop.f32.mrf.mxu0
        %v1157 = vadd.f32 0.0, %v1156
        %1158 = vmatmul.f32.gmra.mxu0 %v1043
        %v1159 = vpop.f32.mrf.mxu0
        %v1160 = vadd.f32 0.0, %v1159
        %1161 = vmatmul.f32.gmra.mxu0 %v1046
        %v1162 = vpop.f32.mrf.mxu0
        %v1163 = vadd.f32 0.0, %v1162
        %1164 = vmatmul.f32.gmra.mxu0 %v1049
        %v1165 = vpop.f32.mrf.mxu0
        %v1166 = vadd.f32 0.0, %v1165
        %1167 = vmatmul.f32.gmra.mxu0 %v1052
        %v1168 = vpop.f32.mrf.mxu0
        %v1169 = vadd.f32 0.0, %v1168
        %1170 = vmatmul.f32.gmra.mxu0 %v1055
        %v1171 = vpop.f32.mrf.mxu0
        %v1172 = vadd.f32 0.0, %v1171
        %1173 = vmatmul.f32.gmra.mxu0 %v1058
        %v1174 = vpop.f32.mrf.mxu0
        %v1175 = vadd.f32 0.0, %v1174
        %1176 = vmatmul.f32.gmra.mxu0 %v1061
        %v1177 = vpop.f32.mrf.mxu0
        %v1178 = vadd.f32 0.0, %v1177
        %1179 = vdwg.mxu0
        %v1180 = vlaneseq
        %v1181 = vand.u32 %v1180, 127
        %vm1182 = vcmp.eq.s32.totalorder %v1181, 0
        %v1183 = vsel %vm1182, 1, 0
        %v1184 = vcvt.s32.f32 %v1183
        %v1185 = vmul.f32 %v1085, %v1184
        %v1186 = vmul.f32 %v1088, %v1184
        %v1187 = vmul.f32 %v1091, %v1184
        %v1188 = vmul.f32 %v1094, %v1184
        %v1189 = vmul.f32 %v1097, %v1184
        %v1190 = vmul.f32 %v1100, %v1184
        %v1191 = vmul.f32 %v1103, %v1184
        %v1192 = vmul.f32 %v1106, %v1184
        %v1193 = vmul.f32 %v1109, %v1184
        %v1194 = vmul.f32 %v1112, %v1184
        %v1195 = vmul.f32 %v1115, %v1184
        %v1196 = vmul.f32 %v1118, %v1184
        %v1197 = vmul.f32 %v1121, %v1184
        %v1198 = vmul.f32 %v1124, %v1184
        %v1199 = vmul.f32 %v1127, %v1184
        %v1200 = vmul.f32 %v1130, %v1184
        %v1201 = vmul.f32 %v1133, %v1184
        %v1202 = vmul.f32 %v1136, %v1184
        %v1203 = vmul.f32 %v1139, %v1184
        %v1204 = vmul.f32 %v1142, %v1184
        %v1205 = vmul.f32 %v1145, %v1184
        %v1206 = vmul.f32 %v1148, %v1184
        %v1207 = vmul.f32 %v1151, %v1184
        %v1208 = vmul.f32 %v1154, %v1184
        %v1209 = vmul.f32 %v1157, %v1184
        %v1210 = vmul.f32 %v1160, %v1184
        %v1211 = vmul.f32 %v1163, %v1184
        %v1212 = vmul.f32 %v1166, %v1184
        %v1213 = vmul.f32 %v1169, %v1184
        %v1214 = vmul.f32 %v1172, %v1184
        %v1215 = vmul.f32 %v1175, %v1184
        %v1216 = vmul.f32 %v1178, %v1184
        %vm1217 = vcmask 15360
        %v1218 = vsel %vm1217, %v1185, 0.0
        %1219 = vadd.xlane.f32.xlu0 %v1218
        %v1220 = vpop.xlane.xlu0 %1219
        %v1221 = vsel %vm1217, %v1186, 0.0
        %1222 = vadd.xlane.f32.xlu0 %v1221
        %v1223 = vpop.xlane.xlu0 %1222
        %v1224 = vsel %vm1217, %v1187, 0.0
        %1225 = vadd.xlane.f32.xlu0 %v1224
        %v1226 = vpop.xlane.xlu0 %1225
        %v1227 = vsel %vm1217, %v1188, 0.0
        %1228 = vadd.xlane.f32.xlu0 %v1227
        %v1229 = vpop.xlane.xlu0 %1228
        %v1230 = vsel %vm1217, %v1189, 0.0
        %1231 = vadd.xlane.f32.xlu0 %v1230
        %v1232 = vpop.xlane.xlu0 %1231
        %v1233 = vsel %vm1217, %v1190, 0.0
        %1234 = vadd.xlane.f32.xlu0 %v1233
        %v1235 = vpop.xlane.xlu0 %1234
        %v1236 = vsel %vm1217, %v1191, 0.0
        %1237 = vadd.xlane.f32.xlu0 %v1236
        %v1238 = vpop.xlane.xlu0 %1237
        %v1239 = vsel %vm1217, %v1192, 0.0
        %1240 = vadd.xlane.f32.xlu0 %v1239
        %v1241 = vpop.xlane.xlu0 %1240
        %v1242 = vsel %vm1217, %v1193, 0.0
        %1243 = vadd.xlane.f32.xlu0 %v1242
        %v1244 = vpop.xlane.xlu0 %1243
        %v1245 = vsel %vm1217, %v1194, 0.0
        %1246 = vadd.xlane.f32.xlu0 %v1245
        %v1247 = vpop.xlane.xlu0 %1246
        %v1248 = vsel %vm1217, %v1195, 0.0
        %1249 = vadd.xlane.f32.xlu0 %v1248
        %v1250 = vpop.xlane.xlu0 %1249
        %v1251 = vsel %vm1217, %v1196, 0.0
        %1252 = vadd.xlane.f32.xlu0 %v1251
        %v1253 = vpop.xlane.xlu0 %1252
        %v1254 = vsel %vm1217, %v1197, 0.0
        %1255 = vadd.xlane.f32.xlu0 %v1254
        %v1256 = vpop.xlane.xlu0 %1255
        %v1257 = vsel %vm1217, %v1198, 0.0
        %1258 = vadd.xlane.f32.xlu0 %v1257
        %v1259 = vpop.xlane.xlu0 %1258
        %v1260 = vsel %vm1217, %v1199, 0.0
        %1261 = vadd.xlane.f32.xlu0 %v1260
        %v1262 = vpop.xlane.xlu0 %1261
        %v1263 = vsel %vm1217, %v1200, 0.0
        %1264 = vadd.xlane.f32.xlu0 %v1263
        %v1265 = vpop.xlane.xlu0 %1264
        %v1266 = vsel %vm1217, %v1201, 0.0
        %1267 = vadd.xlane.f32.xlu0 %v1266
        %v1268 = vpop.xlane.xlu0 %1267
        %v1269 = vsel %vm1217, %v1202, 0.0
        %1270 = vadd.xlane.f32.xlu0 %v1269
        %v1271 = vpop.xlane.xlu0 %1270
        %v1272 = vsel %vm1217, %v1203, 0.0
        %1273 = vadd.xlane.f32.xlu0 %v1272
        %v1274 = vpop.xlane.xlu0 %1273
        %v1275 = vsel %vm1217, %v1204, 0.0
        %1276 = vadd.xlane.f32.xlu0 %v1275
        %v1277 = vpop.xlane.xlu0 %1276
        %v1278 = vsel %vm1217, %v1205, 0.0
        %1279 = vadd.xlane.f32.xlu0 %v1278
        %v1280 = vpop.xlane.xlu0 %1279
        %v1281 = vsel %vm1217, %v1206, 0.0
        %1282 = vadd.xlane.f32.xlu0 %v1281
        %v1283 = vpop.xlane.xlu0 %1282
        %v1284 = vsel %vm1217, %v1207, 0.0
        %1285 = vadd.xlane.f32.xlu0 %v1284
        %v1286 = vpop.xlane.xlu0 %1285
        %v1287 = vsel %vm1217, %v1208, 0.0
        %1288 = vadd.xlane.f32.xlu0 %v1287
        %v1289 = vpop.xlane.xlu0 %1288
        %v1290 = vsel %vm1217, %v1209, 0.0
        %1291 = vadd.xlane.f32.xlu0 %v1290
        %v1292 = vpop.xlane.xlu0 %1291
        %v1293 = vsel %vm1217, %v1210, 0.0
        %1294 = vadd.xlane.f32.xlu0 %v1293
        %v1295 = vpop.xlane.xlu0 %1294
        %v1296 = vsel %vm1217, %v1211, 0.0
        %1297 = vadd.xlane.f32.xlu0 %v1296
        %v1298 = vpop.xlane.xlu0 %1297
        %v1299 = vsel %vm1217, %v1212, 0.0
        %1300 = vadd.xlane.f32.xlu0 %v1299
        %v1301 = vpop.xlane.xlu0 %1300
        %v1302 = vsel %vm1217, %v1213, 0.0
        %1303 = vadd.xlane.f32.xlu0 %v1302
        %v1304 = vpop.xlane.xlu0 %1303
        %v1305 = vsel %vm1217, %v1214, 0.0
        %1306 = vadd.xlane.f32.xlu0 %v1305
        %v1307 = vpop.xlane.xlu0 %1306
        %v1308 = vsel %vm1217, %v1215, 0.0
        %1309 = vadd.xlane.f32.xlu0 %v1308
        %v1310 = vpop.xlane.xlu0 %1309
        %v1311 = vsel %vm1217, %v1216, 0.0
        %1312 = vadd.xlane.f32.xlu0 %v1311
        %v1313 = vpop.xlane.xlu0 %1312
        %v1314 = vsub.f32 1.0, %v1184
        %v1315 = vmul.f32 %v1085, %v1314
        %v1316 = vmul.f32 %v1088, %v1314
        %v1317 = vmul.f32 %v1091, %v1314
        %v1318 = vmul.f32 %v1094, %v1314
        %v1319 = vmul.f32 %v1097, %v1314
        %v1320 = vmul.f32 %v1100, %v1314
        %v1321 = vmul.f32 %v1103, %v1314
        %v1322 = vmul.f32 %v1106, %v1314
        %v1323 = vmul.f32 %v1109, %v1314
        %v1324 = vmul.f32 %v1112, %v1314
        %v1325 = vmul.f32 %v1115, %v1314
        %v1326 = vmul.f32 %v1118, %v1314
        %v1327 = vmul.f32 %v1121, %v1314
        %v1328 = vmul.f32 %v1124, %v1314
        %v1329 = vmul.f32 %v1127, %v1314
        %v1330 = vmul.f32 %v1130, %v1314
        %v1331 = vmul.f32 %v1133, %v1314
        %v1332 = vmul.f32 %v1136, %v1314
        %v1333 = vmul.f32 %v1139, %v1314
        %v1334 = vmul.f32 %v1142, %v1314
        %v1335 = vmul.f32 %v1145, %v1314
        %v1336 = vmul.f32 %v1148, %v1314
        %v1337 = vmul.f32 %v1151, %v1314
        %v1338 = vmul.f32 %v1154, %v1314
        %v1339 = vmul.f32 %v1157, %v1314
        %v1340 = vmul.f32 %v1160, %v1314
        %v1341 = vmul.f32 %v1163, %v1314
        %v1342 = vmul.f32 %v1166, %v1314
        %v1343 = vmul.f32 %v1169, %v1314
        %v1344 = vmul.f32 %v1172, %v1314
        %v1345 = vmul.f32 %v1175, %v1314
        %v1346 = vmul.f32 %v1178, %v1314
        %v1347 = vsel %vm1217, %v1315, 0.0
        %1348 = vadd.xlane.f32.xlu0 %v1347
        %v1349 = vpop.xlane.xlu0 %1348
        %v1350 = vsel %vm1217, %v1316, 0.0
        %1351 = vadd.xlane.f32.xlu0 %v1350
        %v1352 = vpop.xlane.xlu0 %1351
        %v1353 = vsel %vm1217, %v1317, 0.0
        %1354 = vadd.xlane.f32.xlu0 %v1353
        %v1355 = vpop.xlane.xlu0 %1354
        %v1356 = vsel %vm1217, %v1318, 0.0
        %1357 = vadd.xlane.f32.xlu0 %v1356
        %v1358 = vpop.xlane.xlu0 %1357
        %v1359 = vsel %vm1217, %v1319, 0.0
        %1360 = vadd.xlane.f32.xlu0 %v1359
        %v1361 = vpop.xlane.xlu0 %1360
        %v1362 = vsel %vm1217, %v1320, 0.0
        %1363 = vadd.xlane.f32.xlu0 %v1362
        %v1364 = vpop.xlane.xlu0 %1363
        %v1365 = vsel %vm1217, %v1321, 0.0
        %1366 = vadd.xlane.f32.xlu0 %v1365
        %v1367 = vpop.xlane.xlu0 %1366
        %v1368 = vsel %vm1217, %v1322, 0.0
        %1369 = vadd.xlane.f32.xlu0 %v1368
        %v1370 = vpop.xlane.xlu0 %1369
        %v1371 = vsel %vm1217, %v1323, 0.0
        %1372 = vadd.xlane.f32.xlu0 %v1371
        %v1373 = vpop.xlane.xlu0 %1372
        %v1374 = vsel %vm1217, %v1324, 0.0
        %1375 = vadd.xlane.f32.xlu0 %v1374
        %v1376 = vpop.xlane.xlu0 %1375
        %v1377 = vsel %vm1217, %v1325, 0.0
        %1378 = vadd.xlane.f32.xlu0 %v1377
        %v1379 = vpop.xlane.xlu0 %1378
        %v1380 = vsel %vm1217, %v1326, 0.0
        %1381 = vadd.xlane.f32.xlu0 %v1380
        %v1382 = vpop.xlane.xlu0 %1381
        %v1383 = vsel %vm1217, %v1327, 0.0
        %1384 = vadd.xlane.f32.xlu0 %v1383
        %v1385 = vpop.xlane.xlu0 %1384
        %v1386 = vsel %vm1217, %v1328, 0.0
        %1387 = vadd.xlane.f32.xlu0 %v1386
        %v1388 = vpop.xlane.xlu0 %1387
        %v1389 = vsel %vm1217, %v1329, 0.0
        %1390 = vadd.xlane.f32.xlu0 %v1389
        %v1391 = vpop.xlane.xlu0 %1390
        %v1392 = vsel %vm1217, %v1330, 0.0
        %1393 = vadd.xlane.f32.xlu0 %v1392
        %v1394 = vpop.xlane.xlu0 %1393
        %v1395 = vsel %vm1217, %v1331, 0.0
        %1396 = vadd.xlane.f32.xlu0 %v1395
        %v1397 = vpop.xlane.xlu0 %1396
        %v1398 = vsel %vm1217, %v1332, 0.0
        %1399 = vadd.xlane.f32.xlu0 %v1398
        %v1400 = vpop.xlane.xlu0 %1399
        %v1401 = vsel %vm1217, %v1333, 0.0
        %1402 = vadd.xlane.f32.xlu0 %v1401
        %v1403 = vpop.xlane.xlu0 %1402
        %v1404 = vsel %vm1217, %v1334, 0.0
        %1405 = vadd.xlane.f32.xlu0 %v1404
        %v1406 = vpop.xlane.xlu0 %1405
        %v1407 = vsel %vm1217, %v1335, 0.0
        %1408 = vadd.xlane.f32.xlu0 %v1407
        %v1409 = vpop.xlane.xlu0 %1408
        %v1410 = vsel %vm1217, %v1336, 0.0
        %1411 = vadd.xlane.f32.xlu0 %v1410
        %v1412 = vpop.xlane.xlu0 %1411
        %v1413 = vsel %vm1217, %v1337, 0.0
        %1414 = vadd.xlane.f32.xlu0 %v1413
        %v1415 = vpop.xlane.xlu0 %1414
        %v1416 = vsel %vm1217, %v1338, 0.0
        %1417 = vadd.xlane.f32.xlu0 %v1416
        %v1418 = vpop.xlane.xlu0 %1417
        %v1419 = vsel %vm1217, %v1339, 0.0
        %1420 = vadd.xlane.f32.xlu0 %v1419
        %v1421 = vpop.xlane.xlu0 %1420
        %v1422 = vsel %vm1217, %v1340, 0.0
        %1423 = vadd.xlane.f32.xlu0 %v1422
        %v1424 = vpop.xlane.xlu0 %1423
        %v1425 = vsel %vm1217, %v1341, 0.0
        %1426 = vadd.xlane.f32.xlu0 %v1425
        %v1427 = vpop.xlane.xlu0 %1426
        %v1428 = vsel %vm1217, %v1342, 0.0
        %1429 = vadd.xlane.f32.xlu0 %v1428
        %v1430 = vpop.xlane.xlu0 %1429
        %v1431 = vsel %vm1217, %v1343, 0.0
        %1432 = vadd.xlane.f32.xlu0 %v1431
        %v1433 = vpop.xlane.xlu0 %1432
        %v1434 = vsel %vm1217, %v1344, 0.0
        %1435 = vadd.xlane.f32.xlu0 %v1434
        %v1436 = vpop.xlane.xlu0 %1435
        %v1437 = vsel %vm1217, %v1345, 0.0
        %1438 = vadd.xlane.f32.xlu0 %v1437
        %v1439 = vpop.xlane.xlu0 %1438
        %v1440 = vsel %vm1217, %v1346, 0.0
        %1441 = vadd.xlane.f32.xlu0 %v1440
        %v1442 = vpop.xlane.xlu0 %1441
        %v1443 = vmul.f32 %v1220, %v1220
        %v1444 = vmul.f32 %v1223, %v1223
        %v1445 = vmul.f32 %v1226, %v1226
        %v1446 = vmul.f32 %v1229, %v1229
        %v1447 = vmul.f32 %v1232, %v1232
        %v1448 = vmul.f32 %v1235, %v1235
        %v1449 = vmul.f32 %v1238, %v1238
        %v1450 = vmul.f32 %v1241, %v1241
        %v1451 = vmul.f32 %v1244, %v1244
        %v1452 = vmul.f32 %v1247, %v1247
        %v1453 = vmul.f32 %v1250, %v1250
        %v1454 = vmul.f32 %v1253, %v1253
        %v1455 = vmul.f32 %v1256, %v1256
        %v1456 = vmul.f32 %v1259, %v1259
        %v1457 = vmul.f32 %v1262, %v1262
        %v1458 = vmul.f32 %v1265, %v1265
        %v1459 = vmul.f32 %v1268, %v1268
        %v1460 = vmul.f32 %v1271, %v1271
        %v1461 = vmul.f32 %v1274, %v1274
        %v1462 = vmul.f32 %v1277, %v1277
        %v1463 = vmul.f32 %v1280, %v1280
        %v1464 = vmul.f32 %v1283, %v1283
        %v1465 = vmul.f32 %v1286, %v1286
        %v1466 = vmul.f32 %v1289, %v1289
        %v1467 = vmul.f32 %v1292, %v1292
        %v1468 = vmul.f32 %v1295, %v1295
        %v1469 = vmul.f32 %v1298, %v1298
        %v1470 = vmul.f32 %v1301, %v1301
        %v1471 = vmul.f32 %v1304, %v1304
        %v1472 = vmul.f32 %v1307, %v1307
        %v1473 = vmul.f32 %v1310, %v1310
        %v1474 = vmul.f32 %v1313, %v1313
        %v1475 = vmul.f32 %v1349, %v1349
        %v1476 = vmul.f32 %v1352, %v1352
        %v1477 = vmul.f32 %v1355, %v1355
        %v1478 = vmul.f32 %v1358, %v1358
        %v1479 = vmul.f32 %v1361, %v1361
        %v1480 = vmul.f32 %v1364, %v1364
        %v1481 = vmul.f32 %v1367, %v1367
        %v1482 = vmul.f32 %v1370, %v1370
        %v1483 = vmul.f32 %v1373, %v1373
        %v1484 = vmul.f32 %v1376, %v1376
        %v1485 = vmul.f32 %v1379, %v1379
        %v1486 = vmul.f32 %v1382, %v1382
        %v1487 = vmul.f32 %v1385, %v1385
        %v1488 = vmul.f32 %v1388, %v1388
        %v1489 = vmul.f32 %v1391, %v1391
        %v1490 = vmul.f32 %v1394, %v1394
        %v1491 = vmul.f32 %v1397, %v1397
        %v1492 = vmul.f32 %v1400, %v1400
        %v1493 = vmul.f32 %v1403, %v1403
        %v1494 = vmul.f32 %v1406, %v1406
        %v1495 = vmul.f32 %v1409, %v1409
        %v1496 = vmul.f32 %v1412, %v1412
        %v1497 = vmul.f32 %v1415, %v1415
        %v1498 = vmul.f32 %v1418, %v1418
        %v1499 = vmul.f32 %v1421, %v1421
        %v1500 = vmul.f32 %v1424, %v1424
        %v1501 = vmul.f32 %v1427, %v1427
        %v1502 = vmul.f32 %v1430, %v1430
        %v1503 = vmul.f32 %v1433, %v1433
        %v1504 = vmul.f32 %v1436, %v1436
        %v1505 = vmul.f32 %v1439, %v1439
        %v1506 = vmul.f32 %v1442, %v1442
        %v1507 = vadd.f32 %v1443, %v1475
        %v1508 = vadd.f32 %v1444, %v1476
        %v1509 = vadd.f32 %v1445, %v1477
        %v1510 = vadd.f32 %v1446, %v1478
        %v1511 = vadd.f32 %v1447, %v1479
        %v1512 = vadd.f32 %v1448, %v1480
        %v1513 = vadd.f32 %v1449, %v1481
        %v1514 = vadd.f32 %v1450, %v1482
        %v1515 = vadd.f32 %v1451, %v1483
        %v1516 = vadd.f32 %v1452, %v1484
        %v1517 = vadd.f32 %v1453, %v1485
        %v1518 = vadd.f32 %v1454, %v1486
        %v1519 = vadd.f32 %v1455, %v1487
        %v1520 = vadd.f32 %v1456, %v1488
        %v1521 = vadd.f32 %v1457, %v1489
        %v1522 = vadd.f32 %v1458, %v1490
        %v1523 = vadd.f32 %v1459, %v1491
        %v1524 = vadd.f32 %v1460, %v1492
        %v1525 = vadd.f32 %v1461, %v1493
        %v1526 = vadd.f32 %v1462, %v1494
        %v1527 = vadd.f32 %v1463, %v1495
        %v1528 = vadd.f32 %v1464, %v1496
        %v1529 = vadd.f32 %v1465, %v1497
        %v1530 = vadd.f32 %v1466, %v1498
        %v1531 = vadd.f32 %v1467, %v1499
        %v1532 = vadd.f32 %v1468, %v1500
        %v1533 = vadd.f32 %v1469, %v1501
        %v1534 = vadd.f32 %v1470, %v1502
        %v1535 = vadd.f32 %v1471, %v1503
        %v1536 = vadd.f32 %v1472, %v1504
        %v1537 = vadd.f32 %v1473, %v1505
        %v1538 = vadd.f32 %v1474, %v1506
        %v1539 = vrsqrt.pop %v1507
        %v1540 = vmul.f32 %v1539, %v1507
        %v1541 = vmul.f32 %v1540, %v1539
        %v1542 = vmul.f32 0.5, %v1541
        %v1543 = vsub.f32 1.5, %v1542
        %v1544 = vmul.f32 %v1539, %v1543
        %v1545 = vmul.f32 %v1507, %v1544
        %vm1546 = vcmp.eq.f32.partialorder %v1507, inf
        %v1547 = vsel %vm1546, %v1507, %v1545
        %vm1548 = vcmp.eq.f32.partialorder %v1507, 0.0
        %v1549 = vand.u32 %v1507, 2147483648
        %v1550 = vsel %vm1548, %v1549, %v1547
        %v1551 = vrsqrt.pop %v1508
        %v1552 = vmul.f32 %v1551, %v1508
        %v1553 = vmul.f32 %v1552, %v1551
        %v1554 = vmul.f32 0.5, %v1553
        %v1555 = vsub.f32 1.5, %v1554
        %v1556 = vmul.f32 %v1551, %v1555
        %v1557 = vmul.f32 %v1508, %v1556
        %vm1558 = vcmp.eq.f32.partialorder %v1508, inf
        %v1559 = vsel %vm1558, %v1508, %v1557
        %vm1560 = vcmp.eq.f32.partialorder %v1508, 0.0
        %v1561 = vand.u32 %v1508, 2147483648
        %v1562 = vsel %vm1560, %v1561, %v1559
        %v1563 = vrsqrt.pop %v1509
        %v1564 = vmul.f32 %v1563, %v1509
        %v1565 = vmul.f32 %v1564, %v1563
        %v1566 = vmul.f32 0.5, %v1565
        %v1567 = vsub.f32 1.5, %v1566
        %v1568 = vmul.f32 %v1563, %v1567
        %v1569 = vmul.f32 %v1509, %v1568
        %vm1570 = vcmp.eq.f32.partialorder %v1509, inf
        %v1571 = vsel %vm1570, %v1509, %v1569
        %vm1572 = vcmp.eq.f32.partialorder %v1509, 0.0
        %v1573 = vand.u32 %v1509, 2147483648
        %v1574 = vsel %vm1572, %v1573, %v1571
        %v1575 = vrsqrt.pop %v1510
        %v1576 = vmul.f32 %v1575, %v1510
        %v1577 = vmul.f32 %v1576, %v1575
        %v1578 = vmul.f32 0.5, %v1577
        %v1579 = vsub.f32 1.5, %v1578
        %v1580 = vmul.f32 %v1575, %v1579
        %v1581 = vmul.f32 %v1510, %v1580
        %vm1582 = vcmp.eq.f32.partialorder %v1510, inf
        %v1583 = vsel %vm1582, %v1510, %v1581
        %vm1584 = vcmp.eq.f32.partialorder %v1510, 0.0
        %v1585 = vand.u32 %v1510, 2147483648
        %v1586 = vsel %vm1584, %v1585, %v1583
        %v1587 = vrsqrt.pop %v1511
        %v1588 = vmul.f32 %v1587, %v1511
        %v1589 = vmul.f32 %v1588, %v1587
        %v1590 = vmul.f32 0.5, %v1589
        %v1591 = vsub.f32 1.5, %v1590
        %v1592 = vmul.f32 %v1587, %v1591
        %v1593 = vmul.f32 %v1511, %v1592
        %vm1594 = vcmp.eq.f32.partialorder %v1511, inf
        %v1595 = vsel %vm1594, %v1511, %v1593
        %vm1596 = vcmp.eq.f32.partialorder %v1511, 0.0
        %v1597 = vand.u32 %v1511, 2147483648
        %v1598 = vsel %vm1596, %v1597, %v1595
        %v1599 = vrsqrt.pop %v1512
        %v1600 = vmul.f32 %v1599, %v1512
        %v1601 = vmul.f32 %v1600, %v1599
        %v1602 = vmul.f32 0.5, %v1601
        %v1603 = vsub.f32 1.5, %v1602
        %v1604 = vmul.f32 %v1599, %v1603
        %v1605 = vmul.f32 %v1512, %v1604
        %vm1606 = vcmp.eq.f32.partialorder %v1512, inf
        %v1607 = vsel %vm1606, %v1512, %v1605
        %vm1608 = vcmp.eq.f32.partialorder %v1512, 0.0
        %v1609 = vand.u32 %v1512, 2147483648
        %v1610 = vsel %vm1608, %v1609, %v1607
        %v1611 = vrsqrt.pop %v1513
        %v1612 = vmul.f32 %v1611, %v1513
        %v1613 = vmul.f32 %v1612, %v1611
        %v1614 = vmul.f32 0.5, %v1613
        %v1615 = vsub.f32 1.5, %v1614
        %v1616 = vmul.f32 %v1611, %v1615
        %v1617 = vmul.f32 %v1513, %v1616
        %vm1618 = vcmp.eq.f32.partialorder %v1513, inf
        %v1619 = vsel %vm1618, %v1513, %v1617
        %vm1620 = vcmp.eq.f32.partialorder %v1513, 0.0
        %v1621 = vand.u32 %v1513, 2147483648
        %v1622 = vsel %vm1620, %v1621, %v1619
        %v1623 = vrsqrt.pop %v1514
        %v1624 = vmul.f32 %v1623, %v1514
        %v1625 = vmul.f32 %v1624, %v1623
        %v1626 = vmul.f32 0.5, %v1625
        %v1627 = vsub.f32 1.5, %v1626
        %v1628 = vmul.f32 %v1623, %v1627
        %v1629 = vmul.f32 %v1514, %v1628
        %vm1630 = vcmp.eq.f32.partialorder %v1514, inf
        %v1631 = vsel %vm1630, %v1514, %v1629
        %vm1632 = vcmp.eq.f32.partialorder %v1514, 0.0
        %v1633 = vand.u32 %v1514, 2147483648
        %v1634 = vsel %vm1632, %v1633, %v1631
        %v1635 = vrsqrt.pop %v1515
        %v1636 = vmul.f32 %v1635, %v1515
        %v1637 = vmul.f32 %v1636, %v1635
        %v1638 = vmul.f32 0.5, %v1637
        %v1639 = vsub.f32 1.5, %v1638
        %v1640 = vmul.f32 %v1635, %v1639
        %v1641 = vmul.f32 %v1515, %v1640
        %vm1642 = vcmp.eq.f32.partialorder %v1515, inf
        %v1643 = vsel %vm1642, %v1515, %v1641
        %vm1644 = vcmp.eq.f32.partialorder %v1515, 0.0
        %v1645 = vand.u32 %v1515, 2147483648
        %v1646 = vsel %vm1644, %v1645, %v1643
        %v1647 = vrsqrt.pop %v1516
        %v1648 = vmul.f32 %v1647, %v1516
        %v1649 = vmul.f32 %v1648, %v1647
        %v1650 = vmul.f32 0.5, %v1649
        %v1651 = vsub.f32 1.5, %v1650
        %v1652 = vmul.f32 %v1647, %v1651
        %v1653 = vmul.f32 %v1516, %v1652
        %vm1654 = vcmp.eq.f32.partialorder %v1516, inf
        %v1655 = vsel %vm1654, %v1516, %v1653
        %vm1656 = vcmp.eq.f32.partialorder %v1516, 0.0
        %v1657 = vand.u32 %v1516, 2147483648
        %v1658 = vsel %vm1656, %v1657, %v1655
        %v1659 = vrsqrt.pop %v1517
        %v1660 = vmul.f32 %v1659, %v1517
        %v1661 = vmul.f32 %v1660, %v1659
        %v1662 = vmul.f32 0.5, %v1661
        %v1663 = vsub.f32 1.5, %v1662
        %v1664 = vmul.f32 %v1659, %v1663
        %v1665 = vmul.f32 %v1517, %v1664
        %vm1666 = vcmp.eq.f32.partialorder %v1517, inf
        %v1667 = vsel %vm1666, %v1517, %v1665
        %vm1668 = vcmp.eq.f32.partialorder %v1517, 0.0
        %v1669 = vand.u32 %v1517, 2147483648
        %v1670 = vsel %vm1668, %v1669, %v1667
        %v1671 = vrsqrt.pop %v1518
        %v1672 = vmul.f32 %v1671, %v1518
        %v1673 = vmul.f32 %v1672, %v1671
        %v1674 = vmul.f32 0.5, %v1673
        %v1675 = vsub.f32 1.5, %v1674
        %v1676 = vmul.f32 %v1671, %v1675
        %v1677 = vmul.f32 %v1518, %v1676
        %vm1678 = vcmp.eq.f32.partialorder %v1518, inf
        %v1679 = vsel %vm1678, %v1518, %v1677
        %vm1680 = vcmp.eq.f32.partialorder %v1518, 0.0
        %v1681 = vand.u32 %v1518, 2147483648
        %v1682 = vsel %vm1680, %v1681, %v1679
        %v1683 = vrsqrt.pop %v1519
        %v1684 = vmul.f32 %v1683, %v1519
        %v1685 = vmul.f32 %v1684, %v1683
        %v1686 = vmul.f32 0.5, %v1685
        %v1687 = vsub.f32 1.5, %v1686
        %v1688 = vmul.f32 %v1683, %v1687
        %v1689 = vmul.f32 %v1519, %v1688
        %vm1690 = vcmp.eq.f32.partialorder %v1519, inf
        %v1691 = vsel %vm1690, %v1519, %v1689
        %vm1692 = vcmp.eq.f32.partialorder %v1519, 0.0
        %v1693 = vand.u32 %v1519, 2147483648
        %v1694 = vsel %vm1692, %v1693, %v1691
        %v1695 = vrsqrt.pop %v1520
        %v1696 = vmul.f32 %v1695, %v1520
        %v1697 = vmul.f32 %v1696, %v1695
        %v1698 = vmul.f32 0.5, %v1697
        %v1699 = vsub.f32 1.5, %v1698
        %v1700 = vmul.f32 %v1695, %v1699
        %v1701 = vmul.f32 %v1520, %v1700
        %vm1702 = vcmp.eq.f32.partialorder %v1520, inf
        %v1703 = vsel %vm1702, %v1520, %v1701
        %vm1704 = vcmp.eq.f32.partialorder %v1520, 0.0
        %v1705 = vand.u32 %v1520, 2147483648
        %v1706 = vsel %vm1704, %v1705, %v1703
        %v1707 = vrsqrt.pop %v1521
        %v1708 = vmul.f32 %v1707, %v1521
        %v1709 = vmul.f32 %v1708, %v1707
        %v1710 = vmul.f32 0.5, %v1709
        %v1711 = vsub.f32 1.5, %v1710
        %v1712 = vmul.f32 %v1707, %v1711
        %v1713 = vmul.f32 %v1521, %v1712
        %vm1714 = vcmp.eq.f32.partialorder %v1521, inf
        %v1715 = vsel %vm1714, %v1521, %v1713
        %vm1716 = vcmp.eq.f32.partialorder %v1521, 0.0
        %v1717 = vand.u32 %v1521, 2147483648
        %v1718 = vsel %vm1716, %v1717, %v1715
        %v1719 = vrsqrt.pop %v1522
        %v1720 = vmul.f32 %v1719, %v1522
        %v1721 = vmul.f32 %v1720, %v1719
        %v1722 = vmul.f32 0.5, %v1721
        %v1723 = vsub.f32 1.5, %v1722
        %v1724 = vmul.f32 %v1719, %v1723
        %v1725 = vmul.f32 %v1522, %v1724
        %vm1726 = vcmp.eq.f32.partialorder %v1522, inf
        %v1727 = vsel %vm1726, %v1522, %v1725
        %vm1728 = vcmp.eq.f32.partialorder %v1522, 0.0
        %v1729 = vand.u32 %v1522, 2147483648
        %v1730 = vsel %vm1728, %v1729, %v1727
        %v1731 = vrsqrt.pop %v1523
        %v1732 = vmul.f32 %v1731, %v1523
        %v1733 = vmul.f32 %v1732, %v1731
        %v1734 = vmul.f32 0.5, %v1733
        %v1735 = vsub.f32 1.5, %v1734
        %v1736 = vmul.f32 %v1731, %v1735
        %v1737 = vmul.f32 %v1523, %v1736
        %vm1738 = vcmp.eq.f32.partialorder %v1523, inf
        %v1739 = vsel %vm1738, %v1523, %v1737
        %vm1740 = vcmp.eq.f32.partialorder %v1523, 0.0
        %v1741 = vand.u32 %v1523, 2147483648
        %v1742 = vsel %vm1740, %v1741, %v1739
        %v1743 = vrsqrt.pop %v1524
        %v1744 = vmul.f32 %v1743, %v1524
        %v1745 = vmul.f32 %v1744, %v1743
        %v1746 = vmul.f32 0.5, %v1745
        %v1747 = vsub.f32 1.5, %v1746
        %v1748 = vmul.f32 %v1743, %v1747
        %v1749 = vmul.f32 %v1524, %v1748
        %vm1750 = vcmp.eq.f32.partialorder %v1524, inf
        %v1751 = vsel %vm1750, %v1524, %v1749
        %vm1752 = vcmp.eq.f32.partialorder %v1524, 0.0
        %v1753 = vand.u32 %v1524, 2147483648
        %v1754 = vsel %vm1752, %v1753, %v1751
        %v1755 = vrsqrt.pop %v1525
        %v1756 = vmul.f32 %v1755, %v1525
        %v1757 = vmul.f32 %v1756, %v1755
        %v1758 = vmul.f32 0.5, %v1757
        %v1759 = vsub.f32 1.5, %v1758
        %v1760 = vmul.f32 %v1755, %v1759
        %v1761 = vmul.f32 %v1525, %v1760
        %vm1762 = vcmp.eq.f32.partialorder %v1525, inf
        %v1763 = vsel %vm1762, %v1525, %v1761
        %vm1764 = vcmp.eq.f32.partialorder %v1525, 0.0
        %v1765 = vand.u32 %v1525, 2147483648
        %v1766 = vsel %vm1764, %v1765, %v1763
        %v1767 = vrsqrt.pop %v1526
        %v1768 = vmul.f32 %v1767, %v1526
        %v1769 = vmul.f32 %v1768, %v1767
        %v1770 = vmul.f32 0.5, %v1769
        %v1771 = vsub.f32 1.5, %v1770
        %v1772 = vmul.f32 %v1767, %v1771
        %v1773 = vmul.f32 %v1526, %v1772
        %vm1774 = vcmp.eq.f32.partialorder %v1526, inf
        %v1775 = vsel %vm1774, %v1526, %v1773
        %vm1776 = vcmp.eq.f32.partialorder %v1526, 0.0
        %v1777 = vand.u32 %v1526, 2147483648
        %v1778 = vsel %vm1776, %v1777, %v1775
        %v1779 = vrsqrt.pop %v1527
        %v1780 = vmul.f32 %v1779, %v1527
        %v1781 = vmul.f32 %v1780, %v1779
        %v1782 = vmul.f32 0.5, %v1781
        %v1783 = vsub.f32 1.5, %v1782
        %v1784 = vmul.f32 %v1779, %v1783
        %v1785 = vmul.f32 %v1527, %v1784
        %vm1786 = vcmp.eq.f32.partialorder %v1527, inf
        %v1787 = vsel %vm1786, %v1527, %v1785
        %vm1788 = vcmp.eq.f32.partialorder %v1527, 0.0
        %v1789 = vand.u32 %v1527, 2147483648
        %v1790 = vsel %vm1788, %v1789, %v1787
        %v1791 = vrsqrt.pop %v1528
        %v1792 = vmul.f32 %v1791, %v1528
        %v1793 = vmul.f32 %v1792, %v1791
        %v1794 = vmul.f32 0.5, %v1793
        %v1795 = vsub.f32 1.5, %v1794
        %v1796 = vmul.f32 %v1791, %v1795
        %v1797 = vmul.f32 %v1528, %v1796
        %vm1798 = vcmp.eq.f32.partialorder %v1528, inf
        %v1799 = vsel %vm1798, %v1528, %v1797
        %vm1800 = vcmp.eq.f32.partialorder %v1528, 0.0
        %v1801 = vand.u32 %v1528, 2147483648
        %v1802 = vsel %vm1800, %v1801, %v1799
        %v1803 = vrsqrt.pop %v1529
        %v1804 = vmul.f32 %v1803, %v1529
        %v1805 = vmul.f32 %v1804, %v1803
        %v1806 = vmul.f32 0.5, %v1805
        %v1807 = vsub.f32 1.5, %v1806
        %v1808 = vmul.f32 %v1803, %v1807
        %v1809 = vmul.f32 %v1529, %v1808
        %vm1810 = vcmp.eq.f32.partialorder %v1529, inf
        %v1811 = vsel %vm1810, %v1529, %v1809
        %vm1812 = vcmp.eq.f32.partialorder %v1529, 0.0
        %v1813 = vand.u32 %v1529, 2147483648
        %v1814 = vsel %vm1812, %v1813, %v1811
        %v1815 = vrsqrt.pop %v1530
        %v1816 = vmul.f32 %v1815, %v1530
        %v1817 = vmul.f32 %v1816, %v1815
        %v1818 = vmul.f32 0.5, %v1817
        %v1819 = vsub.f32 1.5, %v1818
        %v1820 = vmul.f32 %v1815, %v1819
        %v1821 = vmul.f32 %v1530, %v1820
        %vm1822 = vcmp.eq.f32.partialorder %v1530, inf
        %v1823 = vsel %vm1822, %v1530, %v1821
        %vm1824 = vcmp.eq.f32.partialorder %v1530, 0.0
        %v1825 = vand.u32 %v1530, 2147483648
        %v1826 = vsel %vm1824, %v1825, %v1823
        %v1827 = vrsqrt.pop %v1531
        %v1828 = vmul.f32 %v1827, %v1531
        %v1829 = vmul.f32 %v1828, %v1827
        %v1830 = vmul.f32 0.5, %v1829
        %v1831 = vsub.f32 1.5, %v1830
        %v1832 = vmul.f32 %v1827, %v1831
        %v1833 = vmul.f32 %v1531, %v1832
        %vm1834 = vcmp.eq.f32.partialorder %v1531, inf
        %v1835 = vsel %vm1834, %v1531, %v1833
        %vm1836 = vcmp.eq.f32.partialorder %v1531, 0.0
        %v1837 = vand.u32 %v1531, 2147483648
        %v1838 = vsel %vm1836, %v1837, %v1835
        %v1839 = vrsqrt.pop %v1532
        %v1840 = vmul.f32 %v1839, %v1532
        %v1841 = vmul.f32 %v1840, %v1839
        %v1842 = vmul.f32 0.5, %v1841
        %v1843 = vsub.f32 1.5, %v1842
        %v1844 = vmul.f32 %v1839, %v1843
        %v1845 = vmul.f32 %v1532, %v1844
        %vm1846 = vcmp.eq.f32.partialorder %v1532, inf
        %v1847 = vsel %vm1846, %v1532, %v1845
        %vm1848 = vcmp.eq.f32.partialorder %v1532, 0.0
        %v1849 = vand.u32 %v1532, 2147483648
        %v1850 = vsel %vm1848, %v1849, %v1847
        %v1851 = vrsqrt.pop %v1533
        %v1852 = vmul.f32 %v1851, %v1533
        %v1853 = vmul.f32 %v1852, %v1851
        %v1854 = vmul.f32 0.5, %v1853
        %v1855 = vsub.f32 1.5, %v1854
        %v1856 = vmul.f32 %v1851, %v1855
        %v1857 = vmul.f32 %v1533, %v1856
        %vm1858 = vcmp.eq.f32.partialorder %v1533, inf
        %v1859 = vsel %vm1858, %v1533, %v1857
        %vm1860 = vcmp.eq.f32.partialorder %v1533, 0.0
        %v1861 = vand.u32 %v1533, 2147483648
        %v1862 = vsel %vm1860, %v1861, %v1859
        %v1863 = vrsqrt.pop %v1534
        %v1864 = vmul.f32 %v1863, %v1534
        %v1865 = vmul.f32 %v1864, %v1863
        %v1866 = vmul.f32 0.5, %v1865
        %v1867 = vsub.f32 1.5, %v1866
        %v1868 = vmul.f32 %v1863, %v1867
        %v1869 = vmul.f32 %v1534, %v1868
        %vm1870 = vcmp.eq.f32.partialorder %v1534, inf
        %v1871 = vsel %vm1870, %v1534, %v1869
        %vm1872 = vcmp.eq.f32.partialorder %v1534, 0.0
        %v1873 = vand.u32 %v1534, 2147483648
        %v1874 = vsel %vm1872, %v1873, %v1871
        %v1875 = vrsqrt.pop %v1535
        %v1876 = vmul.f32 %v1875, %v1535
        %v1877 = vmul.f32 %v1876, %v1875
        %v1878 = vmul.f32 0.5, %v1877
        %v1879 = vsub.f32 1.5, %v1878
        %v1880 = vmul.f32 %v1875, %v1879
        %v1881 = vmul.f32 %v1535, %v1880
        %vm1882 = vcmp.eq.f32.partialorder %v1535, inf
        %v1883 = vsel %vm1882, %v1535, %v1881
        %vm1884 = vcmp.eq.f32.partialorder %v1535, 0.0
        %v1885 = vand.u32 %v1535, 2147483648
        %v1886 = vsel %vm1884, %v1885, %v1883
        %v1887 = vrsqrt.pop %v1536
        %v1888 = vmul.f32 %v1887, %v1536
        %v1889 = vmul.f32 %v1888, %v1887
        %v1890 = vmul.f32 0.5, %v1889
        %v1891 = vsub.f32 1.5, %v1890
        %v1892 = vmul.f32 %v1887, %v1891
        %v1893 = vmul.f32 %v1536, %v1892
        %vm1894 = vcmp.eq.f32.partialorder %v1536, inf
        %v1895 = vsel %vm1894, %v1536, %v1893
        %vm1896 = vcmp.eq.f32.partialorder %v1536, 0.0
        %v1897 = vand.u32 %v1536, 2147483648
        %v1898 = vsel %vm1896, %v1897, %v1895
        %v1899 = vrsqrt.pop %v1537
        %v1900 = vmul.f32 %v1899, %v1537
        %v1901 = vmul.f32 %v1900, %v1899
        %v1902 = vmul.f32 0.5, %v1901
        %v1903 = vsub.f32 1.5, %v1902
        %v1904 = vmul.f32 %v1899, %v1903
        %v1905 = vmul.f32 %v1537, %v1904
        %vm1906 = vcmp.eq.f32.partialorder %v1537, inf
        %v1907 = vsel %vm1906, %v1537, %v1905
        %vm1908 = vcmp.eq.f32.partialorder %v1537, 0.0
        %v1909 = vand.u32 %v1537, 2147483648
        %v1910 = vsel %vm1908, %v1909, %v1907
        %v1911 = vrsqrt.pop %v1538
        %v1912 = vmul.f32 %v1911, %v1538
        %v1913 = vmul.f32 %v1912, %v1911
        %v1914 = vmul.f32 0.5, %v1913
        %v1915 = vsub.f32 1.5, %v1914
        %v1916 = vmul.f32 %v1911, %v1915
        %v1917 = vmul.f32 %v1538, %v1916
        %vm1918 = vcmp.eq.f32.partialorder %v1538, inf
        %v1919 = vsel %vm1918, %v1538, %v1917
        %vm1920 = vcmp.eq.f32.partialorder %v1538, 0.0
        %v1921 = vand.u32 %v1538, 2147483648
        %v1922 = vsel %vm1920, %v1921, %v1919
        %v1955 = vadd.s32 %v1181, 4294967295
        %v1956 = vperm.slane %v1220, %v1955
        %v1957 = vadd.s32 %v1181, 4294967287
        %v1958 = vperm.slane %v1223, %v1957
        %vm1959 = vcmask 138312
        %v1960 = vsel %vm1959, %v1958, %v1956
        %v1961 = vperm.slane %v1226, %v1955
        %v1962 = vperm.slane %v1229, %v1957
        %v1963 = vsel %vm1959, %v1962, %v1961
        %v1964 = vperm.slane %v1232, %v1955
        %v1965 = vperm.slane %v1235, %v1957
        %v1966 = vsel %vm1959, %v1965, %v1964
        %v1967 = vperm.slane %v1238, %v1955
        %v1968 = vperm.slane %v1241, %v1957
        %v1969 = vsel %vm1959, %v1968, %v1967
        %v1970 = vperm.slane %v1244, %v1955
        %v1971 = vperm.slane %v1247, %v1957
        %v1972 = vsel %vm1959, %v1971, %v1970
        %v1973 = vperm.slane %v1250, %v1955
        %v1974 = vperm.slane %v1253, %v1957
        %v1975 = vsel %vm1959, %v1974, %v1973
        %v1976 = vperm.slane %v1256, %v1955
        %v1977 = vperm.slane %v1259, %v1957
        %v1978 = vsel %vm1959, %v1977, %v1976
        %v1979 = vperm.slane %v1262, %v1955
        %v1980 = vperm.slane %v1265, %v1957
        %v1981 = vsel %vm1959, %v1980, %v1979
        %v1982 = vperm.slane %v1268, %v1955
        %v1983 = vperm.slane %v1271, %v1957
        %v1984 = vsel %vm1959, %v1983, %v1982
        %v1985 = vperm.slane %v1274, %v1955
        %v1986 = vperm.slane %v1277, %v1957
        %v1987 = vsel %vm1959, %v1986, %v1985
        %v1988 = vperm.slane %v1280, %v1955
        %v1989 = vperm.slane %v1283, %v1957
        %v1990 = vsel %vm1959, %v1989, %v1988
        %v1991 = vperm.slane %v1286, %v1955
        %v1992 = vperm.slane %v1289, %v1957
        %v1993 = vsel %vm1959, %v1992, %v1991
        %v1994 = vperm.slane %v1292, %v1955
        %v1995 = vperm.slane %v1295, %v1957
        %v1996 = vsel %vm1959, %v1995, %v1994
        %v1997 = vperm.slane %v1298, %v1955
        %v1998 = vperm.slane %v1301, %v1957
        %v1999 = vsel %vm1959, %v1998, %v1997
        %v2000 = vperm.slane %v1304, %v1955
        %v2001 = vperm.slane %v1307, %v1957
        %v2002 = vsel %vm1959, %v2001, %v2000
        %v2003 = vperm.slane %v1310, %v1955
        %v2004 = vperm.slane %v1313, %v1957
        %v2005 = vsel %vm1959, %v2004, %v2003
        %vm2006 = vcmask 1041409
        %v2007 = vsel %vm2006, %v1963, %v1960
        %vm2008 = vcmask 1042434
        %v2009 = vsel %vm2008, %v1966, %v2007
        %vm2010 = vcmask 1043459
        %v2011 = vsel %vm2010, %v1969, %v2009
        %vm2012 = vcmask 1044484
        %v2013 = vsel %vm2012, %v1972, %v2011
        %vm2014 = vcmask 1045509
        %v2015 = vsel %vm2014, %v1975, %v2013
        %vm2016 = vcmask 1046534
        %v2017 = vsel %vm2016, %v1978, %v2015
        %vm2018 = vcmask 1047559
        %v2019 = vsel %vm2018, %v1981, %v2017
        %v2020 = vsel %vm2006, %v1987, %v1984
        %v2021 = vsel %vm2008, %v1990, %v2020
        %v2022 = vsel %vm2010, %v1993, %v2021
        %v2023 = vsel %vm2012, %v1996, %v2022
        %v2024 = vsel %vm2014, %v1999, %v2023
        %v2025 = vsel %vm2016, %v2002, %v2024
        %v2026 = vsel %vm2018, %v2005, %v2025
        %vm2029 = vcmask 7168
        %v2030 = vsel %vm2029, 0.0, %v2019
        %v2031 = vsel %vm2029, 0.0, %v2026
        %v2034 = vperm.slane %v2030, 0
        %v2035 = vlaneseq
        %v2036 = vshrl.u32 %v2035, 7
        %2038 = vset.pattern.permute.xlu0 %v2036
        %2039 = vperm.xlu0 %2038, %v2034
        %v2040 = vpop.permute.xlu0 %2039
        %v2041 = vlaneseq
        %v2042 = vshrl.u32 %v2041, 7
        %v2043 = vadd.s32 %v2042, 8
        %2044 = vset.pattern.permute.xlu0 %v2043
        %2045 = vperm.xlu0 %2044, %v2034
        %v2046 = vpop.permute.xlu0 %2045
        %v2047 = vperm.slane %v2030, 1
        %v2048 = vlaneseq
        %v2049 = vshrl.u32 %v2048, 7
        %2051 = vset.pattern.permute.xlu0 %v2049
        %2052 = vperm.xlu0 %2051, %v2047
        %v2053 = vpop.permute.xlu0 %2052
        %v2054 = vlaneseq
        %v2055 = vshrl.u32 %v2054, 7
        %v2056 = vadd.s32 %v2055, 8
        %2057 = vset.pattern.permute.xlu0 %v2056
        %2058 = vperm.xlu0 %2057, %v2047
        %v2059 = vpop.permute.xlu0 %2058
        %v2060 = vperm.slane %v2030, 2
        %v2061 = vlaneseq
        %v2062 = vshrl.u32 %v2061, 7
        %2064 = vset.pattern.permute.xlu0 %v2062
        %2065 = vperm.xlu0 %2064, %v2060
        %v2066 = vpop.permute.xlu0 %2065
        %v2067 = vlaneseq
        %v2068 = vshrl.u32 %v2067, 7
        %v2069 = vadd.s32 %v2068, 8
        %2070 = vset.pattern.permute.xlu0 %v2069
        %2071 = vperm.xlu0 %2070, %v2060
        %v2072 = vpop.permute.xlu0 %2071
        %v2073 = vperm.slane %v2030, 3
        %v2074 = vlaneseq
        %v2075 = vshrl.u32 %v2074, 7
        %2077 = vset.pattern.permute.xlu0 %v2075
        %2078 = vperm.xlu0 %2077, %v2073
        %v2079 = vpop.permute.xlu0 %2078
        %v2080 = vlaneseq
        %v2081 = vshrl.u32 %v2080, 7
        %v2082 = vadd.s32 %v2081, 8
        %2083 = vset.pattern.permute.xlu0 %v2082
        %2084 = vperm.xlu0 %2083, %v2073
        %v2085 = vpop.permute.xlu0 %2084
        %v2086 = vperm.slane %v2030, 4
        %v2087 = vlaneseq
        %v2088 = vshrl.u32 %v2087, 7
        %2090 = vset.pattern.permute.xlu0 %v2088
        %2091 = vperm.xlu0 %2090, %v2086
        %v2092 = vpop.permute.xlu0 %2091
        %v2093 = vlaneseq
        %v2094 = vshrl.u32 %v2093, 7
        %v2095 = vadd.s32 %v2094, 8
        %2096 = vset.pattern.permute.xlu0 %v2095
        %2097 = vperm.xlu0 %2096, %v2086
        %v2098 = vpop.permute.xlu0 %2097
        %v2099 = vperm.slane %v2030, 5
        %v2100 = vlaneseq
        %v2101 = vshrl.u32 %v2100, 7
        %2103 = vset.pattern.permute.xlu0 %v2101
        %2104 = vperm.xlu0 %2103, %v2099
        %v2105 = vpop.permute.xlu0 %2104
        %v2106 = vlaneseq
        %v2107 = vshrl.u32 %v2106, 7
        %v2108 = vadd.s32 %v2107, 8
        %2109 = vset.pattern.permute.xlu0 %v2108
        %2110 = vperm.xlu0 %2109, %v2099
        %v2111 = vpop.permute.xlu0 %2110
        %v2112 = vperm.slane %v2030, 6
        %v2113 = vlaneseq
        %v2114 = vshrl.u32 %v2113, 7
        %2116 = vset.pattern.permute.xlu0 %v2114
        %2117 = vperm.xlu0 %2116, %v2112
        %v2118 = vpop.permute.xlu0 %2117
        %v2119 = vlaneseq
        %v2120 = vshrl.u32 %v2119, 7
        %v2121 = vadd.s32 %v2120, 8
        %2122 = vset.pattern.permute.xlu0 %v2121
        %2123 = vperm.xlu0 %2122, %v2112
        %v2124 = vpop.permute.xlu0 %2123
        %v2125 = vperm.slane %v2030, 7
        %v2126 = vlaneseq
        %v2127 = vshrl.u32 %v2126, 7
        %2129 = vset.pattern.permute.xlu0 %v2127
        %2130 = vperm.xlu0 %2129, %v2125
        %v2131 = vpop.permute.xlu0 %2130
        %v2132 = vlaneseq
        %v2133 = vshrl.u32 %v2132, 7
        %v2134 = vadd.s32 %v2133, 8
        %2135 = vset.pattern.permute.xlu0 %v2134
        %2136 = vperm.xlu0 %2135, %v2125
        %v2137 = vpop.permute.xlu0 %2136
        %v2138 = vperm.slane %v2031, 0
        %v2139 = vlaneseq
        %v2140 = vshrl.u32 %v2139, 7
        %2142 = vset.pattern.permute.xlu0 %v2140
        %2143 = vperm.xlu0 %2142, %v2138
        %v2144 = vpop.permute.xlu0 %2143
        %v2145 = vlaneseq
        %v2146 = vshrl.u32 %v2145, 7
        %v2147 = vadd.s32 %v2146, 8
        %2148 = vset.pattern.permute.xlu0 %v2147
        %2149 = vperm.xlu0 %2148, %v2138
        %v2150 = vpop.permute.xlu0 %2149
        %v2151 = vperm.slane %v2031, 1
        %v2152 = vlaneseq
        %v2153 = vshrl.u32 %v2152, 7
        %2155 = vset.pattern.permute.xlu0 %v2153
        %2156 = vperm.xlu0 %2155, %v2151
        %v2157 = vpop.permute.xlu0 %2156
        %v2158 = vlaneseq
        %v2159 = vshrl.u32 %v2158, 7
        %v2160 = vadd.s32 %v2159, 8
        %2161 = vset.pattern.permute.xlu0 %v2160
        %2162 = vperm.xlu0 %2161, %v2151
        %v2163 = vpop.permute.xlu0 %2162
        %v2164 = vperm.slane %v2031, 2
        %v2165 = vlaneseq
        %v2166 = vshrl.u32 %v2165, 7
        %2168 = vset.pattern.permute.xlu0 %v2166
        %2169 = vperm.xlu0 %2168, %v2164
        %v2170 = vpop.permute.xlu0 %2169
        %v2171 = vlaneseq
        %v2172 = vshrl.u32 %v2171, 7
        %v2173 = vadd.s32 %v2172, 8
        %2174 = vset.pattern.permute.xlu0 %v2173
        %2175 = vperm.xlu0 %2174, %v2164
        %v2176 = vpop.permute.xlu0 %2175
        %v2177 = vperm.slane %v2031, 3
        %v2178 = vlaneseq
        %v2179 = vshrl.u32 %v2178, 7
        %2181 = vset.pattern.permute.xlu0 %v2179
        %2182 = vperm.xlu0 %2181, %v2177
        %v2183 = vpop.permute.xlu0 %2182
        %v2184 = vlaneseq
        %v2185 = vshrl.u32 %v2184, 7
        %v2186 = vadd.s32 %v2185, 8
        %2187 = vset.pattern.permute.xlu0 %v2186
        %2188 = vperm.xlu0 %2187, %v2177
        %v2189 = vpop.permute.xlu0 %2188
        %v2190 = vperm.slane %v2031, 4
        %v2191 = vlaneseq
        %v2192 = vshrl.u32 %v2191, 7
        %2194 = vset.pattern.permute.xlu0 %v2192
        %2195 = vperm.xlu0 %2194, %v2190
        %v2196 = vpop.permute.xlu0 %2195
        %v2197 = vlaneseq
        %v2198 = vshrl.u32 %v2197, 7
        %v2199 = vadd.s32 %v2198, 8
        %2200 = vset.pattern.permute.xlu0 %v2199
        %2201 = vperm.xlu0 %2200, %v2190
        %v2202 = vpop.permute.xlu0 %2201
        %v2203 = vperm.slane %v2031, 5
        %v2204 = vlaneseq
        %v2205 = vshrl.u32 %v2204, 7
        %2207 = vset.pattern.permute.xlu0 %v2205
        %2208 = vperm.xlu0 %2207, %v2203
        %v2209 = vpop.permute.xlu0 %2208
        %v2210 = vlaneseq
        %v2211 = vshrl.u32 %v2210, 7
        %v2212 = vadd.s32 %v2211, 8
        %2213 = vset.pattern.permute.xlu0 %v2212
        %2214 = vperm.xlu0 %2213, %v2203
        %v2215 = vpop.permute.xlu0 %2214
        %v2216 = vperm.slane %v2031, 6
        %v2217 = vlaneseq
        %v2218 = vshrl.u32 %v2217, 7
        %2220 = vset.pattern.permute.xlu0 %v2218
        %2221 = vperm.xlu0 %2220, %v2216
        %v2222 = vpop.permute.xlu0 %2221
        %v2223 = vlaneseq
        %v2224 = vshrl.u32 %v2223, 7
        %v2225 = vadd.s32 %v2224, 8
        %2226 = vset.pattern.permute.xlu0 %v2225
        %2227 = vperm.xlu0 %2226, %v2216
        %v2228 = vpop.permute.xlu0 %2227
        %v2229 = vperm.slane %v2031, 7
        %v2230 = vlaneseq
        %v2231 = vshrl.u32 %v2230, 7
        %2233 = vset.pattern.permute.xlu0 %v2231
        %2234 = vperm.xlu0 %2233, %v2229
        %v2235 = vpop.permute.xlu0 %2234
        %v2236 = vlaneseq
        %v2237 = vshrl.u32 %v2236, 7
        %v2238 = vadd.s32 %v2237, 8
        %2239 = vset.pattern.permute.xlu0 %v2238
        %2240 = vperm.xlu0 %2239, %v2229
        %v2241 = vpop.permute.xlu0 %2240
        %v2274 = vadd.f32 %v1220, %v2040
        %v2275 = vadd.f32 %v1223, %v2046
        %v2276 = vadd.f32 %v1226, %v2053
        %v2277 = vadd.f32 %v1229, %v2059
        %v2278 = vadd.f32 %v1232, %v2066
        %v2279 = vadd.f32 %v1235, %v2072
        %v2280 = vadd.f32 %v1238, %v2079
        %v2281 = vadd.f32 %v1241, %v2085
        %v2282 = vadd.f32 %v1244, %v2092
        %v2283 = vadd.f32 %v1247, %v2098
        %v2284 = vadd.f32 %v1250, %v2105
        %v2285 = vadd.f32 %v1253, %v2111
        %v2286 = vadd.f32 %v1256, %v2118
        %v2287 = vadd.f32 %v1259, %v2124
        %v2288 = vadd.f32 %v1262, %v2131
        %v2289 = vadd.f32 %v1265, %v2137
        %v2290 = vadd.f32 %v1268, %v2144
        %v2291 = vadd.f32 %v1271, %v2150
        %v2292 = vadd.f32 %v1274, %v2157
        %v2293 = vadd.f32 %v1277, %v2163
        %v2294 = vadd.f32 %v1280, %v2170
        %v2295 = vadd.f32 %v1283, %v2176
        %v2296 = vadd.f32 %v1286, %v2183
        %v2297 = vadd.f32 %v1289, %v2189
        %v2298 = vadd.f32 %v1292, %v2196
        %v2299 = vadd.f32 %v1295, %v2202
        %v2300 = vadd.f32 %v1298, %v2209
        %v2301 = vadd.f32 %v1301, %v2215
        %v2302 = vadd.f32 %v1304, %v2222
        %v2303 = vadd.f32 %v1307, %v2228
        %v2304 = vadd.f32 %v1310, %v2235
        %v2305 = vadd.f32 %v1313, %v2241
        %v2306 = vadd.s32 %v1181, 1
        %v2307 = vperm.slane %v1220, %v2306
        %v2308 = vadd.s32 %v1181, 4294967289
        %v2309 = vperm.slane %v1223, %v2308
        %vm2310 = vcmask 121912
        %v2311 = vsel %vm2310, %v2309, %v2307
        %v2312 = vperm.slane %v1226, %v2306
        %v2313 = vperm.slane %v1229, %v2308
        %v2314 = vsel %vm2310, %v2313, %v2312
        %v2315 = vperm.slane %v1232, %v2306
        %v2316 = vperm.slane %v1235, %v2308
        %v2317 = vsel %vm2310, %v2316, %v2315
        %v2318 = vperm.slane %v1238, %v2306
        %v2319 = vperm.slane %v1241, %v2308
        %v2320 = vsel %vm2310, %v2319, %v2318
        %v2321 = vperm.slane %v1244, %v2306
        %v2322 = vperm.slane %v1247, %v2308
        %v2323 = vsel %vm2310, %v2322, %v2321
        %v2324 = vperm.slane %v1250, %v2306
        %v2325 = vperm.slane %v1253, %v2308
        %v2326 = vsel %vm2310, %v2325, %v2324
        %v2327 = vperm.slane %v1256, %v2306
        %v2328 = vperm.slane %v1259, %v2308
        %v2329 = vsel %vm2310, %v2328, %v2327
        %v2330 = vperm.slane %v1262, %v2306
        %v2331 = vperm.slane %v1265, %v2308
        %v2332 = vsel %vm2310, %v2331, %v2330
        %v2333 = vperm.slane %v1268, %v2306
        %v2334 = vperm.slane %v1271, %v2308
        %v2335 = vsel %vm2310, %v2334, %v2333
        %v2336 = vperm.slane %v1274, %v2306
        %v2337 = vperm.slane %v1277, %v2308
        %v2338 = vsel %vm2310, %v2337, %v2336
        %v2339 = vperm.slane %v1280, %v2306
        %v2340 = vperm.slane %v1283, %v2308
        %v2341 = vsel %vm2310, %v2340, %v2339
        %v2342 = vperm.slane %v1286, %v2306
        %v2343 = vperm.slane %v1289, %v2308
        %v2344 = vsel %vm2310, %v2343, %v2342
        %v2345 = vperm.slane %v1292, %v2306
        %v2346 = vperm.slane %v1295, %v2308
        %v2347 = vsel %vm2310, %v2346, %v2345
        %v2348 = vperm.slane %v1298, %v2306
        %v2349 = vperm.slane %v1301, %v2308
        %v2350 = vsel %vm2310, %v2349, %v2348
        %v2351 = vperm.slane %v1304, %v2306
        %v2352 = vperm.slane %v1307, %v2308
        %v2353 = vsel %vm2310, %v2352, %v2351
        %v2354 = vperm.slane %v1310, %v2306
        %v2355 = vperm.slane %v1313, %v2308
        %v2356 = vsel %vm2310, %v2355, %v2354
        %v2357 = vsel %vm2008, %v2314, %v2311
        %v2358 = vsel %vm2010, %v2317, %v2357
        %v2359 = vsel %vm2012, %v2320, %v2358
        %v2360 = vsel %vm2014, %v2323, %v2359
        %v2361 = vsel %vm2016, %v2326, %v2360
        %v2362 = vsel %vm2018, %v2329, %v2361
        %v2363 = vsel %vm2006, %v2335, %v2332
        %v2364 = vsel %vm2008, %v2338, %v2363
        %v2365 = vsel %vm2010, %v2341, %v2364
        %v2366 = vsel %vm2012, %v2344, %v2365
        %v2367 = vsel %vm2014, %v2347, %v2366
        %v2368 = vsel %vm2016, %v2350, %v2367
        %v2369 = vsel %vm2018, %v2353, %v2368
        %vm2373 = vcmask 121856
        %v2374 = vsel %vm2373, %v2362, 0.0
        %v2375 = vsel %vm2373, %v2369, 0.0
        %v2376 = vsel %vm2373, %v2356, 0.0
        %v2380 = vperm.slane %v2374, 1
        %v2381 = vlaneseq
        %v2382 = vshrl.u32 %v2381, 7
        %2384 = vset.pattern.permute.xlu0 %v2382
        %2385 = vperm.xlu0 %2384, %v2380
        %v2386 = vpop.permute.xlu0 %2385
        %v2387 = vlaneseq
        %v2388 = vshrl.u32 %v2387, 7
        %v2389 = vadd.s32 %v2388, 8
        %2390 = vset.pattern.permute.xlu0 %v2389
        %2391 = vperm.xlu0 %2390, %v2380
        %v2392 = vpop.permute.xlu0 %2391
        %v2393 = vperm.slane %v2374, 2
        %v2394 = vlaneseq
        %v2395 = vshrl.u32 %v2394, 7
        %2397 = vset.pattern.permute.xlu0 %v2395
        %2398 = vperm.xlu0 %2397, %v2393
        %v2399 = vpop.permute.xlu0 %2398
        %v2400 = vlaneseq
        %v2401 = vshrl.u32 %v2400, 7
        %v2402 = vadd.s32 %v2401, 8
        %2403 = vset.pattern.permute.xlu0 %v2402
        %2404 = vperm.xlu0 %2403, %v2393
        %v2405 = vpop.permute.xlu0 %2404
        %v2406 = vperm.slane %v2374, 3
        %v2407 = vlaneseq
        %v2408 = vshrl.u32 %v2407, 7
        %2410 = vset.pattern.permute.xlu0 %v2408
        %2411 = vperm.xlu0 %2410, %v2406
        %v2412 = vpop.permute.xlu0 %2411
        %v2413 = vlaneseq
        %v2414 = vshrl.u32 %v2413, 7
        %v2415 = vadd.s32 %v2414, 8
        %2416 = vset.pattern.permute.xlu0 %v2415
        %2417 = vperm.xlu0 %2416, %v2406
        %v2418 = vpop.permute.xlu0 %2417
        %v2419 = vperm.slane %v2374, 4
        %v2420 = vlaneseq
        %v2421 = vshrl.u32 %v2420, 7
        %2423 = vset.pattern.permute.xlu0 %v2421
        %2424 = vperm.xlu0 %2423, %v2419
        %v2425 = vpop.permute.xlu0 %2424
        %v2426 = vlaneseq
        %v2427 = vshrl.u32 %v2426, 7
        %v2428 = vadd.s32 %v2427, 8
        %2429 = vset.pattern.permute.xlu0 %v2428
        %2430 = vperm.xlu0 %2429, %v2419
        %v2431 = vpop.permute.xlu0 %2430
        %v2432 = vperm.slane %v2374, 5
        %v2433 = vlaneseq
        %v2434 = vshrl.u32 %v2433, 7
        %2436 = vset.pattern.permute.xlu0 %v2434
        %2437 = vperm.xlu0 %2436, %v2432
        %v2438 = vpop.permute.xlu0 %2437
        %v2439 = vlaneseq
        %v2440 = vshrl.u32 %v2439, 7
        %v2441 = vadd.s32 %v2440, 8
        %2442 = vset.pattern.permute.xlu0 %v2441
        %2443 = vperm.xlu0 %2442, %v2432
        %v2444 = vpop.permute.xlu0 %2443
        %v2445 = vperm.slane %v2374, 6
        %v2446 = vlaneseq
        %v2447 = vshrl.u32 %v2446, 7
        %2449 = vset.pattern.permute.xlu0 %v2447
        %2450 = vperm.xlu0 %2449, %v2445
        %v2451 = vpop.permute.xlu0 %2450
        %v2452 = vlaneseq
        %v2453 = vshrl.u32 %v2452, 7
        %v2454 = vadd.s32 %v2453, 8
        %2455 = vset.pattern.permute.xlu0 %v2454
        %2456 = vperm.xlu0 %2455, %v2445
        %v2457 = vpop.permute.xlu0 %2456
        %v2458 = vperm.slane %v2374, 7
        %v2459 = vlaneseq
        %v2460 = vshrl.u32 %v2459, 7
        %2462 = vset.pattern.permute.xlu0 %v2460
        %2463 = vperm.xlu0 %2462, %v2458
        %v2464 = vpop.permute.xlu0 %2463
        %v2465 = vlaneseq
        %v2466 = vshrl.u32 %v2465, 7
        %v2467 = vadd.s32 %v2466, 8
        %2468 = vset.pattern.permute.xlu0 %v2467
        %2469 = vperm.xlu0 %2468, %v2458
        %v2470 = vpop.permute.xlu0 %2469
        %v2471 = vperm.slane %v2375, 0
        %v2472 = vlaneseq
        %v2473 = vshrl.u32 %v2472, 7
        %2475 = vset.pattern.permute.xlu0 %v2473
        %2476 = vperm.xlu0 %2475, %v2471
        %v2477 = vpop.permute.xlu0 %2476
        %v2478 = vlaneseq
        %v2479 = vshrl.u32 %v2478, 7
        %v2480 = vadd.s32 %v2479, 8
        %2481 = vset.pattern.permute.xlu0 %v2480
        %2482 = vperm.xlu0 %2481, %v2471
        %v2483 = vpop.permute.xlu0 %2482
        %v2484 = vperm.slane %v2375, 1
        %v2485 = vlaneseq
        %v2486 = vshrl.u32 %v2485, 7
        %2488 = vset.pattern.permute.xlu0 %v2486
        %2489 = vperm.xlu0 %2488, %v2484
        %v2490 = vpop.permute.xlu0 %2489
        %v2491 = vlaneseq
        %v2492 = vshrl.u32 %v2491, 7
        %v2493 = vadd.s32 %v2492, 8
        %2494 = vset.pattern.permute.xlu0 %v2493
        %2495 = vperm.xlu0 %2494, %v2484
        %v2496 = vpop.permute.xlu0 %2495
        %v2497 = vperm.slane %v2375, 2
        %v2498 = vlaneseq
        %v2499 = vshrl.u32 %v2498, 7
        %2501 = vset.pattern.permute.xlu0 %v2499
        %2502 = vperm.xlu0 %2501, %v2497
        %v2503 = vpop.permute.xlu0 %2502
        %v2504 = vlaneseq
        %v2505 = vshrl.u32 %v2504, 7
        %v2506 = vadd.s32 %v2505, 8
        %2507 = vset.pattern.permute.xlu0 %v2506
        %2508 = vperm.xlu0 %2507, %v2497
        %v2509 = vpop.permute.xlu0 %2508
        %v2510 = vperm.slane %v2375, 3
        %v2511 = vlaneseq
        %v2512 = vshrl.u32 %v2511, 7
        %2514 = vset.pattern.permute.xlu0 %v2512
        %2515 = vperm.xlu0 %2514, %v2510
        %v2516 = vpop.permute.xlu0 %2515
        %v2517 = vlaneseq
        %v2518 = vshrl.u32 %v2517, 7
        %v2519 = vadd.s32 %v2518, 8
        %2520 = vset.pattern.permute.xlu0 %v2519
        %2521 = vperm.xlu0 %2520, %v2510
        %v2522 = vpop.permute.xlu0 %2521
        %v2523 = vperm.slane %v2375, 4
        %v2524 = vlaneseq
        %v2525 = vshrl.u32 %v2524, 7
        %2527 = vset.pattern.permute.xlu0 %v2525
        %2528 = vperm.xlu0 %2527, %v2523
        %v2529 = vpop.permute.xlu0 %2528
        %v2530 = vlaneseq
        %v2531 = vshrl.u32 %v2530, 7
        %v2532 = vadd.s32 %v2531, 8
        %2533 = vset.pattern.permute.xlu0 %v2532
        %2534 = vperm.xlu0 %2533, %v2523
        %v2535 = vpop.permute.xlu0 %2534
        %v2536 = vperm.slane %v2375, 5
        %v2537 = vlaneseq
        %v2538 = vshrl.u32 %v2537, 7
        %2540 = vset.pattern.permute.xlu0 %v2538
        %2541 = vperm.xlu0 %2540, %v2536
        %v2542 = vpop.permute.xlu0 %2541
        %v2543 = vlaneseq
        %v2544 = vshrl.u32 %v2543, 7
        %v2545 = vadd.s32 %v2544, 8
        %2546 = vset.pattern.permute.xlu0 %v2545
        %2547 = vperm.xlu0 %2546, %v2536
        %v2548 = vpop.permute.xlu0 %2547
        %v2549 = vperm.slane %v2375, 6
        %v2550 = vlaneseq
        %v2551 = vshrl.u32 %v2550, 7
        %2553 = vset.pattern.permute.xlu0 %v2551
        %2554 = vperm.xlu0 %2553, %v2549
        %v2555 = vpop.permute.xlu0 %2554
        %v2556 = vlaneseq
        %v2557 = vshrl.u32 %v2556, 7
        %v2558 = vadd.s32 %v2557, 8
        %2559 = vset.pattern.permute.xlu0 %v2558
        %2560 = vperm.xlu0 %2559, %v2549
        %v2561 = vpop.permute.xlu0 %2560
        %v2562 = vperm.slane %v2375, 7
        %v2563 = vlaneseq
        %v2564 = vshrl.u32 %v2563, 7
        %2566 = vset.pattern.permute.xlu0 %v2564
        %2567 = vperm.xlu0 %2566, %v2562
        %v2568 = vpop.permute.xlu0 %2567
        %v2569 = vlaneseq
        %v2570 = vshrl.u32 %v2569, 7
        %v2571 = vadd.s32 %v2570, 8
        %2572 = vset.pattern.permute.xlu0 %v2571
        %2573 = vperm.xlu0 %2572, %v2562
        %v2574 = vpop.permute.xlu0 %2573
        %v2575 = vperm.slane %v2376, 0
        %v2576 = vlaneseq
        %v2577 = vshrl.u32 %v2576, 7
        %2579 = vset.pattern.permute.xlu0 %v2577
        %2580 = vperm.xlu0 %2579, %v2575
        %v2581 = vpop.permute.xlu0 %2580
        %v2582 = vlaneseq
        %v2583 = vshrl.u32 %v2582, 7
        %v2584 = vadd.s32 %v2583, 8
        %2585 = vset.pattern.permute.xlu0 %v2584
        %2586 = vperm.xlu0 %2585, %v2575
        %v2587 = vpop.permute.xlu0 %2586
        %v2620 = vadd.f32 %v2274, %v2386
        %v2621 = vadd.f32 %v2275, %v2392
        %v2622 = vadd.f32 %v2276, %v2399
        %v2623 = vadd.f32 %v2277, %v2405
        %v2624 = vadd.f32 %v2278, %v2412
        %v2625 = vadd.f32 %v2279, %v2418
        %v2626 = vadd.f32 %v2280, %v2425
        %v2627 = vadd.f32 %v2281, %v2431
        %v2628 = vadd.f32 %v2282, %v2438
        %v2629 = vadd.f32 %v2283, %v2444
        %v2630 = vadd.f32 %v2284, %v2451
        %v2631 = vadd.f32 %v2285, %v2457
        %v2632 = vadd.f32 %v2286, %v2464
        %v2633 = vadd.f32 %v2287, %v2470
        %v2634 = vadd.f32 %v2288, %v2477
        %v2635 = vadd.f32 %v2289, %v2483
        %v2636 = vadd.f32 %v2290, %v2490
        %v2637 = vadd.f32 %v2291, %v2496
        %v2638 = vadd.f32 %v2292, %v2503
        %v2639 = vadd.f32 %v2293, %v2509
        %v2640 = vadd.f32 %v2294, %v2516
        %v2641 = vadd.f32 %v2295, %v2522
        %v2642 = vadd.f32 %v2296, %v2529
        %v2643 = vadd.f32 %v2297, %v2535
        %v2644 = vadd.f32 %v2298, %v2542
        %v2645 = vadd.f32 %v2299, %v2548
        %v2646 = vadd.f32 %v2300, %v2555
        %v2647 = vadd.f32 %v2301, %v2561
        %v2648 = vadd.f32 %v2302, %v2568
        %v2649 = vadd.f32 %v2303, %v2574
        %v2650 = vadd.f32 %v2304, %v2581
        %v2651 = vadd.f32 %v2305, %v2587
        %2682 = vset.pattern.permute.xlu0 0
        %2683 = vperm.xlu0 %2682, %v2620
        %v2684 = vpop.permute.xlu0 %2683
        %2685 = vset.pattern.permute.xlu0 0
        %2686 = vperm.xlu0 %2685, %v2621
        %v2687 = vpop.permute.xlu0 %2686
        %2688 = vset.pattern.permute.xlu0 0
        %2689 = vperm.xlu0 %2688, %v2622
        %v2690 = vpop.permute.xlu0 %2689
        %2691 = vset.pattern.permute.xlu0 0
        %2692 = vperm.xlu0 %2691, %v2623
        %v2693 = vpop.permute.xlu0 %2692
        %2694 = vset.pattern.permute.xlu0 0
        %2695 = vperm.xlu0 %2694, %v2624
        %v2696 = vpop.permute.xlu0 %2695
        %2697 = vset.pattern.permute.xlu0 0
        %2698 = vperm.xlu0 %2697, %v2625
        %v2699 = vpop.permute.xlu0 %2698
        %2700 = vset.pattern.permute.xlu0 0
        %2701 = vperm.xlu0 %2700, %v2626
        %v2702 = vpop.permute.xlu0 %2701
        %2703 = vset.pattern.permute.xlu0 0
        %2704 = vperm.xlu0 %2703, %v2627
        %v2705 = vpop.permute.xlu0 %2704
        %2706 = vset.pattern.permute.xlu0 0
        %2707 = vperm.xlu0 %2706, %v2628
        %v2708 = vpop.permute.xlu0 %2707
        %2709 = vset.pattern.permute.xlu0 0
        %2710 = vperm.xlu0 %2709, %v2629
        %v2711 = vpop.permute.xlu0 %2710
        %2712 = vset.pattern.permute.xlu0 0
        %2713 = vperm.xlu0 %2712, %v2630
        %v2714 = vpop.permute.xlu0 %2713
        %2715 = vset.pattern.permute.xlu0 0
        %2716 = vperm.xlu0 %2715, %v2631
        %v2717 = vpop.permute.xlu0 %2716
        %2718 = vset.pattern.permute.xlu0 0
        %2719 = vperm.xlu0 %2718, %v2632
        %v2720 = vpop.permute.xlu0 %2719
        %2721 = vset.pattern.permute.xlu0 0
        %2722 = vperm.xlu0 %2721, %v2633
        %v2723 = vpop.permute.xlu0 %2722
        %2724 = vset.pattern.permute.xlu0 0
        %2725 = vperm.xlu0 %2724, %v2634
        %v2726 = vpop.permute.xlu0 %2725
        %2727 = vset.pattern.permute.xlu0 0
        %2728 = vperm.xlu0 %2727, %v2635
        %v2729 = vpop.permute.xlu0 %2728
        %2730 = vset.pattern.permute.xlu0 0
        %2731 = vperm.xlu0 %2730, %v2636
        %v2732 = vpop.permute.xlu0 %2731
        %2733 = vset.pattern.permute.xlu0 0
        %2734 = vperm.xlu0 %2733, %v2637
        %v2735 = vpop.permute.xlu0 %2734
        %2736 = vset.pattern.permute.xlu0 0
        %2737 = vperm.xlu0 %2736, %v2638
        %v2738 = vpop.permute.xlu0 %2737
        %2739 = vset.pattern.permute.xlu0 0
        %2740 = vperm.xlu0 %2739, %v2639
        %v2741 = vpop.permute.xlu0 %2740
        %2742 = vset.pattern.permute.xlu0 0
        %2743 = vperm.xlu0 %2742, %v2640
        %v2744 = vpop.permute.xlu0 %2743
        %2745 = vset.pattern.permute.xlu0 0
        %2746 = vperm.xlu0 %2745, %v2641
        %v2747 = vpop.permute.xlu0 %2746
        %2748 = vset.pattern.permute.xlu0 0
        %2749 = vperm.xlu0 %2748, %v2642
        %v2750 = vpop.permute.xlu0 %2749
        %2751 = vset.pattern.permute.xlu0 0
        %2752 = vperm.xlu0 %2751, %v2643
        %v2753 = vpop.permute.xlu0 %2752
        %2754 = vset.pattern.permute.xlu0 0
        %2755 = vperm.xlu0 %2754, %v2644
        %v2756 = vpop.permute.xlu0 %2755
        %2757 = vset.pattern.permute.xlu0 0
        %2758 = vperm.xlu0 %2757, %v2645
        %v2759 = vpop.permute.xlu0 %2758
        %2760 = vset.pattern.permute.xlu0 0
        %2761 = vperm.xlu0 %2760, %v2646
        %v2762 = vpop.permute.xlu0 %2761
        %2763 = vset.pattern.permute.xlu0 0
        %2764 = vperm.xlu0 %2763, %v2647
        %v2765 = vpop.permute.xlu0 %2764
        %2766 = vset.pattern.permute.xlu0 0
        %2767 = vperm.xlu0 %2766, %v2648
        %v2768 = vpop.permute.xlu0 %2767
        %2769 = vset.pattern.permute.xlu0 0
        %2770 = vperm.xlu0 %2769, %v2649
        %v2771 = vpop.permute.xlu0 %2770
        %v2772 = vperm.slane %v2684, %v1181
        %v2773 = vadd.s32 %v1181, 4294967288
        %v2774 = vperm.slane %v2687, %v2773
        %vm2775 = vcmask 130112
        %v2776 = vsel %vm2775, %v2774, %v2772
        %v2777 = vperm.slane %v2690, %v1181
        %v2778 = vperm.slane %v2693, %v2773
        %v2779 = vsel %vm2775, %v2778, %v2777
        %v2780 = vperm.slane %v2696, %v1181
        %v2781 = vperm.slane %v2699, %v2773
        %v2782 = vsel %vm2775, %v2781, %v2780
        %v2783 = vperm.slane %v2702, %v1181
        %v2784 = vperm.slane %v2705, %v2773
        %v2785 = vsel %vm2775, %v2784, %v2783
        %v2786 = vperm.slane %v2708, %v1181
        %v2787 = vperm.slane %v2711, %v2773
        %v2788 = vsel %vm2775, %v2787, %v2786
        %v2789 = vperm.slane %v2714, %v1181
        %v2790 = vperm.slane %v2717, %v2773
        %v2791 = vsel %vm2775, %v2790, %v2789
        %v2792 = vperm.slane %v2720, %v1181
        %v2793 = vperm.slane %v2723, %v2773
        %v2794 = vsel %vm2775, %v2793, %v2792
        %v2795 = vperm.slane %v2726, %v1181
        %v2796 = vperm.slane %v2729, %v2773
        %v2797 = vsel %vm2775, %v2796, %v2795
        %v2798 = vperm.slane %v2732, %v1181
        %v2799 = vperm.slane %v2735, %v2773
        %v2800 = vsel %vm2775, %v2799, %v2798
        %v2801 = vperm.slane %v2738, %v1181
        %v2802 = vperm.slane %v2741, %v2773
        %v2803 = vsel %vm2775, %v2802, %v2801
        %v2804 = vperm.slane %v2744, %v1181
        %v2805 = vperm.slane %v2747, %v2773
        %v2806 = vsel %vm2775, %v2805, %v2804
        %v2807 = vperm.slane %v2750, %v1181
        %v2808 = vperm.slane %v2753, %v2773
        %v2809 = vsel %vm2775, %v2808, %v2807
        %v2810 = vperm.slane %v2756, %v1181
        %v2811 = vperm.slane %v2759, %v2773
        %v2812 = vsel %vm2775, %v2811, %v2810
        %v2813 = vperm.slane %v2762, %v1181
        %v2814 = vperm.slane %v2765, %v2773
        %v2815 = vsel %vm2775, %v2814, %v2813
        %v2816 = vperm.slane %v2768, %v1181
        %v2817 = vperm.slane %v2771, %v2773
        %v2818 = vsel %vm2775, %v2817, %v2816
        %v2819 = vsel %vm2008, %v2779, %v2776
        %v2820 = vsel %vm2010, %v2782, %v2819
        %v2821 = vsel %vm2012, %v2785, %v2820
        %v2822 = vsel %vm2014, %v2788, %v2821
        %v2823 = vsel %vm2016, %v2791, %v2822
        %v2824 = vsel %vm2018, %v2794, %v2823
        %v2825 = vsel %vm2006, %v2800, %v2797
        %v2826 = vsel %vm2008, %v2803, %v2825
        %v2827 = vsel %vm2010, %v2806, %v2826
        %v2828 = vsel %vm2012, %v2809, %v2827
        %v2829 = vsel %vm2014, %v2812, %v2828
        %v2830 = vsel %vm2016, %v2815, %v2829
        %v2831 = vsel %vm2018, %v2818, %v2830
        %vm2833 = vcmask 1040384
        %v2834 = vsel %vm2833, 0.0, %v2824
        %v2836 = vperm.slane %v2834, 0
        %v2837 = vlaneseq
        %v2838 = vshrl.u32 %v2837, 7
        %2840 = vset.pattern.permute.xlu0 %v2838
        %2841 = vperm.xlu0 %2840, %v2836
        %v2842 = vpop.permute.xlu0 %2841
        %v2843 = vlaneseq
        %v2844 = vshrl.u32 %v2843, 7
        %v2845 = vadd.s32 %v2844, 8
        %2846 = vset.pattern.permute.xlu0 %v2845
        %2847 = vperm.xlu0 %2846, %v2836
        %v2848 = vpop.permute.xlu0 %2847
        %v2849 = vperm.slane %v2834, 1
        %v2850 = vlaneseq
        %v2851 = vshrl.u32 %v2850, 7
        %2853 = vset.pattern.permute.xlu0 %v2851
        %2854 = vperm.xlu0 %2853, %v2849
        %v2855 = vpop.permute.xlu0 %2854
        %v2856 = vlaneseq
        %v2857 = vshrl.u32 %v2856, 7
        %v2858 = vadd.s32 %v2857, 8
        %2859 = vset.pattern.permute.xlu0 %v2858
        %2860 = vperm.xlu0 %2859, %v2849
        %v2861 = vpop.permute.xlu0 %2860
        %v2862 = vperm.slane %v2834, 2
        %v2863 = vlaneseq
        %v2864 = vshrl.u32 %v2863, 7
        %2866 = vset.pattern.permute.xlu0 %v2864
        %2867 = vperm.xlu0 %2866, %v2862
        %v2868 = vpop.permute.xlu0 %2867
        %v2869 = vlaneseq
        %v2870 = vshrl.u32 %v2869, 7
        %v2871 = vadd.s32 %v2870, 8
        %2872 = vset.pattern.permute.xlu0 %v2871
        %2873 = vperm.xlu0 %2872, %v2862
        %v2874 = vpop.permute.xlu0 %2873
        %v2875 = vperm.slane %v2834, 3
        %v2876 = vlaneseq
        %v2877 = vshrl.u32 %v2876, 7
        %2879 = vset.pattern.permute.xlu0 %v2877
        %2880 = vperm.xlu0 %2879, %v2875
        %v2881 = vpop.permute.xlu0 %2880
        %v2882 = vlaneseq
        %v2883 = vshrl.u32 %v2882, 7
        %v2884 = vadd.s32 %v2883, 8
        %2885 = vset.pattern.permute.xlu0 %v2884
        %2886 = vperm.xlu0 %2885, %v2875
        %v2887 = vpop.permute.xlu0 %2886
        %v2888 = vperm.slane %v2834, 4
        %v2889 = vlaneseq
        %v2890 = vshrl.u32 %v2889, 7
        %2892 = vset.pattern.permute.xlu0 %v2890
        %2893 = vperm.xlu0 %2892, %v2888
        %v2894 = vpop.permute.xlu0 %2893
        %v2895 = vlaneseq
        %v2896 = vshrl.u32 %v2895, 7
        %v2897 = vadd.s32 %v2896, 8
        %2898 = vset.pattern.permute.xlu0 %v2897
        %2899 = vperm.xlu0 %2898, %v2888
        %v2900 = vpop.permute.xlu0 %2899
        %v2901 = vperm.slane %v2834, 5
        %v2902 = vlaneseq
        %v2903 = vshrl.u32 %v2902, 7
        %2905 = vset.pattern.permute.xlu0 %v2903
        %2906 = vperm.xlu0 %2905, %v2901
        %v2907 = vpop.permute.xlu0 %2906
        %v2908 = vlaneseq
        %v2909 = vshrl.u32 %v2908, 7
        %v2910 = vadd.s32 %v2909, 8
        %2911 = vset.pattern.permute.xlu0 %v2910
        %2912 = vperm.xlu0 %2911, %v2901
        %v2913 = vpop.permute.xlu0 %2912
        %v2914 = vperm.slane %v2834, 6
        %v2915 = vlaneseq
        %v2916 = vshrl.u32 %v2915, 7
        %2918 = vset.pattern.permute.xlu0 %v2916
        %2919 = vperm.xlu0 %2918, %v2914
        %v2920 = vpop.permute.xlu0 %2919
        %v2921 = vlaneseq
        %v2922 = vshrl.u32 %v2921, 7
        %v2923 = vadd.s32 %v2922, 8
        %2924 = vset.pattern.permute.xlu0 %v2923
        %2925 = vperm.xlu0 %2924, %v2914
        %v2926 = vpop.permute.xlu0 %2925
        %v2927 = vperm.slane %v2834, 7
        %v2928 = vlaneseq
        %v2929 = vshrl.u32 %v2928, 7
        %2931 = vset.pattern.permute.xlu0 %v2929
        %2932 = vperm.xlu0 %2931, %v2927
        %v2933 = vpop.permute.xlu0 %2932
        %v2934 = vlaneseq
        %v2935 = vshrl.u32 %v2934, 7
        %v2936 = vadd.s32 %v2935, 8
        %2937 = vset.pattern.permute.xlu0 %v2936
        %2938 = vperm.xlu0 %2937, %v2927
        %v2939 = vpop.permute.xlu0 %2938
        %v2940 = vperm.slane %v2831, 0
        %v2941 = vlaneseq
        %v2942 = vshrl.u32 %v2941, 7
        %2944 = vset.pattern.permute.xlu0 %v2942
        %2945 = vperm.xlu0 %2944, %v2940
        %v2946 = vpop.permute.xlu0 %2945
        %v2947 = vlaneseq
        %v2948 = vshrl.u32 %v2947, 7
        %v2949 = vadd.s32 %v2948, 8
        %2950 = vset.pattern.permute.xlu0 %v2949
        %2951 = vperm.xlu0 %2950, %v2940
        %v2952 = vpop.permute.xlu0 %2951
        %v2953 = vperm.slane %v2831, 1
        %v2954 = vlaneseq
        %v2955 = vshrl.u32 %v2954, 7
        %2957 = vset.pattern.permute.xlu0 %v2955
        %2958 = vperm.xlu0 %2957, %v2953
        %v2959 = vpop.permute.xlu0 %2958
        %v2960 = vlaneseq
        %v2961 = vshrl.u32 %v2960, 7
        %v2962 = vadd.s32 %v2961, 8
        %2963 = vset.pattern.permute.xlu0 %v2962
        %2964 = vperm.xlu0 %2963, %v2953
        %v2965 = vpop.permute.xlu0 %2964
        %v2966 = vperm.slane %v2831, 2
        %v2967 = vlaneseq
        %v2968 = vshrl.u32 %v2967, 7
        %2970 = vset.pattern.permute.xlu0 %v2968
        %2971 = vperm.xlu0 %2970, %v2966
        %v2972 = vpop.permute.xlu0 %2971
        %v2973 = vlaneseq
        %v2974 = vshrl.u32 %v2973, 7
        %v2975 = vadd.s32 %v2974, 8
        %2976 = vset.pattern.permute.xlu0 %v2975
        %2977 = vperm.xlu0 %2976, %v2966
        %v2978 = vpop.permute.xlu0 %2977
        %v2979 = vperm.slane %v2831, 3
        %v2980 = vlaneseq
        %v2981 = vshrl.u32 %v2980, 7
        %2983 = vset.pattern.permute.xlu0 %v2981
        %2984 = vperm.xlu0 %2983, %v2979
        %v2985 = vpop.permute.xlu0 %2984
        %v2986 = vlaneseq
        %v2987 = vshrl.u32 %v2986, 7
        %v2988 = vadd.s32 %v2987, 8
        %2989 = vset.pattern.permute.xlu0 %v2988
        %2990 = vperm.xlu0 %2989, %v2979
        %v2991 = vpop.permute.xlu0 %2990
        %v2992 = vperm.slane %v2831, 4
        %v2993 = vlaneseq
        %v2994 = vshrl.u32 %v2993, 7
        %2996 = vset.pattern.permute.xlu0 %v2994
        %2997 = vperm.xlu0 %2996, %v2992
        %v2998 = vpop.permute.xlu0 %2997
        %v2999 = vlaneseq
        %v3000 = vshrl.u32 %v2999, 7
        %v3001 = vadd.s32 %v3000, 8
        %3002 = vset.pattern.permute.xlu0 %v3001
        %3003 = vperm.xlu0 %3002, %v2992
        %v3004 = vpop.permute.xlu0 %3003
        %v3005 = vperm.slane %v2831, 5
        %v3006 = vlaneseq
        %v3007 = vshrl.u32 %v3006, 7
        %3009 = vset.pattern.permute.xlu0 %v3007
        %3010 = vperm.xlu0 %3009, %v3005
        %v3011 = vpop.permute.xlu0 %3010
        %v3012 = vlaneseq
        %v3013 = vshrl.u32 %v3012, 7
        %v3014 = vadd.s32 %v3013, 8
        %3015 = vset.pattern.permute.xlu0 %v3014
        %3016 = vperm.xlu0 %3015, %v3005
        %v3017 = vpop.permute.xlu0 %3016
        %v3018 = vperm.slane %v2831, 6
        %v3019 = vlaneseq
        %v3020 = vshrl.u32 %v3019, 7
        %3022 = vset.pattern.permute.xlu0 %v3020
        %3023 = vperm.xlu0 %3022, %v3018
        %v3024 = vpop.permute.xlu0 %3023
        %v3025 = vlaneseq
        %v3026 = vshrl.u32 %v3025, 7
        %v3027 = vadd.s32 %v3026, 8
        %3028 = vset.pattern.permute.xlu0 %v3027
        %3029 = vperm.xlu0 %3028, %v3018
        %v3030 = vpop.permute.xlu0 %3029
        %v3031 = vperm.slane %v2831, 7
        %v3032 = vlaneseq
        %v3033 = vshrl.u32 %v3032, 7
        %3035 = vset.pattern.permute.xlu0 %v3033
        %3036 = vperm.xlu0 %3035, %v3031
        %v3037 = vpop.permute.xlu0 %3036
        %v3038 = vlaneseq
        %v3039 = vshrl.u32 %v3038, 7
        %v3040 = vadd.s32 %v3039, 8
        %3041 = vset.pattern.permute.xlu0 %v3040
        %3042 = vperm.xlu0 %3041, %v3031
        %v3043 = vpop.permute.xlu0 %3042
        %v3076 = vadd.f32 %v2620, %v2842
        %v3077 = vadd.f32 %v2621, %v2848
        %v3078 = vadd.f32 %v2622, %v2855
        %v3079 = vadd.f32 %v2623, %v2861
        %v3080 = vadd.f32 %v2624, %v2868
        %v3081 = vadd.f32 %v2625, %v2874
        %v3082 = vadd.f32 %v2626, %v2881
        %v3083 = vadd.f32 %v2627, %v2887
        %v3084 = vadd.f32 %v2628, %v2894
        %v3085 = vadd.f32 %v2629, %v2900
        %v3086 = vadd.f32 %v2630, %v2907
        %v3087 = vadd.f32 %v2631, %v2913
        %v3088 = vadd.f32 %v2632, %v2920
        %v3089 = vadd.f32 %v2633, %v2926
        %v3090 = vadd.f32 %v2634, %v2933
        %v3091 = vadd.f32 %v2635, %v2939
        %v3092 = vadd.f32 %v2636, %v2946
        %v3093 = vadd.f32 %v2637, %v2952
        %v3094 = vadd.f32 %v2638, %v2959
        %v3095 = vadd.f32 %v2639, %v2965
        %v3096 = vadd.f32 %v2640, %v2972
        %v3097 = vadd.f32 %v2641, %v2978
        %v3098 = vadd.f32 %v2642, %v2985
        %v3099 = vadd.f32 %v2643, %v2991
        %v3100 = vadd.f32 %v2644, %v2998
        %v3101 = vadd.f32 %v2645, %v3004
        %v3102 = vadd.f32 %v2646, %v3011
        %v3103 = vadd.f32 %v2647, %v3017
        %v3104 = vadd.f32 %v2648, %v3024
        %v3105 = vadd.f32 %v2649, %v3030
        %v3106 = vadd.f32 %v2650, %v3037
        %v3107 = vadd.f32 %v2651, %v3043
        %3110 = vset.pattern.permute.xlu0 0
        %3111 = vperm.xlu0 %3110, %v2650
        %v3112 = vpop.permute.xlu0 %3111
        %3113 = vset.pattern.permute.xlu0 0
        %3114 = vperm.xlu0 %3113, %v2651
        %v3115 = vpop.permute.xlu0 %3114
        %v3116 = vperm.slane %v3112, %v1181
        %v3117 = vperm.slane %v3115, %v2773
        %v3118 = vsel %vm2775, %v3117, %v3116
        %v3119 = vsel %vm2006, %v2782, %v2779
        %v3120 = vsel %vm2008, %v2785, %v3119
        %v3121 = vsel %vm2010, %v2788, %v3120
        %v3122 = vsel %vm2012, %v2791, %v3121
        %v3123 = vsel %vm2014, %v2794, %v3122
        %v3124 = vsel %vm2016, %v2797, %v3123
        %v3125 = vsel %vm2018, %v2800, %v3124
        %v3126 = vsel %vm2006, %v2806, %v2803
        %v3127 = vsel %vm2008, %v2809, %v3126
        %v3128 = vsel %vm2010, %v2812, %v3127
        %v3129 = vsel %vm2012, %v2815, %v3128
        %v3130 = vsel %vm2014, %v2818, %v3129
        %v3131 = vsel %vm2016, %v3118, %v3130
        %vm3133 = vcmask 1046528
        %v3134 = vsel %vm3133, %v3131, 0.0
        %v3136 = vperm.slane %v3125, 0
        %v3137 = vlaneseq
        %v3138 = vshrl.u32 %v3137, 7
        %3140 = vset.pattern.permute.xlu0 %v3138
        %3141 = vperm.xlu0 %3140, %v3136
        %v3142 = vpop.permute.xlu0 %3141
        %v3143 = vlaneseq
        %v3144 = vshrl.u32 %v3143, 7
        %v3145 = vadd.s32 %v3144, 8
        %3146 = vset.pattern.permute.xlu0 %v3145
        %3147 = vperm.xlu0 %3146, %v3136
        %v3148 = vpop.permute.xlu0 %3147
        %v3149 = vperm.slane %v3125, 1
        %v3150 = vlaneseq
        %v3151 = vshrl.u32 %v3150, 7
        %3153 = vset.pattern.permute.xlu0 %v3151
        %3154 = vperm.xlu0 %3153, %v3149
        %v3155 = vpop.permute.xlu0 %3154
        %v3156 = vlaneseq
        %v3157 = vshrl.u32 %v3156, 7
        %v3158 = vadd.s32 %v3157, 8
        %3159 = vset.pattern.permute.xlu0 %v3158
        %3160 = vperm.xlu0 %3159, %v3149
        %v3161 = vpop.permute.xlu0 %3160
        %v3162 = vperm.slane %v3125, 2
        %v3163 = vlaneseq
        %v3164 = vshrl.u32 %v3163, 7
        %3166 = vset.pattern.permute.xlu0 %v3164
        %3167 = vperm.xlu0 %3166, %v3162
        %v3168 = vpop.permute.xlu0 %3167
        %v3169 = vlaneseq
        %v3170 = vshrl.u32 %v3169, 7
        %v3171 = vadd.s32 %v3170, 8
        %3172 = vset.pattern.permute.xlu0 %v3171
        %3173 = vperm.xlu0 %3172, %v3162
        %v3174 = vpop.permute.xlu0 %3173
        %v3175 = vperm.slane %v3125, 3
        %v3176 = vlaneseq
        %v3177 = vshrl.u32 %v3176, 7
        %3179 = vset.pattern.permute.xlu0 %v3177
        %3180 = vperm.xlu0 %3179, %v3175
        %v3181 = vpop.permute.xlu0 %3180
        %v3182 = vlaneseq
        %v3183 = vshrl.u32 %v3182, 7
        %v3184 = vadd.s32 %v3183, 8
        %3185 = vset.pattern.permute.xlu0 %v3184
        %3186 = vperm.xlu0 %3185, %v3175
        %v3187 = vpop.permute.xlu0 %3186
        %v3188 = vperm.slane %v3125, 4
        %v3189 = vlaneseq
        %v3190 = vshrl.u32 %v3189, 7
        %3192 = vset.pattern.permute.xlu0 %v3190
        %3193 = vperm.xlu0 %3192, %v3188
        %v3194 = vpop.permute.xlu0 %3193
        %v3195 = vlaneseq
        %v3196 = vshrl.u32 %v3195, 7
        %v3197 = vadd.s32 %v3196, 8
        %3198 = vset.pattern.permute.xlu0 %v3197
        %3199 = vperm.xlu0 %3198, %v3188
        %v3200 = vpop.permute.xlu0 %3199
        %v3201 = vperm.slane %v3125, 5
        %v3202 = vlaneseq
        %v3203 = vshrl.u32 %v3202, 7
        %3205 = vset.pattern.permute.xlu0 %v3203
        %3206 = vperm.xlu0 %3205, %v3201
        %v3207 = vpop.permute.xlu0 %3206
        %v3208 = vlaneseq
        %v3209 = vshrl.u32 %v3208, 7
        %v3210 = vadd.s32 %v3209, 8
        %3211 = vset.pattern.permute.xlu0 %v3210
        %3212 = vperm.xlu0 %3211, %v3201
        %v3213 = vpop.permute.xlu0 %3212
        %v3214 = vperm.slane %v3125, 6
        %v3215 = vlaneseq
        %v3216 = vshrl.u32 %v3215, 7
        %3218 = vset.pattern.permute.xlu0 %v3216
        %3219 = vperm.xlu0 %3218, %v3214
        %v3220 = vpop.permute.xlu0 %3219
        %v3221 = vlaneseq
        %v3222 = vshrl.u32 %v3221, 7
        %v3223 = vadd.s32 %v3222, 8
        %3224 = vset.pattern.permute.xlu0 %v3223
        %3225 = vperm.xlu0 %3224, %v3214
        %v3226 = vpop.permute.xlu0 %3225
        %v3227 = vperm.slane %v3125, 7
        %v3228 = vlaneseq
        %v3229 = vshrl.u32 %v3228, 7
        %3231 = vset.pattern.permute.xlu0 %v3229
        %3232 = vperm.xlu0 %3231, %v3227
        %v3233 = vpop.permute.xlu0 %3232
        %v3234 = vlaneseq
        %v3235 = vshrl.u32 %v3234, 7
        %v3236 = vadd.s32 %v3235, 8
        %3237 = vset.pattern.permute.xlu0 %v3236
        %3238 = vperm.xlu0 %3237, %v3227
        %v3239 = vpop.permute.xlu0 %3238
        %v3240 = vperm.slane %v3134, 0
        %v3241 = vlaneseq
        %v3242 = vshrl.u32 %v3241, 7
        %3244 = vset.pattern.permute.xlu0 %v3242
        %3245 = vperm.xlu0 %3244, %v3240
        %v3246 = vpop.permute.xlu0 %3245
        %v3247 = vlaneseq
        %v3248 = vshrl.u32 %v3247, 7
        %v3249 = vadd.s32 %v3248, 8
        %3250 = vset.pattern.permute.xlu0 %v3249
        %3251 = vperm.xlu0 %3250, %v3240
        %v3252 = vpop.permute.xlu0 %3251
        %v3253 = vperm.slane %v3134, 1
        %v3254 = vlaneseq
        %v3255 = vshrl.u32 %v3254, 7
        %3257 = vset.pattern.permute.xlu0 %v3255
        %3258 = vperm.xlu0 %3257, %v3253
        %v3259 = vpop.permute.xlu0 %3258
        %v3260 = vlaneseq
        %v3261 = vshrl.u32 %v3260, 7
        %v3262 = vadd.s32 %v3261, 8
        %3263 = vset.pattern.permute.xlu0 %v3262
        %3264 = vperm.xlu0 %3263, %v3253
        %v3265 = vpop.permute.xlu0 %3264
        %v3266 = vperm.slane %v3134, 2
        %v3267 = vlaneseq
        %v3268 = vshrl.u32 %v3267, 7
        %3270 = vset.pattern.permute.xlu0 %v3268
        %3271 = vperm.xlu0 %3270, %v3266
        %v3272 = vpop.permute.xlu0 %3271
        %v3273 = vlaneseq
        %v3274 = vshrl.u32 %v3273, 7
        %v3275 = vadd.s32 %v3274, 8
        %3276 = vset.pattern.permute.xlu0 %v3275
        %3277 = vperm.xlu0 %3276, %v3266
        %v3278 = vpop.permute.xlu0 %3277
        %v3279 = vperm.slane %v3134, 3
        %v3280 = vlaneseq
        %v3281 = vshrl.u32 %v3280, 7
        %3283 = vset.pattern.permute.xlu0 %v3281
        %3284 = vperm.xlu0 %3283, %v3279
        %v3285 = vpop.permute.xlu0 %3284
        %v3286 = vlaneseq
        %v3287 = vshrl.u32 %v3286, 7
        %v3288 = vadd.s32 %v3287, 8
        %3289 = vset.pattern.permute.xlu0 %v3288
        %3290 = vperm.xlu0 %3289, %v3279
        %v3291 = vpop.permute.xlu0 %3290
        %v3292 = vperm.slane %v3134, 4
        %v3293 = vlaneseq
        %v3294 = vshrl.u32 %v3293, 7
        %3296 = vset.pattern.permute.xlu0 %v3294
        %3297 = vperm.xlu0 %3296, %v3292
        %v3298 = vpop.permute.xlu0 %3297
        %v3299 = vlaneseq
        %v3300 = vshrl.u32 %v3299, 7
        %v3301 = vadd.s32 %v3300, 8
        %3302 = vset.pattern.permute.xlu0 %v3301
        %3303 = vperm.xlu0 %3302, %v3292
        %v3304 = vpop.permute.xlu0 %3303
        %v3305 = vperm.slane %v3134, 5
        %v3306 = vlaneseq
        %v3307 = vshrl.u32 %v3306, 7
        %3309 = vset.pattern.permute.xlu0 %v3307
        %3310 = vperm.xlu0 %3309, %v3305
        %v3311 = vpop.permute.xlu0 %3310
        %v3312 = vlaneseq
        %v3313 = vshrl.u32 %v3312, 7
        %v3314 = vadd.s32 %v3313, 8
        %3315 = vset.pattern.permute.xlu0 %v3314
        %3316 = vperm.xlu0 %3315, %v3305
        %v3317 = vpop.permute.xlu0 %3316
        %v3318 = vperm.slane %v3134, 6
        %v3319 = vlaneseq
        %v3320 = vshrl.u32 %v3319, 7
        %3322 = vset.pattern.permute.xlu0 %v3320
        %3323 = vperm.xlu0 %3322, %v3318
        %v3324 = vpop.permute.xlu0 %3323
        %v3325 = vlaneseq
        %v3326 = vshrl.u32 %v3325, 7
        %v3327 = vadd.s32 %v3326, 8
        %3328 = vset.pattern.permute.xlu0 %v3327
        %3329 = vperm.xlu0 %3328, %v3318
        %v3330 = vpop.permute.xlu0 %3329
        %v3331 = vperm.slane %v3134, 7
        %v3332 = vlaneseq
        %v3333 = vshrl.u32 %v3332, 7
        %3335 = vset.pattern.permute.xlu0 %v3333
        %3336 = vperm.xlu0 %3335, %v3331
        %v3337 = vpop.permute.xlu0 %3336
        %v3338 = vlaneseq
        %v3339 = vshrl.u32 %v3338, 7
        %v3340 = vadd.s32 %v3339, 8
        %3341 = vset.pattern.permute.xlu0 %v3340
        %3342 = vperm.xlu0 %3341, %v3331
        %v3343 = vpop.permute.xlu0 %3342
        %v3376 = vadd.f32 %v3076, %v3142
        %v3377 = vadd.f32 %v3077, %v3148
        %v3378 = vadd.f32 %v3078, %v3155
        %v3379 = vadd.f32 %v3079, %v3161
        %v3380 = vadd.f32 %v3080, %v3168
        %v3381 = vadd.f32 %v3081, %v3174
        %v3382 = vadd.f32 %v3082, %v3181
        %v3383 = vadd.f32 %v3083, %v3187
        %v3384 = vadd.f32 %v3084, %v3194
        %v3385 = vadd.f32 %v3085, %v3200
        %v3386 = vadd.f32 %v3086, %v3207
        %v3387 = vadd.f32 %v3087, %v3213
        %v3388 = vadd.f32 %v3088, %v3220
        %v3389 = vadd.f32 %v3089, %v3226
        %v3390 = vadd.f32 %v3090, %v3233
        %v3391 = vadd.f32 %v3091, %v3239
        %v3392 = vadd.f32 %v3092, %v3246
        %v3393 = vadd.f32 %v3093, %v3252
        %v3394 = vadd.f32 %v3094, %v3259
        %v3395 = vadd.f32 %v3095, %v3265
        %v3396 = vadd.f32 %v3096, %v3272
        %v3397 = vadd.f32 %v3097, %v3278
        %v3398 = vadd.f32 %v3098, %v3285
        %v3399 = vadd.f32 %v3099, %v3291
        %v3400 = vadd.f32 %v3100, %v3298
        %v3401 = vadd.f32 %v3101, %v3304
        %v3402 = vadd.f32 %v3102, %v3311
        %v3403 = vadd.f32 %v3103, %v3317
        %v3404 = vadd.f32 %v3104, %v3324
        %v3405 = vadd.f32 %v3105, %v3330
        %v3406 = vadd.f32 %v3106, %v3337
        %v3407 = vadd.f32 %v3107, %v3343
        %v3408 = vmul.f32 %v3376, 0.11111111
        %v3409 = vmul.f32 %v3377, 0.11111111
        %v3410 = vmul.f32 %v3378, 0.11111111
        %v3411 = vmul.f32 %v3379, 0.11111111
        %v3412 = vmul.f32 %v3380, 0.11111111
        %v3413 = vmul.f32 %v3381, 0.11111111
        %v3414 = vmul.f32 %v3382, 0.11111111
        %v3415 = vmul.f32 %v3383, 0.11111111
        %v3416 = vmul.f32 %v3384, 0.11111111
        %v3417 = vmul.f32 %v3385, 0.11111111
        %v3418 = vmul.f32 %v3386, 0.11111111
        %v3419 = vmul.f32 %v3387, 0.11111111
        %v3420 = vmul.f32 %v3388, 0.11111111
        %v3421 = vmul.f32 %v3389, 0.11111111
        %v3422 = vmul.f32 %v3390, 0.11111111
        %v3423 = vmul.f32 %v3391, 0.11111111
        %v3424 = vmul.f32 %v3392, 0.11111111
        %v3425 = vmul.f32 %v3393, 0.11111111
        %v3426 = vmul.f32 %v3394, 0.11111111
        %v3427 = vmul.f32 %v3395, 0.11111111
        %v3428 = vmul.f32 %v3396, 0.11111111
        %v3429 = vmul.f32 %v3397, 0.11111111
        %v3430 = vmul.f32 %v3398, 0.11111111
        %v3431 = vmul.f32 %v3399, 0.11111111
        %v3432 = vmul.f32 %v3400, 0.11111111
        %v3433 = vmul.f32 %v3401, 0.11111111
        %v3434 = vmul.f32 %v3402, 0.11111111
        %v3435 = vmul.f32 %v3403, 0.11111111
        %v3436 = vmul.f32 %v3404, 0.11111111
        %v3437 = vmul.f32 %v3405, 0.11111111
        %v3438 = vmul.f32 %v3406, 0.11111111
        %v3439 = vmul.f32 %v3407, 0.11111111
        %v3472 = vperm.slane %v1349, %v1955
        %v3473 = vperm.slane %v1352, %v1957
        %v3474 = vsel %vm1959, %v3473, %v3472
        %v3475 = vperm.slane %v1355, %v1955
        %v3476 = vperm.slane %v1358, %v1957
        %v3477 = vsel %vm1959, %v3476, %v3475
        %v3478 = vperm.slane %v1361, %v1955
        %v3479 = vperm.slane %v1364, %v1957
        %v3480 = vsel %vm1959, %v3479, %v3478
        %v3481 = vperm.slane %v1367, %v1955
        %v3482 = vperm.slane %v1370, %v1957
        %v3483 = vsel %vm1959, %v3482, %v3481
        %v3484 = vperm.slane %v1373, %v1955
        %v3485 = vperm.slane %v1376, %v1957
        %v3486 = vsel %vm1959, %v3485, %v3484
        %v3487 = vperm.slane %v1379, %v1955
        %v3488 = vperm.slane %v1382, %v1957
        %v3489 = vsel %vm1959, %v3488, %v3487
        %v3490 = vperm.slane %v1385, %v1955
        %v3491 = vperm.slane %v1388, %v1957
        %v3492 = vsel %vm1959, %v3491, %v3490
        %v3493 = vperm.slane %v1391, %v1955
        %v3494 = vperm.slane %v1394, %v1957
        %v3495 = vsel %vm1959, %v3494, %v3493
        %v3496 = vperm.slane %v1397, %v1955
        %v3497 = vperm.slane %v1400, %v1957
        %v3498 = vsel %vm1959, %v3497, %v3496
        %v3499 = vperm.slane %v1403, %v1955
        %v3500 = vperm.slane %v1406, %v1957
        %v3501 = vsel %vm1959, %v3500, %v3499
        %v3502 = vperm.slane %v1409, %v1955
        %v3503 = vperm.slane %v1412, %v1957
        %v3504 = vsel %vm1959, %v3503, %v3502
        %v3505 = vperm.slane %v1415, %v1955
        %v3506 = vperm.slane %v1418, %v1957
        %v3507 = vsel %vm1959, %v3506, %v3505
        %v3508 = vperm.slane %v1421, %v1955
        %v3509 = vperm.slane %v1424, %v1957
        %v3510 = vsel %vm1959, %v3509, %v3508
        %v3511 = vperm.slane %v1427, %v1955
        %v3512 = vperm.slane %v1430, %v1957
        %v3513 = vsel %vm1959, %v3512, %v3511
        %v3514 = vperm.slane %v1433, %v1955
        %v3515 = vperm.slane %v1436, %v1957
        %v3516 = vsel %vm1959, %v3515, %v3514
        %v3517 = vperm.slane %v1439, %v1955
        %v3518 = vperm.slane %v1442, %v1957
        %v3519 = vsel %vm1959, %v3518, %v3517
        %v3520 = vsel %vm2006, %v3477, %v3474
        %v3521 = vsel %vm2008, %v3480, %v3520
        %v3522 = vsel %vm2010, %v3483, %v3521
        %v3523 = vsel %vm2012, %v3486, %v3522
        %v3524 = vsel %vm2014, %v3489, %v3523
        %v3525 = vsel %vm2016, %v3492, %v3524
        %v3526 = vsel %vm2018, %v3495, %v3525
        %v3527 = vsel %vm2006, %v3501, %v3498
        %v3528 = vsel %vm2008, %v3504, %v3527
        %v3529 = vsel %vm2010, %v3507, %v3528
        %v3530 = vsel %vm2012, %v3510, %v3529
        %v3531 = vsel %vm2014, %v3513, %v3530
        %v3532 = vsel %vm2016, %v3516, %v3531
        %v3533 = vsel %vm2018, %v3519, %v3532
        %v3536 = vsel %vm2029, 0.0, %v3526
        %v3537 = vsel %vm2029, 0.0, %v3533
        %v3540 = vperm.slane %v3536, 0
        %v3541 = vlaneseq
        %v3542 = vshrl.u32 %v3541, 7
        %3544 = vset.pattern.permute.xlu0 %v3542
        %3545 = vperm.xlu0 %3544, %v3540
        %v3546 = vpop.permute.xlu0 %3545
        %v3547 = vlaneseq
        %v3548 = vshrl.u32 %v3547, 7
        %v3549 = vadd.s32 %v3548, 8
        %3550 = vset.pattern.permute.xlu0 %v3549
        %3551 = vperm.xlu0 %3550, %v3540
        %v3552 = vpop.permute.xlu0 %3551
        %v3553 = vperm.slane %v3536, 1
        %v3554 = vlaneseq
        %v3555 = vshrl.u32 %v3554, 7
        %3557 = vset.pattern.permute.xlu0 %v3555
        %3558 = vperm.xlu0 %3557, %v3553
        %v3559 = vpop.permute.xlu0 %3558
        %v3560 = vlaneseq
        %v3561 = vshrl.u32 %v3560, 7
        %v3562 = vadd.s32 %v3561, 8
        %3563 = vset.pattern.permute.xlu0 %v3562
        %3564 = vperm.xlu0 %3563, %v3553
        %v3565 = vpop.permute.xlu0 %3564
        %v3566 = vperm.slane %v3536, 2
        %v3567 = vlaneseq
        %v3568 = vshrl.u32 %v3567, 7
        %3570 = vset.pattern.permute.xlu0 %v3568
        %3571 = vperm.xlu0 %3570, %v3566
        %v3572 = vpop.permute.xlu0 %3571
        %v3573 = vlaneseq
        %v3574 = vshrl.u32 %v3573, 7
        %v3575 = vadd.s32 %v3574, 8
        %3576 = vset.pattern.permute.xlu0 %v3575
        %3577 = vperm.xlu0 %3576, %v3566
        %v3578 = vpop.permute.xlu0 %3577
        %v3579 = vperm.slane %v3536, 3
        %v3580 = vlaneseq
        %v3581 = vshrl.u32 %v3580, 7
        %3583 = vset.pattern.permute.xlu0 %v3581
        %3584 = vperm.xlu0 %3583, %v3579
        %v3585 = vpop.permute.xlu0 %3584
        %v3586 = vlaneseq
        %v3587 = vshrl.u32 %v3586, 7
        %v3588 = vadd.s32 %v3587, 8
        %3589 = vset.pattern.permute.xlu0 %v3588
        %3590 = vperm.xlu0 %3589, %v3579
        %v3591 = vpop.permute.xlu0 %3590
        %v3592 = vperm.slane %v3536, 4
        %v3593 = vlaneseq
        %v3594 = vshrl.u32 %v3593, 7
        %3596 = vset.pattern.permute.xlu0 %v3594
        %3597 = vperm.xlu0 %3596, %v3592
        %v3598 = vpop.permute.xlu0 %3597
        %v3599 = vlaneseq
        %v3600 = vshrl.u32 %v3599, 7
        %v3601 = vadd.s32 %v3600, 8
        %3602 = vset.pattern.permute.xlu0 %v3601
        %3603 = vperm.xlu0 %3602, %v3592
        %v3604 = vpop.permute.xlu0 %3603
        %v3605 = vperm.slane %v3536, 5
        %v3606 = vlaneseq
        %v3607 = vshrl.u32 %v3606, 7
        %3609 = vset.pattern.permute.xlu0 %v3607
        %3610 = vperm.xlu0 %3609, %v3605
        %v3611 = vpop.permute.xlu0 %3610
        %v3612 = vlaneseq
        %v3613 = vshrl.u32 %v3612, 7
        %v3614 = vadd.s32 %v3613, 8
        %3615 = vset.pattern.permute.xlu0 %v3614
        %3616 = vperm.xlu0 %3615, %v3605
        %v3617 = vpop.permute.xlu0 %3616
        %v3618 = vperm.slane %v3536, 6
        %v3619 = vlaneseq
        %v3620 = vshrl.u32 %v3619, 7
        %3622 = vset.pattern.permute.xlu0 %v3620
        %3623 = vperm.xlu0 %3622, %v3618
        %v3624 = vpop.permute.xlu0 %3623
        %v3625 = vlaneseq
        %v3626 = vshrl.u32 %v3625, 7
        %v3627 = vadd.s32 %v3626, 8
        %3628 = vset.pattern.permute.xlu0 %v3627
        %3629 = vperm.xlu0 %3628, %v3618
        %v3630 = vpop.permute.xlu0 %3629
        %v3631 = vperm.slane %v3536, 7
        %v3632 = vlaneseq
        %v3633 = vshrl.u32 %v3632, 7
        %3635 = vset.pattern.permute.xlu0 %v3633
        %3636 = vperm.xlu0 %3635, %v3631
        %v3637 = vpop.permute.xlu0 %3636
        %v3638 = vlaneseq
        %v3639 = vshrl.u32 %v3638, 7
        %v3640 = vadd.s32 %v3639, 8
        %3641 = vset.pattern.permute.xlu0 %v3640
        %3642 = vperm.xlu0 %3641, %v3631
        %v3643 = vpop.permute.xlu0 %3642
        %v3644 = vperm.slane %v3537, 0
        %v3645 = vlaneseq
        %v3646 = vshrl.u32 %v3645, 7
        %3648 = vset.pattern.permute.xlu0 %v3646
        %3649 = vperm.xlu0 %3648, %v3644
        %v3650 = vpop.permute.xlu0 %3649
        %v3651 = vlaneseq
        %v3652 = vshrl.u32 %v3651, 7
        %v3653 = vadd.s32 %v3652, 8
        %3654 = vset.pattern.permute.xlu0 %v3653
        %3655 = vperm.xlu0 %3654, %v3644
        %v3656 = vpop.permute.xlu0 %3655
        %v3657 = vperm.slane %v3537, 1
        %v3658 = vlaneseq
        %v3659 = vshrl.u32 %v3658, 7
        %3661 = vset.pattern.permute.xlu0 %v3659
        %3662 = vperm.xlu0 %3661, %v3657
        %v3663 = vpop.permute.xlu0 %3662
        %v3664 = vlaneseq
        %v3665 = vshrl.u32 %v3664, 7
        %v3666 = vadd.s32 %v3665, 8
        %3667 = vset.pattern.permute.xlu0 %v3666
        %3668 = vperm.xlu0 %3667, %v3657
        %v3669 = vpop.permute.xlu0 %3668
        %v3670 = vperm.slane %v3537, 2
        %v3671 = vlaneseq
        %v3672 = vshrl.u32 %v3671, 7
        %3674 = vset.pattern.permute.xlu0 %v3672
        %3675 = vperm.xlu0 %3674, %v3670
        %v3676 = vpop.permute.xlu0 %3675
        %v3677 = vlaneseq
        %v3678 = vshrl.u32 %v3677, 7
        %v3679 = vadd.s32 %v3678, 8
        %3680 = vset.pattern.permute.xlu0 %v3679
        %3681 = vperm.xlu0 %3680, %v3670
        %v3682 = vpop.permute.xlu0 %3681
        %v3683 = vperm.slane %v3537, 3
        %v3684 = vlaneseq
        %v3685 = vshrl.u32 %v3684, 7
        %3687 = vset.pattern.permute.xlu0 %v3685
        %3688 = vperm.xlu0 %3687, %v3683
        %v3689 = vpop.permute.xlu0 %3688
        %v3690 = vlaneseq
        %v3691 = vshrl.u32 %v3690, 7
        %v3692 = vadd.s32 %v3691, 8
        %3693 = vset.pattern.permute.xlu0 %v3692
        %3694 = vperm.xlu0 %3693, %v3683
        %v3695 = vpop.permute.xlu0 %3694
        %v3696 = vperm.slane %v3537, 4
        %v3697 = vlaneseq
        %v3698 = vshrl.u32 %v3697, 7
        %3700 = vset.pattern.permute.xlu0 %v3698
        %3701 = vperm.xlu0 %3700, %v3696
        %v3702 = vpop.permute.xlu0 %3701
        %v3703 = vlaneseq
        %v3704 = vshrl.u32 %v3703, 7
        %v3705 = vadd.s32 %v3704, 8
        %3706 = vset.pattern.permute.xlu0 %v3705
        %3707 = vperm.xlu0 %3706, %v3696
        %v3708 = vpop.permute.xlu0 %3707
        %v3709 = vperm.slane %v3537, 5
        %v3710 = vlaneseq
        %v3711 = vshrl.u32 %v3710, 7
        %3713 = vset.pattern.permute.xlu0 %v3711
        %3714 = vperm.xlu0 %3713, %v3709
        %v3715 = vpop.permute.xlu0 %3714
        %v3716 = vlaneseq
        %v3717 = vshrl.u32 %v3716, 7
        %v3718 = vadd.s32 %v3717, 8
        %3719 = vset.pattern.permute.xlu0 %v3718
        %3720 = vperm.xlu0 %3719, %v3709
        %v3721 = vpop.permute.xlu0 %3720
        %v3722 = vperm.slane %v3537, 6
        %v3723 = vlaneseq
        %v3724 = vshrl.u32 %v3723, 7
        %3726 = vset.pattern.permute.xlu0 %v3724
        %3727 = vperm.xlu0 %3726, %v3722
        %v3728 = vpop.permute.xlu0 %3727
        %v3729 = vlaneseq
        %v3730 = vshrl.u32 %v3729, 7
        %v3731 = vadd.s32 %v3730, 8
        %3732 = vset.pattern.permute.xlu0 %v3731
        %3733 = vperm.xlu0 %3732, %v3722
        %v3734 = vpop.permute.xlu0 %3733
        %v3735 = vperm.slane %v3537, 7
        %v3736 = vlaneseq
        %v3737 = vshrl.u32 %v3736, 7
        %3739 = vset.pattern.permute.xlu0 %v3737
        %3740 = vperm.xlu0 %3739, %v3735
        %v3741 = vpop.permute.xlu0 %3740
        %v3742 = vlaneseq
        %v3743 = vshrl.u32 %v3742, 7
        %v3744 = vadd.s32 %v3743, 8
        %3745 = vset.pattern.permute.xlu0 %v3744
        %3746 = vperm.xlu0 %3745, %v3735
        %v3747 = vpop.permute.xlu0 %3746
        %v3780 = vadd.f32 %v1349, %v3546
        %v3781 = vadd.f32 %v1352, %v3552
        %v3782 = vadd.f32 %v1355, %v3559
        %v3783 = vadd.f32 %v1358, %v3565
        %v3784 = vadd.f32 %v1361, %v3572
        %v3785 = vadd.f32 %v1364, %v3578
        %v3786 = vadd.f32 %v1367, %v3585
        %v3787 = vadd.f32 %v1370, %v3591
        %v3788 = vadd.f32 %v1373, %v3598
        %v3789 = vadd.f32 %v1376, %v3604
        %v3790 = vadd.f32 %v1379, %v3611
        %v3791 = vadd.f32 %v1382, %v3617
        %v3792 = vadd.f32 %v1385, %v3624
        %v3793 = vadd.f32 %v1388, %v3630
        %v3794 = vadd.f32 %v1391, %v3637
        %v3795 = vadd.f32 %v1394, %v3643
        %v3796 = vadd.f32 %v1397, %v3650
        %v3797 = vadd.f32 %v1400, %v3656
        %v3798 = vadd.f32 %v1403, %v3663
        %v3799 = vadd.f32 %v1406, %v3669
        %v3800 = vadd.f32 %v1409, %v3676
        %v3801 = vadd.f32 %v1412, %v3682
        %v3802 = vadd.f32 %v1415, %v3689
        %v3803 = vadd.f32 %v1418, %v3695
        %v3804 = vadd.f32 %v1421, %v3702
        %v3805 = vadd.f32 %v1424, %v3708
        %v3806 = vadd.f32 %v1427, %v3715
        %v3807 = vadd.f32 %v1430, %v3721
        %v3808 = vadd.f32 %v1433, %v3728
        %v3809 = vadd.f32 %v1436, %v3734
        %v3810 = vadd.f32 %v1439, %v3741
        %v3811 = vadd.f32 %v1442, %v3747
        %v3812 = vperm.slane %v1349, %v2306
        %v3813 = vperm.slane %v1352, %v2308
        %v3814 = vsel %vm2310, %v3813, %v3812
        %v3815 = vperm.slane %v1355, %v2306
        %v3816 = vperm.slane %v1358, %v2308
        %v3817 = vsel %vm2310, %v3816, %v3815
        %v3818 = vperm.slane %v1361, %v2306
        %v3819 = vperm.slane %v1364, %v2308
        %v3820 = vsel %vm2310, %v3819, %v3818
        %v3821 = vperm.slane %v1367, %v2306
        %v3822 = vperm.slane %v1370, %v2308
        %v3823 = vsel %vm2310, %v3822, %v3821
        %v3824 = vperm.slane %v1373, %v2306
        %v3825 = vperm.slane %v1376, %v2308
        %v3826 = vsel %vm2310, %v3825, %v3824
        %v3827 = vperm.slane %v1379, %v2306
        %v3828 = vperm.slane %v1382, %v2308
        %v3829 = vsel %vm2310, %v3828, %v3827
        %v3830 = vperm.slane %v1385, %v2306
        %v3831 = vperm.slane %v1388, %v2308
        %v3832 = vsel %vm2310, %v3831, %v3830
        %v3833 = vperm.slane %v1391, %v2306
        %v3834 = vperm.slane %v1394, %v2308
        %v3835 = vsel %vm2310, %v3834, %v3833
        %v3836 = vperm.slane %v1397, %v2306
        %v3837 = vperm.slane %v1400, %v2308
        %v3838 = vsel %vm2310, %v3837, %v3836
        %v3839 = vperm.slane %v1403, %v2306
        %v3840 = vperm.slane %v1406, %v2308
        %v3841 = vsel %vm2310, %v3840, %v3839
        %v3842 = vperm.slane %v1409, %v2306
        %v3843 = vperm.slane %v1412, %v2308
        %v3844 = vsel %vm2310, %v3843, %v3842
        %v3845 = vperm.slane %v1415, %v2306
        %v3846 = vperm.slane %v1418, %v2308
        %v3847 = vsel %vm2310, %v3846, %v3845
        %v3848 = vperm.slane %v1421, %v2306
        %v3849 = vperm.slane %v1424, %v2308
        %v3850 = vsel %vm2310, %v3849, %v3848
        %v3851 = vperm.slane %v1427, %v2306
        %v3852 = vperm.slane %v1430, %v2308
        %v3853 = vsel %vm2310, %v3852, %v3851
        %v3854 = vperm.slane %v1433, %v2306
        %v3855 = vperm.slane %v1436, %v2308
        %v3856 = vsel %vm2310, %v3855, %v3854
        %v3857 = vperm.slane %v1439, %v2306
        %v3858 = vperm.slane %v1442, %v2308
        %v3859 = vsel %vm2310, %v3858, %v3857
        %v3860 = vsel %vm2008, %v3817, %v3814
        %v3861 = vsel %vm2010, %v3820, %v3860
        %v3862 = vsel %vm2012, %v3823, %v3861
        %v3863 = vsel %vm2014, %v3826, %v3862
        %v3864 = vsel %vm2016, %v3829, %v3863
        %v3865 = vsel %vm2018, %v3832, %v3864
        %v3866 = vsel %vm2006, %v3838, %v3835
        %v3867 = vsel %vm2008, %v3841, %v3866
        %v3868 = vsel %vm2010, %v3844, %v3867
        %v3869 = vsel %vm2012, %v3847, %v3868
        %v3870 = vsel %vm2014, %v3850, %v3869
        %v3871 = vsel %vm2016, %v3853, %v3870
        %v3872 = vsel %vm2018, %v3856, %v3871
        %v3876 = vsel %vm2373, %v3865, 0.0
        %v3877 = vsel %vm2373, %v3872, 0.0
        %v3878 = vsel %vm2373, %v3859, 0.0
        %v3882 = vperm.slane %v3876, 1
        %v3883 = vlaneseq
        %v3884 = vshrl.u32 %v3883, 7
        %3886 = vset.pattern.permute.xlu0 %v3884
        %3887 = vperm.xlu0 %3886, %v3882
        %v3888 = vpop.permute.xlu0 %3887
        %v3889 = vlaneseq
        %v3890 = vshrl.u32 %v3889, 7
        %v3891 = vadd.s32 %v3890, 8
        %3892 = vset.pattern.permute.xlu0 %v3891
        %3893 = vperm.xlu0 %3892, %v3882
        %v3894 = vpop.permute.xlu0 %3893
        %v3895 = vperm.slane %v3876, 2
        %v3896 = vlaneseq
        %v3897 = vshrl.u32 %v3896, 7
        %3899 = vset.pattern.permute.xlu0 %v3897
        %3900 = vperm.xlu0 %3899, %v3895
        %v3901 = vpop.permute.xlu0 %3900
        %v3902 = vlaneseq
        %v3903 = vshrl.u32 %v3902, 7
        %v3904 = vadd.s32 %v3903, 8
        %3905 = vset.pattern.permute.xlu0 %v3904
        %3906 = vperm.xlu0 %3905, %v3895
        %v3907 = vpop.permute.xlu0 %3906
        %v3908 = vperm.slane %v3876, 3
        %v3909 = vlaneseq
        %v3910 = vshrl.u32 %v3909, 7
        %3912 = vset.pattern.permute.xlu0 %v3910
        %3913 = vperm.xlu0 %3912, %v3908
        %v3914 = vpop.permute.xlu0 %3913
        %v3915 = vlaneseq
        %v3916 = vshrl.u32 %v3915, 7
        %v3917 = vadd.s32 %v3916, 8
        %3918 = vset.pattern.permute.xlu0 %v3917
        %3919 = vperm.xlu0 %3918, %v3908
        %v3920 = vpop.permute.xlu0 %3919
        %v3921 = vperm.slane %v3876, 4
        %v3922 = vlaneseq
        %v3923 = vshrl.u32 %v3922, 7
        %3925 = vset.pattern.permute.xlu0 %v3923
        %3926 = vperm.xlu0 %3925, %v3921
        %v3927 = vpop.permute.xlu0 %3926
        %v3928 = vlaneseq
        %v3929 = vshrl.u32 %v3928, 7
        %v3930 = vadd.s32 %v3929, 8
        %3931 = vset.pattern.permute.xlu0 %v3930
        %3932 = vperm.xlu0 %3931, %v3921
        %v3933 = vpop.permute.xlu0 %3932
        %v3934 = vperm.slane %v3876, 5
        %v3935 = vlaneseq
        %v3936 = vshrl.u32 %v3935, 7
        %3938 = vset.pattern.permute.xlu0 %v3936
        %3939 = vperm.xlu0 %3938, %v3934
        %v3940 = vpop.permute.xlu0 %3939
        %v3941 = vlaneseq
        %v3942 = vshrl.u32 %v3941, 7
        %v3943 = vadd.s32 %v3942, 8
        %3944 = vset.pattern.permute.xlu0 %v3943
        %3945 = vperm.xlu0 %3944, %v3934
        %v3946 = vpop.permute.xlu0 %3945
        %v3947 = vperm.slane %v3876, 6
        %v3948 = vlaneseq
        %v3949 = vshrl.u32 %v3948, 7
        %3951 = vset.pattern.permute.xlu0 %v3949
        %3952 = vperm.xlu0 %3951, %v3947
        %v3953 = vpop.permute.xlu0 %3952
        %v3954 = vlaneseq
        %v3955 = vshrl.u32 %v3954, 7
        %v3956 = vadd.s32 %v3955, 8
        %3957 = vset.pattern.permute.xlu0 %v3956
        %3958 = vperm.xlu0 %3957, %v3947
        %v3959 = vpop.permute.xlu0 %3958
        %v3960 = vperm.slane %v3876, 7
        %v3961 = vlaneseq
        %v3962 = vshrl.u32 %v3961, 7
        %3964 = vset.pattern.permute.xlu0 %v3962
        %3965 = vperm.xlu0 %3964, %v3960
        %v3966 = vpop.permute.xlu0 %3965
        %v3967 = vlaneseq
        %v3968 = vshrl.u32 %v3967, 7
        %v3969 = vadd.s32 %v3968, 8
        %3970 = vset.pattern.permute.xlu0 %v3969
        %3971 = vperm.xlu0 %3970, %v3960
        %v3972 = vpop.permute.xlu0 %3971
        %v3973 = vperm.slane %v3877, 0
        %v3974 = vlaneseq
        %v3975 = vshrl.u32 %v3974, 7
        %3977 = vset.pattern.permute.xlu0 %v3975
        %3978 = vperm.xlu0 %3977, %v3973
        %v3979 = vpop.permute.xlu0 %3978
        %v3980 = vlaneseq
        %v3981 = vshrl.u32 %v3980, 7
        %v3982 = vadd.s32 %v3981, 8
        %3983 = vset.pattern.permute.xlu0 %v3982
        %3984 = vperm.xlu0 %3983, %v3973
        %v3985 = vpop.permute.xlu0 %3984
        %v3986 = vperm.slane %v3877, 1
        %v3987 = vlaneseq
        %v3988 = vshrl.u32 %v3987, 7
        %3990 = vset.pattern.permute.xlu0 %v3988
        %3991 = vperm.xlu0 %3990, %v3986
        %v3992 = vpop.permute.xlu0 %3991
        %v3993 = vlaneseq
        %v3994 = vshrl.u32 %v3993, 7
        %v3995 = vadd.s32 %v3994, 8
        %3996 = vset.pattern.permute.xlu0 %v3995
        %3997 = vperm.xlu0 %3996, %v3986
        %v3998 = vpop.permute.xlu0 %3997
        %v3999 = vperm.slane %v3877, 2
        %v4000 = vlaneseq
        %v4001 = vshrl.u32 %v4000, 7
        %4003 = vset.pattern.permute.xlu0 %v4001
        %4004 = vperm.xlu0 %4003, %v3999
        %v4005 = vpop.permute.xlu0 %4004
        %v4006 = vlaneseq
        %v4007 = vshrl.u32 %v4006, 7
        %v4008 = vadd.s32 %v4007, 8
        %4009 = vset.pattern.permute.xlu0 %v4008
        %4010 = vperm.xlu0 %4009, %v3999
        %v4011 = vpop.permute.xlu0 %4010
        %v4012 = vperm.slane %v3877, 3
        %v4013 = vlaneseq
        %v4014 = vshrl.u32 %v4013, 7
        %4016 = vset.pattern.permute.xlu0 %v4014
        %4017 = vperm.xlu0 %4016, %v4012
        %v4018 = vpop.permute.xlu0 %4017
        %v4019 = vlaneseq
        %v4020 = vshrl.u32 %v4019, 7
        %v4021 = vadd.s32 %v4020, 8
        %4022 = vset.pattern.permute.xlu0 %v4021
        %4023 = vperm.xlu0 %4022, %v4012
        %v4024 = vpop.permute.xlu0 %4023
        %v4025 = vperm.slane %v3877, 4
        %v4026 = vlaneseq
        %v4027 = vshrl.u32 %v4026, 7
        %4029 = vset.pattern.permute.xlu0 %v4027
        %4030 = vperm.xlu0 %4029, %v4025
        %v4031 = vpop.permute.xlu0 %4030
        %v4032 = vlaneseq
        %v4033 = vshrl.u32 %v4032, 7
        %v4034 = vadd.s32 %v4033, 8
        %4035 = vset.pattern.permute.xlu0 %v4034
        %4036 = vperm.xlu0 %4035, %v4025
        %v4037 = vpop.permute.xlu0 %4036
        %v4038 = vperm.slane %v3877, 5
        %v4039 = vlaneseq
        %v4040 = vshrl.u32 %v4039, 7
        %4042 = vset.pattern.permute.xlu0 %v4040
        %4043 = vperm.xlu0 %4042, %v4038
        %v4044 = vpop.permute.xlu0 %4043
        %v4045 = vlaneseq
        %v4046 = vshrl.u32 %v4045, 7
        %v4047 = vadd.s32 %v4046, 8
        %4048 = vset.pattern.permute.xlu0 %v4047
        %4049 = vperm.xlu0 %4048, %v4038
        %v4050 = vpop.permute.xlu0 %4049
        %v4051 = vperm.slane %v3877, 6
        %v4052 = vlaneseq
        %v4053 = vshrl.u32 %v4052, 7
        %4055 = vset.pattern.permute.xlu0 %v4053
        %4056 = vperm.xlu0 %4055, %v4051
        %v4057 = vpop.permute.xlu0 %4056
        %v4058 = vlaneseq
        %v4059 = vshrl.u32 %v4058, 7
        %v4060 = vadd.s32 %v4059, 8
        %4061 = vset.pattern.permute.xlu0 %v4060
        %4062 = vperm.xlu0 %4061, %v4051
        %v4063 = vpop.permute.xlu0 %4062
        %v4064 = vperm.slane %v3877, 7
        %v4065 = vlaneseq
        %v4066 = vshrl.u32 %v4065, 7
        %4068 = vset.pattern.permute.xlu0 %v4066
        %4069 = vperm.xlu0 %4068, %v4064
        %v4070 = vpop.permute.xlu0 %4069
        %v4071 = vlaneseq
        %v4072 = vshrl.u32 %v4071, 7
        %v4073 = vadd.s32 %v4072, 8
        %4074 = vset.pattern.permute.xlu0 %v4073
        %4075 = vperm.xlu0 %4074, %v4064
        %v4076 = vpop.permute.xlu0 %4075
        %v4077 = vperm.slane %v3878, 0
        %v4078 = vlaneseq
        %v4079 = vshrl.u32 %v4078, 7
        %4081 = vset.pattern.permute.xlu0 %v4079
        %4082 = vperm.xlu0 %4081, %v4077
        %v4083 = vpop.permute.xlu0 %4082
        %v4084 = vlaneseq
        %v4085 = vshrl.u32 %v4084, 7
        %v4086 = vadd.s32 %v4085, 8
        %4087 = vset.pattern.permute.xlu0 %v4086
        %4088 = vperm.xlu0 %4087, %v4077
        %v4089 = vpop.permute.xlu0 %4088
        %v4122 = vadd.f32 %v3780, %v3888
        %v4123 = vadd.f32 %v3781, %v3894
        %v4124 = vadd.f32 %v3782, %v3901
        %v4125 = vadd.f32 %v3783, %v3907
        %v4126 = vadd.f32 %v3784, %v3914
        %v4127 = vadd.f32 %v3785, %v3920
        %v4128 = vadd.f32 %v3786, %v3927
        %v4129 = vadd.f32 %v3787, %v3933
        %v4130 = vadd.f32 %v3788, %v3940
        %v4131 = vadd.f32 %v3789, %v3946
        %v4132 = vadd.f32 %v3790, %v3953
        %v4133 = vadd.f32 %v3791, %v3959
        %v4134 = vadd.f32 %v3792, %v3966
        %v4135 = vadd.f32 %v3793, %v3972
        %v4136 = vadd.f32 %v3794, %v3979
        %v4137 = vadd.f32 %v3795, %v3985
        %v4138 = vadd.f32 %v3796, %v3992
        %v4139 = vadd.f32 %v3797, %v3998
        %v4140 = vadd.f32 %v3798, %v4005
        %v4141 = vadd.f32 %v3799, %v4011
        %v4142 = vadd.f32 %v3800, %v4018
        %v4143 = vadd.f32 %v3801, %v4024
        %v4144 = vadd.f32 %v3802, %v4031
        %v4145 = vadd.f32 %v3803, %v4037
        %v4146 = vadd.f32 %v3804, %v4044
        %v4147 = vadd.f32 %v3805, %v4050
        %v4148 = vadd.f32 %v3806, %v4057
        %v4149 = vadd.f32 %v3807, %v4063
        %v4150 = vadd.f32 %v3808, %v4070
        %v4151 = vadd.f32 %v3809, %v4076
        %v4152 = vadd.f32 %v3810, %v4083
        %v4153 = vadd.f32 %v3811, %v4089
        %4184 = vset.pattern.permute.xlu0 0
        %4185 = vperm.xlu0 %4184, %v4122
        %v4186 = vpop.permute.xlu0 %4185
        %4187 = vset.pattern.permute.xlu0 0
        %4188 = vperm.xlu0 %4187, %v4123
        %v4189 = vpop.permute.xlu0 %4188
        %4190 = vset.pattern.permute.xlu0 0
        %4191 = vperm.xlu0 %4190, %v4124
        %v4192 = vpop.permute.xlu0 %4191
        %4193 = vset.pattern.permute.xlu0 0
        %4194 = vperm.xlu0 %4193, %v4125
        %v4195 = vpop.permute.xlu0 %4194
        %4196 = vset.pattern.permute.xlu0 0
        %4197 = vperm.xlu0 %4196, %v4126
        %v4198 = vpop.permute.xlu0 %4197
        %4199 = vset.pattern.permute.xlu0 0
        %4200 = vperm.xlu0 %4199, %v4127
        %v4201 = vpop.permute.xlu0 %4200
        %4202 = vset.pattern.permute.xlu0 0
        %4203 = vperm.xlu0 %4202, %v4128
        %v4204 = vpop.permute.xlu0 %4203
        %4205 = vset.pattern.permute.xlu0 0
        %4206 = vperm.xlu0 %4205, %v4129
        %v4207 = vpop.permute.xlu0 %4206
        %4208 = vset.pattern.permute.xlu0 0
        %4209 = vperm.xlu0 %4208, %v4130
        %v4210 = vpop.permute.xlu0 %4209
        %4211 = vset.pattern.permute.xlu0 0
        %4212 = vperm.xlu0 %4211, %v4131
        %v4213 = vpop.permute.xlu0 %4212
        %4214 = vset.pattern.permute.xlu0 0
        %4215 = vperm.xlu0 %4214, %v4132
        %v4216 = vpop.permute.xlu0 %4215
        %4217 = vset.pattern.permute.xlu0 0
        %4218 = vperm.xlu0 %4217, %v4133
        %v4219 = vpop.permute.xlu0 %4218
        %4220 = vset.pattern.permute.xlu0 0
        %4221 = vperm.xlu0 %4220, %v4134
        %v4222 = vpop.permute.xlu0 %4221
        %4223 = vset.pattern.permute.xlu0 0
        %4224 = vperm.xlu0 %4223, %v4135
        %v4225 = vpop.permute.xlu0 %4224
        %4226 = vset.pattern.permute.xlu0 0
        %4227 = vperm.xlu0 %4226, %v4136
        %v4228 = vpop.permute.xlu0 %4227
        %4229 = vset.pattern.permute.xlu0 0
        %4230 = vperm.xlu0 %4229, %v4137
        %v4231 = vpop.permute.xlu0 %4230
        %4232 = vset.pattern.permute.xlu0 0
        %4233 = vperm.xlu0 %4232, %v4138
        %v4234 = vpop.permute.xlu0 %4233
        %4235 = vset.pattern.permute.xlu0 0
        %4236 = vperm.xlu0 %4235, %v4139
        %v4237 = vpop.permute.xlu0 %4236
        %4238 = vset.pattern.permute.xlu0 0
        %4239 = vperm.xlu0 %4238, %v4140
        %v4240 = vpop.permute.xlu0 %4239
        %4241 = vset.pattern.permute.xlu0 0
        %4242 = vperm.xlu0 %4241, %v4141
        %v4243 = vpop.permute.xlu0 %4242
        %4244 = vset.pattern.permute.xlu0 0
        %4245 = vperm.xlu0 %4244, %v4142
        %v4246 = vpop.permute.xlu0 %4245
        %4247 = vset.pattern.permute.xlu0 0
        %4248 = vperm.xlu0 %4247, %v4143
        %v4249 = vpop.permute.xlu0 %4248
        %4250 = vset.pattern.permute.xlu0 0
        %4251 = vperm.xlu0 %4250, %v4144
        %v4252 = vpop.permute.xlu0 %4251
        %4253 = vset.pattern.permute.xlu0 0
        %4254 = vperm.xlu0 %4253, %v4145
        %v4255 = vpop.permute.xlu0 %4254
        %4256 = vset.pattern.permute.xlu0 0
        %4257 = vperm.xlu0 %4256, %v4146
        %v4258 = vpop.permute.xlu0 %4257
        %4259 = vset.pattern.permute.xlu0 0
        %4260 = vperm.xlu0 %4259, %v4147
        %v4261 = vpop.permute.xlu0 %4260
        %4262 = vset.pattern.permute.xlu0 0
        %4263 = vperm.xlu0 %4262, %v4148
        %v4264 = vpop.permute.xlu0 %4263
        %4265 = vset.pattern.permute.xlu0 0
        %4266 = vperm.xlu0 %4265, %v4149
        %v4267 = vpop.permute.xlu0 %4266
        %4268 = vset.pattern.permute.xlu0 0
        %4269 = vperm.xlu0 %4268, %v4150
        %v4270 = vpop.permute.xlu0 %4269
        %4271 = vset.pattern.permute.xlu0 0
        %4272 = vperm.xlu0 %4271, %v4151
        %v4273 = vpop.permute.xlu0 %4272
        %v4274 = vperm.slane %v4186, %v1181
        %v4275 = vperm.slane %v4189, %v2773
        %v4276 = vsel %vm2775, %v4275, %v4274
        %v4277 = vperm.slane %v4192, %v1181
        %v4278 = vperm.slane %v4195, %v2773
        %v4279 = vsel %vm2775, %v4278, %v4277
        %v4280 = vperm.slane %v4198, %v1181
        %v4281 = vperm.slane %v4201, %v2773
        %v4282 = vsel %vm2775, %v4281, %v4280
        %v4283 = vperm.slane %v4204, %v1181
        %v4284 = vperm.slane %v4207, %v2773
        %v4285 = vsel %vm2775, %v4284, %v4283
        %v4286 = vperm.slane %v4210, %v1181
        %v4287 = vperm.slane %v4213, %v2773
        %v4288 = vsel %vm2775, %v4287, %v4286
        %v4289 = vperm.slane %v4216, %v1181
        %v4290 = vperm.slane %v4219, %v2773
        %v4291 = vsel %vm2775, %v4290, %v4289
        %v4292 = vperm.slane %v4222, %v1181
        %v4293 = vperm.slane %v4225, %v2773
        %v4294 = vsel %vm2775, %v4293, %v4292
        %v4295 = vperm.slane %v4228, %v1181
        %v4296 = vperm.slane %v4231, %v2773
        %v4297 = vsel %vm2775, %v4296, %v4295
        %v4298 = vperm.slane %v4234, %v1181
        %v4299 = vperm.slane %v4237, %v2773
        %v4300 = vsel %vm2775, %v4299, %v4298
        %v4301 = vperm.slane %v4240, %v1181
        %v4302 = vperm.slane %v4243, %v2773
        %v4303 = vsel %vm2775, %v4302, %v4301
        %v4304 = vperm.slane %v4246, %v1181
        %v4305 = vperm.slane %v4249, %v2773
        %v4306 = vsel %vm2775, %v4305, %v4304
        %v4307 = vperm.slane %v4252, %v1181
        %v4308 = vperm.slane %v4255, %v2773
        %v4309 = vsel %vm2775, %v4308, %v4307
        %v4310 = vperm.slane %v4258, %v1181
        %v4311 = vperm.slane %v4261, %v2773
        %v4312 = vsel %vm2775, %v4311, %v4310
        %v4313 = vperm.slane %v4264, %v1181
        %v4314 = vperm.slane %v4267, %v2773
        %v4315 = vsel %vm2775, %v4314, %v4313
        %v4316 = vperm.slane %v4270, %v1181
        %v4317 = vperm.slane %v4273, %v2773
        %v4318 = vsel %vm2775, %v4317, %v4316
        %v4319 = vsel %vm2008, %v4279, %v4276
        %v4320 = vsel %vm2010, %v4282, %v4319
        %v4321 = vsel %vm2012, %v4285, %v4320
        %v4322 = vsel %vm2014, %v4288, %v4321
        %v4323 = vsel %vm2016, %v4291, %v4322
        %v4324 = vsel %vm2018, %v4294, %v4323
        %v4325 = vsel %vm2006, %v4300, %v4297
        %v4326 = vsel %vm2008, %v4303, %v4325
        %v4327 = vsel %vm2010, %v4306, %v4326
        %v4328 = vsel %vm2012, %v4309, %v4327
        %v4329 = vsel %vm2014, %v4312, %v4328
        %v4330 = vsel %vm2016, %v4315, %v4329
        %v4331 = vsel %vm2018, %v4318, %v4330
        %v4333 = vsel %vm2833, 0.0, %v4324
        %v4335 = vperm.slane %v4333, 0
        %v4336 = vlaneseq
        %v4337 = vshrl.u32 %v4336, 7
        %4339 = vset.pattern.permute.xlu0 %v4337
        %4340 = vperm.xlu0 %4339, %v4335
        %v4341 = vpop.permute.xlu0 %4340
        %v4342 = vlaneseq
        %v4343 = vshrl.u32 %v4342, 7
        %v4344 = vadd.s32 %v4343, 8
        %4345 = vset.pattern.permute.xlu0 %v4344
        %4346 = vperm.xlu0 %4345, %v4335
        %v4347 = vpop.permute.xlu0 %4346
        %v4348 = vperm.slane %v4333, 1
        %v4349 = vlaneseq
        %v4350 = vshrl.u32 %v4349, 7
        %4352 = vset.pattern.permute.xlu0 %v4350
        %4353 = vperm.xlu0 %4352, %v4348
        %v4354 = vpop.permute.xlu0 %4353
        %v4355 = vlaneseq
        %v4356 = vshrl.u32 %v4355, 7
        %v4357 = vadd.s32 %v4356, 8
        %4358 = vset.pattern.permute.xlu0 %v4357
        %4359 = vperm.xlu0 %4358, %v4348
        %v4360 = vpop.permute.xlu0 %4359
        %v4361 = vperm.slane %v4333, 2
        %v4362 = vlaneseq
        %v4363 = vshrl.u32 %v4362, 7
        %4365 = vset.pattern.permute.xlu0 %v4363
        %4366 = vperm.xlu0 %4365, %v4361
        %v4367 = vpop.permute.xlu0 %4366
        %v4368 = vlaneseq
        %v4369 = vshrl.u32 %v4368, 7
        %v4370 = vadd.s32 %v4369, 8
        %4371 = vset.pattern.permute.xlu0 %v4370
        %4372 = vperm.xlu0 %4371, %v4361
        %v4373 = vpop.permute.xlu0 %4372
        %v4374 = vperm.slane %v4333, 3
        %v4375 = vlaneseq
        %v4376 = vshrl.u32 %v4375, 7
        %4378 = vset.pattern.permute.xlu0 %v4376
        %4379 = vperm.xlu0 %4378, %v4374
        %v4380 = vpop.permute.xlu0 %4379
        %v4381 = vlaneseq
        %v4382 = vshrl.u32 %v4381, 7
        %v4383 = vadd.s32 %v4382, 8
        %4384 = vset.pattern.permute.xlu0 %v4383
        %4385 = vperm.xlu0 %4384, %v4374
        %v4386 = vpop.permute.xlu0 %4385
        %v4387 = vperm.slane %v4333, 4
        %v4388 = vlaneseq
        %v4389 = vshrl.u32 %v4388, 7
        %4391 = vset.pattern.permute.xlu0 %v4389
        %4392 = vperm.xlu0 %4391, %v4387
        %v4393 = vpop.permute.xlu0 %4392
        %v4394 = vlaneseq
        %v4395 = vshrl.u32 %v4394, 7
        %v4396 = vadd.s32 %v4395, 8
        %4397 = vset.pattern.permute.xlu0 %v4396
        %4398 = vperm.xlu0 %4397, %v4387
        %v4399 = vpop.permute.xlu0 %4398
        %v4400 = vperm.slane %v4333, 5
        %v4401 = vlaneseq
        %v4402 = vshrl.u32 %v4401, 7
        %4404 = vset.pattern.permute.xlu0 %v4402
        %4405 = vperm.xlu0 %4404, %v4400
        %v4406 = vpop.permute.xlu0 %4405
        %v4407 = vlaneseq
        %v4408 = vshrl.u32 %v4407, 7
        %v4409 = vadd.s32 %v4408, 8
        %4410 = vset.pattern.permute.xlu0 %v4409
        %4411 = vperm.xlu0 %4410, %v4400
        %v4412 = vpop.permute.xlu0 %4411
        %v4413 = vperm.slane %v4333, 6
        %v4414 = vlaneseq
        %v4415 = vshrl.u32 %v4414, 7
        %4417 = vset.pattern.permute.xlu0 %v4415
        %4418 = vperm.xlu0 %4417, %v4413
        %v4419 = vpop.permute.xlu0 %4418
        %v4420 = vlaneseq
        %v4421 = vshrl.u32 %v4420, 7
        %v4422 = vadd.s32 %v4421, 8
        %4423 = vset.pattern.permute.xlu0 %v4422
        %4424 = vperm.xlu0 %4423, %v4413
        %v4425 = vpop.permute.xlu0 %4424
        %v4426 = vperm.slane %v4333, 7
        %v4427 = vlaneseq
        %v4428 = vshrl.u32 %v4427, 7
        %4430 = vset.pattern.permute.xlu0 %v4428
        %4431 = vperm.xlu0 %4430, %v4426
        %v4432 = vpop.permute.xlu0 %4431
        %v4433 = vlaneseq
        %v4434 = vshrl.u32 %v4433, 7
        %v4435 = vadd.s32 %v4434, 8
        %4436 = vset.pattern.permute.xlu0 %v4435
        %4437 = vperm.xlu0 %4436, %v4426
        %v4438 = vpop.permute.xlu0 %4437
        %v4439 = vperm.slane %v4331, 0
        %v4440 = vlaneseq
        %v4441 = vshrl.u32 %v4440, 7
        %4443 = vset.pattern.permute.xlu0 %v4441
        %4444 = vperm.xlu0 %4443, %v4439
        %v4445 = vpop.permute.xlu0 %4444
        %v4446 = vlaneseq
        %v4447 = vshrl.u32 %v4446, 7
        %v4448 = vadd.s32 %v4447, 8
        %4449 = vset.pattern.permute.xlu0 %v4448
        %4450 = vperm.xlu0 %4449, %v4439
        %v4451 = vpop.permute.xlu0 %4450
        %v4452 = vperm.slane %v4331, 1
        %v4453 = vlaneseq
        %v4454 = vshrl.u32 %v4453, 7
        %4456 = vset.pattern.permute.xlu0 %v4454
        %4457 = vperm.xlu0 %4456, %v4452
        %v4458 = vpop.permute.xlu0 %4457
        %v4459 = vlaneseq
        %v4460 = vshrl.u32 %v4459, 7
        %v4461 = vadd.s32 %v4460, 8
        %4462 = vset.pattern.permute.xlu0 %v4461
        %4463 = vperm.xlu0 %4462, %v4452
        %v4464 = vpop.permute.xlu0 %4463
        %v4465 = vperm.slane %v4331, 2
        %v4466 = vlaneseq
        %v4467 = vshrl.u32 %v4466, 7
        %4469 = vset.pattern.permute.xlu0 %v4467
        %4470 = vperm.xlu0 %4469, %v4465
        %v4471 = vpop.permute.xlu0 %4470
        %v4472 = vlaneseq
        %v4473 = vshrl.u32 %v4472, 7
        %v4474 = vadd.s32 %v4473, 8
        %4475 = vset.pattern.permute.xlu0 %v4474
        %4476 = vperm.xlu0 %4475, %v4465
        %v4477 = vpop.permute.xlu0 %4476
        %v4478 = vperm.slane %v4331, 3
        %v4479 = vlaneseq
        %v4480 = vshrl.u32 %v4479, 7
        %4482 = vset.pattern.permute.xlu0 %v4480
        %4483 = vperm.xlu0 %4482, %v4478
        %v4484 = vpop.permute.xlu0 %4483
        %v4485 = vlaneseq
        %v4486 = vshrl.u32 %v4485, 7
        %v4487 = vadd.s32 %v4486, 8
        %4488 = vset.pattern.permute.xlu0 %v4487
        %4489 = vperm.xlu0 %4488, %v4478
        %v4490 = vpop.permute.xlu0 %4489
        %v4491 = vperm.slane %v4331, 4
        %v4492 = vlaneseq
        %v4493 = vshrl.u32 %v4492, 7
        %4495 = vset.pattern.permute.xlu0 %v4493
        %4496 = vperm.xlu0 %4495, %v4491
        %v4497 = vpop.permute.xlu0 %4496
        %v4498 = vlaneseq
        %v4499 = vshrl.u32 %v4498, 7
        %v4500 = vadd.s32 %v4499, 8
        %4501 = vset.pattern.permute.xlu0 %v4500
        %4502 = vperm.xlu0 %4501, %v4491
        %v4503 = vpop.permute.xlu0 %4502
        %v4504 = vperm.slane %v4331, 5
        %v4505 = vlaneseq
        %v4506 = vshrl.u32 %v4505, 7
        %4508 = vset.pattern.permute.xlu0 %v4506
        %4509 = vperm.xlu0 %4508, %v4504
        %v4510 = vpop.permute.xlu0 %4509
        %v4511 = vlaneseq
        %v4512 = vshrl.u32 %v4511, 7
        %v4513 = vadd.s32 %v4512, 8
        %4514 = vset.pattern.permute.xlu0 %v4513
        %4515 = vperm.xlu0 %4514, %v4504
        %v4516 = vpop.permute.xlu0 %4515
        %v4517 = vperm.slane %v4331, 6
        %v4518 = vlaneseq
        %v4519 = vshrl.u32 %v4518, 7
        %4521 = vset.pattern.permute.xlu0 %v4519
        %4522 = vperm.xlu0 %4521, %v4517
        %v4523 = vpop.permute.xlu0 %4522
        %v4524 = vlaneseq
        %v4525 = vshrl.u32 %v4524, 7
        %v4526 = vadd.s32 %v4525, 8
        %4527 = vset.pattern.permute.xlu0 %v4526
        %4528 = vperm.xlu0 %4527, %v4517
        %v4529 = vpop.permute.xlu0 %4528
        %v4530 = vperm.slane %v4331, 7
        %v4531 = vlaneseq
        %v4532 = vshrl.u32 %v4531, 7
        %4534 = vset.pattern.permute.xlu0 %v4532
        %4535 = vperm.xlu0 %4534, %v4530
        %v4536 = vpop.permute.xlu0 %4535
        %v4537 = vlaneseq
        %v4538 = vshrl.u32 %v4537, 7
        %v4539 = vadd.s32 %v4538, 8
        %4540 = vset.pattern.permute.xlu0 %v4539
        %4541 = vperm.xlu0 %4540, %v4530
        %v4542 = vpop.permute.xlu0 %4541
        %v4575 = vadd.f32 %v4122, %v4341
        %v4576 = vadd.f32 %v4123, %v4347
        %v4577 = vadd.f32 %v4124, %v4354
        %v4578 = vadd.f32 %v4125, %v4360
        %v4579 = vadd.f32 %v4126, %v4367
        %v4580 = vadd.f32 %v4127, %v4373
        %v4581 = vadd.f32 %v4128, %v4380
        %v4582 = vadd.f32 %v4129, %v4386
        %v4583 = vadd.f32 %v4130, %v4393
        %v4584 = vadd.f32 %v4131, %v4399
        %v4585 = vadd.f32 %v4132, %v4406
        %v4586 = vadd.f32 %v4133, %v4412
        %v4587 = vadd.f32 %v4134, %v4419
        %v4588 = vadd.f32 %v4135, %v4425
        %v4589 = vadd.f32 %v4136, %v4432
        %v4590 = vadd.f32 %v4137, %v4438
        %v4591 = vadd.f32 %v4138, %v4445
        %v4592 = vadd.f32 %v4139, %v4451
        %v4593 = vadd.f32 %v4140, %v4458
        %v4594 = vadd.f32 %v4141, %v4464
        %v4595 = vadd.f32 %v4142, %v4471
        %v4596 = vadd.f32 %v4143, %v4477
        %v4597 = vadd.f32 %v4144, %v4484
        %v4598 = vadd.f32 %v4145, %v4490
        %v4599 = vadd.f32 %v4146, %v4497
        %v4600 = vadd.f32 %v4147, %v4503
        %v4601 = vadd.f32 %v4148, %v4510
        %v4602 = vadd.f32 %v4149, %v4516
        %v4603 = vadd.f32 %v4150, %v4523
        %v4604 = vadd.f32 %v4151, %v4529
        %v4605 = vadd.f32 %v4152, %v4536
        %v4606 = vadd.f32 %v4153, %v4542
        %4609 = vset.pattern.permute.xlu0 0
        %4610 = vperm.xlu0 %4609, %v4152
        %v4611 = vpop.permute.xlu0 %4610
        %4612 = vset.pattern.permute.xlu0 0
        %4613 = vperm.xlu0 %4612, %v4153
        %v4614 = vpop.permute.xlu0 %4613
        %v4615 = vperm.slane %v4611, %v1181
        %v4616 = vperm.slane %v4614, %v2773
        %v4617 = vsel %vm2775, %v4616, %v4615
        %v4618 = vsel %vm2006, %v4282, %v4279
        %v4619 = vsel %vm2008, %v4285, %v4618
        %v4620 = vsel %vm2010, %v4288, %v4619
        %v4621 = vsel %vm2012, %v4291, %v4620
        %v4622 = vsel %vm2014, %v4294, %v4621
        %v4623 = vsel %vm2016, %v4297, %v4622
        %v4624 = vsel %vm2018, %v4300, %v4623
        %v4625 = vsel %vm2006, %v4306, %v4303
        %v4626 = vsel %vm2008, %v4309, %v4625
        %v4627 = vsel %vm2010, %v4312, %v4626
        %v4628 = vsel %vm2012, %v4315, %v4627
        %v4629 = vsel %vm2014, %v4318, %v4628
        %v4630 = vsel %vm2016, %v4617, %v4629
        %v4632 = vsel %vm3133, %v4630, 0.0
        %v4634 = vperm.slane %v4624, 0
        %v4635 = vlaneseq
        %v4636 = vshrl.u32 %v4635, 7
        %4638 = vset.pattern.permute.xlu0 %v4636
        %4639 = vperm.xlu0 %4638, %v4634
        %v4640 = vpop.permute.xlu0 %4639
        %v4641 = vlaneseq
        %v4642 = vshrl.u32 %v4641, 7
        %v4643 = vadd.s32 %v4642, 8
        %4644 = vset.pattern.permute.xlu0 %v4643
        %4645 = vperm.xlu0 %4644, %v4634
        %v4646 = vpop.permute.xlu0 %4645
        %v4647 = vperm.slane %v4624, 1
        %v4648 = vlaneseq
        %v4649 = vshrl.u32 %v4648, 7
        %4651 = vset.pattern.permute.xlu0 %v4649
        %4652 = vperm.xlu0 %4651, %v4647
        %v4653 = vpop.permute.xlu0 %4652
        %v4654 = vlaneseq
        %v4655 = vshrl.u32 %v4654, 7
        %v4656 = vadd.s32 %v4655, 8
        %4657 = vset.pattern.permute.xlu0 %v4656
        %4658 = vperm.xlu0 %4657, %v4647
        %v4659 = vpop.permute.xlu0 %4658
        %v4660 = vperm.slane %v4624, 2
        %v4661 = vlaneseq
        %v4662 = vshrl.u32 %v4661, 7
        %4664 = vset.pattern.permute.xlu0 %v4662
        %4665 = vperm.xlu0 %4664, %v4660
        %v4666 = vpop.permute.xlu0 %4665
        %v4667 = vlaneseq
        %v4668 = vshrl.u32 %v4667, 7
        %v4669 = vadd.s32 %v4668, 8
        %4670 = vset.pattern.permute.xlu0 %v4669
        %4671 = vperm.xlu0 %4670, %v4660
        %v4672 = vpop.permute.xlu0 %4671
        %v4673 = vperm.slane %v4624, 3
        %v4674 = vlaneseq
        %v4675 = vshrl.u32 %v4674, 7
        %4677 = vset.pattern.permute.xlu0 %v4675
        %4678 = vperm.xlu0 %4677, %v4673
        %v4679 = vpop.permute.xlu0 %4678
        %v4680 = vlaneseq
        %v4681 = vshrl.u32 %v4680, 7
        %v4682 = vadd.s32 %v4681, 8
        %4683 = vset.pattern.permute.xlu0 %v4682
        %4684 = vperm.xlu0 %4683, %v4673
        %v4685 = vpop.permute.xlu0 %4684
        %v4686 = vperm.slane %v4624, 4
        %v4687 = vlaneseq
        %v4688 = vshrl.u32 %v4687, 7
        %4690 = vset.pattern.permute.xlu0 %v4688
        %4691 = vperm.xlu0 %4690, %v4686
        %v4692 = vpop.permute.xlu0 %4691
        %v4693 = vlaneseq
        %v4694 = vshrl.u32 %v4693, 7
        %v4695 = vadd.s32 %v4694, 8
        %4696 = vset.pattern.permute.xlu0 %v4695
        %4697 = vperm.xlu0 %4696, %v4686
        %v4698 = vpop.permute.xlu0 %4697
        %v4699 = vperm.slane %v4624, 5
        %v4700 = vlaneseq
        %v4701 = vshrl.u32 %v4700, 7
        %4703 = vset.pattern.permute.xlu0 %v4701
        %4704 = vperm.xlu0 %4703, %v4699
        %v4705 = vpop.permute.xlu0 %4704
        %v4706 = vlaneseq
        %v4707 = vshrl.u32 %v4706, 7
        %v4708 = vadd.s32 %v4707, 8
        %4709 = vset.pattern.permute.xlu0 %v4708
        %4710 = vperm.xlu0 %4709, %v4699
        %v4711 = vpop.permute.xlu0 %4710
        %v4712 = vperm.slane %v4624, 6
        %v4713 = vlaneseq
        %v4714 = vshrl.u32 %v4713, 7
        %4716 = vset.pattern.permute.xlu0 %v4714
        %4717 = vperm.xlu0 %4716, %v4712
        %v4718 = vpop.permute.xlu0 %4717
        %v4719 = vlaneseq
        %v4720 = vshrl.u32 %v4719, 7
        %v4721 = vadd.s32 %v4720, 8
        %4722 = vset.pattern.permute.xlu0 %v4721
        %4723 = vperm.xlu0 %4722, %v4712
        %v4724 = vpop.permute.xlu0 %4723
        %v4725 = vperm.slane %v4624, 7
        %v4726 = vlaneseq
        %v4727 = vshrl.u32 %v4726, 7
        %4729 = vset.pattern.permute.xlu0 %v4727
        %4730 = vperm.xlu0 %4729, %v4725
        %v4731 = vpop.permute.xlu0 %4730
        %v4732 = vlaneseq
        %v4733 = vshrl.u32 %v4732, 7
        %v4734 = vadd.s32 %v4733, 8
        %4735 = vset.pattern.permute.xlu0 %v4734
        %4736 = vperm.xlu0 %4735, %v4725
        %v4737 = vpop.permute.xlu0 %4736
        %v4738 = vperm.slane %v4632, 0
        %v4739 = vlaneseq
        %v4740 = vshrl.u32 %v4739, 7
        %4742 = vset.pattern.permute.xlu0 %v4740
        %4743 = vperm.xlu0 %4742, %v4738
        %v4744 = vpop.permute.xlu0 %4743
        %v4745 = vlaneseq
        %v4746 = vshrl.u32 %v4745, 7
        %v4747 = vadd.s32 %v4746, 8
        %4748 = vset.pattern.permute.xlu0 %v4747
        %4749 = vperm.xlu0 %4748, %v4738
        %v4750 = vpop.permute.xlu0 %4749
        %v4751 = vperm.slane %v4632, 1
        %v4752 = vlaneseq
        %v4753 = vshrl.u32 %v4752, 7
        %4755 = vset.pattern.permute.xlu0 %v4753
        %4756 = vperm.xlu0 %4755, %v4751
        %v4757 = vpop.permute.xlu0 %4756
        %v4758 = vlaneseq
        %v4759 = vshrl.u32 %v4758, 7
        %v4760 = vadd.s32 %v4759, 8
        %4761 = vset.pattern.permute.xlu0 %v4760
        %4762 = vperm.xlu0 %4761, %v4751
        %v4763 = vpop.permute.xlu0 %4762
        %v4764 = vperm.slane %v4632, 2
        %v4765 = vlaneseq
        %v4766 = vshrl.u32 %v4765, 7
        %4768 = vset.pattern.permute.xlu0 %v4766
        %4769 = vperm.xlu0 %4768, %v4764
        %v4770 = vpop.permute.xlu0 %4769
        %v4771 = vlaneseq
        %v4772 = vshrl.u32 %v4771, 7
        %v4773 = vadd.s32 %v4772, 8
        %4774 = vset.pattern.permute.xlu0 %v4773
        %4775 = vperm.xlu0 %4774, %v4764
        %v4776 = vpop.permute.xlu0 %4775
        %v4777 = vperm.slane %v4632, 3
        %v4778 = vlaneseq
        %v4779 = vshrl.u32 %v4778, 7
        %4781 = vset.pattern.permute.xlu0 %v4779
        %4782 = vperm.xlu0 %4781, %v4777
        %v4783 = vpop.permute.xlu0 %4782
        %v4784 = vlaneseq
        %v4785 = vshrl.u32 %v4784, 7
        %v4786 = vadd.s32 %v4785, 8
        %4787 = vset.pattern.permute.xlu0 %v4786
        %4788 = vperm.xlu0 %4787, %v4777
        %v4789 = vpop.permute.xlu0 %4788
        %v4790 = vperm.slane %v4632, 4
        %v4791 = vlaneseq
        %v4792 = vshrl.u32 %v4791, 7
        %4794 = vset.pattern.permute.xlu0 %v4792
        %4795 = vperm.xlu0 %4794, %v4790
        %v4796 = vpop.permute.xlu0 %4795
        %v4797 = vlaneseq
        %v4798 = vshrl.u32 %v4797, 7
        %v4799 = vadd.s32 %v4798, 8
        %4800 = vset.pattern.permute.xlu0 %v4799
        %4801 = vperm.xlu0 %4800, %v4790
        %v4802 = vpop.permute.xlu0 %4801
        %v4803 = vperm.slane %v4632, 5
        %v4804 = vlaneseq
        %v4805 = vshrl.u32 %v4804, 7
        %4807 = vset.pattern.permute.xlu0 %v4805
        %4808 = vperm.xlu0 %4807, %v4803
        %v4809 = vpop.permute.xlu0 %4808
        %v4810 = vlaneseq
        %v4811 = vshrl.u32 %v4810, 7
        %v4812 = vadd.s32 %v4811, 8
        %4813 = vset.pattern.permute.xlu0 %v4812
        %4814 = vperm.xlu0 %4813, %v4803
        %v4815 = vpop.permute.xlu0 %4814
        %v4816 = vperm.slane %v4632, 6
        %v4817 = vlaneseq
        %v4818 = vshrl.u32 %v4817, 7
        %4820 = vset.pattern.permute.xlu0 %v4818
        %4821 = vperm.xlu0 %4820, %v4816
        %v4822 = vpop.permute.xlu0 %4821
        %v4823 = vlaneseq
        %v4824 = vshrl.u32 %v4823, 7
        %v4825 = vadd.s32 %v4824, 8
        %4826 = vset.pattern.permute.xlu0 %v4825
        %4827 = vperm.xlu0 %4826, %v4816
        %v4828 = vpop.permute.xlu0 %4827
        %v4829 = vperm.slane %v4632, 7
        %v4830 = vlaneseq
        %v4831 = vshrl.u32 %v4830, 7
        %4833 = vset.pattern.permute.xlu0 %v4831
        %4834 = vperm.xlu0 %4833, %v4829
        %v4835 = vpop.permute.xlu0 %4834
        %v4836 = vlaneseq
        %v4837 = vshrl.u32 %v4836, 7
        %v4838 = vadd.s32 %v4837, 8
        %4839 = vset.pattern.permute.xlu0 %v4838
        %4840 = vperm.xlu0 %4839, %v4829
        %v4841 = vpop.permute.xlu0 %4840
        %v4874 = vadd.f32 %v4575, %v4640
        %v4875 = vadd.f32 %v4576, %v4646
        %v4876 = vadd.f32 %v4577, %v4653
        %v4877 = vadd.f32 %v4578, %v4659
        %v4878 = vadd.f32 %v4579, %v4666
        %v4879 = vadd.f32 %v4580, %v4672
        %v4880 = vadd.f32 %v4581, %v4679
        %v4881 = vadd.f32 %v4582, %v4685
        %v4882 = vadd.f32 %v4583, %v4692
        %v4883 = vadd.f32 %v4584, %v4698
        %v4884 = vadd.f32 %v4585, %v4705
        %v4885 = vadd.f32 %v4586, %v4711
        %v4886 = vadd.f32 %v4587, %v4718
        %v4887 = vadd.f32 %v4588, %v4724
        %v4888 = vadd.f32 %v4589, %v4731
        %v4889 = vadd.f32 %v4590, %v4737
        %v4890 = vadd.f32 %v4591, %v4744
        %v4891 = vadd.f32 %v4592, %v4750
        %v4892 = vadd.f32 %v4593, %v4757
        %v4893 = vadd.f32 %v4594, %v4763
        %v4894 = vadd.f32 %v4595, %v4770
        %v4895 = vadd.f32 %v4596, %v4776
        %v4896 = vadd.f32 %v4597, %v4783
        %v4897 = vadd.f32 %v4598, %v4789
        %v4898 = vadd.f32 %v4599, %v4796
        %v4899 = vadd.f32 %v4600, %v4802
        %v4900 = vadd.f32 %v4601, %v4809
        %v4901 = vadd.f32 %v4602, %v4815
        %v4902 = vadd.f32 %v4603, %v4822
        %v4903 = vadd.f32 %v4604, %v4828
        %v4904 = vadd.f32 %v4605, %v4835
        %v4905 = vadd.f32 %v4606, %v4841
        %v4906 = vmul.f32 %v4874, 0.11111111
        %v4907 = vmul.f32 %v4875, 0.11111111
        %v4908 = vmul.f32 %v4876, 0.11111111
        %v4909 = vmul.f32 %v4877, 0.11111111
        %v4910 = vmul.f32 %v4878, 0.11111111
        %v4911 = vmul.f32 %v4879, 0.11111111
        %v4912 = vmul.f32 %v4880, 0.11111111
        %v4913 = vmul.f32 %v4881, 0.11111111
        %v4914 = vmul.f32 %v4882, 0.11111111
        %v4915 = vmul.f32 %v4883, 0.11111111
        %v4916 = vmul.f32 %v4884, 0.11111111
        %v4917 = vmul.f32 %v4885, 0.11111111
        %v4918 = vmul.f32 %v4886, 0.11111111
        %v4919 = vmul.f32 %v4887, 0.11111111
        %v4920 = vmul.f32 %v4888, 0.11111111
        %v4921 = vmul.f32 %v4889, 0.11111111
        %v4922 = vmul.f32 %v4890, 0.11111111
        %v4923 = vmul.f32 %v4891, 0.11111111
        %v4924 = vmul.f32 %v4892, 0.11111111
        %v4925 = vmul.f32 %v4893, 0.11111111
        %v4926 = vmul.f32 %v4894, 0.11111111
        %v4927 = vmul.f32 %v4895, 0.11111111
        %v4928 = vmul.f32 %v4896, 0.11111111
        %v4929 = vmul.f32 %v4897, 0.11111111
        %v4930 = vmul.f32 %v4898, 0.11111111
        %v4931 = vmul.f32 %v4899, 0.11111111
        %v4932 = vmul.f32 %v4900, 0.11111111
        %v4933 = vmul.f32 %v4901, 0.11111111
        %v4934 = vmul.f32 %v4902, 0.11111111
        %v4935 = vmul.f32 %v4903, 0.11111111
        %v4936 = vmul.f32 %v4904, 0.11111111
        %v4937 = vmul.f32 %v4905, 0.11111111
        %v4970 = vperm.slane %v1550, %v1955
        %v4971 = vperm.slane %v1562, %v1957
        %v4972 = vsel %vm1959, %v4971, %v4970
        %v4973 = vperm.slane %v1574, %v1955
        %v4974 = vperm.slane %v1586, %v1957
        %v4975 = vsel %vm1959, %v4974, %v4973
        %v4976 = vperm.slane %v1598, %v1955
        %v4977 = vperm.slane %v1610, %v1957
        %v4978 = vsel %vm1959, %v4977, %v4976
        %v4979 = vperm.slane %v1622, %v1955
        %v4980 = vperm.slane %v1634, %v1957
        %v4981 = vsel %vm1959, %v4980, %v4979
        %v4982 = vperm.slane %v1646, %v1955
        %v4983 = vperm.slane %v1658, %v1957
        %v4984 = vsel %vm1959, %v4983, %v4982
        %v4985 = vperm.slane %v1670, %v1955
        %v4986 = vperm.slane %v1682, %v1957
        %v4987 = vsel %vm1959, %v4986, %v4985
        %v4988 = vperm.slane %v1694, %v1955
        %v4989 = vperm.slane %v1706, %v1957
        %v4990 = vsel %vm1959, %v4989, %v4988
        %v4991 = vperm.slane %v1718, %v1955
        %v4992 = vperm.slane %v1730, %v1957
        %v4993 = vsel %vm1959, %v4992, %v4991
        %v4994 = vperm.slane %v1742, %v1955
        %v4995 = vperm.slane %v1754, %v1957
        %v4996 = vsel %vm1959, %v4995, %v4994
        %v4997 = vperm.slane %v1766, %v1955
        %v4998 = vperm.slane %v1778, %v1957
        %v4999 = vsel %vm1959, %v4998, %v4997
        %v5000 = vperm.slane %v1790, %v1955
        %v5001 = vperm.slane %v1802, %v1957
        %v5002 = vsel %vm1959, %v5001, %v5000
        %v5003 = vperm.slane %v1814, %v1955
        %v5004 = vperm.slane %v1826, %v1957
        %v5005 = vsel %vm1959, %v5004, %v5003
        %v5006 = vperm.slane %v1838, %v1955
        %v5007 = vperm.slane %v1850, %v1957
        %v5008 = vsel %vm1959, %v5007, %v5006
        %v5009 = vperm.slane %v1862, %v1955
        %v5010 = vperm.slane %v1874, %v1957
        %v5011 = vsel %vm1959, %v5010, %v5009
        %v5012 = vperm.slane %v1886, %v1955
        %v5013 = vperm.slane %v1898, %v1957
        %v5014 = vsel %vm1959, %v5013, %v5012
        %v5015 = vperm.slane %v1910, %v1955
        %v5016 = vperm.slane %v1922, %v1957
        %v5017 = vsel %vm1959, %v5016, %v5015
        %v5018 = vsel %vm2006, %v4975, %v4972
        %v5019 = vsel %vm2008, %v4978, %v5018
        %v5020 = vsel %vm2010, %v4981, %v5019
        %v5021 = vsel %vm2012, %v4984, %v5020
        %v5022 = vsel %vm2014, %v4987, %v5021
        %v5023 = vsel %vm2016, %v4990, %v5022
        %v5024 = vsel %vm2018, %v4993, %v5023
        %v5025 = vsel %vm2006, %v4999, %v4996
        %v5026 = vsel %vm2008, %v5002, %v5025
        %v5027 = vsel %vm2010, %v5005, %v5026
        %v5028 = vsel %vm2012, %v5008, %v5027
        %v5029 = vsel %vm2014, %v5011, %v5028
        %v5030 = vsel %vm2016, %v5014, %v5029
        %v5031 = vsel %vm2018, %v5017, %v5030
        %v5034 = vsel %vm2029, 0.0, %v5024
        %v5035 = vsel %vm2029, 0.0, %v5031
        %v5038 = vperm.slane %v5034, 0
        %v5039 = vlaneseq
        %v5040 = vshrl.u32 %v5039, 7
        %5042 = vset.pattern.permute.xlu0 %v5040
        %5043 = vperm.xlu0 %5042, %v5038
        %v5044 = vpop.permute.xlu0 %5043
        %v5045 = vlaneseq
        %v5046 = vshrl.u32 %v5045, 7
        %v5047 = vadd.s32 %v5046, 8
        %5048 = vset.pattern.permute.xlu0 %v5047
        %5049 = vperm.xlu0 %5048, %v5038
        %v5050 = vpop.permute.xlu0 %5049
        %v5051 = vperm.slane %v5034, 1
        %v5052 = vlaneseq
        %v5053 = vshrl.u32 %v5052, 7
        %5055 = vset.pattern.permute.xlu0 %v5053
        %5056 = vperm.xlu0 %5055, %v5051
        %v5057 = vpop.permute.xlu0 %5056
        %v5058 = vlaneseq
        %v5059 = vshrl.u32 %v5058, 7
        %v5060 = vadd.s32 %v5059, 8
        %5061 = vset.pattern.permute.xlu0 %v5060
        %5062 = vperm.xlu0 %5061, %v5051
        %v5063 = vpop.permute.xlu0 %5062
        %v5064 = vperm.slane %v5034, 2
        %v5065 = vlaneseq
        %v5066 = vshrl.u32 %v5065, 7
        %5068 = vset.pattern.permute.xlu0 %v5066
        %5069 = vperm.xlu0 %5068, %v5064
        %v5070 = vpop.permute.xlu0 %5069
        %v5071 = vlaneseq
        %v5072 = vshrl.u32 %v5071, 7
        %v5073 = vadd.s32 %v5072, 8
        %5074 = vset.pattern.permute.xlu0 %v5073
        %5075 = vperm.xlu0 %5074, %v5064
        %v5076 = vpop.permute.xlu0 %5075
        %v5077 = vperm.slane %v5034, 3
        %v5078 = vlaneseq
        %v5079 = vshrl.u32 %v5078, 7
        %5081 = vset.pattern.permute.xlu0 %v5079
        %5082 = vperm.xlu0 %5081, %v5077
        %v5083 = vpop.permute.xlu0 %5082
        %v5084 = vlaneseq
        %v5085 = vshrl.u32 %v5084, 7
        %v5086 = vadd.s32 %v5085, 8
        %5087 = vset.pattern.permute.xlu0 %v5086
        %5088 = vperm.xlu0 %5087, %v5077
        %v5089 = vpop.permute.xlu0 %5088
        %v5090 = vperm.slane %v5034, 4
        %v5091 = vlaneseq
        %v5092 = vshrl.u32 %v5091, 7
        %5094 = vset.pattern.permute.xlu0 %v5092
        %5095 = vperm.xlu0 %5094, %v5090
        %v5096 = vpop.permute.xlu0 %5095
        %v5097 = vlaneseq
        %v5098 = vshrl.u32 %v5097, 7
        %v5099 = vadd.s32 %v5098, 8
        %5100 = vset.pattern.permute.xlu0 %v5099
        %5101 = vperm.xlu0 %5100, %v5090
        %v5102 = vpop.permute.xlu0 %5101
        %v5103 = vperm.slane %v5034, 5
        %v5104 = vlaneseq
        %v5105 = vshrl.u32 %v5104, 7
        %5107 = vset.pattern.permute.xlu0 %v5105
        %5108 = vperm.xlu0 %5107, %v5103
        %v5109 = vpop.permute.xlu0 %5108
        %v5110 = vlaneseq
        %v5111 = vshrl.u32 %v5110, 7
        %v5112 = vadd.s32 %v5111, 8
        %5113 = vset.pattern.permute.xlu0 %v5112
        %5114 = vperm.xlu0 %5113, %v5103
        %v5115 = vpop.permute.xlu0 %5114
        %v5116 = vperm.slane %v5034, 6
        %v5117 = vlaneseq
        %v5118 = vshrl.u32 %v5117, 7
        %5120 = vset.pattern.permute.xlu0 %v5118
        %5121 = vperm.xlu0 %5120, %v5116
        %v5122 = vpop.permute.xlu0 %5121
        %v5123 = vlaneseq
        %v5124 = vshrl.u32 %v5123, 7
        %v5125 = vadd.s32 %v5124, 8
        %5126 = vset.pattern.permute.xlu0 %v5125
        %5127 = vperm.xlu0 %5126, %v5116
        %v5128 = vpop.permute.xlu0 %5127
        %v5129 = vperm.slane %v5034, 7
        %v5130 = vlaneseq
        %v5131 = vshrl.u32 %v5130, 7
        %5133 = vset.pattern.permute.xlu0 %v5131
        %5134 = vperm.xlu0 %5133, %v5129
        %v5135 = vpop.permute.xlu0 %5134
        %v5136 = vlaneseq
        %v5137 = vshrl.u32 %v5136, 7
        %v5138 = vadd.s32 %v5137, 8
        %5139 = vset.pattern.permute.xlu0 %v5138
        %5140 = vperm.xlu0 %5139, %v5129
        %v5141 = vpop.permute.xlu0 %5140
        %v5142 = vperm.slane %v5035, 0
        %v5143 = vlaneseq
        %v5144 = vshrl.u32 %v5143, 7
        %5146 = vset.pattern.permute.xlu0 %v5144
        %5147 = vperm.xlu0 %5146, %v5142
        %v5148 = vpop.permute.xlu0 %5147
        %v5149 = vlaneseq
        %v5150 = vshrl.u32 %v5149, 7
        %v5151 = vadd.s32 %v5150, 8
        %5152 = vset.pattern.permute.xlu0 %v5151
        %5153 = vperm.xlu0 %5152, %v5142
        %v5154 = vpop.permute.xlu0 %5153
        %v5155 = vperm.slane %v5035, 1
        %v5156 = vlaneseq
        %v5157 = vshrl.u32 %v5156, 7
        %5159 = vset.pattern.permute.xlu0 %v5157
        %5160 = vperm.xlu0 %5159, %v5155
        %v5161 = vpop.permute.xlu0 %5160
        %v5162 = vlaneseq
        %v5163 = vshrl.u32 %v5162, 7
        %v5164 = vadd.s32 %v5163, 8
        %5165 = vset.pattern.permute.xlu0 %v5164
        %5166 = vperm.xlu0 %5165, %v5155
        %v5167 = vpop.permute.xlu0 %5166
        %v5168 = vperm.slane %v5035, 2
        %v5169 = vlaneseq
        %v5170 = vshrl.u32 %v5169, 7
        %5172 = vset.pattern.permute.xlu0 %v5170
        %5173 = vperm.xlu0 %5172, %v5168
        %v5174 = vpop.permute.xlu0 %5173
        %v5175 = vlaneseq
        %v5176 = vshrl.u32 %v5175, 7
        %v5177 = vadd.s32 %v5176, 8
        %5178 = vset.pattern.permute.xlu0 %v5177
        %5179 = vperm.xlu0 %5178, %v5168
        %v5180 = vpop.permute.xlu0 %5179
        %v5181 = vperm.slane %v5035, 3
        %v5182 = vlaneseq
        %v5183 = vshrl.u32 %v5182, 7
        %5185 = vset.pattern.permute.xlu0 %v5183
        %5186 = vperm.xlu0 %5185, %v5181
        %v5187 = vpop.permute.xlu0 %5186
        %v5188 = vlaneseq
        %v5189 = vshrl.u32 %v5188, 7
        %v5190 = vadd.s32 %v5189, 8
        %5191 = vset.pattern.permute.xlu0 %v5190
        %5192 = vperm.xlu0 %5191, %v5181
        %v5193 = vpop.permute.xlu0 %5192
        %v5194 = vperm.slane %v5035, 4
        %v5195 = vlaneseq
        %v5196 = vshrl.u32 %v5195, 7
        %5198 = vset.pattern.permute.xlu0 %v5196
        %5199 = vperm.xlu0 %5198, %v5194
        %v5200 = vpop.permute.xlu0 %5199
        %v5201 = vlaneseq
        %v5202 = vshrl.u32 %v5201, 7
        %v5203 = vadd.s32 %v5202, 8
        %5204 = vset.pattern.permute.xlu0 %v5203
        %5205 = vperm.xlu0 %5204, %v5194
        %v5206 = vpop.permute.xlu0 %5205
        %v5207 = vperm.slane %v5035, 5
        %v5208 = vlaneseq
        %v5209 = vshrl.u32 %v5208, 7
        %5211 = vset.pattern.permute.xlu0 %v5209
        %5212 = vperm.xlu0 %5211, %v5207
        %v5213 = vpop.permute.xlu0 %5212
        %v5214 = vlaneseq
        %v5215 = vshrl.u32 %v5214, 7
        %v5216 = vadd.s32 %v5215, 8
        %5217 = vset.pattern.permute.xlu0 %v5216
        %5218 = vperm.xlu0 %5217, %v5207
        %v5219 = vpop.permute.xlu0 %5218
        %v5220 = vperm.slane %v5035, 6
        %v5221 = vlaneseq
        %v5222 = vshrl.u32 %v5221, 7
        %5224 = vset.pattern.permute.xlu0 %v5222
        %5225 = vperm.xlu0 %5224, %v5220
        %v5226 = vpop.permute.xlu0 %5225
        %v5227 = vlaneseq
        %v5228 = vshrl.u32 %v5227, 7
        %v5229 = vadd.s32 %v5228, 8
        %5230 = vset.pattern.permute.xlu0 %v5229
        %5231 = vperm.xlu0 %5230, %v5220
        %v5232 = vpop.permute.xlu0 %5231
        %v5233 = vperm.slane %v5035, 7
        %v5234 = vlaneseq
        %v5235 = vshrl.u32 %v5234, 7
        %5237 = vset.pattern.permute.xlu0 %v5235
        %5238 = vperm.xlu0 %5237, %v5233
        %v5239 = vpop.permute.xlu0 %5238
        %v5240 = vlaneseq
        %v5241 = vshrl.u32 %v5240, 7
        %v5242 = vadd.s32 %v5241, 8
        %5243 = vset.pattern.permute.xlu0 %v5242
        %5244 = vperm.xlu0 %5243, %v5233
        %v5245 = vpop.permute.xlu0 %5244
        %v5278 = vadd.f32 %v1550, %v5044
        %v5279 = vadd.f32 %v1562, %v5050
        %v5280 = vadd.f32 %v1574, %v5057
        %v5281 = vadd.f32 %v1586, %v5063
        %v5282 = vadd.f32 %v1598, %v5070
        %v5283 = vadd.f32 %v1610, %v5076
        %v5284 = vadd.f32 %v1622, %v5083
        %v5285 = vadd.f32 %v1634, %v5089
        %v5286 = vadd.f32 %v1646, %v5096
        %v5287 = vadd.f32 %v1658, %v5102
        %v5288 = vadd.f32 %v1670, %v5109
        %v5289 = vadd.f32 %v1682, %v5115
        %v5290 = vadd.f32 %v1694, %v5122
        %v5291 = vadd.f32 %v1706, %v5128
        %v5292 = vadd.f32 %v1718, %v5135
        %v5293 = vadd.f32 %v1730, %v5141
        %v5294 = vadd.f32 %v1742, %v5148
        %v5295 = vadd.f32 %v1754, %v5154
        %v5296 = vadd.f32 %v1766, %v5161
        %v5297 = vadd.f32 %v1778, %v5167
        %v5298 = vadd.f32 %v1790, %v5174
        %v5299 = vadd.f32 %v1802, %v5180
        %v5300 = vadd.f32 %v1814, %v5187
        %v5301 = vadd.f32 %v1826, %v5193
        %v5302 = vadd.f32 %v1838, %v5200
        %v5303 = vadd.f32 %v1850, %v5206
        %v5304 = vadd.f32 %v1862, %v5213
        %v5305 = vadd.f32 %v1874, %v5219
        %v5306 = vadd.f32 %v1886, %v5226
        %v5307 = vadd.f32 %v1898, %v5232
        %v5308 = vadd.f32 %v1910, %v5239
        %v5309 = vadd.f32 %v1922, %v5245
        %v5310 = vperm.slane %v1550, %v2306
        %v5311 = vperm.slane %v1562, %v2308
        %v5312 = vsel %vm2310, %v5311, %v5310
        %v5313 = vperm.slane %v1574, %v2306
        %v5314 = vperm.slane %v1586, %v2308
        %v5315 = vsel %vm2310, %v5314, %v5313
        %v5316 = vperm.slane %v1598, %v2306
        %v5317 = vperm.slane %v1610, %v2308
        %v5318 = vsel %vm2310, %v5317, %v5316
        %v5319 = vperm.slane %v1622, %v2306
        %v5320 = vperm.slane %v1634, %v2308
        %v5321 = vsel %vm2310, %v5320, %v5319
        %v5322 = vperm.slane %v1646, %v2306
        %v5323 = vperm.slane %v1658, %v2308
        %v5324 = vsel %vm2310, %v5323, %v5322
        %v5325 = vperm.slane %v1670, %v2306
        %v5326 = vperm.slane %v1682, %v2308
        %v5327 = vsel %vm2310, %v5326, %v5325
        %v5328 = vperm.slane %v1694, %v2306
        %v5329 = vperm.slane %v1706, %v2308
        %v5330 = vsel %vm2310, %v5329, %v5328
        %v5331 = vperm.slane %v1718, %v2306
        %v5332 = vperm.slane %v1730, %v2308
        %v5333 = vsel %vm2310, %v5332, %v5331
        %v5334 = vperm.slane %v1742, %v2306
        %v5335 = vperm.slane %v1754, %v2308
        %v5336 = vsel %vm2310, %v5335, %v5334
        %v5337 = vperm.slane %v1766, %v2306
        %v5338 = vperm.slane %v1778, %v2308
        %v5339 = vsel %vm2310, %v5338, %v5337
        %v5340 = vperm.slane %v1790, %v2306
        %v5341 = vperm.slane %v1802, %v2308
        %v5342 = vsel %vm2310, %v5341, %v5340
        %v5343 = vperm.slane %v1814, %v2306
        %v5344 = vperm.slane %v1826, %v2308
        %v5345 = vsel %vm2310, %v5344, %v5343
        %v5346 = vperm.slane %v1838, %v2306
        %v5347 = vperm.slane %v1850, %v2308
        %v5348 = vsel %vm2310, %v5347, %v5346
        %v5349 = vperm.slane %v1862, %v2306
        %v5350 = vperm.slane %v1874, %v2308
        %v5351 = vsel %vm2310, %v5350, %v5349
        %v5352 = vperm.slane %v1886, %v2306
        %v5353 = vperm.slane %v1898, %v2308
        %v5354 = vsel %vm2310, %v5353, %v5352
        %v5355 = vperm.slane %v1910, %v2306
        %v5356 = vperm.slane %v1922, %v2308
        %v5357 = vsel %vm2310, %v5356, %v5355
        %v5358 = vsel %vm2008, %v5315, %v5312
        %v5359 = vsel %vm2010, %v5318, %v5358
        %v5360 = vsel %vm2012, %v5321, %v5359
        %v5361 = vsel %vm2014, %v5324, %v5360
        %v5362 = vsel %vm2016, %v5327, %v5361
        %v5363 = vsel %vm2018, %v5330, %v5362
        %v5364 = vsel %vm2006, %v5336, %v5333
        %v5365 = vsel %vm2008, %v5339, %v5364
        %v5366 = vsel %vm2010, %v5342, %v5365
        %v5367 = vsel %vm2012, %v5345, %v5366
        %v5368 = vsel %vm2014, %v5348, %v5367
        %v5369 = vsel %vm2016, %v5351, %v5368
        %v5370 = vsel %vm2018, %v5354, %v5369
        %v5374 = vsel %vm2373, %v5363, 0.0
        %v5375 = vsel %vm2373, %v5370, 0.0
        %v5376 = vsel %vm2373, %v5357, 0.0
        %v5380 = vperm.slane %v5374, 1
        %v5381 = vlaneseq
        %v5382 = vshrl.u32 %v5381, 7
        %5384 = vset.pattern.permute.xlu0 %v5382
        %5385 = vperm.xlu0 %5384, %v5380
        %v5386 = vpop.permute.xlu0 %5385
        %v5387 = vlaneseq
        %v5388 = vshrl.u32 %v5387, 7
        %v5389 = vadd.s32 %v5388, 8
        %5390 = vset.pattern.permute.xlu0 %v5389
        %5391 = vperm.xlu0 %5390, %v5380
        %v5392 = vpop.permute.xlu0 %5391
        %v5393 = vperm.slane %v5374, 2
        %v5394 = vlaneseq
        %v5395 = vshrl.u32 %v5394, 7
        %5397 = vset.pattern.permute.xlu0 %v5395
        %5398 = vperm.xlu0 %5397, %v5393
        %v5399 = vpop.permute.xlu0 %5398
        %v5400 = vlaneseq
        %v5401 = vshrl.u32 %v5400, 7
        %v5402 = vadd.s32 %v5401, 8
        %5403 = vset.pattern.permute.xlu0 %v5402
        %5404 = vperm.xlu0 %5403, %v5393
        %v5405 = vpop.permute.xlu0 %5404
        %v5406 = vperm.slane %v5374, 3
        %v5407 = vlaneseq
        %v5408 = vshrl.u32 %v5407, 7
        %5410 = vset.pattern.permute.xlu0 %v5408
        %5411 = vperm.xlu0 %5410, %v5406
        %v5412 = vpop.permute.xlu0 %5411
        %v5413 = vlaneseq
        %v5414 = vshrl.u32 %v5413, 7
        %v5415 = vadd.s32 %v5414, 8
        %5416 = vset.pattern.permute.xlu0 %v5415
        %5417 = vperm.xlu0 %5416, %v5406
        %v5418 = vpop.permute.xlu0 %5417
        %v5419 = vperm.slane %v5374, 4
        %v5420 = vlaneseq
        %v5421 = vshrl.u32 %v5420, 7
        %5423 = vset.pattern.permute.xlu0 %v5421
        %5424 = vperm.xlu0 %5423, %v5419
        %v5425 = vpop.permute.xlu0 %5424
        %v5426 = vlaneseq
        %v5427 = vshrl.u32 %v5426, 7
        %v5428 = vadd.s32 %v5427, 8
        %5429 = vset.pattern.permute.xlu0 %v5428
        %5430 = vperm.xlu0 %5429, %v5419
        %v5431 = vpop.permute.xlu0 %5430
        %v5432 = vperm.slane %v5374, 5
        %v5433 = vlaneseq
        %v5434 = vshrl.u32 %v5433, 7
        %5436 = vset.pattern.permute.xlu0 %v5434
        %5437 = vperm.xlu0 %5436, %v5432
        %v5438 = vpop.permute.xlu0 %5437
        %v5439 = vlaneseq
        %v5440 = vshrl.u32 %v5439, 7
        %v5441 = vadd.s32 %v5440, 8
        %5442 = vset.pattern.permute.xlu0 %v5441
        %5443 = vperm.xlu0 %5442, %v5432
        %v5444 = vpop.permute.xlu0 %5443
        %v5445 = vperm.slane %v5374, 6
        %v5446 = vlaneseq
        %v5447 = vshrl.u32 %v5446, 7
        %5449 = vset.pattern.permute.xlu0 %v5447
        %5450 = vperm.xlu0 %5449, %v5445
        %v5451 = vpop.permute.xlu0 %5450
        %v5452 = vlaneseq
        %v5453 = vshrl.u32 %v5452, 7
        %v5454 = vadd.s32 %v5453, 8
        %5455 = vset.pattern.permute.xlu0 %v5454
        %5456 = vperm.xlu0 %5455, %v5445
        %v5457 = vpop.permute.xlu0 %5456
        %v5458 = vperm.slane %v5374, 7
        %v5459 = vlaneseq
        %v5460 = vshrl.u32 %v5459, 7
        %5462 = vset.pattern.permute.xlu0 %v5460
        %5463 = vperm.xlu0 %5462, %v5458
        %v5464 = vpop.permute.xlu0 %5463
        %v5465 = vlaneseq
        %v5466 = vshrl.u32 %v5465, 7
        %v5467 = vadd.s32 %v5466, 8
        %5468 = vset.pattern.permute.xlu0 %v5467
        %5469 = vperm.xlu0 %5468, %v5458
        %v5470 = vpop.permute.xlu0 %5469
        %v5471 = vperm.slane %v5375, 0
        %v5472 = vlaneseq
        %v5473 = vshrl.u32 %v5472, 7
        %5475 = vset.pattern.permute.xlu0 %v5473
        %5476 = vperm.xlu0 %5475, %v5471
        %v5477 = vpop.permute.xlu0 %5476
        %v5478 = vlaneseq
        %v5479 = vshrl.u32 %v5478, 7
        %v5480 = vadd.s32 %v5479, 8
        %5481 = vset.pattern.permute.xlu0 %v5480
        %5482 = vperm.xlu0 %5481, %v5471
        %v5483 = vpop.permute.xlu0 %5482
        %v5484 = vperm.slane %v5375, 1
        %v5485 = vlaneseq
        %v5486 = vshrl.u32 %v5485, 7
        %5488 = vset.pattern.permute.xlu0 %v5486
        %5489 = vperm.xlu0 %5488, %v5484
        %v5490 = vpop.permute.xlu0 %5489
        %v5491 = vlaneseq
        %v5492 = vshrl.u32 %v5491, 7
        %v5493 = vadd.s32 %v5492, 8
        %5494 = vset.pattern.permute.xlu0 %v5493
        %5495 = vperm.xlu0 %5494, %v5484
        %v5496 = vpop.permute.xlu0 %5495
        %v5497 = vperm.slane %v5375, 2
        %v5498 = vlaneseq
        %v5499 = vshrl.u32 %v5498, 7
        %5501 = vset.pattern.permute.xlu0 %v5499
        %5502 = vperm.xlu0 %5501, %v5497
        %v5503 = vpop.permute.xlu0 %5502
        %v5504 = vlaneseq
        %v5505 = vshrl.u32 %v5504, 7
        %v5506 = vadd.s32 %v5505, 8
        %5507 = vset.pattern.permute.xlu0 %v5506
        %5508 = vperm.xlu0 %5507, %v5497
        %v5509 = vpop.permute.xlu0 %5508
        %v5510 = vperm.slane %v5375, 3
        %v5511 = vlaneseq
        %v5512 = vshrl.u32 %v5511, 7
        %5514 = vset.pattern.permute.xlu0 %v5512
        %5515 = vperm.xlu0 %5514, %v5510
        %v5516 = vpop.permute.xlu0 %5515
        %v5517 = vlaneseq
        %v5518 = vshrl.u32 %v5517, 7
        %v5519 = vadd.s32 %v5518, 8
        %5520 = vset.pattern.permute.xlu0 %v5519
        %5521 = vperm.xlu0 %5520, %v5510
        %v5522 = vpop.permute.xlu0 %5521
        %v5523 = vperm.slane %v5375, 4
        %v5524 = vlaneseq
        %v5525 = vshrl.u32 %v5524, 7
        %5527 = vset.pattern.permute.xlu0 %v5525
        %5528 = vperm.xlu0 %5527, %v5523
        %v5529 = vpop.permute.xlu0 %5528
        %v5530 = vlaneseq
        %v5531 = vshrl.u32 %v5530, 7
        %v5532 = vadd.s32 %v5531, 8
        %5533 = vset.pattern.permute.xlu0 %v5532
        %5534 = vperm.xlu0 %5533, %v5523
        %v5535 = vpop.permute.xlu0 %5534
        %v5536 = vperm.slane %v5375, 5
        %v5537 = vlaneseq
        %v5538 = vshrl.u32 %v5537, 7
        %5540 = vset.pattern.permute.xlu0 %v5538
        %5541 = vperm.xlu0 %5540, %v5536
        %v5542 = vpop.permute.xlu0 %5541
        %v5543 = vlaneseq
        %v5544 = vshrl.u32 %v5543, 7
        %v5545 = vadd.s32 %v5544, 8
        %5546 = vset.pattern.permute.xlu0 %v5545
        %5547 = vperm.xlu0 %5546, %v5536
        %v5548 = vpop.permute.xlu0 %5547
        %v5549 = vperm.slane %v5375, 6
        %v5550 = vlaneseq
        %v5551 = vshrl.u32 %v5550, 7
        %5553 = vset.pattern.permute.xlu0 %v5551
        %5554 = vperm.xlu0 %5553, %v5549
        %v5555 = vpop.permute.xlu0 %5554
        %v5556 = vlaneseq
        %v5557 = vshrl.u32 %v5556, 7
        %v5558 = vadd.s32 %v5557, 8
        %5559 = vset.pattern.permute.xlu0 %v5558
        %5560 = vperm.xlu0 %5559, %v5549
        %v5561 = vpop.permute.xlu0 %5560
        %v5562 = vperm.slane %v5375, 7
        %v5563 = vlaneseq
        %v5564 = vshrl.u32 %v5563, 7
        %5566 = vset.pattern.permute.xlu0 %v5564
        %5567 = vperm.xlu0 %5566, %v5562
        %v5568 = vpop.permute.xlu0 %5567
        %v5569 = vlaneseq
        %v5570 = vshrl.u32 %v5569, 7
        %v5571 = vadd.s32 %v5570, 8
        %5572 = vset.pattern.permute.xlu0 %v5571
        %5573 = vperm.xlu0 %5572, %v5562
        %v5574 = vpop.permute.xlu0 %5573
        %v5575 = vperm.slane %v5376, 0
        %v5576 = vlaneseq
        %v5577 = vshrl.u32 %v5576, 7
        %5579 = vset.pattern.permute.xlu0 %v5577
        %5580 = vperm.xlu0 %5579, %v5575
        %v5581 = vpop.permute.xlu0 %5580
        %v5582 = vlaneseq
        %v5583 = vshrl.u32 %v5582, 7
        %v5584 = vadd.s32 %v5583, 8
        %5585 = vset.pattern.permute.xlu0 %v5584
        %5586 = vperm.xlu0 %5585, %v5575
        %v5587 = vpop.permute.xlu0 %5586
        %v5620 = vadd.f32 %v5278, %v5386
        %v5621 = vadd.f32 %v5279, %v5392
        %v5622 = vadd.f32 %v5280, %v5399
        %v5623 = vadd.f32 %v5281, %v5405
        %v5624 = vadd.f32 %v5282, %v5412
        %v5625 = vadd.f32 %v5283, %v5418
        %v5626 = vadd.f32 %v5284, %v5425
        %v5627 = vadd.f32 %v5285, %v5431
        %v5628 = vadd.f32 %v5286, %v5438
        %v5629 = vadd.f32 %v5287, %v5444
        %v5630 = vadd.f32 %v5288, %v5451
        %v5631 = vadd.f32 %v5289, %v5457
        %v5632 = vadd.f32 %v5290, %v5464
        %v5633 = vadd.f32 %v5291, %v5470
        %v5634 = vadd.f32 %v5292, %v5477
        %v5635 = vadd.f32 %v5293, %v5483
        %v5636 = vadd.f32 %v5294, %v5490
        %v5637 = vadd.f32 %v5295, %v5496
        %v5638 = vadd.f32 %v5296, %v5503
        %v5639 = vadd.f32 %v5297, %v5509
        %v5640 = vadd.f32 %v5298, %v5516
        %v5641 = vadd.f32 %v5299, %v5522
        %v5642 = vadd.f32 %v5300, %v5529
        %v5643 = vadd.f32 %v5301, %v5535
        %v5644 = vadd.f32 %v5302, %v5542
        %v5645 = vadd.f32 %v5303, %v5548
        %v5646 = vadd.f32 %v5304, %v5555
        %v5647 = vadd.f32 %v5305, %v5561
        %v5648 = vadd.f32 %v5306, %v5568
        %v5649 = vadd.f32 %v5307, %v5574
        %v5650 = vadd.f32 %v5308, %v5581
        %v5651 = vadd.f32 %v5309, %v5587
        %5682 = vset.pattern.permute.xlu0 0
        %5683 = vperm.xlu0 %5682, %v5620
        %v5684 = vpop.permute.xlu0 %5683
        %5685 = vset.pattern.permute.xlu0 0
        %5686 = vperm.xlu0 %5685, %v5621
        %v5687 = vpop.permute.xlu0 %5686
        %5688 = vset.pattern.permute.xlu0 0
        %5689 = vperm.xlu0 %5688, %v5622
        %v5690 = vpop.permute.xlu0 %5689
        %5691 = vset.pattern.permute.xlu0 0
        %5692 = vperm.xlu0 %5691, %v5623
        %v5693 = vpop.permute.xlu0 %5692
        %5694 = vset.pattern.permute.xlu0 0
        %5695 = vperm.xlu0 %5694, %v5624
        %v5696 = vpop.permute.xlu0 %5695
        %5697 = vset.pattern.permute.xlu0 0
        %5698 = vperm.xlu0 %5697, %v5625
        %v5699 = vpop.permute.xlu0 %5698
        %5700 = vset.pattern.permute.xlu0 0
        %5701 = vperm.xlu0 %5700, %v5626
        %v5702 = vpop.permute.xlu0 %5701
        %5703 = vset.pattern.permute.xlu0 0
        %5704 = vperm.xlu0 %5703, %v5627
        %v5705 = vpop.permute.xlu0 %5704
        %5706 = vset.pattern.permute.xlu0 0
        %5707 = vperm.xlu0 %5706, %v5628
        %v5708 = vpop.permute.xlu0 %5707
        %5709 = vset.pattern.permute.xlu0 0
        %5710 = vperm.xlu0 %5709, %v5629
        %v5711 = vpop.permute.xlu0 %5710
        %5712 = vset.pattern.permute.xlu0 0
        %5713 = vperm.xlu0 %5712, %v5630
        %v5714 = vpop.permute.xlu0 %5713
        %5715 = vset.pattern.permute.xlu0 0
        %5716 = vperm.xlu0 %5715, %v5631
        %v5717 = vpop.permute.xlu0 %5716
        %5718 = vset.pattern.permute.xlu0 0
        %5719 = vperm.xlu0 %5718, %v5632
        %v5720 = vpop.permute.xlu0 %5719
        %5721 = vset.pattern.permute.xlu0 0
        %5722 = vperm.xlu0 %5721, %v5633
        %v5723 = vpop.permute.xlu0 %5722
        %5724 = vset.pattern.permute.xlu0 0
        %5725 = vperm.xlu0 %5724, %v5634
        %v5726 = vpop.permute.xlu0 %5725
        %5727 = vset.pattern.permute.xlu0 0
        %5728 = vperm.xlu0 %5727, %v5635
        %v5729 = vpop.permute.xlu0 %5728
        %5730 = vset.pattern.permute.xlu0 0
        %5731 = vperm.xlu0 %5730, %v5636
        %v5732 = vpop.permute.xlu0 %5731
        %5733 = vset.pattern.permute.xlu0 0
        %5734 = vperm.xlu0 %5733, %v5637
        %v5735 = vpop.permute.xlu0 %5734
        %5736 = vset.pattern.permute.xlu0 0
        %5737 = vperm.xlu0 %5736, %v5638
        %v5738 = vpop.permute.xlu0 %5737
        %5739 = vset.pattern.permute.xlu0 0
        %5740 = vperm.xlu0 %5739, %v5639
        %v5741 = vpop.permute.xlu0 %5740
        %5742 = vset.pattern.permute.xlu0 0
        %5743 = vperm.xlu0 %5742, %v5640
        %v5744 = vpop.permute.xlu0 %5743
        %5745 = vset.pattern.permute.xlu0 0
        %5746 = vperm.xlu0 %5745, %v5641
        %v5747 = vpop.permute.xlu0 %5746
        %5748 = vset.pattern.permute.xlu0 0
        %5749 = vperm.xlu0 %5748, %v5642
        %v5750 = vpop.permute.xlu0 %5749
        %5751 = vset.pattern.permute.xlu0 0
        %5752 = vperm.xlu0 %5751, %v5643
        %v5753 = vpop.permute.xlu0 %5752
        %5754 = vset.pattern.permute.xlu0 0
        %5755 = vperm.xlu0 %5754, %v5644
        %v5756 = vpop.permute.xlu0 %5755
        %5757 = vset.pattern.permute.xlu0 0
        %5758 = vperm.xlu0 %5757, %v5645
        %v5759 = vpop.permute.xlu0 %5758
        %5760 = vset.pattern.permute.xlu0 0
        %5761 = vperm.xlu0 %5760, %v5646
        %v5762 = vpop.permute.xlu0 %5761
        %5763 = vset.pattern.permute.xlu0 0
        %5764 = vperm.xlu0 %5763, %v5647
        %v5765 = vpop.permute.xlu0 %5764
        %5766 = vset.pattern.permute.xlu0 0
        %5767 = vperm.xlu0 %5766, %v5648
        %v5768 = vpop.permute.xlu0 %5767
        %5769 = vset.pattern.permute.xlu0 0
        %5770 = vperm.xlu0 %5769, %v5649
        %v5771 = vpop.permute.xlu0 %5770
        %v5772 = vperm.slane %v5684, %v1181
        %v5773 = vperm.slane %v5687, %v2773
        %v5774 = vsel %vm2775, %v5773, %v5772
        %v5775 = vperm.slane %v5690, %v1181
        %v5776 = vperm.slane %v5693, %v2773
        %v5777 = vsel %vm2775, %v5776, %v5775
        %v5778 = vperm.slane %v5696, %v1181
        %v5779 = vperm.slane %v5699, %v2773
        %v5780 = vsel %vm2775, %v5779, %v5778
        %v5781 = vperm.slane %v5702, %v1181
        %v5782 = vperm.slane %v5705, %v2773
        %v5783 = vsel %vm2775, %v5782, %v5781
        %v5784 = vperm.slane %v5708, %v1181
        %v5785 = vperm.slane %v5711, %v2773
        %v5786 = vsel %vm2775, %v5785, %v5784
        %v5787 = vperm.slane %v5714, %v1181
        %v5788 = vperm.slane %v5717, %v2773
        %v5789 = vsel %vm2775, %v5788, %v5787
        %v5790 = vperm.slane %v5720, %v1181
        %v5791 = vperm.slane %v5723, %v2773
        %v5792 = vsel %vm2775, %v5791, %v5790
        %v5793 = vperm.slane %v5726, %v1181
        %v5794 = vperm.slane %v5729, %v2773
        %v5795 = vsel %vm2775, %v5794, %v5793
        %v5796 = vperm.slane %v5732, %v1181
        %v5797 = vperm.slane %v5735, %v2773
        %v5798 = vsel %vm2775, %v5797, %v5796
        %v5799 = vperm.slane %v5738, %v1181
        %v5800 = vperm.slane %v5741, %v2773
        %v5801 = vsel %vm2775, %v5800, %v5799
        %v5802 = vperm.slane %v5744, %v1181
        %v5803 = vperm.slane %v5747, %v2773
        %v5804 = vsel %vm2775, %v5803, %v5802
        %v5805 = vperm.slane %v5750, %v1181
        %v5806 = vperm.slane %v5753, %v2773
        %v5807 = vsel %vm2775, %v5806, %v5805
        %v5808 = vperm.slane %v5756, %v1181
        %v5809 = vperm.slane %v5759, %v2773
        %v5810 = vsel %vm2775, %v5809, %v5808
        %v5811 = vperm.slane %v5762, %v1181
        %v5812 = vperm.slane %v5765, %v2773
        %v5813 = vsel %vm2775, %v5812, %v5811
        %v5814 = vperm.slane %v5768, %v1181
        %v5815 = vperm.slane %v5771, %v2773
        %v5816 = vsel %vm2775, %v5815, %v5814
        %v5817 = vsel %vm2008, %v5777, %v5774
        %v5818 = vsel %vm2010, %v5780, %v5817
        %v5819 = vsel %vm2012, %v5783, %v5818
        %v5820 = vsel %vm2014, %v5786, %v5819
        %v5821 = vsel %vm2016, %v5789, %v5820
        %v5822 = vsel %vm2018, %v5792, %v5821
        %v5823 = vsel %vm2006, %v5798, %v5795
        %v5824 = vsel %vm2008, %v5801, %v5823
        %v5825 = vsel %vm2010, %v5804, %v5824
        %v5826 = vsel %vm2012, %v5807, %v5825
        %v5827 = vsel %vm2014, %v5810, %v5826
        %v5828 = vsel %vm2016, %v5813, %v5827
        %v5829 = vsel %vm2018, %v5816, %v5828
        %v5831 = vsel %vm2833, 0.0, %v5822
        %v5833 = vperm.slane %v5831, 0
        %v5834 = vlaneseq
        %v5835 = vshrl.u32 %v5834, 7
        %5837 = vset.pattern.permute.xlu0 %v5835
        %5838 = vperm.xlu0 %5837, %v5833
        %v5839 = vpop.permute.xlu0 %5838
        %v5840 = vlaneseq
        %v5841 = vshrl.u32 %v5840, 7
        %v5842 = vadd.s32 %v5841, 8
        %5843 = vset.pattern.permute.xlu0 %v5842
        %5844 = vperm.xlu0 %5843, %v5833
        %v5845 = vpop.permute.xlu0 %5844
        %v5846 = vperm.slane %v5831, 1
        %v5847 = vlaneseq
        %v5848 = vshrl.u32 %v5847, 7
        %5850 = vset.pattern.permute.xlu0 %v5848
        %5851 = vperm.xlu0 %5850, %v5846
        %v5852 = vpop.permute.xlu0 %5851
        %v5853 = vlaneseq
        %v5854 = vshrl.u32 %v5853, 7
        %v5855 = vadd.s32 %v5854, 8
        %5856 = vset.pattern.permute.xlu0 %v5855
        %5857 = vperm.xlu0 %5856, %v5846
        %v5858 = vpop.permute.xlu0 %5857
        %v5859 = vperm.slane %v5831, 2
        %v5860 = vlaneseq
        %v5861 = vshrl.u32 %v5860, 7
        %5863 = vset.pattern.permute.xlu0 %v5861
        %5864 = vperm.xlu0 %5863, %v5859
        %v5865 = vpop.permute.xlu0 %5864
        %v5866 = vlaneseq
        %v5867 = vshrl.u32 %v5866, 7
        %v5868 = vadd.s32 %v5867, 8
        %5869 = vset.pattern.permute.xlu0 %v5868
        %5870 = vperm.xlu0 %5869, %v5859
        %v5871 = vpop.permute.xlu0 %5870
        %v5872 = vperm.slane %v5831, 3
        %v5873 = vlaneseq
        %v5874 = vshrl.u32 %v5873, 7
        %5876 = vset.pattern.permute.xlu0 %v5874
        %5877 = vperm.xlu0 %5876, %v5872
        %v5878 = vpop.permute.xlu0 %5877
        %v5879 = vlaneseq
        %v5880 = vshrl.u32 %v5879, 7
        %v5881 = vadd.s32 %v5880, 8
        %5882 = vset.pattern.permute.xlu0 %v5881
        %5883 = vperm.xlu0 %5882, %v5872
        %v5884 = vpop.permute.xlu0 %5883
        %v5885 = vperm.slane %v5831, 4
        %v5886 = vlaneseq
        %v5887 = vshrl.u32 %v5886, 7
        %5889 = vset.pattern.permute.xlu0 %v5887
        %5890 = vperm.xlu0 %5889, %v5885
        %v5891 = vpop.permute.xlu0 %5890
        %v5892 = vlaneseq
        %v5893 = vshrl.u32 %v5892, 7
        %v5894 = vadd.s32 %v5893, 8
        %5895 = vset.pattern.permute.xlu0 %v5894
        %5896 = vperm.xlu0 %5895, %v5885
        %v5897 = vpop.permute.xlu0 %5896
        %v5898 = vperm.slane %v5831, 5
        %v5899 = vlaneseq
        %v5900 = vshrl.u32 %v5899, 7
        %5902 = vset.pattern.permute.xlu0 %v5900
        %5903 = vperm.xlu0 %5902, %v5898
        %v5904 = vpop.permute.xlu0 %5903
        %v5905 = vlaneseq
        %v5906 = vshrl.u32 %v5905, 7
        %v5907 = vadd.s32 %v5906, 8
        %5908 = vset.pattern.permute.xlu0 %v5907
        %5909 = vperm.xlu0 %5908, %v5898
        %v5910 = vpop.permute.xlu0 %5909
        %v5911 = vperm.slane %v5831, 6
        %v5912 = vlaneseq
        %v5913 = vshrl.u32 %v5912, 7
        %5915 = vset.pattern.permute.xlu0 %v5913
        %5916 = vperm.xlu0 %5915, %v5911
        %v5917 = vpop.permute.xlu0 %5916
        %v5918 = vlaneseq
        %v5919 = vshrl.u32 %v5918, 7
        %v5920 = vadd.s32 %v5919, 8
        %5921 = vset.pattern.permute.xlu0 %v5920
        %5922 = vperm.xlu0 %5921, %v5911
        %v5923 = vpop.permute.xlu0 %5922
        %v5924 = vperm.slane %v5831, 7
        %v5925 = vlaneseq
        %v5926 = vshrl.u32 %v5925, 7
        %5928 = vset.pattern.permute.xlu0 %v5926
        %5929 = vperm.xlu0 %5928, %v5924
        %v5930 = vpop.permute.xlu0 %5929
        %v5931 = vlaneseq
        %v5932 = vshrl.u32 %v5931, 7
        %v5933 = vadd.s32 %v5932, 8
        %5934 = vset.pattern.permute.xlu0 %v5933
        %5935 = vperm.xlu0 %5934, %v5924
        %v5936 = vpop.permute.xlu0 %5935
        %v5937 = vperm.slane %v5829, 0
        %v5938 = vlaneseq
        %v5939 = vshrl.u32 %v5938, 7
        %5941 = vset.pattern.permute.xlu0 %v5939
        %5942 = vperm.xlu0 %5941, %v5937
        %v5943 = vpop.permute.xlu0 %5942
        %v5944 = vlaneseq
        %v5945 = vshrl.u32 %v5944, 7
        %v5946 = vadd.s32 %v5945, 8
        %5947 = vset.pattern.permute.xlu0 %v5946
        %5948 = vperm.xlu0 %5947, %v5937
        %v5949 = vpop.permute.xlu0 %5948
        %v5950 = vperm.slane %v5829, 1
        %v5951 = vlaneseq
        %v5952 = vshrl.u32 %v5951, 7
        %5954 = vset.pattern.permute.xlu0 %v5952
        %5955 = vperm.xlu0 %5954, %v5950
        %v5956 = vpop.permute.xlu0 %5955
        %v5957 = vlaneseq
        %v5958 = vshrl.u32 %v5957, 7
        %v5959 = vadd.s32 %v5958, 8
        %5960 = vset.pattern.permute.xlu0 %v5959
        %5961 = vperm.xlu0 %5960, %v5950
        %v5962 = vpop.permute.xlu0 %5961
        %v5963 = vperm.slane %v5829, 2
        %v5964 = vlaneseq
        %v5965 = vshrl.u32 %v5964, 7
        %5967 = vset.pattern.permute.xlu0 %v5965
        %5968 = vperm.xlu0 %5967, %v5963
        %v5969 = vpop.permute.xlu0 %5968
        %v5970 = vlaneseq
        %v5971 = vshrl.u32 %v5970, 7
        %v5972 = vadd.s32 %v5971, 8
        %5973 = vset.pattern.permute.xlu0 %v5972
        %5974 = vperm.xlu0 %5973, %v5963
        %v5975 = vpop.permute.xlu0 %5974
        %v5976 = vperm.slane %v5829, 3
        %v5977 = vlaneseq
        %v5978 = vshrl.u32 %v5977, 7
        %5980 = vset.pattern.permute.xlu0 %v5978
        %5981 = vperm.xlu0 %5980, %v5976
        %v5982 = vpop.permute.xlu0 %5981
        %v5983 = vlaneseq
        %v5984 = vshrl.u32 %v5983, 7
        %v5985 = vadd.s32 %v5984, 8
        %5986 = vset.pattern.permute.xlu0 %v5985
        %5987 = vperm.xlu0 %5986, %v5976
        %v5988 = vpop.permute.xlu0 %5987
        %v5989 = vperm.slane %v5829, 4
        %v5990 = vlaneseq
        %v5991 = vshrl.u32 %v5990, 7
        %5993 = vset.pattern.permute.xlu0 %v5991
        %5994 = vperm.xlu0 %5993, %v5989
        %v5995 = vpop.permute.xlu0 %5994
        %v5996 = vlaneseq
        %v5997 = vshrl.u32 %v5996, 7
        %v5998 = vadd.s32 %v5997, 8
        %5999 = vset.pattern.permute.xlu0 %v5998
        %6000 = vperm.xlu0 %5999, %v5989
        %v6001 = vpop.permute.xlu0 %6000
        %v6002 = vperm.slane %v5829, 5
        %v6003 = vlaneseq
        %v6004 = vshrl.u32 %v6003, 7
        %6006 = vset.pattern.permute.xlu0 %v6004
        %6007 = vperm.xlu0 %6006, %v6002
        %v6008 = vpop.permute.xlu0 %6007
        %v6009 = vlaneseq
        %v6010 = vshrl.u32 %v6009, 7
        %v6011 = vadd.s32 %v6010, 8
        %6012 = vset.pattern.permute.xlu0 %v6011
        %6013 = vperm.xlu0 %6012, %v6002
        %v6014 = vpop.permute.xlu0 %6013
        %v6015 = vperm.slane %v5829, 6
        %v6016 = vlaneseq
        %v6017 = vshrl.u32 %v6016, 7
        %6019 = vset.pattern.permute.xlu0 %v6017
        %6020 = vperm.xlu0 %6019, %v6015
        %v6021 = vpop.permute.xlu0 %6020
        %v6022 = vlaneseq
        %v6023 = vshrl.u32 %v6022, 7
        %v6024 = vadd.s32 %v6023, 8
        %6025 = vset.pattern.permute.xlu0 %v6024
        %6026 = vperm.xlu0 %6025, %v6015
        %v6027 = vpop.permute.xlu0 %6026
        %v6028 = vperm.slane %v5829, 7
        %v6029 = vlaneseq
        %v6030 = vshrl.u32 %v6029, 7
        %6032 = vset.pattern.permute.xlu0 %v6030
        %6033 = vperm.xlu0 %6032, %v6028
        %v6034 = vpop.permute.xlu0 %6033
        %v6035 = vlaneseq
        %v6036 = vshrl.u32 %v6035, 7
        %v6037 = vadd.s32 %v6036, 8
        %6038 = vset.pattern.permute.xlu0 %v6037
        %6039 = vperm.xlu0 %6038, %v6028
        %v6040 = vpop.permute.xlu0 %6039
        %v6073 = vadd.f32 %v5620, %v5839
        %v6074 = vadd.f32 %v5621, %v5845
        %v6075 = vadd.f32 %v5622, %v5852
        %v6076 = vadd.f32 %v5623, %v5858
        %v6077 = vadd.f32 %v5624, %v5865
        %v6078 = vadd.f32 %v5625, %v5871
        %v6079 = vadd.f32 %v5626, %v5878
        %v6080 = vadd.f32 %v5627, %v5884
        %v6081 = vadd.f32 %v5628, %v5891
        %v6082 = vadd.f32 %v5629, %v5897
        %v6083 = vadd.f32 %v5630, %v5904
        %v6084 = vadd.f32 %v5631, %v5910
        %v6085 = vadd.f32 %v5632, %v5917
        %v6086 = vadd.f32 %v5633, %v5923
        %v6087 = vadd.f32 %v5634, %v5930
        %v6088 = vadd.f32 %v5635, %v5936
        %v6089 = vadd.f32 %v5636, %v5943
        %v6090 = vadd.f32 %v5637, %v5949
        %v6091 = vadd.f32 %v5638, %v5956
        %v6092 = vadd.f32 %v5639, %v5962
        %v6093 = vadd.f32 %v5640, %v5969
        %v6094 = vadd.f32 %v5641, %v5975
        %v6095 = vadd.f32 %v5642, %v5982
        %v6096 = vadd.f32 %v5643, %v5988
        %v6097 = vadd.f32 %v5644, %v5995
        %v6098 = vadd.f32 %v5645, %v6001
        %v6099 = vadd.f32 %v5646, %v6008
        %v6100 = vadd.f32 %v5647, %v6014
        %v6101 = vadd.f32 %v5648, %v6021
        %v6102 = vadd.f32 %v5649, %v6027
        %v6103 = vadd.f32 %v5650, %v6034
        %v6104 = vadd.f32 %v5651, %v6040
        %6107 = vset.pattern.permute.xlu0 0
        %6108 = vperm.xlu0 %6107, %v5650
        %v6109 = vpop.permute.xlu0 %6108
        %6110 = vset.pattern.permute.xlu0 0
        %6111 = vperm.xlu0 %6110, %v5651
        %v6112 = vpop.permute.xlu0 %6111
        %v6113 = vperm.slane %v6109, %v1181
        %v6114 = vperm.slane %v6112, %v2773
        %v6115 = vsel %vm2775, %v6114, %v6113
        %v6116 = vsel %vm2006, %v5780, %v5777
        %v6117 = vsel %vm2008, %v5783, %v6116
        %v6118 = vsel %vm2010, %v5786, %v6117
        %v6119 = vsel %vm2012, %v5789, %v6118
        %v6120 = vsel %vm2014, %v5792, %v6119
        %v6121 = vsel %vm2016, %v5795, %v6120
        %v6122 = vsel %vm2018, %v5798, %v6121
        %v6123 = vsel %vm2006, %v5804, %v5801
        %v6124 = vsel %vm2008, %v5807, %v6123
        %v6125 = vsel %vm2010, %v5810, %v6124
        %v6126 = vsel %vm2012, %v5813, %v6125
        %v6127 = vsel %vm2014, %v5816, %v6126
        %v6128 = vsel %vm2016, %v6115, %v6127
        %v6130 = vsel %vm3133, %v6128, 0.0
        %v6132 = vperm.slane %v6122, 0
        %v6133 = vlaneseq
        %v6134 = vshrl.u32 %v6133, 7
        %6136 = vset.pattern.permute.xlu0 %v6134
        %6137 = vperm.xlu0 %6136, %v6132
        %v6138 = vpop.permute.xlu0 %6137
        %v6139 = vlaneseq
        %v6140 = vshrl.u32 %v6139, 7
        %v6141 = vadd.s32 %v6140, 8
        %6142 = vset.pattern.permute.xlu0 %v6141
        %6143 = vperm.xlu0 %6142, %v6132
        %v6144 = vpop.permute.xlu0 %6143
        %v6145 = vperm.slane %v6122, 1
        %v6146 = vlaneseq
        %v6147 = vshrl.u32 %v6146, 7
        %6149 = vset.pattern.permute.xlu0 %v6147
        %6150 = vperm.xlu0 %6149, %v6145
        %v6151 = vpop.permute.xlu0 %6150
        %v6152 = vlaneseq
        %v6153 = vshrl.u32 %v6152, 7
        %v6154 = vadd.s32 %v6153, 8
        %6155 = vset.pattern.permute.xlu0 %v6154
        %6156 = vperm.xlu0 %6155, %v6145
        %v6157 = vpop.permute.xlu0 %6156
        %v6158 = vperm.slane %v6122, 2
        %v6159 = vlaneseq
        %v6160 = vshrl.u32 %v6159, 7
        %6162 = vset.pattern.permute.xlu0 %v6160
        %6163 = vperm.xlu0 %6162, %v6158
        %v6164 = vpop.permute.xlu0 %6163
        %v6165 = vlaneseq
        %v6166 = vshrl.u32 %v6165, 7
        %v6167 = vadd.s32 %v6166, 8
        %6168 = vset.pattern.permute.xlu0 %v6167
        %6169 = vperm.xlu0 %6168, %v6158
        %v6170 = vpop.permute.xlu0 %6169
        %v6171 = vperm.slane %v6122, 3
        %v6172 = vlaneseq
        %v6173 = vshrl.u32 %v6172, 7
        %6175 = vset.pattern.permute.xlu0 %v6173
        %6176 = vperm.xlu0 %6175, %v6171
        %v6177 = vpop.permute.xlu0 %6176
        %v6178 = vlaneseq
        %v6179 = vshrl.u32 %v6178, 7
        %v6180 = vadd.s32 %v6179, 8
        %6181 = vset.pattern.permute.xlu0 %v6180
        %6182 = vperm.xlu0 %6181, %v6171
        %v6183 = vpop.permute.xlu0 %6182
        %v6184 = vperm.slane %v6122, 4
        %v6185 = vlaneseq
        %v6186 = vshrl.u32 %v6185, 7
        %6188 = vset.pattern.permute.xlu0 %v6186
        %6189 = vperm.xlu0 %6188, %v6184
        %v6190 = vpop.permute.xlu0 %6189
        %v6191 = vlaneseq
        %v6192 = vshrl.u32 %v6191, 7
        %v6193 = vadd.s32 %v6192, 8
        %6194 = vset.pattern.permute.xlu0 %v6193
        %6195 = vperm.xlu0 %6194, %v6184
        %v6196 = vpop.permute.xlu0 %6195
        %v6197 = vperm.slane %v6122, 5
        %v6198 = vlaneseq
        %v6199 = vshrl.u32 %v6198, 7
        %6201 = vset.pattern.permute.xlu0 %v6199
        %6202 = vperm.xlu0 %6201, %v6197
        %v6203 = vpop.permute.xlu0 %6202
        %v6204 = vlaneseq
        %v6205 = vshrl.u32 %v6204, 7
        %v6206 = vadd.s32 %v6205, 8
        %6207 = vset.pattern.permute.xlu0 %v6206
        %6208 = vperm.xlu0 %6207, %v6197
        %v6209 = vpop.permute.xlu0 %6208
        %v6210 = vperm.slane %v6122, 6
        %v6211 = vlaneseq
        %v6212 = vshrl.u32 %v6211, 7
        %6214 = vset.pattern.permute.xlu0 %v6212
        %6215 = vperm.xlu0 %6214, %v6210
        %v6216 = vpop.permute.xlu0 %6215
        %v6217 = vlaneseq
        %v6218 = vshrl.u32 %v6217, 7
        %v6219 = vadd.s32 %v6218, 8
        %6220 = vset.pattern.permute.xlu0 %v6219
        %6221 = vperm.xlu0 %6220, %v6210
        %v6222 = vpop.permute.xlu0 %6221
        %v6223 = vperm.slane %v6122, 7
        %v6224 = vlaneseq
        %v6225 = vshrl.u32 %v6224, 7
        %6227 = vset.pattern.permute.xlu0 %v6225
        %6228 = vperm.xlu0 %6227, %v6223
        %v6229 = vpop.permute.xlu0 %6228
        %v6230 = vlaneseq
        %v6231 = vshrl.u32 %v6230, 7
        %v6232 = vadd.s32 %v6231, 8
        %6233 = vset.pattern.permute.xlu0 %v6232
        %6234 = vperm.xlu0 %6233, %v6223
        %v6235 = vpop.permute.xlu0 %6234
        %v6236 = vperm.slane %v6130, 0
        %v6237 = vlaneseq
        %v6238 = vshrl.u32 %v6237, 7
        %6240 = vset.pattern.permute.xlu0 %v6238
        %6241 = vperm.xlu0 %6240, %v6236
        %v6242 = vpop.permute.xlu0 %6241
        %v6243 = vlaneseq
        %v6244 = vshrl.u32 %v6243, 7
        %v6245 = vadd.s32 %v6244, 8
        %6246 = vset.pattern.permute.xlu0 %v6245
        %6247 = vperm.xlu0 %6246, %v6236
        %v6248 = vpop.permute.xlu0 %6247
        %v6249 = vperm.slane %v6130, 1
        %v6250 = vlaneseq
        %v6251 = vshrl.u32 %v6250, 7
        %6253 = vset.pattern.permute.xlu0 %v6251
        %6254 = vperm.xlu0 %6253, %v6249
        %v6255 = vpop.permute.xlu0 %6254
        %v6256 = vlaneseq
        %v6257 = vshrl.u32 %v6256, 7
        %v6258 = vadd.s32 %v6257, 8
        %6259 = vset.pattern.permute.xlu0 %v6258
        %6260 = vperm.xlu0 %6259, %v6249
        %v6261 = vpop.permute.xlu0 %6260
        %v6262 = vperm.slane %v6130, 2
        %v6263 = vlaneseq
        %v6264 = vshrl.u32 %v6263, 7
        %6266 = vset.pattern.permute.xlu0 %v6264
        %6267 = vperm.xlu0 %6266, %v6262
        %v6268 = vpop.permute.xlu0 %6267
        %v6269 = vlaneseq
        %v6270 = vshrl.u32 %v6269, 7
        %v6271 = vadd.s32 %v6270, 8
        %6272 = vset.pattern.permute.xlu0 %v6271
        %6273 = vperm.xlu0 %6272, %v6262
        %v6274 = vpop.permute.xlu0 %6273
        %v6275 = vperm.slane %v6130, 3
        %v6276 = vlaneseq
        %v6277 = vshrl.u32 %v6276, 7
        %6279 = vset.pattern.permute.xlu0 %v6277
        %6280 = vperm.xlu0 %6279, %v6275
        %v6281 = vpop.permute.xlu0 %6280
        %v6282 = vlaneseq
        %v6283 = vshrl.u32 %v6282, 7
        %v6284 = vadd.s32 %v6283, 8
        %6285 = vset.pattern.permute.xlu0 %v6284
        %6286 = vperm.xlu0 %6285, %v6275
        %v6287 = vpop.permute.xlu0 %6286
        %v6288 = vperm.slane %v6130, 4
        %v6289 = vlaneseq
        %v6290 = vshrl.u32 %v6289, 7
        %6292 = vset.pattern.permute.xlu0 %v6290
        %6293 = vperm.xlu0 %6292, %v6288
        %v6294 = vpop.permute.xlu0 %6293
        %v6295 = vlaneseq
        %v6296 = vshrl.u32 %v6295, 7
        %v6297 = vadd.s32 %v6296, 8
        %6298 = vset.pattern.permute.xlu0 %v6297
        %6299 = vperm.xlu0 %6298, %v6288
        %v6300 = vpop.permute.xlu0 %6299
        %v6301 = vperm.slane %v6130, 5
        %v6302 = vlaneseq
        %v6303 = vshrl.u32 %v6302, 7
        %6305 = vset.pattern.permute.xlu0 %v6303
        %6306 = vperm.xlu0 %6305, %v6301
        %v6307 = vpop.permute.xlu0 %6306
        %v6308 = vlaneseq
        %v6309 = vshrl.u32 %v6308, 7
        %v6310 = vadd.s32 %v6309, 8
        %6311 = vset.pattern.permute.xlu0 %v6310
        %6312 = vperm.xlu0 %6311, %v6301
        %v6313 = vpop.permute.xlu0 %6312
        %v6314 = vperm.slane %v6130, 6
        %v6315 = vlaneseq
        %v6316 = vshrl.u32 %v6315, 7
        %6318 = vset.pattern.permute.xlu0 %v6316
        %6319 = vperm.xlu0 %6318, %v6314
        %v6320 = vpop.permute.xlu0 %6319
        %v6321 = vlaneseq
        %v6322 = vshrl.u32 %v6321, 7
        %v6323 = vadd.s32 %v6322, 8
        %6324 = vset.pattern.permute.xlu0 %v6323
        %6325 = vperm.xlu0 %6324, %v6314
        %v6326 = vpop.permute.xlu0 %6325
        %v6327 = vperm.slane %v6130, 7
        %v6328 = vlaneseq
        %v6329 = vshrl.u32 %v6328, 7
        %6331 = vset.pattern.permute.xlu0 %v6329
        %6332 = vperm.xlu0 %6331, %v6327
        %v6333 = vpop.permute.xlu0 %6332
        %v6334 = vlaneseq
        %v6335 = vshrl.u32 %v6334, 7
        %v6336 = vadd.s32 %v6335, 8
        %6337 = vset.pattern.permute.xlu0 %v6336
        %6338 = vperm.xlu0 %6337, %v6327
        %v6339 = vpop.permute.xlu0 %6338
        %v6372 = vadd.f32 %v6073, %v6138
        %v6373 = vadd.f32 %v6074, %v6144
        %v6374 = vadd.f32 %v6075, %v6151
        %v6375 = vadd.f32 %v6076, %v6157
        %v6376 = vadd.f32 %v6077, %v6164
        %v6377 = vadd.f32 %v6078, %v6170
        %v6378 = vadd.f32 %v6079, %v6177
        %v6379 = vadd.f32 %v6080, %v6183
        %v6380 = vadd.f32 %v6081, %v6190
        %v6381 = vadd.f32 %v6082, %v6196
        %v6382 = vadd.f32 %v6083, %v6203
        %v6383 = vadd.f32 %v6084, %v6209
        %v6384 = vadd.f32 %v6085, %v6216
        %v6385 = vadd.f32 %v6086, %v6222
        %v6386 = vadd.f32 %v6087, %v6229
        %v6387 = vadd.f32 %v6088, %v6235
        %v6388 = vadd.f32 %v6089, %v6242
        %v6389 = vadd.f32 %v6090, %v6248
        %v6390 = vadd.f32 %v6091, %v6255
        %v6391 = vadd.f32 %v6092, %v6261
        %v6392 = vadd.f32 %v6093, %v6268
        %v6393 = vadd.f32 %v6094, %v6274
        %v6394 = vadd.f32 %v6095, %v6281
        %v6395 = vadd.f32 %v6096, %v6287
        %v6396 = vadd.f32 %v6097, %v6294
        %v6397 = vadd.f32 %v6098, %v6300
        %v6398 = vadd.f32 %v6099, %v6307
        %v6399 = vadd.f32 %v6100, %v6313
        %v6400 = vadd.f32 %v6101, %v6320
        %v6401 = vadd.f32 %v6102, %v6326
        %v6402 = vadd.f32 %v6103, %v6333
        %v6403 = vadd.f32 %v6104, %v6339
        %v6404 = vmul.f32 %v6372, 0.11111111
        %v6405 = vmul.f32 %v6373, 0.11111111
        %v6406 = vmul.f32 %v6374, 0.11111111
        %v6407 = vmul.f32 %v6375, 0.11111111
        %v6408 = vmul.f32 %v6376, 0.11111111
        %v6409 = vmul.f32 %v6377, 0.11111111
        %v6410 = vmul.f32 %v6378, 0.11111111
        %v6411 = vmul.f32 %v6379, 0.11111111
        %v6412 = vmul.f32 %v6380, 0.11111111
        %v6413 = vmul.f32 %v6381, 0.11111111
        %v6414 = vmul.f32 %v6382, 0.11111111
        %v6415 = vmul.f32 %v6383, 0.11111111
        %v6416 = vmul.f32 %v6384, 0.11111111
        %v6417 = vmul.f32 %v6385, 0.11111111
        %v6418 = vmul.f32 %v6386, 0.11111111
        %v6419 = vmul.f32 %v6387, 0.11111111
        %v6420 = vmul.f32 %v6388, 0.11111111
        %v6421 = vmul.f32 %v6389, 0.11111111
        %v6422 = vmul.f32 %v6390, 0.11111111
        %v6423 = vmul.f32 %v6391, 0.11111111
        %v6424 = vmul.f32 %v6392, 0.11111111
        %v6425 = vmul.f32 %v6393, 0.11111111
        %v6426 = vmul.f32 %v6394, 0.11111111
        %v6427 = vmul.f32 %v6395, 0.11111111
        %v6428 = vmul.f32 %v6396, 0.11111111
        %v6429 = vmul.f32 %v6397, 0.11111111
        %v6430 = vmul.f32 %v6398, 0.11111111
        %v6431 = vmul.f32 %v6399, 0.11111111
        %v6432 = vmul.f32 %v6400, 0.11111111
        %v6433 = vmul.f32 %v6401, 0.11111111
        %v6434 = vmul.f32 %v6402, 0.11111111
        %v6435 = vmul.f32 %v6403, 0.11111111
        %v6436 = vmul.f32 %v4906, %v4906
        %v6437 = vmul.f32 %v4907, %v4907
        %v6438 = vmul.f32 %v4908, %v4908
        %v6439 = vmul.f32 %v4909, %v4909
        %v6440 = vmul.f32 %v4910, %v4910
        %v6441 = vmul.f32 %v4911, %v4911
        %v6442 = vmul.f32 %v4912, %v4912
        %v6443 = vmul.f32 %v4913, %v4913
        %v6444 = vmul.f32 %v4914, %v4914
        %v6445 = vmul.f32 %v4915, %v4915
        %v6446 = vmul.f32 %v4916, %v4916
        %v6447 = vmul.f32 %v4917, %v4917
        %v6448 = vmul.f32 %v4918, %v4918
        %v6449 = vmul.f32 %v4919, %v4919
        %v6450 = vmul.f32 %v4920, %v4920
        %v6451 = vmul.f32 %v4921, %v4921
        %v6452 = vmul.f32 %v4922, %v4922
        %v6453 = vmul.f32 %v4923, %v4923
        %v6454 = vmul.f32 %v4924, %v4924
        %v6455 = vmul.f32 %v4925, %v4925
        %v6456 = vmul.f32 %v4926, %v4926
        %v6457 = vmul.f32 %v4927, %v4927
        %v6458 = vmul.f32 %v4928, %v4928
        %v6459 = vmul.f32 %v4929, %v4929
        %v6460 = vmul.f32 %v4930, %v4930
        %v6461 = vmul.f32 %v4931, %v4931
        %v6462 = vmul.f32 %v4932, %v4932
        %v6463 = vmul.f32 %v4933, %v4933
        %v6464 = vmul.f32 %v4934, %v4934
        %v6465 = vmul.f32 %v4935, %v4935
        %v6466 = vmul.f32 %v4936, %v4936
        %v6467 = vmul.f32 %v4937, %v4937
        %v6468 = vmul.f32 %v3408, %v3408
        %v6469 = vmul.f32 %v3409, %v3409
        %v6470 = vmul.f32 %v3410, %v3410
        %v6471 = vmul.f32 %v3411, %v3411
        %v6472 = vmul.f32 %v3412, %v3412
        %v6473 = vmul.f32 %v3413, %v3413
        %v6474 = vmul.f32 %v3414, %v3414
        %v6475 = vmul.f32 %v3415, %v3415
        %v6476 = vmul.f32 %v3416, %v3416
        %v6477 = vmul.f32 %v3417, %v3417
        %v6478 = vmul.f32 %v3418, %v3418
        %v6479 = vmul.f32 %v3419, %v3419
        %v6480 = vmul.f32 %v3420, %v3420
        %v6481 = vmul.f32 %v3421, %v3421
        %v6482 = vmul.f32 %v3422, %v3422
        %v6483 = vmul.f32 %v3423, %v3423
        %v6484 = vmul.f32 %v3424, %v3424
        %v6485 = vmul.f32 %v3425, %v3425
        %v6486 = vmul.f32 %v3426, %v3426
        %v6487 = vmul.f32 %v3427, %v3427
        %v6488 = vmul.f32 %v3428, %v3428
        %v6489 = vmul.f32 %v3429, %v3429
        %v6490 = vmul.f32 %v3430, %v3430
        %v6491 = vmul.f32 %v3431, %v3431
        %v6492 = vmul.f32 %v3432, %v3432
        %v6493 = vmul.f32 %v3433, %v3433
        %v6494 = vmul.f32 %v3434, %v3434
        %v6495 = vmul.f32 %v3435, %v3435
        %v6496 = vmul.f32 %v3436, %v3436
        %v6497 = vmul.f32 %v3437, %v3437
        %v6498 = vmul.f32 %v3438, %v3438
        %v6499 = vmul.f32 %v3439, %v3439
        %v6500 = vadd.f32 %v6436, %v6468
        %v6501 = vadd.f32 %v6437, %v6469
        %v6502 = vadd.f32 %v6438, %v6470
        %v6503 = vadd.f32 %v6439, %v6471
        %v6504 = vadd.f32 %v6440, %v6472
        %v6505 = vadd.f32 %v6441, %v6473
        %v6506 = vadd.f32 %v6442, %v6474
        %v6507 = vadd.f32 %v6443, %v6475
        %v6508 = vadd.f32 %v6444, %v6476
        %v6509 = vadd.f32 %v6445, %v6477
        %v6510 = vadd.f32 %v6446, %v6478
        %v6511 = vadd.f32 %v6447, %v6479
        %v6512 = vadd.f32 %v6448, %v6480
        %v6513 = vadd.f32 %v6449, %v6481
        %v6514 = vadd.f32 %v6450, %v6482
        %v6515 = vadd.f32 %v6451, %v6483
        %v6516 = vadd.f32 %v6452, %v6484
        %v6517 = vadd.f32 %v6453, %v6485
        %v6518 = vadd.f32 %v6454, %v6486
        %v6519 = vadd.f32 %v6455, %v6487
        %v6520 = vadd.f32 %v6456, %v6488
        %v6521 = vadd.f32 %v6457, %v6489
        %v6522 = vadd.f32 %v6458, %v6490
        %v6523 = vadd.f32 %v6459, %v6491
        %v6524 = vadd.f32 %v6460, %v6492
        %v6525 = vadd.f32 %v6461, %v6493
        %v6526 = vadd.f32 %v6462, %v6494
        %v6527 = vadd.f32 %v6463, %v6495
        %v6528 = vadd.f32 %v6464, %v6496
        %v6529 = vadd.f32 %v6465, %v6497
        %v6530 = vadd.f32 %v6466, %v6498
        %v6531 = vadd.f32 %v6467, %v6499
        %v6532 = vrsqrt.pop %v6500
        %v6533 = vmul.f32 %v6532, %v6500
        %v6534 = vmul.f32 %v6533, %v6532
        %v6535 = vmul.f32 0.5, %v6534
        %v6536 = vsub.f32 1.5, %v6535
        %v6537 = vmul.f32 %v6532, %v6536
        %v6538 = vmul.f32 %v6500, %v6537
        %vm6539 = vcmp.eq.f32.partialorder %v6500, inf
        %v6540 = vsel %vm6539, %v6500, %v6538
        %vm6541 = vcmp.eq.f32.partialorder %v6500, 0.0
        %v6542 = vand.u32 %v6500, 2147483648
        %v6543 = vsel %vm6541, %v6542, %v6540
        %v6544 = vrsqrt.pop %v6501
        %v6545 = vmul.f32 %v6544, %v6501
        %v6546 = vmul.f32 %v6545, %v6544
        %v6547 = vmul.f32 0.5, %v6546
        %v6548 = vsub.f32 1.5, %v6547
        %v6549 = vmul.f32 %v6544, %v6548
        %v6550 = vmul.f32 %v6501, %v6549
        %vm6551 = vcmp.eq.f32.partialorder %v6501, inf
        %v6552 = vsel %vm6551, %v6501, %v6550
        %vm6553 = vcmp.eq.f32.partialorder %v6501, 0.0
        %v6554 = vand.u32 %v6501, 2147483648
        %v6555 = vsel %vm6553, %v6554, %v6552
        %v6556 = vrsqrt.pop %v6502
        %v6557 = vmul.f32 %v6556, %v6502
        %v6558 = vmul.f32 %v6557, %v6556
        %v6559 = vmul.f32 0.5, %v6558
        %v6560 = vsub.f32 1.5, %v6559
        %v6561 = vmul.f32 %v6556, %v6560
        %v6562 = vmul.f32 %v6502, %v6561
        %vm6563 = vcmp.eq.f32.partialorder %v6502, inf
        %v6564 = vsel %vm6563, %v6502, %v6562
        %vm6565 = vcmp.eq.f32.partialorder %v6502, 0.0
        %v6566 = vand.u32 %v6502, 2147483648
        %v6567 = vsel %vm6565, %v6566, %v6564
        %v6568 = vrsqrt.pop %v6503
        %v6569 = vmul.f32 %v6568, %v6503
        %v6570 = vmul.f32 %v6569, %v6568
        %v6571 = vmul.f32 0.5, %v6570
        %v6572 = vsub.f32 1.5, %v6571
        %v6573 = vmul.f32 %v6568, %v6572
        %v6574 = vmul.f32 %v6503, %v6573
        %vm6575 = vcmp.eq.f32.partialorder %v6503, inf
        %v6576 = vsel %vm6575, %v6503, %v6574
        %vm6577 = vcmp.eq.f32.partialorder %v6503, 0.0
        %v6578 = vand.u32 %v6503, 2147483648
        %v6579 = vsel %vm6577, %v6578, %v6576
        %v6580 = vrsqrt.pop %v6504
        %v6581 = vmul.f32 %v6580, %v6504
        %v6582 = vmul.f32 %v6581, %v6580
        %v6583 = vmul.f32 0.5, %v6582
        %v6584 = vsub.f32 1.5, %v6583
        %v6585 = vmul.f32 %v6580, %v6584
        %v6586 = vmul.f32 %v6504, %v6585
        %vm6587 = vcmp.eq.f32.partialorder %v6504, inf
        %v6588 = vsel %vm6587, %v6504, %v6586
        %vm6589 = vcmp.eq.f32.partialorder %v6504, 0.0
        %v6590 = vand.u32 %v6504, 2147483648
        %v6591 = vsel %vm6589, %v6590, %v6588
        %v6592 = vrsqrt.pop %v6505
        %v6593 = vmul.f32 %v6592, %v6505
        %v6594 = vmul.f32 %v6593, %v6592
        %v6595 = vmul.f32 0.5, %v6594
        %v6596 = vsub.f32 1.5, %v6595
        %v6597 = vmul.f32 %v6592, %v6596
        %v6598 = vmul.f32 %v6505, %v6597
        %vm6599 = vcmp.eq.f32.partialorder %v6505, inf
        %v6600 = vsel %vm6599, %v6505, %v6598
        %vm6601 = vcmp.eq.f32.partialorder %v6505, 0.0
        %v6602 = vand.u32 %v6505, 2147483648
        %v6603 = vsel %vm6601, %v6602, %v6600
        %v6604 = vrsqrt.pop %v6506
        %v6605 = vmul.f32 %v6604, %v6506
        %v6606 = vmul.f32 %v6605, %v6604
        %v6607 = vmul.f32 0.5, %v6606
        %v6608 = vsub.f32 1.5, %v6607
        %v6609 = vmul.f32 %v6604, %v6608
        %v6610 = vmul.f32 %v6506, %v6609
        %vm6611 = vcmp.eq.f32.partialorder %v6506, inf
        %v6612 = vsel %vm6611, %v6506, %v6610
        %vm6613 = vcmp.eq.f32.partialorder %v6506, 0.0
        %v6614 = vand.u32 %v6506, 2147483648
        %v6615 = vsel %vm6613, %v6614, %v6612
        %v6616 = vrsqrt.pop %v6507
        %v6617 = vmul.f32 %v6616, %v6507
        %v6618 = vmul.f32 %v6617, %v6616
        %v6619 = vmul.f32 0.5, %v6618
        %v6620 = vsub.f32 1.5, %v6619
        %v6621 = vmul.f32 %v6616, %v6620
        %v6622 = vmul.f32 %v6507, %v6621
        %vm6623 = vcmp.eq.f32.partialorder %v6507, inf
        %v6624 = vsel %vm6623, %v6507, %v6622
        %vm6625 = vcmp.eq.f32.partialorder %v6507, 0.0
        %v6626 = vand.u32 %v6507, 2147483648
        %v6627 = vsel %vm6625, %v6626, %v6624
        %v6628 = vrsqrt.pop %v6508
        %v6629 = vmul.f32 %v6628, %v6508
        %v6630 = vmul.f32 %v6629, %v6628
        %v6631 = vmul.f32 0.5, %v6630
        %v6632 = vsub.f32 1.5, %v6631
        %v6633 = vmul.f32 %v6628, %v6632
        %v6634 = vmul.f32 %v6508, %v6633
        %vm6635 = vcmp.eq.f32.partialorder %v6508, inf
        %v6636 = vsel %vm6635, %v6508, %v6634
        %vm6637 = vcmp.eq.f32.partialorder %v6508, 0.0
        %v6638 = vand.u32 %v6508, 2147483648
        %v6639 = vsel %vm6637, %v6638, %v6636
        %v6640 = vrsqrt.pop %v6509
        %v6641 = vmul.f32 %v6640, %v6509
        %v6642 = vmul.f32 %v6641, %v6640
        %v6643 = vmul.f32 0.5, %v6642
        %v6644 = vsub.f32 1.5, %v6643
        %v6645 = vmul.f32 %v6640, %v6644
        %v6646 = vmul.f32 %v6509, %v6645
        %vm6647 = vcmp.eq.f32.partialorder %v6509, inf
        %v6648 = vsel %vm6647, %v6509, %v6646
        %vm6649 = vcmp.eq.f32.partialorder %v6509, 0.0
        %v6650 = vand.u32 %v6509, 2147483648
        %v6651 = vsel %vm6649, %v6650, %v6648
        %v6652 = vrsqrt.pop %v6510
        %v6653 = vmul.f32 %v6652, %v6510
        %v6654 = vmul.f32 %v6653, %v6652
        %v6655 = vmul.f32 0.5, %v6654
        %v6656 = vsub.f32 1.5, %v6655
        %v6657 = vmul.f32 %v6652, %v6656
        %v6658 = vmul.f32 %v6510, %v6657
        %vm6659 = vcmp.eq.f32.partialorder %v6510, inf
        %v6660 = vsel %vm6659, %v6510, %v6658
        %vm6661 = vcmp.eq.f32.partialorder %v6510, 0.0
        %v6662 = vand.u32 %v6510, 2147483648
        %v6663 = vsel %vm6661, %v6662, %v6660
        %v6664 = vrsqrt.pop %v6511
        %v6665 = vmul.f32 %v6664, %v6511
        %v6666 = vmul.f32 %v6665, %v6664
        %v6667 = vmul.f32 0.5, %v6666
        %v6668 = vsub.f32 1.5, %v6667
        %v6669 = vmul.f32 %v6664, %v6668
        %v6670 = vmul.f32 %v6511, %v6669
        %vm6671 = vcmp.eq.f32.partialorder %v6511, inf
        %v6672 = vsel %vm6671, %v6511, %v6670
        %vm6673 = vcmp.eq.f32.partialorder %v6511, 0.0
        %v6674 = vand.u32 %v6511, 2147483648
        %v6675 = vsel %vm6673, %v6674, %v6672
        %v6676 = vrsqrt.pop %v6512
        %v6677 = vmul.f32 %v6676, %v6512
        %v6678 = vmul.f32 %v6677, %v6676
        %v6679 = vmul.f32 0.5, %v6678
        %v6680 = vsub.f32 1.5, %v6679
        %v6681 = vmul.f32 %v6676, %v6680
        %v6682 = vmul.f32 %v6512, %v6681
        %vm6683 = vcmp.eq.f32.partialorder %v6512, inf
        %v6684 = vsel %vm6683, %v6512, %v6682
        %vm6685 = vcmp.eq.f32.partialorder %v6512, 0.0
        %v6686 = vand.u32 %v6512, 2147483648
        %v6687 = vsel %vm6685, %v6686, %v6684
        %v6688 = vrsqrt.pop %v6513
        %v6689 = vmul.f32 %v6688, %v6513
        %v6690 = vmul.f32 %v6689, %v6688
        %v6691 = vmul.f32 0.5, %v6690
        %v6692 = vsub.f32 1.5, %v6691
        %v6693 = vmul.f32 %v6688, %v6692
        %v6694 = vmul.f32 %v6513, %v6693
        %vm6695 = vcmp.eq.f32.partialorder %v6513, inf
        %v6696 = vsel %vm6695, %v6513, %v6694
        %vm6697 = vcmp.eq.f32.partialorder %v6513, 0.0
        %v6698 = vand.u32 %v6513, 2147483648
        %v6699 = vsel %vm6697, %v6698, %v6696
        %v6700 = vrsqrt.pop %v6514
        %v6701 = vmul.f32 %v6700, %v6514
        %v6702 = vmul.f32 %v6701, %v6700
        %v6703 = vmul.f32 0.5, %v6702
        %v6704 = vsub.f32 1.5, %v6703
        %v6705 = vmul.f32 %v6700, %v6704
        %v6706 = vmul.f32 %v6514, %v6705
        %vm6707 = vcmp.eq.f32.partialorder %v6514, inf
        %v6708 = vsel %vm6707, %v6514, %v6706
        %vm6709 = vcmp.eq.f32.partialorder %v6514, 0.0
        %v6710 = vand.u32 %v6514, 2147483648
        %v6711 = vsel %vm6709, %v6710, %v6708
        %v6712 = vrsqrt.pop %v6515
        %v6713 = vmul.f32 %v6712, %v6515
        %v6714 = vmul.f32 %v6713, %v6712
        %v6715 = vmul.f32 0.5, %v6714
        %v6716 = vsub.f32 1.5, %v6715
        %v6717 = vmul.f32 %v6712, %v6716
        %v6718 = vmul.f32 %v6515, %v6717
        %vm6719 = vcmp.eq.f32.partialorder %v6515, inf
        %v6720 = vsel %vm6719, %v6515, %v6718
        %vm6721 = vcmp.eq.f32.partialorder %v6515, 0.0
        %v6722 = vand.u32 %v6515, 2147483648
        %v6723 = vsel %vm6721, %v6722, %v6720
        %v6724 = vrsqrt.pop %v6516
        %v6725 = vmul.f32 %v6724, %v6516
        %v6726 = vmul.f32 %v6725, %v6724
        %v6727 = vmul.f32 0.5, %v6726
        %v6728 = vsub.f32 1.5, %v6727
        %v6729 = vmul.f32 %v6724, %v6728
        %v6730 = vmul.f32 %v6516, %v6729
        %vm6731 = vcmp.eq.f32.partialorder %v6516, inf
        %v6732 = vsel %vm6731, %v6516, %v6730
        %vm6733 = vcmp.eq.f32.partialorder %v6516, 0.0
        %v6734 = vand.u32 %v6516, 2147483648
        %v6735 = vsel %vm6733, %v6734, %v6732
        %v6736 = vrsqrt.pop %v6517
        %v6737 = vmul.f32 %v6736, %v6517
        %v6738 = vmul.f32 %v6737, %v6736
        %v6739 = vmul.f32 0.5, %v6738
        %v6740 = vsub.f32 1.5, %v6739
        %v6741 = vmul.f32 %v6736, %v6740
        %v6742 = vmul.f32 %v6517, %v6741
        %vm6743 = vcmp.eq.f32.partialorder %v6517, inf
        %v6744 = vsel %vm6743, %v6517, %v6742
        %vm6745 = vcmp.eq.f32.partialorder %v6517, 0.0
        %v6746 = vand.u32 %v6517, 2147483648
        %v6747 = vsel %vm6745, %v6746, %v6744
        %v6748 = vrsqrt.pop %v6518
        %v6749 = vmul.f32 %v6748, %v6518
        %v6750 = vmul.f32 %v6749, %v6748
        %v6751 = vmul.f32 0.5, %v6750
        %v6752 = vsub.f32 1.5, %v6751
        %v6753 = vmul.f32 %v6748, %v6752
        %v6754 = vmul.f32 %v6518, %v6753
        %vm6755 = vcmp.eq.f32.partialorder %v6518, inf
        %v6756 = vsel %vm6755, %v6518, %v6754
        %vm6757 = vcmp.eq.f32.partialorder %v6518, 0.0
        %v6758 = vand.u32 %v6518, 2147483648
        %v6759 = vsel %vm6757, %v6758, %v6756
        %v6760 = vrsqrt.pop %v6519
        %v6761 = vmul.f32 %v6760, %v6519
        %v6762 = vmul.f32 %v6761, %v6760
        %v6763 = vmul.f32 0.5, %v6762
        %v6764 = vsub.f32 1.5, %v6763
        %v6765 = vmul.f32 %v6760, %v6764
        %v6766 = vmul.f32 %v6519, %v6765
        %vm6767 = vcmp.eq.f32.partialorder %v6519, inf
        %v6768 = vsel %vm6767, %v6519, %v6766
        %vm6769 = vcmp.eq.f32.partialorder %v6519, 0.0
        %v6770 = vand.u32 %v6519, 2147483648
        %v6771 = vsel %vm6769, %v6770, %v6768
        %v6772 = vrsqrt.pop %v6520
        %v6773 = vmul.f32 %v6772, %v6520
        %v6774 = vmul.f32 %v6773, %v6772
        %v6775 = vmul.f32 0.5, %v6774
        %v6776 = vsub.f32 1.5, %v6775
        %v6777 = vmul.f32 %v6772, %v6776
        %v6778 = vmul.f32 %v6520, %v6777
        %vm6779 = vcmp.eq.f32.partialorder %v6520, inf
        %v6780 = vsel %vm6779, %v6520, %v6778
        %vm6781 = vcmp.eq.f32.partialorder %v6520, 0.0
        %v6782 = vand.u32 %v6520, 2147483648
        %v6783 = vsel %vm6781, %v6782, %v6780
        %v6784 = vrsqrt.pop %v6521
        %v6785 = vmul.f32 %v6784, %v6521
        %v6786 = vmul.f32 %v6785, %v6784
        %v6787 = vmul.f32 0.5, %v6786
        %v6788 = vsub.f32 1.5, %v6787
        %v6789 = vmul.f32 %v6784, %v6788
        %v6790 = vmul.f32 %v6521, %v6789
        %vm6791 = vcmp.eq.f32.partialorder %v6521, inf
        %v6792 = vsel %vm6791, %v6521, %v6790
        %vm6793 = vcmp.eq.f32.partialorder %v6521, 0.0
        %v6794 = vand.u32 %v6521, 2147483648
        %v6795 = vsel %vm6793, %v6794, %v6792
        %v6796 = vrsqrt.pop %v6522
        %v6797 = vmul.f32 %v6796, %v6522
        %v6798 = vmul.f32 %v6797, %v6796
        %v6799 = vmul.f32 0.5, %v6798
        %v6800 = vsub.f32 1.5, %v6799
        %v6801 = vmul.f32 %v6796, %v6800
        %v6802 = vmul.f32 %v6522, %v6801
        %vm6803 = vcmp.eq.f32.partialorder %v6522, inf
        %v6804 = vsel %vm6803, %v6522, %v6802
        %vm6805 = vcmp.eq.f32.partialorder %v6522, 0.0
        %v6806 = vand.u32 %v6522, 2147483648
        %v6807 = vsel %vm6805, %v6806, %v6804
        %v6808 = vrsqrt.pop %v6523
        %v6809 = vmul.f32 %v6808, %v6523
        %v6810 = vmul.f32 %v6809, %v6808
        %v6811 = vmul.f32 0.5, %v6810
        %v6812 = vsub.f32 1.5, %v6811
        %v6813 = vmul.f32 %v6808, %v6812
        %v6814 = vmul.f32 %v6523, %v6813
        %vm6815 = vcmp.eq.f32.partialorder %v6523, inf
        %v6816 = vsel %vm6815, %v6523, %v6814
        %vm6817 = vcmp.eq.f32.partialorder %v6523, 0.0
        %v6818 = vand.u32 %v6523, 2147483648
        %v6819 = vsel %vm6817, %v6818, %v6816
        %v6820 = vrsqrt.pop %v6524
        %v6821 = vmul.f32 %v6820, %v6524
        %v6822 = vmul.f32 %v6821, %v6820
        %v6823 = vmul.f32 0.5, %v6822
        %v6824 = vsub.f32 1.5, %v6823
        %v6825 = vmul.f32 %v6820, %v6824
        %v6826 = vmul.f32 %v6524, %v6825
        %vm6827 = vcmp.eq.f32.partialorder %v6524, inf
        %v6828 = vsel %vm6827, %v6524, %v6826
        %vm6829 = vcmp.eq.f32.partialorder %v6524, 0.0
        %v6830 = vand.u32 %v6524, 2147483648
        %v6831 = vsel %vm6829, %v6830, %v6828
        %v6832 = vrsqrt.pop %v6525
        %v6833 = vmul.f32 %v6832, %v6525
        %v6834 = vmul.f32 %v6833, %v6832
        %v6835 = vmul.f32 0.5, %v6834
        %v6836 = vsub.f32 1.5, %v6835
        %v6837 = vmul.f32 %v6832, %v6836
        %v6838 = vmul.f32 %v6525, %v6837
        %vm6839 = vcmp.eq.f32.partialorder %v6525, inf
        %v6840 = vsel %vm6839, %v6525, %v6838
        %vm6841 = vcmp.eq.f32.partialorder %v6525, 0.0
        %v6842 = vand.u32 %v6525, 2147483648
        %v6843 = vsel %vm6841, %v6842, %v6840
        %v6844 = vrsqrt.pop %v6526
        %v6845 = vmul.f32 %v6844, %v6526
        %v6846 = vmul.f32 %v6845, %v6844
        %v6847 = vmul.f32 0.5, %v6846
        %v6848 = vsub.f32 1.5, %v6847
        %v6849 = vmul.f32 %v6844, %v6848
        %v6850 = vmul.f32 %v6526, %v6849
        %vm6851 = vcmp.eq.f32.partialorder %v6526, inf
        %v6852 = vsel %vm6851, %v6526, %v6850
        %vm6853 = vcmp.eq.f32.partialorder %v6526, 0.0
        %v6854 = vand.u32 %v6526, 2147483648
        %v6855 = vsel %vm6853, %v6854, %v6852
        %v6856 = vrsqrt.pop %v6527
        %v6857 = vmul.f32 %v6856, %v6527
        %v6858 = vmul.f32 %v6857, %v6856
        %v6859 = vmul.f32 0.5, %v6858
        %v6860 = vsub.f32 1.5, %v6859
        %v6861 = vmul.f32 %v6856, %v6860
        %v6862 = vmul.f32 %v6527, %v6861
        %vm6863 = vcmp.eq.f32.partialorder %v6527, inf
        %v6864 = vsel %vm6863, %v6527, %v6862
        %vm6865 = vcmp.eq.f32.partialorder %v6527, 0.0
        %v6866 = vand.u32 %v6527, 2147483648
        %v6867 = vsel %vm6865, %v6866, %v6864
        %v6868 = vrsqrt.pop %v6528
        %v6869 = vmul.f32 %v6868, %v6528
        %v6870 = vmul.f32 %v6869, %v6868
        %v6871 = vmul.f32 0.5, %v6870
        %v6872 = vsub.f32 1.5, %v6871
        %v6873 = vmul.f32 %v6868, %v6872
        %v6874 = vmul.f32 %v6528, %v6873
        %vm6875 = vcmp.eq.f32.partialorder %v6528, inf
        %v6876 = vsel %vm6875, %v6528, %v6874
        %vm6877 = vcmp.eq.f32.partialorder %v6528, 0.0
        %v6878 = vand.u32 %v6528, 2147483648
        %v6879 = vsel %vm6877, %v6878, %v6876
        %v6880 = vrsqrt.pop %v6529
        %v6881 = vmul.f32 %v6880, %v6529
        %v6882 = vmul.f32 %v6881, %v6880
        %v6883 = vmul.f32 0.5, %v6882
        %v6884 = vsub.f32 1.5, %v6883
        %v6885 = vmul.f32 %v6880, %v6884
        %v6886 = vmul.f32 %v6529, %v6885
        %vm6887 = vcmp.eq.f32.partialorder %v6529, inf
        %v6888 = vsel %vm6887, %v6529, %v6886
        %vm6889 = vcmp.eq.f32.partialorder %v6529, 0.0
        %v6890 = vand.u32 %v6529, 2147483648
        %v6891 = vsel %vm6889, %v6890, %v6888
        %v6892 = vrsqrt.pop %v6530
        %v6893 = vmul.f32 %v6892, %v6530
        %v6894 = vmul.f32 %v6893, %v6892
        %v6895 = vmul.f32 0.5, %v6894
        %v6896 = vsub.f32 1.5, %v6895
        %v6897 = vmul.f32 %v6892, %v6896
        %v6898 = vmul.f32 %v6530, %v6897
        %vm6899 = vcmp.eq.f32.partialorder %v6530, inf
        %v6900 = vsel %vm6899, %v6530, %v6898
        %vm6901 = vcmp.eq.f32.partialorder %v6530, 0.0
        %v6902 = vand.u32 %v6530, 2147483648
        %v6903 = vsel %vm6901, %v6902, %v6900
        %v6904 = vrsqrt.pop %v6531
        %v6905 = vmul.f32 %v6904, %v6531
        %v6906 = vmul.f32 %v6905, %v6904
        %v6907 = vmul.f32 0.5, %v6906
        %v6908 = vsub.f32 1.5, %v6907
        %v6909 = vmul.f32 %v6904, %v6908
        %v6910 = vmul.f32 %v6531, %v6909
        %vm6911 = vcmp.eq.f32.partialorder %v6531, inf
        %v6912 = vsel %vm6911, %v6531, %v6910
        %vm6913 = vcmp.eq.f32.partialorder %v6531, 0.0
        %v6914 = vand.u32 %v6531, 2147483648
        %v6915 = vsel %vm6913, %v6914, %v6912
        %v6916 = vmax.f32 %v6404, 1e-06
        %v6917 = vmax.f32 %v6405, 1e-06
        %v6918 = vmax.f32 %v6406, 1e-06
        %v6919 = vmax.f32 %v6407, 1e-06
        %v6920 = vmax.f32 %v6408, 1e-06
        %v6921 = vmax.f32 %v6409, 1e-06
        %v6922 = vmax.f32 %v6410, 1e-06
        %v6923 = vmax.f32 %v6411, 1e-06
        %v6924 = vmax.f32 %v6412, 1e-06
        %v6925 = vmax.f32 %v6413, 1e-06
        %v6926 = vmax.f32 %v6414, 1e-06
        %v6927 = vmax.f32 %v6415, 1e-06
        %v6928 = vmax.f32 %v6416, 1e-06
        %v6929 = vmax.f32 %v6417, 1e-06
        %v6930 = vmax.f32 %v6418, 1e-06
        %v6931 = vmax.f32 %v6419, 1e-06
        %v6932 = vmax.f32 %v6420, 1e-06
        %v6933 = vmax.f32 %v6421, 1e-06
        %v6934 = vmax.f32 %v6422, 1e-06
        %v6935 = vmax.f32 %v6423, 1e-06
        %v6936 = vmax.f32 %v6424, 1e-06
        %v6937 = vmax.f32 %v6425, 1e-06
        %v6938 = vmax.f32 %v6426, 1e-06
        %v6939 = vmax.f32 %v6427, 1e-06
        %v6940 = vmax.f32 %v6428, 1e-06
        %v6941 = vmax.f32 %v6429, 1e-06
        %v6942 = vmax.f32 %v6430, 1e-06
        %v6943 = vmax.f32 %v6431, 1e-06
        %v6944 = vmax.f32 %v6432, 1e-06
        %v6945 = vmax.f32 %v6433, 1e-06
        %v6946 = vmax.f32 %v6434, 1e-06
        %v6947 = vmax.f32 %v6435, 1e-06
        %v6948 = vrcp.pop %v6916
        %v6949 = vrcp.pop %v6917
        %v6950 = vrcp.pop %v6918
        %v6951 = vrcp.pop %v6919
        %v6952 = vrcp.pop %v6920
        %v6953 = vrcp.pop %v6921
        %v6954 = vrcp.pop %v6922
        %v6955 = vrcp.pop %v6923
        %v6956 = vrcp.pop %v6924
        %v6957 = vrcp.pop %v6925
        %v6958 = vrcp.pop %v6926
        %v6959 = vrcp.pop %v6927
        %v6960 = vrcp.pop %v6928
        %v6961 = vrcp.pop %v6929
        %v6962 = vrcp.pop %v6930
        %v6963 = vrcp.pop %v6931
        %v6964 = vrcp.pop %v6932
        %v6965 = vrcp.pop %v6933
        %v6966 = vrcp.pop %v6934
        %v6967 = vrcp.pop %v6935
        %v6968 = vrcp.pop %v6936
        %v6969 = vrcp.pop %v6937
        %v6970 = vrcp.pop %v6938
        %v6971 = vrcp.pop %v6939
        %v6972 = vrcp.pop %v6940
        %v6973 = vrcp.pop %v6941
        %v6974 = vrcp.pop %v6942
        %v6975 = vrcp.pop %v6943
        %v6976 = vrcp.pop %v6944
        %v6977 = vrcp.pop %v6945
        %v6978 = vrcp.pop %v6946
        %v6979 = vrcp.pop %v6947
        %v6980 = vmul.f32 %v6543, %v6948
        %v6981 = vmul.f32 %v6555, %v6949
        %v6982 = vmul.f32 %v6567, %v6950
        %v6983 = vmul.f32 %v6579, %v6951
        %v6984 = vmul.f32 %v6591, %v6952
        %v6985 = vmul.f32 %v6603, %v6953
        %v6986 = vmul.f32 %v6615, %v6954
        %v6987 = vmul.f32 %v6627, %v6955
        %v6988 = vmul.f32 %v6639, %v6956
        %v6989 = vmul.f32 %v6651, %v6957
        %v6990 = vmul.f32 %v6663, %v6958
        %v6991 = vmul.f32 %v6675, %v6959
        %v6992 = vmul.f32 %v6687, %v6960
        %v6993 = vmul.f32 %v6699, %v6961
        %v6994 = vmul.f32 %v6711, %v6962
        %v6995 = vmul.f32 %v6723, %v6963
        %v6996 = vmul.f32 %v6735, %v6964
        %v6997 = vmul.f32 %v6747, %v6965
        %v6998 = vmul.f32 %v6759, %v6966
        %v6999 = vmul.f32 %v6771, %v6967
        %v7000 = vmul.f32 %v6783, %v6968
        %v7001 = vmul.f32 %v6795, %v6969
        %v7002 = vmul.f32 %v6807, %v6970
        %v7003 = vmul.f32 %v6819, %v6971
        %v7004 = vmul.f32 %v6831, %v6972
        %v7005 = vmul.f32 %v6843, %v6973
        %v7006 = vmul.f32 %v6855, %v6974
        %v7007 = vmul.f32 %v6867, %v6975
        %v7008 = vmul.f32 %v6879, %v6976
        %v7009 = vmul.f32 %v6891, %v6977
        %v7010 = vmul.f32 %v6903, %v6978
        %v7011 = vmul.f32 %v6915, %v6979
        %v7012 = vsub.f32 0.0, %v861
        %v7013 = vsub.f32 0.0, %v864
        %v7014 = vsub.f32 0.0, %v867
        %v7015 = vsub.f32 0.0, %v870
        %v7016 = vsub.f32 0.0, %v873
        %v7017 = vsub.f32 0.0, %v876
        %v7018 = vsub.f32 0.0, %v879
        %v7019 = vsub.f32 0.0, %v882
        %v7020 = vsub.f32 0.0, %v885
        %v7021 = vsub.f32 0.0, %v888
        %v7022 = vsub.f32 0.0, %v891
        %v7023 = vsub.f32 0.0, %v894
        %v7024 = vsub.f32 0.0, %v897
        %v7025 = vsub.f32 0.0, %v900
        %v7026 = vsub.f32 0.0, %v903
        %v7027 = vsub.f32 0.0, %v906
        %v7028 = vsub.f32 0.0, %v909
        %v7029 = vsub.f32 0.0, %v912
        %v7030 = vsub.f32 0.0, %v915
        %v7031 = vsub.f32 0.0, %v918
        %v7032 = vsub.f32 0.0, %v921
        %v7033 = vsub.f32 0.0, %v924
        %v7034 = vsub.f32 0.0, %v927
        %v7035 = vsub.f32 0.0, %v930
        %v7036 = vsub.f32 0.0, %v933
        %v7037 = vsub.f32 0.0, %v936
        %v7038 = vsub.f32 0.0, %v939
        %v7039 = vsub.f32 0.0, %v942
        %v7040 = vsub.f32 0.0, %v945
        %v7041 = vsub.f32 0.0, %v948
        %v7042 = vsub.f32 0.0, %v951
        %v7043 = vsub.f32 0.0, %v954
        %v7046 = vperm.slane %v344, 0
        %v7047 = vlaneseq
        %v7048 = vshrl.u32 %v7047, 7
        %7050 = vset.pattern.permute.xlu0 %v7048
        %7051 = vperm.xlu0 %7050, %v7046
        %v7052 = vpop.permute.xlu0 %7051
        %v7053 = vlaneseq
        %v7054 = vshrl.u32 %v7053, 7
        %v7055 = vadd.s32 %v7054, 8
        %7056 = vset.pattern.permute.xlu0 %v7055
        %7057 = vperm.xlu0 %7056, %v7046
        %v7058 = vpop.permute.xlu0 %7057
        %v7059 = vperm.slane %v344, 1
        %v7060 = vlaneseq
        %v7061 = vshrl.u32 %v7060, 7
        %7063 = vset.pattern.permute.xlu0 %v7061
        %7064 = vperm.xlu0 %7063, %v7059
        %v7065 = vpop.permute.xlu0 %7064
        %v7066 = vlaneseq
        %v7067 = vshrl.u32 %v7066, 7
        %v7068 = vadd.s32 %v7067, 8
        %7069 = vset.pattern.permute.xlu0 %v7068
        %7070 = vperm.xlu0 %7069, %v7059
        %v7071 = vpop.permute.xlu0 %7070
        %v7072 = vperm.slane %v344, 2
        %v7073 = vlaneseq
        %v7074 = vshrl.u32 %v7073, 7
        %7076 = vset.pattern.permute.xlu0 %v7074
        %7077 = vperm.xlu0 %7076, %v7072
        %v7078 = vpop.permute.xlu0 %7077
        %v7079 = vlaneseq
        %v7080 = vshrl.u32 %v7079, 7
        %v7081 = vadd.s32 %v7080, 8
        %7082 = vset.pattern.permute.xlu0 %v7081
        %7083 = vperm.xlu0 %7082, %v7072
        %v7084 = vpop.permute.xlu0 %7083
        %v7085 = vperm.slane %v344, 3
        %v7086 = vlaneseq
        %v7087 = vshrl.u32 %v7086, 7
        %7089 = vset.pattern.permute.xlu0 %v7087
        %7090 = vperm.xlu0 %7089, %v7085
        %v7091 = vpop.permute.xlu0 %7090
        %v7092 = vlaneseq
        %v7093 = vshrl.u32 %v7092, 7
        %v7094 = vadd.s32 %v7093, 8
        %7095 = vset.pattern.permute.xlu0 %v7094
        %7096 = vperm.xlu0 %7095, %v7085
        %v7097 = vpop.permute.xlu0 %7096
        %v7098 = vperm.slane %v344, 4
        %v7099 = vlaneseq
        %v7100 = vshrl.u32 %v7099, 7
        %7102 = vset.pattern.permute.xlu0 %v7100
        %7103 = vperm.xlu0 %7102, %v7098
        %v7104 = vpop.permute.xlu0 %7103
        %v7105 = vlaneseq
        %v7106 = vshrl.u32 %v7105, 7
        %v7107 = vadd.s32 %v7106, 8
        %7108 = vset.pattern.permute.xlu0 %v7107
        %7109 = vperm.xlu0 %7108, %v7098
        %v7110 = vpop.permute.xlu0 %7109
        %v7111 = vperm.slane %v344, 5
        %v7112 = vlaneseq
        %v7113 = vshrl.u32 %v7112, 7
        %7115 = vset.pattern.permute.xlu0 %v7113
        %7116 = vperm.xlu0 %7115, %v7111
        %v7117 = vpop.permute.xlu0 %7116
        %v7118 = vlaneseq
        %v7119 = vshrl.u32 %v7118, 7
        %v7120 = vadd.s32 %v7119, 8
        %7121 = vset.pattern.permute.xlu0 %v7120
        %7122 = vperm.xlu0 %7121, %v7111
        %v7123 = vpop.permute.xlu0 %7122
        %v7124 = vperm.slane %v344, 6
        %v7125 = vlaneseq
        %v7126 = vshrl.u32 %v7125, 7
        %7128 = vset.pattern.permute.xlu0 %v7126
        %7129 = vperm.xlu0 %7128, %v7124
        %v7130 = vpop.permute.xlu0 %7129
        %v7131 = vlaneseq
        %v7132 = vshrl.u32 %v7131, 7
        %v7133 = vadd.s32 %v7132, 8
        %7134 = vset.pattern.permute.xlu0 %v7133
        %7135 = vperm.xlu0 %7134, %v7124
        %v7136 = vpop.permute.xlu0 %7135
        %v7137 = vperm.slane %v344, 7
        %v7138 = vlaneseq
        %v7139 = vshrl.u32 %v7138, 7
        %7141 = vset.pattern.permute.xlu0 %v7139
        %7142 = vperm.xlu0 %7141, %v7137
        %v7143 = vpop.permute.xlu0 %7142
        %v7144 = vlaneseq
        %v7145 = vshrl.u32 %v7144, 7
        %v7146 = vadd.s32 %v7145, 8
        %7147 = vset.pattern.permute.xlu0 %v7146
        %7148 = vperm.xlu0 %7147, %v7137
        %v7149 = vpop.permute.xlu0 %7148
        %v7150 = vperm.slane %v345, 0
        %v7151 = vlaneseq
        %v7152 = vshrl.u32 %v7151, 7
        %7154 = vset.pattern.permute.xlu0 %v7152
        %7155 = vperm.xlu0 %7154, %v7150
        %v7156 = vpop.permute.xlu0 %7155
        %v7157 = vlaneseq
        %v7158 = vshrl.u32 %v7157, 7
        %v7159 = vadd.s32 %v7158, 8
        %7160 = vset.pattern.permute.xlu0 %v7159
        %7161 = vperm.xlu0 %7160, %v7150
        %v7162 = vpop.permute.xlu0 %7161
        %v7163 = vperm.slane %v345, 1
        %v7164 = vlaneseq
        %v7165 = vshrl.u32 %v7164, 7
        %7167 = vset.pattern.permute.xlu0 %v7165
        %7168 = vperm.xlu0 %7167, %v7163
        %v7169 = vpop.permute.xlu0 %7168
        %v7170 = vlaneseq
        %v7171 = vshrl.u32 %v7170, 7
        %v7172 = vadd.s32 %v7171, 8
        %7173 = vset.pattern.permute.xlu0 %v7172
        %7174 = vperm.xlu0 %7173, %v7163
        %v7175 = vpop.permute.xlu0 %7174
        %v7176 = vperm.slane %v345, 2
        %v7177 = vlaneseq
        %v7178 = vshrl.u32 %v7177, 7
        %7180 = vset.pattern.permute.xlu0 %v7178
        %7181 = vperm.xlu0 %7180, %v7176
        %v7182 = vpop.permute.xlu0 %7181
        %v7183 = vlaneseq
        %v7184 = vshrl.u32 %v7183, 7
        %v7185 = vadd.s32 %v7184, 8
        %7186 = vset.pattern.permute.xlu0 %v7185
        %7187 = vperm.xlu0 %7186, %v7176
        %v7188 = vpop.permute.xlu0 %7187
        %v7189 = vperm.slane %v345, 3
        %v7190 = vlaneseq
        %v7191 = vshrl.u32 %v7190, 7
        %7193 = vset.pattern.permute.xlu0 %v7191
        %7194 = vperm.xlu0 %7193, %v7189
        %v7195 = vpop.permute.xlu0 %7194
        %v7196 = vlaneseq
        %v7197 = vshrl.u32 %v7196, 7
        %v7198 = vadd.s32 %v7197, 8
        %7199 = vset.pattern.permute.xlu0 %v7198
        %7200 = vperm.xlu0 %7199, %v7189
        %v7201 = vpop.permute.xlu0 %7200
        %v7202 = vperm.slane %v345, 4
        %v7203 = vlaneseq
        %v7204 = vshrl.u32 %v7203, 7
        %7206 = vset.pattern.permute.xlu0 %v7204
        %7207 = vperm.xlu0 %7206, %v7202
        %v7208 = vpop.permute.xlu0 %7207
        %v7209 = vlaneseq
        %v7210 = vshrl.u32 %v7209, 7
        %v7211 = vadd.s32 %v7210, 8
        %7212 = vset.pattern.permute.xlu0 %v7211
        %7213 = vperm.xlu0 %7212, %v7202
        %v7214 = vpop.permute.xlu0 %7213
        %v7215 = vperm.slane %v345, 5
        %v7216 = vlaneseq
        %v7217 = vshrl.u32 %v7216, 7
        %7219 = vset.pattern.permute.xlu0 %v7217
        %7220 = vperm.xlu0 %7219, %v7215
        %v7221 = vpop.permute.xlu0 %7220
        %v7222 = vlaneseq
        %v7223 = vshrl.u32 %v7222, 7
        %v7224 = vadd.s32 %v7223, 8
        %7225 = vset.pattern.permute.xlu0 %v7224
        %7226 = vperm.xlu0 %7225, %v7215
        %v7227 = vpop.permute.xlu0 %7226
        %v7228 = vperm.slane %v345, 6
        %v7229 = vlaneseq
        %v7230 = vshrl.u32 %v7229, 7
        %7232 = vset.pattern.permute.xlu0 %v7230
        %7233 = vperm.xlu0 %7232, %v7228
        %v7234 = vpop.permute.xlu0 %7233
        %v7235 = vlaneseq
        %v7236 = vshrl.u32 %v7235, 7
        %v7237 = vadd.s32 %v7236, 8
        %7238 = vset.pattern.permute.xlu0 %v7237
        %7239 = vperm.xlu0 %7238, %v7228
        %v7240 = vpop.permute.xlu0 %7239
        %v7241 = vperm.slane %v345, 7
        %v7242 = vlaneseq
        %v7243 = vshrl.u32 %v7242, 7
        %7245 = vset.pattern.permute.xlu0 %v7243
        %7246 = vperm.xlu0 %7245, %v7241
        %v7247 = vpop.permute.xlu0 %7246
        %v7248 = vlaneseq
        %v7249 = vshrl.u32 %v7248, 7
        %v7250 = vadd.s32 %v7249, 8
        %7251 = vset.pattern.permute.xlu0 %v7250
        %7252 = vperm.xlu0 %7251, %v7241
        %v7253 = vpop.permute.xlu0 %7252
        %v7286 = vmul.f32 %v7012, %v7052
        %v7287 = vmul.f32 %v7013, %v7058
        %v7288 = vmul.f32 %v7014, %v7065
        %v7289 = vmul.f32 %v7015, %v7071
        %v7290 = vmul.f32 %v7016, %v7078
        %v7291 = vmul.f32 %v7017, %v7084
        %v7292 = vmul.f32 %v7018, %v7091
        %v7293 = vmul.f32 %v7019, %v7097
        %v7294 = vmul.f32 %v7020, %v7104
        %v7295 = vmul.f32 %v7021, %v7110
        %v7296 = vmul.f32 %v7022, %v7117
        %v7297 = vmul.f32 %v7023, %v7123
        %v7298 = vmul.f32 %v7024, %v7130
        %v7299 = vmul.f32 %v7025, %v7136
        %v7300 = vmul.f32 %v7026, %v7143
        %v7301 = vmul.f32 %v7027, %v7149
        %v7302 = vmul.f32 %v7028, %v7156
        %v7303 = vmul.f32 %v7029, %v7162
        %v7304 = vmul.f32 %v7030, %v7169
        %v7305 = vmul.f32 %v7031, %v7175
        %v7306 = vmul.f32 %v7032, %v7182
        %v7307 = vmul.f32 %v7033, %v7188
        %v7308 = vmul.f32 %v7034, %v7195
        %v7309 = vmul.f32 %v7035, %v7201
        %v7310 = vmul.f32 %v7036, %v7208
        %v7311 = vmul.f32 %v7037, %v7214
        %v7312 = vmul.f32 %v7038, %v7221
        %v7313 = vmul.f32 %v7039, %v7227
        %v7314 = vmul.f32 %v7040, %v7234
        %v7315 = vmul.f32 %v7041, %v7240
        %v7316 = vmul.f32 %v7042, %v7247
        %v7317 = vmul.f32 %v7043, %v7253
        %7350 = vset.pattern.permute.xlu0 0
        %7351 = vperm.xlu0 %7350, %v7286
        %v7352 = vpop.permute.xlu0 %7351
        %7353 = vset.pattern.permute.xlu0 0
        %7354 = vperm.xlu0 %7353, %v7287
        %v7355 = vpop.permute.xlu0 %7354
        %7356 = vset.pattern.permute.xlu0 0
        %7357 = vperm.xlu0 %7356, %v7288
        %v7358 = vpop.permute.xlu0 %7357
        %7359 = vset.pattern.permute.xlu0 0
        %7360 = vperm.xlu0 %7359, %v7289
        %v7361 = vpop.permute.xlu0 %7360
        %7362 = vset.pattern.permute.xlu0 0
        %7363 = vperm.xlu0 %7362, %v7290
        %v7364 = vpop.permute.xlu0 %7363
        %7365 = vset.pattern.permute.xlu0 0
        %7366 = vperm.xlu0 %7365, %v7291
        %v7367 = vpop.permute.xlu0 %7366
        %7368 = vset.pattern.permute.xlu0 0
        %7369 = vperm.xlu0 %7368, %v7292
        %v7370 = vpop.permute.xlu0 %7369
        %7371 = vset.pattern.permute.xlu0 0
        %7372 = vperm.xlu0 %7371, %v7293
        %v7373 = vpop.permute.xlu0 %7372
        %7374 = vset.pattern.permute.xlu0 0
        %7375 = vperm.xlu0 %7374, %v7294
        %v7376 = vpop.permute.xlu0 %7375
        %7377 = vset.pattern.permute.xlu0 0
        %7378 = vperm.xlu0 %7377, %v7295
        %v7379 = vpop.permute.xlu0 %7378
        %7380 = vset.pattern.permute.xlu0 0
        %7381 = vperm.xlu0 %7380, %v7296
        %v7382 = vpop.permute.xlu0 %7381
        %7383 = vset.pattern.permute.xlu0 0
        %7384 = vperm.xlu0 %7383, %v7297
        %v7385 = vpop.permute.xlu0 %7384
        %7386 = vset.pattern.permute.xlu0 0
        %7387 = vperm.xlu0 %7386, %v7298
        %v7388 = vpop.permute.xlu0 %7387
        %7389 = vset.pattern.permute.xlu0 0
        %7390 = vperm.xlu0 %7389, %v7299
        %v7391 = vpop.permute.xlu0 %7390
        %7392 = vset.pattern.permute.xlu0 0
        %7393 = vperm.xlu0 %7392, %v7300
        %v7394 = vpop.permute.xlu0 %7393
        %7395 = vset.pattern.permute.xlu0 0
        %7396 = vperm.xlu0 %7395, %v7301
        %v7397 = vpop.permute.xlu0 %7396
        %7398 = vset.pattern.permute.xlu0 0
        %7399 = vperm.xlu0 %7398, %v7302
        %v7400 = vpop.permute.xlu0 %7399
        %7401 = vset.pattern.permute.xlu0 0
        %7402 = vperm.xlu0 %7401, %v7303
        %v7403 = vpop.permute.xlu0 %7402
        %7404 = vset.pattern.permute.xlu0 0
        %7405 = vperm.xlu0 %7404, %v7304
        %v7406 = vpop.permute.xlu0 %7405
        %7407 = vset.pattern.permute.xlu0 0
        %7408 = vperm.xlu0 %7407, %v7305
        %v7409 = vpop.permute.xlu0 %7408
        %7410 = vset.pattern.permute.xlu0 0
        %7411 = vperm.xlu0 %7410, %v7306
        %v7412 = vpop.permute.xlu0 %7411
        %7413 = vset.pattern.permute.xlu0 0
        %7414 = vperm.xlu0 %7413, %v7307
        %v7415 = vpop.permute.xlu0 %7414
        %7416 = vset.pattern.permute.xlu0 0
        %7417 = vperm.xlu0 %7416, %v7308
        %v7418 = vpop.permute.xlu0 %7417
        %7419 = vset.pattern.permute.xlu0 0
        %7420 = vperm.xlu0 %7419, %v7309
        %v7421 = vpop.permute.xlu0 %7420
        %7422 = vset.pattern.permute.xlu0 0
        %7423 = vperm.xlu0 %7422, %v7310
        %v7424 = vpop.permute.xlu0 %7423
        %7425 = vset.pattern.permute.xlu0 0
        %7426 = vperm.xlu0 %7425, %v7311
        %v7427 = vpop.permute.xlu0 %7426
        %7428 = vset.pattern.permute.xlu0 0
        %7429 = vperm.xlu0 %7428, %v7312
        %v7430 = vpop.permute.xlu0 %7429
        %7431 = vset.pattern.permute.xlu0 0
        %7432 = vperm.xlu0 %7431, %v7313
        %v7433 = vpop.permute.xlu0 %7432
        %7434 = vset.pattern.permute.xlu0 0
        %7435 = vperm.xlu0 %7434, %v7314
        %v7436 = vpop.permute.xlu0 %7435
        %7437 = vset.pattern.permute.xlu0 0
        %7438 = vperm.xlu0 %7437, %v7315
        %v7439 = vpop.permute.xlu0 %7438
        %7440 = vset.pattern.permute.xlu0 0
        %7441 = vperm.xlu0 %7440, %v7316
        %v7442 = vpop.permute.xlu0 %7441
        %7443 = vset.pattern.permute.xlu0 0
        %7444 = vperm.xlu0 %7443, %v7317
        %v7445 = vpop.permute.xlu0 %7444
        %v7446 = vperm.slane %v7352, %v1181
        %v7447 = vperm.slane %v7355, %v2773
        %v7448 = vsel %vm2775, %v7447, %v7446
        %v7449 = vperm.slane %v7358, %v1181
        %v7450 = vperm.slane %v7361, %v2773
        %v7451 = vsel %vm2775, %v7450, %v7449
        %v7452 = vperm.slane %v7364, %v1181
        %v7453 = vperm.slane %v7367, %v2773
        %v7454 = vsel %vm2775, %v7453, %v7452
        %v7455 = vperm.slane %v7370, %v1181
        %v7456 = vperm.slane %v7373, %v2773
        %v7457 = vsel %vm2775, %v7456, %v7455
        %v7458 = vperm.slane %v7376, %v1181
        %v7459 = vperm.slane %v7379, %v2773
        %v7460 = vsel %vm2775, %v7459, %v7458
        %v7461 = vperm.slane %v7382, %v1181
        %v7462 = vperm.slane %v7385, %v2773
        %v7463 = vsel %vm2775, %v7462, %v7461
        %v7464 = vperm.slane %v7388, %v1181
        %v7465 = vperm.slane %v7391, %v2773
        %v7466 = vsel %vm2775, %v7465, %v7464
        %v7467 = vperm.slane %v7394, %v1181
        %v7468 = vperm.slane %v7397, %v2773
        %v7469 = vsel %vm2775, %v7468, %v7467
        %v7470 = vperm.slane %v7400, %v1181
        %v7471 = vperm.slane %v7403, %v2773
        %v7472 = vsel %vm2775, %v7471, %v7470
        %v7473 = vperm.slane %v7406, %v1181
        %v7474 = vperm.slane %v7409, %v2773
        %v7475 = vsel %vm2775, %v7474, %v7473
        %v7476 = vperm.slane %v7412, %v1181
        %v7477 = vperm.slane %v7415, %v2773
        %v7478 = vsel %vm2775, %v7477, %v7476
        %v7479 = vperm.slane %v7418, %v1181
        %v7480 = vperm.slane %v7421, %v2773
        %v7481 = vsel %vm2775, %v7480, %v7479
        %v7482 = vperm.slane %v7424, %v1181
        %v7483 = vperm.slane %v7427, %v2773
        %v7484 = vsel %vm2775, %v7483, %v7482
        %v7485 = vperm.slane %v7430, %v1181
        %v7486 = vperm.slane %v7433, %v2773
        %v7487 = vsel %vm2775, %v7486, %v7485
        %v7488 = vperm.slane %v7436, %v1181
        %v7489 = vperm.slane %v7439, %v2773
        %v7490 = vsel %vm2775, %v7489, %v7488
        %v7491 = vperm.slane %v7442, %v1181
        %v7492 = vperm.slane %v7445, %v2773
        %v7493 = vsel %vm2775, %v7492, %v7491
        %v7494 = vsel %vm2006, %v7451, %v7448
        %v7495 = vsel %vm2008, %v7454, %v7494
        %v7496 = vsel %vm2010, %v7457, %v7495
        %v7497 = vsel %vm2012, %v7460, %v7496
        %v7498 = vsel %vm2014, %v7463, %v7497
        %v7499 = vsel %vm2016, %v7466, %v7498
        %v7500 = vsel %vm2018, %v7469, %v7499
        %v7501 = vsel %vm2006, %v7475, %v7472
        %v7502 = vsel %vm2008, %v7478, %v7501
        %v7503 = vsel %vm2010, %v7481, %v7502
        %v7504 = vsel %vm2012, %v7484, %v7503
        %v7505 = vsel %vm2014, %v7487, %v7504
        %v7506 = vsel %vm2016, %v7490, %v7505
        %v7507 = vsel %vm2018, %v7493, %v7506
        %vm7510 = vcmask 130048
        %v7511 = vsel %vm7510, %v7500, 0.0
        %v7512 = vsel %vm7510, %v7507, 0.0
        %v7513 = vadd.f32 %v7511, %v7512
        %7514 = vadd.xlane.f32.xlu0 %v7513
        %v7515 = vpop.xlane.xlu0 %7514
        %v7516 = vrot.slane %v7515, 4
        %v7517 = vadd.f32 %v7515, %v7516
        %v7518 = vrot.slane %v7517, 2
        %v7519 = vadd.f32 %v7517, %v7518
        %v7520 = vrot.slane %v7519, 1
        %v7521 = vadd.f32 %v7519, %v7520
        %s7522 = vtos %v7521
        %v7523 = vsel %vm7510, %v344, 0.0
        %v7524 = vsel %vm7510, %v345, 0.0
        %v7525 = vadd.f32 %v7523, %v7524
        %7526 = vadd.xlane.f32.xlu0 %v7525
        %v7527 = vpop.xlane.xlu0 %7526
        %v7528 = vrot.slane %v7527, 4
        %v7529 = vadd.f32 %v7527, %v7528
        %v7530 = vrot.slane %v7529, 2
        %v7531 = vadd.f32 %v7529, %v7530
        %v7532 = vrot.slane %v7531, 1
        %v7533 = vadd.f32 %v7531, %v7532
        %s7534 = vtos %v7533
        %v7535 = vmul.f32 %v6980, %v7052
        %v7536 = vmul.f32 %v6981, %v7058
        %v7537 = vmul.f32 %v6982, %v7065
        %v7538 = vmul.f32 %v6983, %v7071
        %v7539 = vmul.f32 %v6984, %v7078
        %v7540 = vmul.f32 %v6985, %v7084
        %v7541 = vmul.f32 %v6986, %v7091
        %v7542 = vmul.f32 %v6987, %v7097
        %v7543 = vmul.f32 %v6988, %v7104
        %v7544 = vmul.f32 %v6989, %v7110
        %v7545 = vmul.f32 %v6990, %v7117
        %v7546 = vmul.f32 %v6991, %v7123
        %v7547 = vmul.f32 %v6992, %v7130
        %v7548 = vmul.f32 %v6993, %v7136
        %v7549 = vmul.f32 %v6994, %v7143
        %v7550 = vmul.f32 %v6995, %v7149
        %v7551 = vmul.f32 %v6996, %v7156
        %v7552 = vmul.f32 %v6997, %v7162
        %v7553 = vmul.f32 %v6998, %v7169
        %v7554 = vmul.f32 %v6999, %v7175
        %v7555 = vmul.f32 %v7000, %v7182
        %v7556 = vmul.f32 %v7001, %v7188
        %v7557 = vmul.f32 %v7002, %v7195
        %v7558 = vmul.f32 %v7003, %v7201
        %v7559 = vmul.f32 %v7004, %v7208
        %v7560 = vmul.f32 %v7005, %v7214
        %v7561 = vmul.f32 %v7006, %v7221
        %v7562 = vmul.f32 %v7007, %v7227
        %v7563 = vmul.f32 %v7008, %v7234
        %v7564 = vmul.f32 %v7009, %v7240
        %v7565 = vmul.f32 %v7010, %v7247
        %v7566 = vmul.f32 %v7011, %v7253
        %7599 = vset.pattern.permute.xlu0 0
        %7600 = vperm.xlu0 %7599, %v7535
        %v7601 = vpop.permute.xlu0 %7600
        %7602 = vset.pattern.permute.xlu0 0
        %7603 = vperm.xlu0 %7602, %v7536
        %v7604 = vpop.permute.xlu0 %7603
        %7605 = vset.pattern.permute.xlu0 0
        %7606 = vperm.xlu0 %7605, %v7537
        %v7607 = vpop.permute.xlu0 %7606
        %7608 = vset.pattern.permute.xlu0 0
        %7609 = vperm.xlu0 %7608, %v7538
        %v7610 = vpop.permute.xlu0 %7609
        %7611 = vset.pattern.permute.xlu0 0
        %7612 = vperm.xlu0 %7611, %v7539
        %v7613 = vpop.permute.xlu0 %7612
        %7614 = vset.pattern.permute.xlu0 0
        %7615 = vperm.xlu0 %7614, %v7540
        %v7616 = vpop.permute.xlu0 %7615
        %7617 = vset.pattern.permute.xlu0 0
        %7618 = vperm.xlu0 %7617, %v7541
        %v7619 = vpop.permute.xlu0 %7618
        %7620 = vset.pattern.permute.xlu0 0
        %7621 = vperm.xlu0 %7620, %v7542
        %v7622 = vpop.permute.xlu0 %7621
        %7623 = vset.pattern.permute.xlu0 0
        %7624 = vperm.xlu0 %7623, %v7543
        %v7625 = vpop.permute.xlu0 %7624
        %7626 = vset.pattern.permute.xlu0 0
        %7627 = vperm.xlu0 %7626, %v7544
        %v7628 = vpop.permute.xlu0 %7627
        %7629 = vset.pattern.permute.xlu0 0
        %7630 = vperm.xlu0 %7629, %v7545
        %v7631 = vpop.permute.xlu0 %7630
        %7632 = vset.pattern.permute.xlu0 0
        %7633 = vperm.xlu0 %7632, %v7546
        %v7634 = vpop.permute.xlu0 %7633
        %7635 = vset.pattern.permute.xlu0 0
        %7636 = vperm.xlu0 %7635, %v7547
        %v7637 = vpop.permute.xlu0 %7636
        %7638 = vset.pattern.permute.xlu0 0
        %7639 = vperm.xlu0 %7638, %v7548
        %v7640 = vpop.permute.xlu0 %7639
        %7641 = vset.pattern.permute.xlu0 0
        %7642 = vperm.xlu0 %7641, %v7549
        %v7643 = vpop.permute.xlu0 %7642
        %7644 = vset.pattern.permute.xlu0 0
        %7645 = vperm.xlu0 %7644, %v7550
        %v7646 = vpop.permute.xlu0 %7645
        %7647 = vset.pattern.permute.xlu0 0
        %7648 = vperm.xlu0 %7647, %v7551
        %v7649 = vpop.permute.xlu0 %7648
        %7650 = vset.pattern.permute.xlu0 0
        %7651 = vperm.xlu0 %7650, %v7552
        %v7652 = vpop.permute.xlu0 %7651
        %7653 = vset.pattern.permute.xlu0 0
        %7654 = vperm.xlu0 %7653, %v7553
        %v7655 = vpop.permute.xlu0 %7654
        %7656 = vset.pattern.permute.xlu0 0
        %7657 = vperm.xlu0 %7656, %v7554
        %v7658 = vpop.permute.xlu0 %7657
        %7659 = vset.pattern.permute.xlu0 0
        %7660 = vperm.xlu0 %7659, %v7555
        %v7661 = vpop.permute.xlu0 %7660
        %7662 = vset.pattern.permute.xlu0 0
        %7663 = vperm.xlu0 %7662, %v7556
        %v7664 = vpop.permute.xlu0 %7663
        %7665 = vset.pattern.permute.xlu0 0
        %7666 = vperm.xlu0 %7665, %v7557
        %v7667 = vpop.permute.xlu0 %7666
        %7668 = vset.pattern.permute.xlu0 0
        %7669 = vperm.xlu0 %7668, %v7558
        %v7670 = vpop.permute.xlu0 %7669
        %7671 = vset.pattern.permute.xlu0 0
        %7672 = vperm.xlu0 %7671, %v7559
        %v7673 = vpop.permute.xlu0 %7672
        %7674 = vset.pattern.permute.xlu0 0
        %7675 = vperm.xlu0 %7674, %v7560
        %v7676 = vpop.permute.xlu0 %7675
        %7677 = vset.pattern.permute.xlu0 0
        %7678 = vperm.xlu0 %7677, %v7561
        %v7679 = vpop.permute.xlu0 %7678
        %7680 = vset.pattern.permute.xlu0 0
        %7681 = vperm.xlu0 %7680, %v7562
        %v7682 = vpop.permute.xlu0 %7681
        %7683 = vset.pattern.permute.xlu0 0
        %7684 = vperm.xlu0 %7683, %v7563
        %v7685 = vpop.permute.xlu0 %7684
        %7686 = vset.pattern.permute.xlu0 0
        %7687 = vperm.xlu0 %7686, %v7564
        %v7688 = vpop.permute.xlu0 %7687
        %7689 = vset.pattern.permute.xlu0 0
        %7690 = vperm.xlu0 %7689, %v7565
        %v7691 = vpop.permute.xlu0 %7690
        %7692 = vset.pattern.permute.xlu0 0
        %7693 = vperm.xlu0 %7692, %v7566
        %v7694 = vpop.permute.xlu0 %7693
        %v7695 = vperm.slane %v7601, %v1181
        %v7696 = vperm.slane %v7604, %v2773
        %v7697 = vsel %vm2775, %v7696, %v7695
        %v7698 = vperm.slane %v7607, %v1181
        %v7699 = vperm.slane %v7610, %v2773
        %v7700 = vsel %vm2775, %v7699, %v7698
        %v7701 = vperm.slane %v7613, %v1181
        %v7702 = vperm.slane %v7616, %v2773
        %v7703 = vsel %vm2775, %v7702, %v7701
        %v7704 = vperm.slane %v7619, %v1181
        %v7705 = vperm.slane %v7622, %v2773
        %v7706 = vsel %vm2775, %v7705, %v7704
        %v7707 = vperm.slane %v7625, %v1181
        %v7708 = vperm.slane %v7628, %v2773
        %v7709 = vsel %vm2775, %v7708, %v7707
        %v7710 = vperm.slane %v7631, %v1181
        %v7711 = vperm.slane %v7634, %v2773
        %v7712 = vsel %vm2775, %v7711, %v7710
        %v7713 = vperm.slane %v7637, %v1181
        %v7714 = vperm.slane %v7640, %v2773
        %v7715 = vsel %vm2775, %v7714, %v7713
        %v7716 = vperm.slane %v7643, %v1181
        %v7717 = vperm.slane %v7646, %v2773
        %v7718 = vsel %vm2775, %v7717, %v7716
        %v7719 = vperm.slane %v7649, %v1181
        %v7720 = vperm.slane %v7652, %v2773
        %v7721 = vsel %vm2775, %v7720, %v7719
        %v7722 = vperm.slane %v7655, %v1181
        %v7723 = vperm.slane %v7658, %v2773
        %v7724 = vsel %vm2775, %v7723, %v7722
        %v7725 = vperm.slane %v7661, %v1181
        %v7726 = vperm.slane %v7664, %v2773
        %v7727 = vsel %vm2775, %v7726, %v7725
        %v7728 = vperm.slane %v7667, %v1181
        %v7729 = vperm.slane %v7670, %v2773
        %v7730 = vsel %vm2775, %v7729, %v7728
        %v7731 = vperm.slane %v7673, %v1181
        %v7732 = vperm.slane %v7676, %v2773
        %v7733 = vsel %vm2775, %v7732, %v7731
        %v7734 = vperm.slane %v7679, %v1181
        %v7735 = vperm.slane %v7682, %v2773
        %v7736 = vsel %vm2775, %v7735, %v7734
        %v7737 = vperm.slane %v7685, %v1181
        %v7738 = vperm.slane %v7688, %v2773
        %v7739 = vsel %vm2775, %v7738, %v7737
        %v7740 = vperm.slane %v7691, %v1181
        %v7741 = vperm.slane %v7694, %v2773
        %v7742 = vsel %vm2775, %v7741, %v7740
        %v7743 = vsel %vm2006, %v7700, %v7697
        %v7744 = vsel %vm2008, %v7703, %v7743
        %v7745 = vsel %vm2010, %v7706, %v7744
        %v7746 = vsel %vm2012, %v7709, %v7745
        %v7747 = vsel %vm2014, %v7712, %v7746
        %v7748 = vsel %vm2016, %v7715, %v7747
        %v7749 = vsel %vm2018, %v7718, %v7748
        %v7750 = vsel %vm2006, %v7724, %v7721
        %v7751 = vsel %vm2008, %v7727, %v7750
        %v7752 = vsel %vm2010, %v7730, %v7751
        %v7753 = vsel %vm2012, %v7733, %v7752
        %v7754 = vsel %vm2014, %v7736, %v7753
        %v7755 = vsel %vm2016, %v7739, %v7754
        %v7756 = vsel %vm2018, %v7742, %v7755
        %v7759 = vsel %vm7510, %v7749, 0.0
        %v7760 = vsel %vm7510, %v7756, 0.0
        %v7761 = vadd.f32 %v7759, %v7760
        %7762 = vadd.xlane.f32.xlu0 %v7761
        %v7763 = vpop.xlane.xlu0 %7762
        %v7764 = vrot.slane %v7763, 4
        %v7765 = vadd.f32 %v7763, %v7764
        %v7766 = vrot.slane %v7765, 2
        %v7767 = vadd.f32 %v7765, %v7766
        %v7768 = vrot.slane %v7767, 1
        %v7769 = vadd.f32 %v7767, %v7768
        %s7770 = vtos %v7769
        %v7771 = vlaneseq
        %v7772 = vshrl.u32 %v7771, 7
        %vm7773 = vcmp.eq.s32.totalorder %v7772, 0
        %vm7774 = vcmp.eq.s32.totalorder %v7772, 1
        %v7775 = vstv %s7534
        %v7776 = vstv %s7770
        %v7777 = vsel %vm7774, %v7775, %v7776
        %v7778 = vstv %s7522
        %v7779 = vsel %vm7773, %v7778, %v7777
        %7780 = vst [vmem:[%s279] sm:$0x7] %v7779
        %p7781 = scmp.lt.s32.totalorder %s21, 1
        %s7782 = scalar_select %p7781, %s21, 1
        %s7783 = smul.addr %s7782, 4
        %s7784 = scalar_lea.vmem %s4, %s7783
        // Predicated region
        $region45: #{tpu_custom_call.1} parent=35 // pred_check
          %p7785 = pneg %p138
        $region46: #{tpu_custom_call.1} parent=35 // pred_check_branch
          %7787 = sbr.rel (%p7785) target = $region48
        $region47: #{tpu_custom_call.1} parent=35 // pred_region
          _
        $region48: #{tpu_custom_call.1} parent=35 // pred_fallthru
          _
      $region36: #{tpu_custom_call.1} parent=5 // pred_fallthru
        _
      %p7788 = scmp.le.s32.totalorder 2, %s16
      // Predicated region
      $region49: #{tpu_custom_call.1} parent=5 // pred_check
        %p7789 = pneg %p7788
      $region50: #{tpu_custom_call.1} parent=5 // pred_check_branch
        %7791 = sbr.rel (%p7789) target = $region52
      $region51: #{tpu_custom_call.1} parent=5 // pred_region
        %s7792 = ssub.s32 %s16, 2
        // Predicated region
        $region53: #{tpu_custom_call.1} parent=51 // pred_check
          %p7793 = pneg %p144
        $region54: #{tpu_custom_call.1} parent=51 // pred_check_branch
          %7795 = sbr.rel (%p7793) target = $region56
        $region55: #{tpu_custom_call.1} parent=51 // pred_region
          %p7796 = scmp.lt.s32.totalorder %s22, 1
          %s7797 = scalar_select %p7796, %s22, 1
          %s7798 = smul.addr %s7797, 4
          %s7799 = scalar_lea.vmem %s4, %s7798
        $region56: #{tpu_custom_call.1} parent=51 // pred_fallthru
          _
      $region52: #{tpu_custom_call.1} parent=5 // pred_fallthru
        _
    $region6: #{tpu_custom_call.1} parent=1 // loop_footer
      %s20 = sadd.s32 1, %s16
    $region7: #{tpu_custom_call.1} parent=1 // loop_footer_branch
      %15 = sbr.rel target = $region3
    $region8: #{tpu_custom_call.1} parent=1 // loop_exit
      _
    %7800 = vsyncpa [#allocation3], 1
    %s7801 = scalar_lea.sflag [#allocation3], 1
    %7802 = vsyncpa %s7801, 1
    %7803 = vsyncpa [#allocation5], 1
    %s7804 = scalar_lea.sflag [#allocation5], 1
    %7805 = vsyncpa %s7804, 1

</llo_original>
